<compile_context>
chip_gen: v6e
topology: v6e:2x2x1
jax: 0.10.0
libtpu: 0.0.40
codegen_flags: <defaults>
</compile_context>

<pallas_src>
import functools
import math

import jax
import jax.numpy as jnp
from jax.experimental import pallas as pl
from jax.experimental.pallas import tpu as pltpu

MASK_RATIO = 0.2
WEIGHT_DTYPE = jnp.bfloat16   # streamed weight / intermediate activation dtype
LANE = 128


def _round_up(x, m):
    return ((x + m - 1) // m) * m


@functools.lru_cache(maxsize=None)
def _device_caps():
    """Generation-aware tile / VMEM budgets (conservative fallback = v7x)."""
    vmem = 64 * 1024 * 1024
    try:
        vmem = int(getattr(pltpu.get_tpu_info(), "vmem_capacity_bytes", vmem))
    except Exception:
        pass
    if vmem >= 100 * 1024 * 1024:
        # v5e / v6e: 128 MiB VMEM, single TensorCore -> big tiles, no even split.
        return {"tk_cap": 2048, "tn_cap": 4096,
                "vmem_limit": 96 * 1024 * 1024, "multi_core": False}
    # v7x (2 TCs, 64 MiB VMEM) or unknown: tn-biased 8 MiB tiles, even N blocks.
    return {"tk_cap": 1024, "tn_cap": 4096,
            "vmem_limit": 48 * 1024 * 1024, "multi_core": True}


def _pick_tile(dim128, cap, even_blocks=False):
    """Tile (multiple of 128) for a dim already rounded up to 128.

    Largest tile <= cap whose zero-padding overhead is <= ~6%; with
    even_blocks, additionally prefer an even (>= 2) block count so the two
    v7x TensorCores split the axis evenly.  The dim is later padded up to a
    multiple of the chosen tile (exact divisors are NOT required).
    """
    d = dim128 // LANE
    fallback = None
    for t in range(max(1, min(cap // LANE, d)), 0, -1):
        nblk = -(-d // t)
        waste = nblk * t - d
        if waste * 16 > d:            # > ~6% extra streamed (zero) bytes
            continue
        if fallback is None:
            fallback = t
        if (not even_blocks) or nblk % 2 == 0:
            return t * LANE
    return (fallback or 1) * LANE


def _pad_rows(m):
    """Pad batch/M to 16 rows (bf16 sublane packing); tile = min(Mp, 256)."""
    mp = _round_up(m, 16)
    if mp > 256:
        mp = _round_up(mp, 256)
    return mp


# ----------------------------------------------------------------------------
# Pallas kernel: grouped  y[g] = x[g] @ W[g] + b[g].
# K is the LAST grid axis and MUST stay "arbitrary": the f32 accumulator is
# resident across it (bias init at k == 0, cast + store at k == last).
# ----------------------------------------------------------------------------
def _linear_kernel(x_ref, w_ref, b_ref, o_ref, acc_ref):
    k = pl.program_id(3)

    @pl.when(k == 0)
    def _():
        acc_ref[...] = jnp.broadcast_to(
            b_ref[...].astype(jnp.float32), acc_ref.shape)

    acc_ref[...] += jnp.dot(
        x_ref[...], w_ref[...], preferred_element_type=jnp.float32)

    @pl.when(k == pl.num_programs(3) - 1)
    def _():
        o_ref[...] = acc_ref[...].astype(o_ref.dtype)


def linear_pallas(x, w_blocked, b, *, out_dtype):
    """x: (G, Mp, Kp) bf16, w: (G, nK, nN, tk, tn) bf16 tile-contiguous,
    b: (G, 1, Np) f32  ->  (G, Mp, Np) out_dtype.

    The pre-blocked weight layout makes each weight-tile DMA one contiguous
    tk*tn*2-byte HBM read; with batch ~ 2 the kernel is weight-streaming
    bound, so DMA efficiency is the whole game.
    """
    G, Mp, Kp = x.shape
    Gw, nK, nN, tk, tn = w_blocked.shape
    Np = nN * tn
    assert Gw == G and nK * tk == Kp and b.shape == (G, 1, Np)
    tm = Mp if Mp <= 256 else 256
    assert Mp % tm == 0 and Mp % 16 == 0

    caps = _device_caps()
    grid = (G, Mp // tm, nN, nK)

    return pl.pallas_call(
        _linear_kernel,
        out_shape=jax.ShapeDtypeStruct((G, Mp, Np), out_dtype),
        grid_spec=pltpu.PrefetchScalarGridSpec(
            num_scalar_prefetch=0,
            grid=grid,
            in_specs=[
                pl.BlockSpec((None, tm, tk), lambda g, i, j, k: (g, i, k)),
                pl.BlockSpec((None, None, None, tk, tn),
                             lambda g, i, j, k: (g, k, j, 0, 0)),
                pl.BlockSpec((None, 1, tn), lambda g, i, j, k: (g, 0, j)),
            ],
            out_specs=pl.BlockSpec((None, tm, tn),
                                   lambda g, i, j, k: (g, i, j)),
            scratch_shapes=[pltpu.VMEM((tm, tn), jnp.float32)],
        ),
        compiler_params=pltpu.CompilerParams(
            dimension_semantics=("parallel", "parallel", "parallel",
                                 "arbitrary"),
            vmem_limit_bytes=caps["vmem_limit"],
        ),
    )(x, w_blocked, b)


# ----------------------------------------------------------------------------
# Parameters: nn.Linear-style init; weights stored as (in, out) = W^T relative
# to PyTorch, padded once to a tile multiple, cast to bf16 and pre-blocked.
# ----------------------------------------------------------------------------
def _init_linear_group(key, fan_in, fan_out, group, caps):
    k128 = _round_up(fan_in, LANE)
    n128 = _round_up(fan_out, LANE)
    tk = _pick_tile(k128, caps["tk_cap"])
    tn = _pick_tile(n128, caps["tn_cap"], even_blocks=caps["multi_core"])
    kp = _round_up(k128, tk)
    npad = _round_up(n128, tn)
    bound = 1.0 / (fan_in ** 0.5)      # nn.Linear default uniform bound
    ws, bs = [], []
    for _ in range(group):
        key, kw, kb = jax.random.split(key, 3)
        w = jax.random.uniform(kw, (fan_in, fan_out), jnp.float32,
                               -bound, bound)
        b = jax.random.uniform(kb, (fan_out,), jnp.float32, -bound, bound)
        w = jnp.pad(w, ((0, kp - fan_in), (0, npad - fan_out)))
        w = w.astype(WEIGHT_DTYPE)
        # tile-contiguous layout: (nK, nN, tk, tn)
        w = w.reshape(kp // tk, tk, npad // tn, tn).transpose(0, 2, 1, 3)
        ws.append(w)
        bs.append(jnp.pad(b, (0, npad - fan_out)).reshape(1, npad))  # f32
    return jnp.stack(ws), jnp.stack(bs)


def build_autoencoder(key, *, seq_len, seq_dim, x2_feats, x3_feats, hidden,
                      mask_ratio=MASK_RATIO):
    """Returns (params pytree of arrays, static out_dims dict)."""
    len_keep = int(seq_len * (1 - mask_ratio))
    h1, h2, h3 = hidden
    caps = _device_caps()
    keys = jax.random.split(key, 10)
    params = {
        # encoder first layers (different fan-in) -> G = 1 each
        "enc1_in": _init_linear_group(keys[0], len_keep * seq_dim, h1, 1, caps),
        "enc2_in": _init_linear_group(keys[1], x2_feats, h1, 1, caps),
        "enc3_in": _init_linear_group(keys[2], x3_feats, h1, 1, caps),
        # shape-identical middle layers, batched across the 3 branches (G = 3)
        "mid": [
            _init_linear_group(keys[3], h1, h2, 3, caps),   # enc layer 2
            _init_linear_group(keys[4], h2, h3, 3, caps),   # enc layer 3
            _init_linear_group(keys[5], h3, h2, 3, caps),   # dec layer 1
            _init_linear_group(keys[6], h2, h1, 3, caps),   # dec layer 2
        ],
        # decoder last layers (different fan-out) -> G = 1 each, f32 output
        "dec1_out": _init_linear_group(keys[7], h1, seq_len * seq_dim, 1, caps),
        "dec2_out": _init_linear_group(keys[8], h1, x2_feats, 1, caps),
        "dec3_out": _init_linear_group(keys[9], h1, x3_feats, 1, caps),
    }
    out_dims = {"dec1": seq_len * seq_dim, "dec2": x2_feats, "dec3": x3_feats}
    return params, out_dims


def _apply_layer(layer, x, out_dtype):
    """x: (G, Mp, C) -> (G, Mp, Np_padded).  C is fitted (pad / slice) to the
    layer's padded fan-in; the affected columns are exact zeros either way."""
    w, b = layer
    kp = w.shape[1] * w.shape[3]       # nK * tk
    c = x.shape[2]
    if c < kp:
        x = jnp.pad(x, ((0, 0), (0, 0), (0, kp - c)))
    elif c > kp:
        x = x[:, :, :kp]
    return linear_pallas(x.astype(WEIGHT_DTYPE), w, b, out_dtype=out_dtype)


# ----------------------------------------------------------------------------
# Random masking (per-sample shuffle + keep) — glue in plain JAX
# ----------------------------------------------------------------------------
def random_masking(x, key, mask_ratio=MASK_RATIO):
    # x: [N, L, D]
    N, L, D = x.shape
    len_keep = int(L * (1 - mask_ratio))
    noise = jax.random.uniform(key, (N, L))
    ids_shuffle = jnp.argsort(noise, axis=1)
    ids_keep = ids_shuffle[:, :len_keep]
    return jnp.take_along_axis(x, ids_keep[:, :, None], axis=1)


# ----------------------------------------------------------------------------
# Forward pass (mirrors AutoEncoder.forward)
# ----------------------------------------------------------------------------
def autoencoder_forward(params, x_1, x_2, x_3, mask_key, *, out_dims,
                        mask_ratio=MASK_RATIO):
    x_1 = random_masking(x_1, mask_key, mask_ratio)
    x_1 = x_1.reshape(x_1.shape[0], -1)
    x_2 = x_2.reshape(x_2.shape[0], -1)
    x_3 = x_3.reshape(x_3.shape[0], -1)

    m = x_1.shape[0]
    mp = _pad_rows(m)

    def prep(x):                       # (m, C) -> (1, Mp, C)
        return jnp.pad(x, ((0, mp - m), (0, 0)))[None]

    # encoder layer 1: three distinct fan-ins -> three G=1 calls (bf16 out)
    a1 = _apply_layer(params["enc1_in"], prep(x_1), WEIGHT_DTYPE)
    a2 = _apply_layer(params["enc2_in"], prep(x_2), WEIGHT_DTYPE)
    a3 = _apply_layer(params["enc3_in"], prep(x_3), WEIGHT_DTYPE)
    a = jnp.concatenate([a1, a2, a3], axis=0)         # (3, Mp, h1_padded)

    # enc layers 2/3 + dec layers 1/2: one grouped (G=3) call per layer
    for layer in params["mid"]:
        a = _apply_layer(layer, a, WEIGHT_DTYPE)

    # decoder layer 3: three distinct fan-outs -> three G=1 calls (f32 out)
    r1 = _apply_layer(params["dec1_out"], a[0:1], jnp.float32)
    r2 = _apply_layer(params["dec2_out"], a[1:2], jnp.float32)
    r3 = _apply_layer(params["dec3_out"], a[2:3], jnp.float32)

    return (r1[0, :m, :out_dims["dec1"]],
            r2[0, :m, :out_dims["dec2"]],
            r3[0, :m, :out_dims["dec3"]])


if __name__ == "__main__":
    # SMALL-scale stand-in for the original AutoEncoder sizes so the demo
    # finishes quickly; the kernels/wrappers are shape-generic and handle the
    # full 7956/21632/64512 -> 4096/2048/1024 model.
    #   x_1: (N, 128, 78)       -> (N, 20, 8)   (masked to 16 tokens -> 128)
    #   x_2: (N, 128, 13, 13)   -> (N, 4, 8, 8)        -> 256 feats
    #   x_3: (N, 128, 6, 14, 6) -> (N, 4, 4, 8, 4)     -> 512 feats
    #   hidden 4096/2048/1024   -> 512/256/128
    batch = 2
    seq_len, seq_dim = 20, 8
    x2_shape = (4, 8, 8)
    x3_shape = (4, 4, 8, 4)
    hidden = (512, 256, 128)
    x2_feats = math.prod(x2_shape)
    x3_feats = math.prod(x3_shape)

    root = jax.random.PRNGKey(0)
    k_params, k_x1, k_x2, k_x3, k_mask = jax.random.split(root, 5)

    params, out_dims = build_autoencoder(
        k_params, seq_len=seq_len, seq_dim=seq_dim,
        x2_feats=x2_feats, x3_feats=x3_feats, hidden=hidden)

    x_1 = jax.random.normal(k_x1, (batch, seq_len, seq_dim), jnp.float32)
    x_2 = jax.random.normal(k_x2, (batch,) + x2_shape, jnp.float32)
    x_3 = jax.random.normal(k_x3, (batch,) + x3_shape, jnp.float32)

    fwd = jax.jit(functools.partial(autoencoder_forward, out_dims=out_dims))
    r1, r2, r3 = jax.block_until_ready(fwd(params, x_1, x_2, x_3, k_mask))

    assert r1.shape == (batch, seq_len * seq_dim)
    assert r2.shape == (batch, x2_feats)
    assert r3.shape == (batch, x3_feats)
    assert r1.dtype == r2.dtype == r3.dtype == jnp.float32
    assert all(bool(jnp.all(jnp.isfinite(r))) for r in (r1, r2, r3))

    print("KERNEL_OK")
</pallas_src>

<mosaic_0001>
module attributes {stable_mosaic.version = 11 : i64} {
  func.func @_linear_kernel(%arg0: i32, %arg1: i32, %arg2: i32, %arg3: i32, %arg4: memref<1x16x512xbf16, #tpu.memory_space<vmem>>, %arg5: memref<1x1x1x512x256xbf16, #tpu.memory_space<vmem>>, %arg6: memref<1x1x256xf32, #tpu.memory_space<vmem>>, %arg7: memref<1x16x256xbf16, #tpu.memory_space<vmem>>, %arg8: memref<16x256xf32, #tpu.memory_space<vmem>>) attributes {dimension_semantics = [#tpu.dimension_semantics<parallel>, #tpu.dimension_semantics<parallel>, #tpu.dimension_semantics<parallel>, #tpu.dimension_semantics<arbitrary>], iteration_bounds = array<i64: 1, 1, 2, 1>, scalar_prefetch = 0 : i64, scratch_operands = 1 : i64, tpu.core_type = #tpu.core_type<tc>, window_params = [{transform_indices = @transform_0, window_bounds = array<i64: 1, 16, 512>}, {transform_indices = @transform_1, window_bounds = array<i64: 1, 1, 1, 512, 256>}, {transform_indices = @transform_2, window_bounds = array<i64: 1, 1, 256>}, {transform_indices = @transform_3, window_bounds = array<i64: 1, 16, 256>}]} {
    %c0_i32 = arith.constant 0 : i32
    %0 = arith.cmpi eq, %arg3, %c0_i32 : i32
    %1 = arith.extui %0 : i1 to i32
    %c0_i32_0 = arith.constant 0 : i32
    %2 = arith.cmpi ne, %1, %c0_i32_0 : i32
    scf.if %2 {
      %c0_14 = arith.constant 0 : index
      %c0_15 = arith.constant 0 : index
      %c0_16 = arith.constant 0 : index
      %14 = vector.load %arg6[%c0_14, %c0_15, %c0_16] : memref<1x1x256xf32, #tpu.memory_space<vmem>>, vector<1x1x256xf32>
      %15 = vector.shape_cast %14 : vector<1x1x256xf32> to vector<1x256xf32>
      %16 = vector.shape_cast %15 : vector<1x256xf32> to vector<1x256xf32>
      %17 = vector.broadcast %16 : vector<1x256xf32> to vector<16x256xf32>
      %c0_17 = arith.constant 0 : index
      %c0_18 = arith.constant 0 : index
      %18 = vector.load %arg8[%c0_17, %c0_18] : memref<16x256xf32, #tpu.memory_space<vmem>>, vector<16x256xf32>
      tpu.vector_store %arg8[%c0_17, %c0_18], %17 {strides = array<i32>} : memref<16x256xf32, #tpu.memory_space<vmem>>, vector<16x256xf32>,
    } else {
    }
    %c0 = arith.constant 0 : index
    %c0_1 = arith.constant 0 : index
    %3 = vector.load %arg8[%c0, %c0_1] : memref<16x256xf32, #tpu.memory_space<vmem>>, vector<16x256xf32>
    %c0_2 = arith.constant 0 : index
    %c0_3 = arith.constant 0 : index
    %c0_4 = arith.constant 0 : index
    %4 = vector.load %arg4[%c0_2, %c0_3, %c0_4] : memref<1x16x512xbf16, #tpu.memory_space<vmem>>, vector<1x16x512xbf16>
    %5 = vector.shape_cast %4 : vector<1x16x512xbf16> to vector<16x512xbf16>
    %c0_5 = arith.constant 0 : index
    %c0_6 = arith.constant 0 : index
    %c0_7 = arith.constant 0 : index
    %c0_8 = arith.constant 0 : index
    %c0_9 = arith.constant 0 : index
    %6 = vector.load %arg5[%c0_5, %c0_6, %c0_7, %c0_8, %c0_9] : memref<1x1x1x512x256xbf16, #tpu.memory_space<vmem>>, vector<1x1x1x512x256xbf16>
    %7 = vector.shape_cast %6 : vector<1x1x1x512x256xbf16> to vector<512x256xbf16>
    %cst = arith.constant dense<0.000000e+00> : vector<16x256xf32>
    %8 = tpu.matmul %5, %7, %cst {dimension_numbers = #tpu.dot_dimension_numbers<[1], [0], [0], [1], [0, 0, 1, 1], [], []>} : vector<16x512xbf16>, vector<512x256xbf16>, vector<16x256xf32> -> vector<16x256xf32>
    %9 = arith.addf %3, %8 : vector<16x256xf32>
    %c0_10 = arith.constant 0 : index
    %c0_11 = arith.constant 0 : index
    %10 = vector.load %arg8[%c0_10, %c0_11] : memref<16x256xf32, #tpu.memory_space<vmem>>, vector<16x256xf32>
    tpu.vector_store %arg8[%c0_10, %c0_11], %9 {strides = array<i32>} : memref<16x256xf32, #tpu.memory_space<vmem>>, vector<16x256xf32>,
    %c0_i32_12 = arith.constant 0 : i32
    %11 = arith.cmpi eq, %arg3, %c0_i32_12 : i32
    %12 = arith.extui %11 : i1 to i32
    %c0_i32_13 = arith.constant 0 : i32
    %13 = arith.cmpi ne, %12, %c0_i32_13 : i32
    scf.if %13 {
      %c0_14 = arith.constant 0 : index
      %c0_15 = arith.constant 0 : index
      %14 = vector.load %arg8[%c0_14, %c0_15] : memref<16x256xf32, #tpu.memory_space<vmem>>, vector<16x256xf32>
      %15 = arith.truncf %14 : vector<16x256xf32> to vector<16x256xbf16>
      %c0_16 = arith.constant 0 : index
      %c0_17 = arith.constant 0 : index
      %c0_18 = arith.constant 0 : index
      %16 = vector.load %arg7[%c0_16, %c0_17, %c0_18] : memref<1x16x256xbf16, #tpu.memory_space<vmem>>, vector<1x16x256xbf16>
      %17 = vector.shape_cast %16 : vector<1x16x256xbf16> to vector<16x256xbf16>
      %18 = vector.shape_cast %15 : vector<16x256xbf16> to vector<1x16x256xbf16>
      tpu.vector_store %arg7[%c0_16, %c0_17, %c0_18], %18 {strides = array<i32>} : memref<1x16x256xbf16, #tpu.memory_space<vmem>>, vector<1x16x256xbf16>,
    } else {
    }
    return
  }
  func.func @transform_0(%arg0: i32, %arg1: i32, %arg2: i32, %arg3: i32) -> (i32, i32, i32) {
    %c0_i32 = arith.constant 0 : i32
    return %arg0, %arg1, %arg3 : i32, i32, i32
  }
  func.func @transform_1(%arg0: i32, %arg1: i32, %arg2: i32, %arg3: i32) -> (i32, i32, i32, i32, i32) {
    %c0_i32 = arith.constant 0 : i32
    %c0_i32_0 = arith.constant 0 : i32
    %c0_i32_1 = arith.constant 0 : i32
    return %arg0, %arg3, %arg2, %c0_i32, %c0_i32_0 : i32, i32, i32, i32, i32
  }
  func.func @transform_2(%arg0: i32, %arg1: i32, %arg2: i32, %arg3: i32) -> (i32, i32, i32) {
    %c0_i32 = arith.constant 0 : i32
    %c0_i32_0 = arith.constant 0 : i32
    return %arg0, %c0_i32, %arg2 : i32, i32, i32
  }
  func.func @transform_3(%arg0: i32, %arg1: i32, %arg2: i32, %arg3: i32) -> (i32, i32, i32) {
    %c0_i32 = arith.constant 0 : i32
    return %arg0, %arg1, %arg2 : i32, i32, i32
  }
}

module attributes {stable_mosaic.version = 11 : i64} {
  func.func @_linear_kernel(%arg0: i32, %arg1: i32, %arg2: i32, %arg3: i32, %arg4: memref<1x16x256xbf16, #tpu.memory_space<vmem>>, %arg5: memref<1x1x1x256x256xbf16, #tpu.memory_space<vmem>>, %arg6: memref<1x1x256xf32, #tpu.memory_space<vmem>>, %arg7: memref<1x16x256xbf16, #tpu.memory_space<vmem>>, %arg8: memref<16x256xf32, #tpu.memory_space<vmem>>) attributes {dimension_semantics = [#tpu.dimension_semantics<parallel>, #tpu.dimension_semantics<parallel>, #tpu.dimension_semantics<parallel>, #tpu.dimension_semantics<arbitrary>], iteration_bounds = array<i64: 1, 1, 2, 1>, scalar_prefetch = 0 : i64, scratch_operands = 1 : i64, tpu.core_type = #tpu.core_type<tc>, window_params = [{transform_indices = @transform_0, window_bounds = array<i64: 1, 16, 256>}, {transform_indices = @transform_1, window_bounds = array<i64: 1, 1, 1, 256, 256>}, {transform_indices = @transform_2, window_bounds = array<i64: 1, 1, 256>}, {transform_indices = @transform_3, window_bounds = array<i64: 1, 16, 256>}]} {
    %c0_i32 = arith.constant 0 : i32
    %0 = arith.cmpi eq, %arg3, %c0_i32 : i32
    %1 = arith.extui %0 : i1 to i32
    %c0_i32_0 = arith.constant 0 : i32
    %2 = arith.cmpi ne, %1, %c0_i32_0 : i32
    scf.if %2 {
      %c0_14 = arith.constant 0 : index
      %c0_15 = arith.constant 0 : index
      %c0_16 = arith.constant 0 : index
      %14 = vector.load %arg6[%c0_14, %c0_15, %c0_16] : memref<1x1x256xf32, #tpu.memory_space<vmem>>, vector<1x1x256xf32>
      %15 = vector.shape_cast %14 : vector<1x1x256xf32> to vector<1x256xf32>
      %16 = vector.shape_cast %15 : vector<1x256xf32> to vector<1x256xf32>
      %17 = vector.broadcast %16 : vector<1x256xf32> to vector<16x256xf32>
      %c0_17 = arith.constant 0 : index
      %c0_18 = arith.constant 0 : index
      %18 = vector.load %arg8[%c0_17, %c0_18] : memref<16x256xf32, #tpu.memory_space<vmem>>, vector<16x256xf32>
      tpu.vector_store %arg8[%c0_17, %c0_18], %17 {strides = array<i32>} : memref<16x256xf32, #tpu.memory_space<vmem>>, vector<16x256xf32>,
    } else {
    }
    %c0 = arith.constant 0 : index
    %c0_1 = arith.constant 0 : index
    %3 = vector.load %arg8[%c0, %c0_1] : memref<16x256xf32, #tpu.memory_space<vmem>>, vector<16x256xf32>
    %c0_2 = arith.constant 0 : index
    %c0_3 = arith.constant 0 : index
    %c0_4 = arith.constant 0 : index
    %4 = vector.load %arg4[%c0_2, %c0_3, %c0_4] : memref<1x16x256xbf16, #tpu.memory_space<vmem>>, vector<1x16x256xbf16>
    %5 = vector.shape_cast %4 : vector<1x16x256xbf16> to vector<16x256xbf16>
    %c0_5 = arith.constant 0 : index
    %c0_6 = arith.constant 0 : index
    %c0_7 = arith.constant 0 : index
    %c0_8 = arith.constant 0 : index
    %c0_9 = arith.constant 0 : index
    %6 = vector.load %arg5[%c0_5, %c0_6, %c0_7, %c0_8, %c0_9] : memref<1x1x1x256x256xbf16, #tpu.memory_space<vmem>>, vector<1x1x1x256x256xbf16>
    %7 = vector.shape_cast %6 : vector<1x1x1x256x256xbf16> to vector<256x256xbf16>
    %cst = arith.constant dense<0.000000e+00> : vector<16x256xf32>
    %8 = tpu.matmul %5, %7, %cst {dimension_numbers = #tpu.dot_dimension_numbers<[1], [0], [0], [1], [0, 0, 1, 1], [], []>} : vector<16x256xbf16>, vector<256x256xbf16>, vector<16x256xf32> -> vector<16x256xf32>
    %9 = arith.addf %3, %8 : vector<16x256xf32>
    %c0_10 = arith.constant 0 : index
    %c0_11 = arith.constant 0 : index
    %10 = vector.load %arg8[%c0_10, %c0_11] : memref<16x256xf32, #tpu.memory_space<vmem>>, vector<16x256xf32>
    tpu.vector_store %arg8[%c0_10, %c0_11], %9 {strides = array<i32>} : memref<16x256xf32, #tpu.memory_space<vmem>>, vector<16x256xf32>,
    %c0_i32_12 = arith.constant 0 : i32
    %11 = arith.cmpi eq, %arg3, %c0_i32_12 : i32
    %12 = arith.extui %11 : i1 to i32
    %c0_i32_13 = arith.constant 0 : i32
    %13 = arith.cmpi ne, %12, %c0_i32_13 : i32
    scf.if %13 {
      %c0_14 = arith.constant 0 : index
      %c0_15 = arith.constant 0 : index
      %14 = vector.load %arg8[%c0_14, %c0_15] : memref<16x256xf32, #tpu.memory_space<vmem>>, vector<16x256xf32>
      %15 = arith.truncf %14 : vector<16x256xf32> to vector<16x256xbf16>
      %c0_16 = arith.constant 0 : index
      %c0_17 = arith.constant 0 : index
      %c0_18 = arith.constant 0 : index
      %16 = vector.load %arg7[%c0_16, %c0_17, %c0_18] : memref<1x16x256xbf16, #tpu.memory_space<vmem>>, vector<1x16x256xbf16>
      %17 = vector.shape_cast %16 : vector<1x16x256xbf16> to vector<16x256xbf16>
      %18 = vector.shape_cast %15 : vector<16x256xbf16> to vector<1x16x256xbf16>
      tpu.vector_store %arg7[%c0_16, %c0_17, %c0_18], %18 {strides = array<i32>} : memref<1x16x256xbf16, #tpu.memory_space<vmem>>, vector<1x16x256xbf16>,
    } else {
    }
    return
  }
  func.func @transform_0(%arg0: i32, %arg1: i32, %arg2: i32, %arg3: i32) -> (i32, i32, i32) {
    %c0_i32 = arith.constant 0 : i32
    return %arg0, %arg1, %arg3 : i32, i32, i32
  }
  func.func @transform_1(%arg0: i32, %arg1: i32, %arg2: i32, %arg3: i32) -> (i32, i32, i32, i32, i32) {
    %c0_i32 = arith.constant 0 : i32
    %c0_i32_0 = arith.constant 0 : i32
    %c0_i32_1 = arith.constant 0 : i32
    return %arg0, %arg3, %arg2, %c0_i32, %c0_i32_0 : i32, i32, i32, i32, i32
  }
  func.func @transform_2(%arg0: i32, %arg1: i32, %arg2: i32, %arg3: i32) -> (i32, i32, i32) {
    %c0_i32 = arith.constant 0 : i32
    %c0_i32_0 = arith.constant 0 : i32
    return %arg0, %c0_i32, %arg2 : i32, i32, i32
  }
  func.func @transform_3(%arg0: i32, %arg1: i32, %arg2: i32, %arg3: i32) -> (i32, i32, i32) {
    %c0_i32 = arith.constant 0 : i32
    return %arg0, %arg1, %arg2 : i32, i32, i32
  }
}

module attributes {stable_mosaic.version = 11 : i64} {
  func.func @_linear_kernel(%arg0: i32, %arg1: i32, %arg2: i32, %arg3: i32, %arg4: memref<1x16x128xbf16, #tpu.memory_space<vmem>>, %arg5: memref<1x1x1x128x256xbf16, #tpu.memory_space<vmem>>, %arg6: memref<1x1x256xf32, #tpu.memory_space<vmem>>, %arg7: memref<1x16x256xbf16, #tpu.memory_space<vmem>>, %arg8: memref<16x256xf32, #tpu.memory_space<vmem>>) attributes {dimension_semantics = [#tpu.dimension_semantics<parallel>, #tpu.dimension_semantics<parallel>, #tpu.dimension_semantics<parallel>, #tpu.dimension_semantics<arbitrary>], iteration_bounds = array<i64: 1, 1, 2, 1>, scalar_prefetch = 0 : i64, scratch_operands = 1 : i64, tpu.core_type = #tpu.core_type<tc>, window_params = [{transform_indices = @transform_0, window_bounds = array<i64: 1, 16, 128>}, {transform_indices = @transform_1, window_bounds = array<i64: 1, 1, 1, 128, 256>}, {transform_indices = @transform_2, window_bounds = array<i64: 1, 1, 256>}, {transform_indices = @transform_3, window_bounds = array<i64: 1, 16, 256>}]} {
    %c0_i32 = arith.constant 0 : i32
    %0 = arith.cmpi eq, %arg3, %c0_i32 : i32
    %1 = arith.extui %0 : i1 to i32
    %c0_i32_0 = arith.constant 0 : i32
    %2 = arith.cmpi ne, %1, %c0_i32_0 : i32
    scf.if %2 {
      %c0_14 = arith.constant 0 : index
      %c0_15 = arith.constant 0 : index
      %c0_16 = arith.constant 0 : index
      %14 = vector.load %arg6[%c0_14, %c0_15, %c0_16] : memref<1x1x256xf32, #tpu.memory_space<vmem>>, vector<1x1x256xf32>
      %15 = vector.shape_cast %14 : vector<1x1x256xf32> to vector<1x256xf32>
      %16 = vector.shape_cast %15 : vector<1x256xf32> to vector<1x256xf32>
      %17 = vector.broadcast %16 : vector<1x256xf32> to vector<16x256xf32>
      %c0_17 = arith.constant 0 : index
      %c0_18 = arith.constant 0 : index
      %18 = vector.load %arg8[%c0_17, %c0_18] : memref<16x256xf32, #tpu.memory_space<vmem>>, vector<16x256xf32>
      tpu.vector_store %arg8[%c0_17, %c0_18], %17 {strides = array<i32>} : memref<16x256xf32, #tpu.memory_space<vmem>>, vector<16x256xf32>,
    } else {
    }
    %c0 = arith.constant 0 : index
    %c0_1 = arith.constant 0 : index
    %3 = vector.load %arg8[%c0, %c0_1] : memref<16x256xf32, #tpu.memory_space<vmem>>, vector<16x256xf32>
    %c0_2 = arith.constant 0 : index
    %c0_3 = arith.constant 0 : index
    %c0_4 = arith.constant 0 : index
    %4 = vector.load %arg4[%c0_2, %c0_3, %c0_4] : memref<1x16x128xbf16, #tpu.memory_space<vmem>>, vector<1x16x128xbf16>
    %5 = vector.shape_cast %4 : vector<1x16x128xbf16> to vector<16x128xbf16>
    %c0_5 = arith.constant 0 : index
    %c0_6 = arith.constant 0 : index
    %c0_7 = arith.constant 0 : index
    %c0_8 = arith.constant 0 : index
    %c0_9 = arith.constant 0 : index
    %6 = vector.load %arg5[%c0_5, %c0_6, %c0_7, %c0_8, %c0_9] : memref<1x1x1x128x256xbf16, #tpu.memory_space<vmem>>, vector<1x1x1x128x256xbf16>
    %7 = vector.shape_cast %6 : vector<1x1x1x128x256xbf16> to vector<128x256xbf16>
    %cst = arith.constant dense<0.000000e+00> : vector<16x256xf32>
    %8 = tpu.matmul %5, %7, %cst {dimension_numbers = #tpu.dot_dimension_numbers<[1], [0], [0], [1], [0, 0, 1, 1], [], []>} : vector<16x128xbf16>, vector<128x256xbf16>, vector<16x256xf32> -> vector<16x256xf32>
    %9 = arith.addf %3, %8 : vector<16x256xf32>
    %c0_10 = arith.constant 0 : index
    %c0_11 = arith.constant 0 : index
    %10 = vector.load %arg8[%c0_10, %c0_11] : memref<16x256xf32, #tpu.memory_space<vmem>>, vector<16x256xf32>
    tpu.vector_store %arg8[%c0_10, %c0_11], %9 {strides = array<i32>} : memref<16x256xf32, #tpu.memory_space<vmem>>, vector<16x256xf32>,
    %c0_i32_12 = arith.constant 0 : i32
    %11 = arith.cmpi eq, %arg3, %c0_i32_12 : i32
    %12 = arith.extui %11 : i1 to i32
    %c0_i32_13 = arith.constant 0 : i32
    %13 = arith.cmpi ne, %12, %c0_i32_13 : i32
    scf.if %13 {
      %c0_14 = arith.constant 0 : index
      %c0_15 = arith.constant 0 : index
      %14 = vector.load %arg8[%c0_14, %c0_15] : memref<16x256xf32, #tpu.memory_space<vmem>>, vector<16x256xf32>
      %15 = arith.truncf %14 : vector<16x256xf32> to vector<16x256xbf16>
      %c0_16 = arith.constant 0 : index
      %c0_17 = arith.constant 0 : index
      %c0_18 = arith.constant 0 : index
      %16 = vector.load %arg7[%c0_16, %c0_17, %c0_18] : memref<1x16x256xbf16, #tpu.memory_space<vmem>>, vector<1x16x256xbf16>
      %17 = vector.shape_cast %16 : vector<1x16x256xbf16> to vector<16x256xbf16>
      %18 = vector.shape_cast %15 : vector<16x256xbf16> to vector<1x16x256xbf16>
      tpu.vector_store %arg7[%c0_16, %c0_17, %c0_18], %18 {strides = array<i32>} : memref<1x16x256xbf16, #tpu.memory_space<vmem>>, vector<1x16x256xbf16>,
    } else {
    }
    return
  }
  func.func @transform_0(%arg0: i32, %arg1: i32, %arg2: i32, %arg3: i32) -> (i32, i32, i32) {
    %c0_i32 = arith.constant 0 : i32
    return %arg0, %arg1, %arg3 : i32, i32, i32
  }
  func.func @transform_1(%arg0: i32, %arg1: i32, %arg2: i32, %arg3: i32) -> (i32, i32, i32, i32, i32) {
    %c0_i32 = arith.constant 0 : i32
    %c0_i32_0 = arith.constant 0 : i32
    %c0_i32_1 = arith.constant 0 : i32
    return %arg0, %arg3, %arg2, %c0_i32, %c0_i32_0 : i32, i32, i32, i32, i32
  }
  func.func @transform_2(%arg0: i32, %arg1: i32, %arg2: i32, %arg3: i32) -> (i32, i32, i32) {
    %c0_i32 = arith.constant 0 : i32
    %c0_i32_0 = arith.constant 0 : i32
    return %arg0, %c0_i32, %arg2 : i32, i32, i32
  }
  func.func @transform_3(%arg0: i32, %arg1: i32, %arg2: i32, %arg3: i32) -> (i32, i32, i32) {
    %c0_i32 = arith.constant 0 : i32
    return %arg0, %arg1, %arg2 : i32, i32, i32
  }
}

module attributes {stable_mosaic.version = 11 : i64} {
  func.func @_linear_kernel(%arg0: i32, %arg1: i32, %arg2: i32, %arg3: i32, %arg4: memref<1x16x512xbf16, #tpu.memory_space<vmem>>, %arg5: memref<1x1x1x512x128xbf16, #tpu.memory_space<vmem>>, %arg6: memref<1x1x128xf32, #tpu.memory_space<vmem>>, %arg7: memref<1x16x128xbf16, #tpu.memory_space<vmem>>, %arg8: memref<16x128xf32, #tpu.memory_space<vmem>>) attributes {dimension_semantics = [#tpu.dimension_semantics<parallel>, #tpu.dimension_semantics<parallel>, #tpu.dimension_semantics<parallel>, #tpu.dimension_semantics<arbitrary>], iteration_bounds = array<i64: 3, 1, 2, 1>, scalar_prefetch = 0 : i64, scratch_operands = 1 : i64, tpu.core_type = #tpu.core_type<tc>, window_params = [{transform_indices = @transform_0, window_bounds = array<i64: 1, 16, 512>}, {transform_indices = @transform_1, window_bounds = array<i64: 1, 1, 1, 512, 128>}, {transform_indices = @transform_2, window_bounds = array<i64: 1, 1, 128>}, {transform_indices = @transform_3, window_bounds = array<i64: 1, 16, 128>}]} {
    %c0_i32 = arith.constant 0 : i32
    %0 = arith.cmpi eq, %arg3, %c0_i32 : i32
    %1 = arith.extui %0 : i1 to i32
    %c0_i32_0 = arith.constant 0 : i32
    %2 = arith.cmpi ne, %1, %c0_i32_0 : i32
    scf.if %2 {
      %c0_14 = arith.constant 0 : index
      %c0_15 = arith.constant 0 : index
      %c0_16 = arith.constant 0 : index
      %14 = vector.load %arg6[%c0_14, %c0_15, %c0_16] : memref<1x1x128xf32, #tpu.memory_space<vmem>>, vector<1x1x128xf32>
      %15 = vector.shape_cast %14 : vector<1x1x128xf32> to vector<1x128xf32>
      %16 = vector.shape_cast %15 : vector<1x128xf32> to vector<1x128xf32>
      %17 = vector.broadcast %16 : vector<1x128xf32> to vector<16x128xf32>
      %c0_17 = arith.constant 0 : index
      %c0_18 = arith.constant 0 : index
      %18 = vector.load %arg8[%c0_17, %c0_18] : memref<16x128xf32, #tpu.memory_space<vmem>>, vector<16x128xf32>
      tpu.vector_store %arg8[%c0_17, %c0_18], %17 {strides = array<i32>} : memref<16x128xf32, #tpu.memory_space<vmem>>, vector<16x128xf32>,
    } else {
    }
    %c0 = arith.constant 0 : index
    %c0_1 = arith.constant 0 : index
    %3 = vector.load %arg8[%c0, %c0_1] : memref<16x128xf32, #tpu.memory_space<vmem>>, vector<16x128xf32>
    %c0_2 = arith.constant 0 : index
    %c0_3 = arith.constant 0 : index
    %c0_4 = arith.constant 0 : index
    %4 = vector.load %arg4[%c0_2, %c0_3, %c0_4] : memref<1x16x512xbf16, #tpu.memory_space<vmem>>, vector<1x16x512xbf16>
    %5 = vector.shape_cast %4 : vector<1x16x512xbf16> to vector<16x512xbf16>
    %c0_5 = arith.constant 0 : index
    %c0_6 = arith.constant 0 : index
    %c0_7 = arith.constant 0 : index
    %c0_8 = arith.constant 0 : index
    %c0_9 = arith.constant 0 : index
    %6 = vector.load %arg5[%c0_5, %c0_6, %c0_7, %c0_8, %c0_9] : memref<1x1x1x512x128xbf16, #tpu.memory_space<vmem>>, vector<1x1x1x512x128xbf16>
    %7 = vector.shape_cast %6 : vector<1x1x1x512x128xbf16> to vector<512x128xbf16>
    %cst = arith.constant dense<0.000000e+00> : vector<16x128xf32>
    %8 = tpu.matmul %5, %7, %cst {dimension_numbers = #tpu.dot_dimension_numbers<[1], [0], [0], [1], [0, 0, 1, 1], [], []>} : vector<16x512xbf16>, vector<512x128xbf16>, vector<16x128xf32> -> vector<16x128xf32>
    %9 = arith.addf %3, %8 : vector<16x128xf32>
    %c0_10 = arith.constant 0 : index
    %c0_11 = arith.constant 0 : index
    %10 = vector.load %arg8[%c0_10, %c0_11] : memref<16x128xf32, #tpu.memory_space<vmem>>, vector<16x128xf32>
    tpu.vector_store %arg8[%c0_10, %c0_11], %9 {strides = array<i32>} : memref<16x128xf32, #tpu.memory_space<vmem>>, vector<16x128xf32>,
    %c0_i32_12 = arith.constant 0 : i32
    %11 = arith.cmpi eq, %arg3, %c0_i32_12 : i32
    %12 = arith.extui %11 : i1 to i32
    %c0_i32_13 = arith.constant 0 : i32
    %13 = arith.cmpi ne, %12, %c0_i32_13 : i32
    scf.if %13 {
      %c0_14 = arith.constant 0 : index
      %c0_15 = arith.constant 0 : index
      %14 = vector.load %arg8[%c0_14, %c0_15] : memref<16x128xf32, #tpu.memory_space<vmem>>, vector<16x128xf32>
      %15 = arith.truncf %14 : vector<16x128xf32> to vector<16x128xbf16>
      %c0_16 = arith.constant 0 : index
      %c0_17 = arith.constant 0 : index
      %c0_18 = arith.constant 0 : index
      %16 = vector.load %arg7[%c0_16, %c0_17, %c0_18] : memref<1x16x128xbf16, #tpu.memory_space<vmem>>, vector<1x16x128xbf16>
      %17 = vector.shape_cast %16 : vector<1x16x128xbf16> to vector<16x128xbf16>
      %18 = vector.shape_cast %15 : vector<16x128xbf16> to vector<1x16x128xbf16>
      tpu.vector_store %arg7[%c0_16, %c0_17, %c0_18], %18 {strides = array<i32>} : memref<1x16x128xbf16, #tpu.memory_space<vmem>>, vector<1x16x128xbf16>,
    } else {
    }
    return
  }
  func.func @transform_0(%arg0: i32, %arg1: i32, %arg2: i32, %arg3: i32) -> (i32, i32, i32) {
    %c0_i32 = arith.constant 0 : i32
    return %arg0, %arg1, %arg3 : i32, i32, i32
  }
  func.func @transform_1(%arg0: i32, %arg1: i32, %arg2: i32, %arg3: i32) -> (i32, i32, i32, i32, i32) {
    %c0_i32 = arith.constant 0 : i32
    %c0_i32_0 = arith.constant 0 : i32
    %c0_i32_1 = arith.constant 0 : i32
    return %arg0, %arg3, %arg2, %c0_i32, %c0_i32_0 : i32, i32, i32, i32, i32
  }
  func.func @transform_2(%arg0: i32, %arg1: i32, %arg2: i32, %arg3: i32) -> (i32, i32, i32) {
    %c0_i32 = arith.constant 0 : i32
    %c0_i32_0 = arith.constant 0 : i32
    return %arg0, %c0_i32, %arg2 : i32, i32, i32
  }
  func.func @transform_3(%arg0: i32, %arg1: i32, %arg2: i32, %arg3: i32) -> (i32, i32, i32) {
    %c0_i32 = arith.constant 0 : i32
    return %arg0, %arg1, %arg2 : i32, i32, i32
  }
}

module attributes {stable_mosaic.version = 11 : i64} {
  func.func @_linear_kernel(%arg0: i32, %arg1: i32, %arg2: i32, %arg3: i32, %arg4: memref<1x16x256xbf16, #tpu.memory_space<vmem>>, %arg5: memref<1x1x1x256x128xbf16, #tpu.memory_space<vmem>>, %arg6: memref<1x1x128xf32, #tpu.memory_space<vmem>>, %arg7: memref<1x16x128xbf16, #tpu.memory_space<vmem>>, %arg8: memref<16x128xf32, #tpu.memory_space<vmem>>) attributes {dimension_semantics = [#tpu.dimension_semantics<parallel>, #tpu.dimension_semantics<parallel>, #tpu.dimension_semantics<parallel>, #tpu.dimension_semantics<arbitrary>], iteration_bounds = array<i64: 3, 1, 1, 1>, scalar_prefetch = 0 : i64, scratch_operands = 1 : i64, tpu.core_type = #tpu.core_type<tc>, window_params = [{transform_indices = @transform_0, window_bounds = array<i64: 1, 16, 256>}, {transform_indices = @transform_1, window_bounds = array<i64: 1, 1, 1, 256, 128>}, {transform_indices = @transform_2, window_bounds = array<i64: 1, 1, 128>}, {transform_indices = @transform_3, window_bounds = array<i64: 1, 16, 128>}]} {
    %c0_i32 = arith.constant 0 : i32
    %0 = arith.cmpi eq, %arg3, %c0_i32 : i32
    %1 = arith.extui %0 : i1 to i32
    %c0_i32_0 = arith.constant 0 : i32
    %2 = arith.cmpi ne, %1, %c0_i32_0 : i32
    scf.if %2 {
      %c0_14 = arith.constant 0 : index
      %c0_15 = arith.constant 0 : index
      %c0_16 = arith.constant 0 : index
      %14 = vector.load %arg6[%c0_14, %c0_15, %c0_16] : memref<1x1x128xf32, #tpu.memory_space<vmem>>, vector<1x1x128xf32>
      %15 = vector.shape_cast %14 : vector<1x1x128xf32> to vector<1x128xf32>
      %16 = vector.shape_cast %15 : vector<1x128xf32> to vector<1x128xf32>
      %17 = vector.broadcast %16 : vector<1x128xf32> to vector<16x128xf32>
      %c0_17 = arith.constant 0 : index
      %c0_18 = arith.constant 0 : index
      %18 = vector.load %arg8[%c0_17, %c0_18] : memref<16x128xf32, #tpu.memory_space<vmem>>, vector<16x128xf32>
      tpu.vector_store %arg8[%c0_17, %c0_18], %17 {strides = array<i32>} : memref<16x128xf32, #tpu.memory_space<vmem>>, vector<16x128xf32>,
    } else {
    }
    %c0 = arith.constant 0 : index
    %c0_1 = arith.constant 0 : index
    %3 = vector.load %arg8[%c0, %c0_1] : memref<16x128xf32, #tpu.memory_space<vmem>>, vector<16x128xf32>
    %c0_2 = arith.constant 0 : index
    %c0_3 = arith.constant 0 : index
    %c0_4 = arith.constant 0 : index
    %4 = vector.load %arg4[%c0_2, %c0_3, %c0_4] : memref<1x16x256xbf16, #tpu.memory_space<vmem>>, vector<1x16x256xbf16>
    %5 = vector.shape_cast %4 : vector<1x16x256xbf16> to vector<16x256xbf16>
    %c0_5 = arith.constant 0 : index
    %c0_6 = arith.constant 0 : index
    %c0_7 = arith.constant 0 : index
    %c0_8 = arith.constant 0 : index
    %c0_9 = arith.constant 0 : index
    %6 = vector.load %arg5[%c0_5, %c0_6, %c0_7, %c0_8, %c0_9] : memref<1x1x1x256x128xbf16, #tpu.memory_space<vmem>>, vector<1x1x1x256x128xbf16>
    %7 = vector.shape_cast %6 : vector<1x1x1x256x128xbf16> to vector<256x128xbf16>
    %cst = arith.constant dense<0.000000e+00> : vector<16x128xf32>
    %8 = tpu.matmul %5, %7, %cst {dimension_numbers = #tpu.dot_dimension_numbers<[1], [0], [0], [1], [0, 0, 1, 1], [], []>} : vector<16x256xbf16>, vector<256x128xbf16>, vector<16x128xf32> -> vector<16x128xf32>
    %9 = arith.addf %3, %8 : vector<16x128xf32>
    %c0_10 = arith.constant 0 : index
    %c0_11 = arith.constant 0 : index
    %10 = vector.load %arg8[%c0_10, %c0_11] : memref<16x128xf32, #tpu.memory_space<vmem>>, vector<16x128xf32>
    tpu.vector_store %arg8[%c0_10, %c0_11], %9 {strides = array<i32>} : memref<16x128xf32, #tpu.memory_space<vmem>>, vector<16x128xf32>,
    %c0_i32_12 = arith.constant 0 : i32
    %11 = arith.cmpi eq, %arg3, %c0_i32_12 : i32
    %12 = arith.extui %11 : i1 to i32
    %c0_i32_13 = arith.constant 0 : i32
    %13 = arith.cmpi ne, %12, %c0_i32_13 : i32
    scf.if %13 {
      %c0_14 = arith.constant 0 : index
      %c0_15 = arith.constant 0 : index
      %14 = vector.load %arg8[%c0_14, %c0_15] : memref<16x128xf32, #tpu.memory_space<vmem>>, vector<16x128xf32>
      %15 = arith.truncf %14 : vector<16x128xf32> to vector<16x128xbf16>
      %c0_16 = arith.constant 0 : index
      %c0_17 = arith.constant 0 : index
      %c0_18 = arith.constant 0 : index
      %16 = vector.load %arg7[%c0_16, %c0_17, %c0_18] : memref<1x16x128xbf16, #tpu.memory_space<vmem>>, vector<1x16x128xbf16>
      %17 = vector.shape_cast %16 : vector<1x16x128xbf16> to vector<16x128xbf16>
      %18 = vector.shape_cast %15 : vector<16x128xbf16> to vector<1x16x128xbf16>
      tpu.vector_store %arg7[%c0_16, %c0_17, %c0_18], %18 {strides = array<i32>} : memref<1x16x128xbf16, #tpu.memory_space<vmem>>, vector<1x16x128xbf16>,
    } else {
    }
    return
  }
  func.func @transform_0(%arg0: i32, %arg1: i32, %arg2: i32, %arg3: i32) -> (i32, i32, i32) {
    %c0_i32 = arith.constant 0 : i32
    return %arg0, %arg1, %arg3 : i32, i32, i32
  }
  func.func @transform_1(%arg0: i32, %arg1: i32, %arg2: i32, %arg3: i32) -> (i32, i32, i32, i32, i32) {
    %c0_i32 = arith.constant 0 : i32
    %c0_i32_0 = arith.constant 0 : i32
    %c0_i32_1 = arith.constant 0 : i32
    return %arg0, %arg3, %arg2, %c0_i32, %c0_i32_0 : i32, i32, i32, i32, i32
  }
  func.func @transform_2(%arg0: i32, %arg1: i32, %arg2: i32, %arg3: i32) -> (i32, i32, i32) {
    %c0_i32 = arith.constant 0 : i32
    %c0_i32_0 = arith.constant 0 : i32
    return %arg0, %c0_i32, %arg2 : i32, i32, i32
  }
  func.func @transform_3(%arg0: i32, %arg1: i32, %arg2: i32, %arg3: i32) -> (i32, i32, i32) {
    %c0_i32 = arith.constant 0 : i32
    return %arg0, %arg1, %arg2 : i32, i32, i32
  }
}

module attributes {stable_mosaic.version = 11 : i64} {
  func.func @_linear_kernel(%arg0: i32, %arg1: i32, %arg2: i32, %arg3: i32, %arg4: memref<1x16x128xbf16, #tpu.memory_space<vmem>>, %arg5: memref<1x1x1x128x128xbf16, #tpu.memory_space<vmem>>, %arg6: memref<1x1x128xf32, #tpu.memory_space<vmem>>, %arg7: memref<1x16x128xbf16, #tpu.memory_space<vmem>>, %arg8: memref<16x128xf32, #tpu.memory_space<vmem>>) attributes {dimension_semantics = [#tpu.dimension_semantics<parallel>, #tpu.dimension_semantics<parallel>, #tpu.dimension_semantics<parallel>, #tpu.dimension_semantics<arbitrary>], iteration_bounds = array<i64: 3, 1, 2, 1>, scalar_prefetch = 0 : i64, scratch_operands = 1 : i64, tpu.core_type = #tpu.core_type<tc>, window_params = [{transform_indices = @transform_0, window_bounds = array<i64: 1, 16, 128>}, {transform_indices = @transform_1, window_bounds = array<i64: 1, 1, 1, 128, 128>}, {transform_indices = @transform_2, window_bounds = array<i64: 1, 1, 128>}, {transform_indices = @transform_3, window_bounds = array<i64: 1, 16, 128>}]} {
    %c0_i32 = arith.constant 0 : i32
    %0 = arith.cmpi eq, %arg3, %c0_i32 : i32
    %1 = arith.extui %0 : i1 to i32
    %c0_i32_0 = arith.constant 0 : i32
    %2 = arith.cmpi ne, %1, %c0_i32_0 : i32
    scf.if %2 {
      %c0_14 = arith.constant 0 : index
      %c0_15 = arith.constant 0 : index
      %c0_16 = arith.constant 0 : index
      %14 = vector.load %arg6[%c0_14, %c0_15, %c0_16] : memref<1x1x128xf32, #tpu.memory_space<vmem>>, vector<1x1x128xf32>
      %15 = vector.shape_cast %14 : vector<1x1x128xf32> to vector<1x128xf32>
      %16 = vector.shape_cast %15 : vector<1x128xf32> to vector<1x128xf32>
      %17 = vector.broadcast %16 : vector<1x128xf32> to vector<16x128xf32>
      %c0_17 = arith.constant 0 : index
      %c0_18 = arith.constant 0 : index
      %18 = vector.load %arg8[%c0_17, %c0_18] : memref<16x128xf32, #tpu.memory_space<vmem>>, vector<16x128xf32>
      tpu.vector_store %arg8[%c0_17, %c0_18], %17 {strides = array<i32>} : memref<16x128xf32, #tpu.memory_space<vmem>>, vector<16x128xf32>,
    } else {
    }
    %c0 = arith.constant 0 : index
    %c0_1 = arith.constant 0 : index
    %3 = vector.load %arg8[%c0, %c0_1] : memref<16x128xf32, #tpu.memory_space<vmem>>, vector<16x128xf32>
    %c0_2 = arith.constant 0 : index
    %c0_3 = arith.constant 0 : index
    %c0_4 = arith.constant 0 : index
    %4 = vector.load %arg4[%c0_2, %c0_3, %c0_4] : memref<1x16x128xbf16, #tpu.memory_space<vmem>>, vector<1x16x128xbf16>
    %5 = vector.shape_cast %4 : vector<1x16x128xbf16> to vector<16x128xbf16>
    %c0_5 = arith.constant 0 : index
    %c0_6 = arith.constant 0 : index
    %c0_7 = arith.constant 0 : index
    %c0_8 = arith.constant 0 : index
    %c0_9 = arith.constant 0 : index
    %6 = vector.load %arg5[%c0_5, %c0_6, %c0_7, %c0_8, %c0_9] : memref<1x1x1x128x128xbf16, #tpu.memory_space<vmem>>, vector<1x1x1x128x128xbf16>
    %7 = vector.shape_cast %6 : vector<1x1x1x128x128xbf16> to vector<128x128xbf16>
    %cst = arith.constant dense<0.000000e+00> : vector<16x128xf32>
    %8 = tpu.matmul %5, %7, %cst {dimension_numbers = #tpu.dot_dimension_numbers<[1], [0], [0], [1], [0, 0, 1, 1], [], []>} : vector<16x128xbf16>, vector<128x128xbf16>, vector<16x128xf32> -> vector<16x128xf32>
    %9 = arith.addf %3, %8 : vector<16x128xf32>
    %c0_10 = arith.constant 0 : index
    %c0_11 = arith.constant 0 : index
    %10 = vector.load %arg8[%c0_10, %c0_11] : memref<16x128xf32, #tpu.memory_space<vmem>>, vector<16x128xf32>
    tpu.vector_store %arg8[%c0_10, %c0_11], %9 {strides = array<i32>} : memref<16x128xf32, #tpu.memory_space<vmem>>, vector<16x128xf32>,
    %c0_i32_12 = arith.constant 0 : i32
    %11 = arith.cmpi eq, %arg3, %c0_i32_12 : i32
    %12 = arith.extui %11 : i1 to i32
    %c0_i32_13 = arith.constant 0 : i32
    %13 = arith.cmpi ne, %12, %c0_i32_13 : i32
    scf.if %13 {
      %c0_14 = arith.constant 0 : index
      %c0_15 = arith.constant 0 : index
      %14 = vector.load %arg8[%c0_14, %c0_15] : memref<16x128xf32, #tpu.memory_space<vmem>>, vector<16x128xf32>
      %15 = arith.truncf %14 : vector<16x128xf32> to vector<16x128xbf16>
      %c0_16 = arith.constant 0 : index
      %c0_17 = arith.constant 0 : index
      %c0_18 = arith.constant 0 : index
      %16 = vector.load %arg7[%c0_16, %c0_17, %c0_18] : memref<1x16x128xbf16, #tpu.memory_space<vmem>>, vector<1x16x128xbf16>
      %17 = vector.shape_cast %16 : vector<1x16x128xbf16> to vector<16x128xbf16>
      %18 = vector.shape_cast %15 : vector<16x128xbf16> to vector<1x16x128xbf16>
      tpu.vector_store %arg7[%c0_16, %c0_17, %c0_18], %18 {strides = array<i32>} : memref<1x16x128xbf16, #tpu.memory_space<vmem>>, vector<1x16x128xbf16>,
    } else {
    }
    return
  }
  func.func @transform_0(%arg0: i32, %arg1: i32, %arg2: i32, %arg3: i32) -> (i32, i32, i32) {
    %c0_i32 = arith.constant 0 : i32
    return %arg0, %arg1, %arg3 : i32, i32, i32
  }
  func.func @transform_1(%arg0: i32, %arg1: i32, %arg2: i32, %arg3: i32) -> (i32, i32, i32, i32, i32) {
    %c0_i32 = arith.constant 0 : i32
    %c0_i32_0 = arith.constant 0 : i32
    %c0_i32_1 = arith.constant 0 : i32
    return %arg0, %arg3, %arg2, %c0_i32, %c0_i32_0 : i32, i32, i32, i32, i32
  }
  func.func @transform_2(%arg0: i32, %arg1: i32, %arg2: i32, %arg3: i32) -> (i32, i32, i32) {
    %c0_i32 = arith.constant 0 : i32
    %c0_i32_0 = arith.constant 0 : i32
    return %arg0, %c0_i32, %arg2 : i32, i32, i32
  }
  func.func @transform_3(%arg0: i32, %arg1: i32, %arg2: i32, %arg3: i32) -> (i32, i32, i32) {
    %c0_i32 = arith.constant 0 : i32
    return %arg0, %arg1, %arg2 : i32, i32, i32
  }
}

module attributes {stable_mosaic.version = 11 : i64} {
  func.func @_linear_kernel(%arg0: i32, %arg1: i32, %arg2: i32, %arg3: i32, %arg4: memref<1x16x256xbf16, #tpu.memory_space<vmem>>, %arg5: memref<1x1x1x256x256xbf16, #tpu.memory_space<vmem>>, %arg6: memref<1x1x256xf32, #tpu.memory_space<vmem>>, %arg7: memref<1x16x256xbf16, #tpu.memory_space<vmem>>, %arg8: memref<16x256xf32, #tpu.memory_space<vmem>>) attributes {dimension_semantics = [#tpu.dimension_semantics<parallel>, #tpu.dimension_semantics<parallel>, #tpu.dimension_semantics<parallel>, #tpu.dimension_semantics<arbitrary>], iteration_bounds = array<i64: 3, 1, 2, 1>, scalar_prefetch = 0 : i64, scratch_operands = 1 : i64, tpu.core_type = #tpu.core_type<tc>, window_params = [{transform_indices = @transform_0, window_bounds = array<i64: 1, 16, 256>}, {transform_indices = @transform_1, window_bounds = array<i64: 1, 1, 1, 256, 256>}, {transform_indices = @transform_2, window_bounds = array<i64: 1, 1, 256>}, {transform_indices = @transform_3, window_bounds = array<i64: 1, 16, 256>}]} {
    %c0_i32 = arith.constant 0 : i32
    %0 = arith.cmpi eq, %arg3, %c0_i32 : i32
    %1 = arith.extui %0 : i1 to i32
    %c0_i32_0 = arith.constant 0 : i32
    %2 = arith.cmpi ne, %1, %c0_i32_0 : i32
    scf.if %2 {
      %c0_14 = arith.constant 0 : index
      %c0_15 = arith.constant 0 : index
      %c0_16 = arith.constant 0 : index
      %14 = vector.load %arg6[%c0_14, %c0_15, %c0_16] : memref<1x1x256xf32, #tpu.memory_space<vmem>>, vector<1x1x256xf32>
      %15 = vector.shape_cast %14 : vector<1x1x256xf32> to vector<1x256xf32>
      %16 = vector.shape_cast %15 : vector<1x256xf32> to vector<1x256xf32>
      %17 = vector.broadcast %16 : vector<1x256xf32> to vector<16x256xf32>
      %c0_17 = arith.constant 0 : index
      %c0_18 = arith.constant 0 : index
      %18 = vector.load %arg8[%c0_17, %c0_18] : memref<16x256xf32, #tpu.memory_space<vmem>>, vector<16x256xf32>
      tpu.vector_store %arg8[%c0_17, %c0_18], %17 {strides = array<i32>} : memref<16x256xf32, #tpu.memory_space<vmem>>, vector<16x256xf32>,
    } else {
    }
    %c0 = arith.constant 0 : index
    %c0_1 = arith.constant 0 : index
    %3 = vector.load %arg8[%c0, %c0_1] : memref<16x256xf32, #tpu.memory_space<vmem>>, vector<16x256xf32>
    %c0_2 = arith.constant 0 : index
    %c0_3 = arith.constant 0 : index
    %c0_4 = arith.constant 0 : index
    %4 = vector.load %arg4[%c0_2, %c0_3, %c0_4] : memref<1x16x256xbf16, #tpu.memory_space<vmem>>, vector<1x16x256xbf16>
    %5 = vector.shape_cast %4 : vector<1x16x256xbf16> to vector<16x256xbf16>
    %c0_5 = arith.constant 0 : index
    %c0_6 = arith.constant 0 : index
    %c0_7 = arith.constant 0 : index
    %c0_8 = arith.constant 0 : index
    %c0_9 = arith.constant 0 : index
    %6 = vector.load %arg5[%c0_5, %c0_6, %c0_7, %c0_8, %c0_9] : memref<1x1x1x256x256xbf16, #tpu.memory_space<vmem>>, vector<1x1x1x256x256xbf16>
    %7 = vector.shape_cast %6 : vector<1x1x1x256x256xbf16> to vector<256x256xbf16>
    %cst = arith.constant dense<0.000000e+00> : vector<16x256xf32>
    %8 = tpu.matmul %5, %7, %cst {dimension_numbers = #tpu.dot_dimension_numbers<[1], [0], [0], [1], [0, 0, 1, 1], [], []>} : vector<16x256xbf16>, vector<256x256xbf16>, vector<16x256xf32> -> vector<16x256xf32>
    %9 = arith.addf %3, %8 : vector<16x256xf32>
    %c0_10 = arith.constant 0 : index
    %c0_11 = arith.constant 0 : index
    %10 = vector.load %arg8[%c0_10, %c0_11] : memref<16x256xf32, #tpu.memory_space<vmem>>, vector<16x256xf32>
    tpu.vector_store %arg8[%c0_10, %c0_11], %9 {strides = array<i32>} : memref<16x256xf32, #tpu.memory_space<vmem>>, vector<16x256xf32>,
    %c0_i32_12 = arith.constant 0 : i32
    %11 = arith.cmpi eq, %arg3, %c0_i32_12 : i32
    %12 = arith.extui %11 : i1 to i32
    %c0_i32_13 = arith.constant 0 : i32
    %13 = arith.cmpi ne, %12, %c0_i32_13 : i32
    scf.if %13 {
      %c0_14 = arith.constant 0 : index
      %c0_15 = arith.constant 0 : index
      %14 = vector.load %arg8[%c0_14, %c0_15] : memref<16x256xf32, #tpu.memory_space<vmem>>, vector<16x256xf32>
      %15 = arith.truncf %14 : vector<16x256xf32> to vector<16x256xbf16>
      %c0_16 = arith.constant 0 : index
      %c0_17 = arith.constant 0 : index
      %c0_18 = arith.constant 0 : index
      %16 = vector.load %arg7[%c0_16, %c0_17, %c0_18] : memref<1x16x256xbf16, #tpu.memory_space<vmem>>, vector<1x16x256xbf16>
      %17 = vector.shape_cast %16 : vector<1x16x256xbf16> to vector<16x256xbf16>
      %18 = vector.shape_cast %15 : vector<16x256xbf16> to vector<1x16x256xbf16>
      tpu.vector_store %arg7[%c0_16, %c0_17, %c0_18], %18 {strides = array<i32>} : memref<1x16x256xbf16, #tpu.memory_space<vmem>>, vector<1x16x256xbf16>,
    } else {
    }
    return
  }
  func.func @transform_0(%arg0: i32, %arg1: i32, %arg2: i32, %arg3: i32) -> (i32, i32, i32) {
    %c0_i32 = arith.constant 0 : i32
    return %arg0, %arg1, %arg3 : i32, i32, i32
  }
  func.func @transform_1(%arg0: i32, %arg1: i32, %arg2: i32, %arg3: i32) -> (i32, i32, i32, i32, i32) {
    %c0_i32 = arith.constant 0 : i32
    %c0_i32_0 = arith.constant 0 : i32
    %c0_i32_1 = arith.constant 0 : i32
    return %arg0, %arg3, %arg2, %c0_i32, %c0_i32_0 : i32, i32, i32, i32, i32
  }
  func.func @transform_2(%arg0: i32, %arg1: i32, %arg2: i32, %arg3: i32) -> (i32, i32, i32) {
    %c0_i32 = arith.constant 0 : i32
    %c0_i32_0 = arith.constant 0 : i32
    return %arg0, %c0_i32, %arg2 : i32, i32, i32
  }
  func.func @transform_3(%arg0: i32, %arg1: i32, %arg2: i32, %arg3: i32) -> (i32, i32, i32) {
    %c0_i32 = arith.constant 0 : i32
    return %arg0, %arg1, %arg2 : i32, i32, i32
  }
}

module attributes {stable_mosaic.version = 11 : i64} {
  func.func @_linear_kernel(%arg0: i32, %arg1: i32, %arg2: i32, %arg3: i32, %arg4: memref<1x16x512xbf16, #tpu.memory_space<vmem>>, %arg5: memref<1x1x1x512x128xbf16, #tpu.memory_space<vmem>>, %arg6: memref<1x1x128xf32, #tpu.memory_space<vmem>>, %arg7: memref<1x16x128xf32, #tpu.memory_space<vmem>>, %arg8: memref<16x128xf32, #tpu.memory_space<vmem>>) attributes {dimension_semantics = [#tpu.dimension_semantics<parallel>, #tpu.dimension_semantics<parallel>, #tpu.dimension_semantics<parallel>, #tpu.dimension_semantics<arbitrary>], iteration_bounds = array<i64: 1, 1, 2, 1>, scalar_prefetch = 0 : i64, scratch_operands = 1 : i64, tpu.core_type = #tpu.core_type<tc>, window_params = [{transform_indices = @transform_0, window_bounds = array<i64: 1, 16, 512>}, {transform_indices = @transform_1, window_bounds = array<i64: 1, 1, 1, 512, 128>}, {transform_indices = @transform_2, window_bounds = array<i64: 1, 1, 128>}, {transform_indices = @transform_3, window_bounds = array<i64: 1, 16, 128>}]} {
    %c0_i32 = arith.constant 0 : i32
    %0 = arith.cmpi eq, %arg3, %c0_i32 : i32
    %1 = arith.extui %0 : i1 to i32
    %c0_i32_0 = arith.constant 0 : i32
    %2 = arith.cmpi ne, %1, %c0_i32_0 : i32
    scf.if %2 {
      %c0_14 = arith.constant 0 : index
      %c0_15 = arith.constant 0 : index
      %c0_16 = arith.constant 0 : index
      %14 = vector.load %arg6[%c0_14, %c0_15, %c0_16] : memref<1x1x128xf32, #tpu.memory_space<vmem>>, vector<1x1x128xf32>
      %15 = vector.shape_cast %14 : vector<1x1x128xf32> to vector<1x128xf32>
      %16 = vector.shape_cast %15 : vector<1x128xf32> to vector<1x128xf32>
      %17 = vector.broadcast %16 : vector<1x128xf32> to vector<16x128xf32>
      %c0_17 = arith.constant 0 : index
      %c0_18 = arith.constant 0 : index
      %18 = vector.load %arg8[%c0_17, %c0_18] : memref<16x128xf32, #tpu.memory_space<vmem>>, vector<16x128xf32>
      tpu.vector_store %arg8[%c0_17, %c0_18], %17 {strides = array<i32>} : memref<16x128xf32, #tpu.memory_space<vmem>>, vector<16x128xf32>,
    } else {
    }
    %c0 = arith.constant 0 : index
    %c0_1 = arith.constant 0 : index
    %3 = vector.load %arg8[%c0, %c0_1] : memref<16x128xf32, #tpu.memory_space<vmem>>, vector<16x128xf32>
    %c0_2 = arith.constant 0 : index
    %c0_3 = arith.constant 0 : index
    %c0_4 = arith.constant 0 : index
    %4 = vector.load %arg4[%c0_2, %c0_3, %c0_4] : memref<1x16x512xbf16, #tpu.memory_space<vmem>>, vector<1x16x512xbf16>
    %5 = vector.shape_cast %4 : vector<1x16x512xbf16> to vector<16x512xbf16>
    %c0_5 = arith.constant 0 : index
    %c0_6 = arith.constant 0 : index
    %c0_7 = arith.constant 0 : index
    %c0_8 = arith.constant 0 : index
    %c0_9 = arith.constant 0 : index
    %6 = vector.load %arg5[%c0_5, %c0_6, %c0_7, %c0_8, %c0_9] : memref<1x1x1x512x128xbf16, #tpu.memory_space<vmem>>, vector<1x1x1x512x128xbf16>
    %7 = vector.shape_cast %6 : vector<1x1x1x512x128xbf16> to vector<512x128xbf16>
    %cst = arith.constant dense<0.000000e+00> : vector<16x128xf32>
    %8 = tpu.matmul %5, %7, %cst {dimension_numbers = #tpu.dot_dimension_numbers<[1], [0], [0], [1], [0, 0, 1, 1], [], []>} : vector<16x512xbf16>, vector<512x128xbf16>, vector<16x128xf32> -> vector<16x128xf32>
    %9 = arith.addf %3, %8 : vector<16x128xf32>
    %c0_10 = arith.constant 0 : index
    %c0_11 = arith.constant 0 : index
    %10 = vector.load %arg8[%c0_10, %c0_11] : memref<16x128xf32, #tpu.memory_space<vmem>>, vector<16x128xf32>
    tpu.vector_store %arg8[%c0_10, %c0_11], %9 {strides = array<i32>} : memref<16x128xf32, #tpu.memory_space<vmem>>, vector<16x128xf32>,
    %c0_i32_12 = arith.constant 0 : i32
    %11 = arith.cmpi eq, %arg3, %c0_i32_12 : i32
    %12 = arith.extui %11 : i1 to i32
    %c0_i32_13 = arith.constant 0 : i32
    %13 = arith.cmpi ne, %12, %c0_i32_13 : i32
    scf.if %13 {
      %c0_14 = arith.constant 0 : index
      %c0_15 = arith.constant 0 : index
      %14 = vector.load %arg8[%c0_14, %c0_15] : memref<16x128xf32, #tpu.memory_space<vmem>>, vector<16x128xf32>
      %c0_16 = arith.constant 0 : index
      %c0_17 = arith.constant 0 : index
      %c0_18 = arith.constant 0 : index
      %15 = vector.load %arg7[%c0_16, %c0_17, %c0_18] : memref<1x16x128xf32, #tpu.memory_space<vmem>>, vector<1x16x128xf32>
      %16 = vector.shape_cast %15 : vector<1x16x128xf32> to vector<16x128xf32>
      %17 = vector.shape_cast %14 : vector<16x128xf32> to vector<1x16x128xf32>
      tpu.vector_store %arg7[%c0_16, %c0_17, %c0_18], %17 {strides = array<i32>} : memref<1x16x128xf32, #tpu.memory_space<vmem>>, vector<1x16x128xf32>,
    } else {
    }
    return
  }
  func.func @transform_0(%arg0: i32, %arg1: i32, %arg2: i32, %arg3: i32) -> (i32, i32, i32) {
    %c0_i32 = arith.constant 0 : i32
    return %arg0, %arg1, %arg3 : i32, i32, i32
  }
  func.func @transform_1(%arg0: i32, %arg1: i32, %arg2: i32, %arg3: i32) -> (i32, i32, i32, i32, i32) {
    %c0_i32 = arith.constant 0 : i32
    %c0_i32_0 = arith.constant 0 : i32
    %c0_i32_1 = arith.constant 0 : i32
    return %arg0, %arg3, %arg2, %c0_i32, %c0_i32_0 : i32, i32, i32, i32, i32
  }
  func.func @transform_2(%arg0: i32, %arg1: i32, %arg2: i32, %arg3: i32) -> (i32, i32, i32) {
    %c0_i32 = arith.constant 0 : i32
    %c0_i32_0 = arith.constant 0 : i32
    return %arg0, %c0_i32, %arg2 : i32, i32, i32
  }
  func.func @transform_3(%arg0: i32, %arg1: i32, %arg2: i32, %arg3: i32) -> (i32, i32, i32) {
    %c0_i32 = arith.constant 0 : i32
    return %arg0, %arg1, %arg2 : i32, i32, i32
  }
}

module attributes {stable_mosaic.version = 11 : i64} {
  func.func @_linear_kernel(%arg0: i32, %arg1: i32, %arg2: i32, %arg3: i32, %arg4: memref<1x16x512xbf16, #tpu.memory_space<vmem>>, %arg5: memref<1x1x1x512x256xbf16, #tpu.memory_space<vmem>>, %arg6: memref<1x1x256xf32, #tpu.memory_space<vmem>>, %arg7: memref<1x16x256xf32, #tpu.memory_space<vmem>>, %arg8: memref<16x256xf32, #tpu.memory_space<vmem>>) attributes {dimension_semantics = [#tpu.dimension_semantics<parallel>, #tpu.dimension_semantics<parallel>, #tpu.dimension_semantics<parallel>, #tpu.dimension_semantics<arbitrary>], iteration_bounds = array<i64: 1, 1, 2, 1>, scalar_prefetch = 0 : i64, scratch_operands = 1 : i64, tpu.core_type = #tpu.core_type<tc>, window_params = [{transform_indices = @transform_0, window_bounds = array<i64: 1, 16, 512>}, {transform_indices = @transform_1, window_bounds = array<i64: 1, 1, 1, 512, 256>}, {transform_indices = @transform_2, window_bounds = array<i64: 1, 1, 256>}, {transform_indices = @transform_3, window_bounds = array<i64: 1, 16, 256>}]} {
    %c0_i32 = arith.constant 0 : i32
    %0 = arith.cmpi eq, %arg3, %c0_i32 : i32
    %1 = arith.extui %0 : i1 to i32
    %c0_i32_0 = arith.constant 0 : i32
    %2 = arith.cmpi ne, %1, %c0_i32_0 : i32
    scf.if %2 {
      %c0_14 = arith.constant 0 : index
      %c0_15 = arith.constant 0 : index
      %c0_16 = arith.constant 0 : index
      %14 = vector.load %arg6[%c0_14, %c0_15, %c0_16] : memref<1x1x256xf32, #tpu.memory_space<vmem>>, vector<1x1x256xf32>
      %15 = vector.shape_cast %14 : vector<1x1x256xf32> to vector<1x256xf32>
      %16 = vector.shape_cast %15 : vector<1x256xf32> to vector<1x256xf32>
      %17 = vector.broadcast %16 : vector<1x256xf32> to vector<16x256xf32>
      %c0_17 = arith.constant 0 : index
      %c0_18 = arith.constant 0 : index
      %18 = vector.load %arg8[%c0_17, %c0_18] : memref<16x256xf32, #tpu.memory_space<vmem>>, vector<16x256xf32>
      tpu.vector_store %arg8[%c0_17, %c0_18], %17 {strides = array<i32>} : memref<16x256xf32, #tpu.memory_space<vmem>>, vector<16x256xf32>,
    } else {
    }
    %c0 = arith.constant 0 : index
    %c0_1 = arith.constant 0 : index
    %3 = vector.load %arg8[%c0, %c0_1] : memref<16x256xf32, #tpu.memory_space<vmem>>, vector<16x256xf32>
    %c0_2 = arith.constant 0 : index
    %c0_3 = arith.constant 0 : index
    %c0_4 = arith.constant 0 : index
    %4 = vector.load %arg4[%c0_2, %c0_3, %c0_4] : memref<1x16x512xbf16, #tpu.memory_space<vmem>>, vector<1x16x512xbf16>
    %5 = vector.shape_cast %4 : vector<1x16x512xbf16> to vector<16x512xbf16>
    %c0_5 = arith.constant 0 : index
    %c0_6 = arith.constant 0 : index
    %c0_7 = arith.constant 0 : index
    %c0_8 = arith.constant 0 : index
    %c0_9 = arith.constant 0 : index
    %6 = vector.load %arg5[%c0_5, %c0_6, %c0_7, %c0_8, %c0_9] : memref<1x1x1x512x256xbf16, #tpu.memory_space<vmem>>, vector<1x1x1x512x256xbf16>
    %7 = vector.shape_cast %6 : vector<1x1x1x512x256xbf16> to vector<512x256xbf16>
    %cst = arith.constant dense<0.000000e+00> : vector<16x256xf32>
    %8 = tpu.matmul %5, %7, %cst {dimension_numbers = #tpu.dot_dimension_numbers<[1], [0], [0], [1], [0, 0, 1, 1], [], []>} : vector<16x512xbf16>, vector<512x256xbf16>, vector<16x256xf32> -> vector<16x256xf32>
    %9 = arith.addf %3, %8 : vector<16x256xf32>
    %c0_10 = arith.constant 0 : index
    %c0_11 = arith.constant 0 : index
    %10 = vector.load %arg8[%c0_10, %c0_11] : memref<16x256xf32, #tpu.memory_space<vmem>>, vector<16x256xf32>
    tpu.vector_store %arg8[%c0_10, %c0_11], %9 {strides = array<i32>} : memref<16x256xf32, #tpu.memory_space<vmem>>, vector<16x256xf32>,
    %c0_i32_12 = arith.constant 0 : i32
    %11 = arith.cmpi eq, %arg3, %c0_i32_12 : i32
    %12 = arith.extui %11 : i1 to i32
    %c0_i32_13 = arith.constant 0 : i32
    %13 = arith.cmpi ne, %12, %c0_i32_13 : i32
    scf.if %13 {
      %c0_14 = arith.constant 0 : index
      %c0_15 = arith.constant 0 : index
      %14 = vector.load %arg8[%c0_14, %c0_15] : memref<16x256xf32, #tpu.memory_space<vmem>>, vector<16x256xf32>
      %c0_16 = arith.constant 0 : index
      %c0_17 = arith.constant 0 : index
      %c0_18 = arith.constant 0 : index
      %15 = vector.load %arg7[%c0_16, %c0_17, %c0_18] : memref<1x16x256xf32, #tpu.memory_space<vmem>>, vector<1x16x256xf32>
      %16 = vector.shape_cast %15 : vector<1x16x256xf32> to vector<16x256xf32>
      %17 = vector.shape_cast %14 : vector<16x256xf32> to vector<1x16x256xf32>
      tpu.vector_store %arg7[%c0_16, %c0_17, %c0_18], %17 {strides = array<i32>} : memref<1x16x256xf32, #tpu.memory_space<vmem>>, vector<1x16x256xf32>,
    } else {
    }
    return
  }
  func.func @transform_0(%arg0: i32, %arg1: i32, %arg2: i32, %arg3: i32) -> (i32, i32, i32) {
    %c0_i32 = arith.constant 0 : i32
    return %arg0, %arg1, %arg3 : i32, i32, i32
  }
  func.func @transform_1(%arg0: i32, %arg1: i32, %arg2: i32, %arg3: i32) -> (i32, i32, i32, i32, i32) {
    %c0_i32 = arith.constant 0 : i32
    %c0_i32_0 = arith.constant 0 : i32
    %c0_i32_1 = arith.constant 0 : i32
    return %arg0, %arg3, %arg2, %c0_i32, %c0_i32_0 : i32, i32, i32, i32, i32
  }
  func.func @transform_2(%arg0: i32, %arg1: i32, %arg2: i32, %arg3: i32) -> (i32, i32, i32) {
    %c0_i32 = arith.constant 0 : i32
    %c0_i32_0 = arith.constant 0 : i32
    return %arg0, %c0_i32, %arg2 : i32, i32, i32
  }
  func.func @transform_3(%arg0: i32, %arg1: i32, %arg2: i32, %arg3: i32) -> (i32, i32, i32) {
    %c0_i32 = arith.constant 0 : i32
    return %arg0, %arg1, %arg2 : i32, i32, i32
  }
}

</mosaic_0001>

<llo_original>
// kernel: autoencoder_forward.11
$region0: #{autoencoder_forward.11}
  #allocation0 [shape = 'u32[]', space=smem, size = 0x4, offset = 0x4, fixed_abs, tag = 'smem constant byte address 0x4 - core index']
  #allocation1 [shape = 'u32[144,128]{1,0:T(1,128)}', space=vmem, size = 0x12000, scoped, tag = 'internal scratch']
  #allocation2 [shape = 'f32[16,256]{1,0:T(8,128)}', space=vmem, size = 0x4000, scoped, tag = 'scratch operand']
  %s0 = inlined_call_operand.vmem [shape: bf16[1,16,256], index: 0, kind: input, shape index: {}]
  %s1 = inlined_call_operand.vmem [shape: bf16[1,1,2,256,256], index: 1, kind: input, shape index: {}]
  %s2 = inlined_call_operand.vmem [shape: f32[1,1,512], index: 2, kind: input, shape index: {}]
  %s3 = inlined_call_operand.vmem [shape: bf16[1,16,512], index: 3, kind: output, shape index: {}]
  %s4 = sld [smem:[#allocation0]]
  $region87: #{autoencoder_forward.11} parent=0
    _
  %s6 = ssub.s32 1, %s4
  %s7 = scalar_select 0, %s6, %s4
  $region1: #{autoencoder_forward.11} parent=0
    #allocation3 [shape = 'u8[16384]{0}', space=vmem, size = 0x4000, scoped, tag = 'output window, operand 0']
    loop: start=0, step=1, limit=4
    $region2: #{autoencoder_forward.11} parent=1 // loop_pre_header
      _
    $region3: #{autoencoder_forward.11} parent=1 // loop_header
      %s9 = sphi 0, %s13
      %p10 = scmp.ge.s32.totalorder %s9, 4
      %s16 = sphi 0, %s42
      %s17 = sphi 0, %s38
      %s18 = sphi 0, %s34
      %s19 = sphi 0, %s30
      %s20 = sphi 0, %s16
      %s21 = sphi 0, %s17
      %s22 = sphi 0, %s18
      %s23 = sphi 0, %s19
      %s24 = sphi 0, %s20
      %s25 = sphi 0, %s21
      %s26 = sphi 0, %s22
      %s27 = sphi 0, %s23
      %s49 = sphi 0, %s51
      %s52 = sphi 0, %s49
      %s53 = sphi 0, %s52
      %s69 = sphi 0, %s53
      %s79 = sphi 0, %s81
      %s82 = sphi 0, %s79
      %s83 = sphi 0, %s82
      %s99 = sphi 0, %s83
      %s107 = sphi 0, %s109
      %s110 = sphi 0, %s107
      %s111 = sphi 0, %s110
      %s127 = sphi 0, %s111
      %s137 = sphi 0, %s139
      %s140 = sphi 0, %s137
      %s141 = sphi 0, %s140
      %s157 = sphi 0, %s141
    $region4: #{autoencoder_forward.11} parent=1 // loop_header_branch
      %12 = sbr.rel (%p10) target = $region8
    $region5: #{autoencoder_forward.11} parent=1 // loop_body
      %s14 = ssub.s32 %s9, 1
      %s15 = ssub.s32 %s9, 2
      %s28 = sadd.s32 1, %s19
      %p29 = scmp.ge.s32.totalorder %s28, 1
      %s30 = scalar_select %p29, 0, %s28
      %s31 = sadd.s32 1, %s18
      %s32 = scalar_select %p29, %s31, %s18
      %p33 = scmp.ge.s32.totalorder %s32, 2
      %s34 = scalar_select %p33, 0, %s32
      %s35 = sadd.s32 1, %s17
      %s36 = scalar_select %p33, %s35, %s17
      %p37 = scmp.ge.s32.totalorder %s36, 1
      %s38 = scalar_select %p37, 0, %s36
      %s39 = sadd.s32 1, %s16
      %s40 = scalar_select %p37, %s39, %s16
      %p41 = scmp.ge.s32.totalorder %s40, 1
      %s42 = scalar_select %p41, 0, %s40
      %s43 = ssub.s32 %s16, %s42
      %s44 = ssub.s32 %s17, %s38
      %s45 = sor.u32 %s43, %s44
      %s46 = ssub.s32 %s19, %s30
      %s47 = sor.u32 %s45, %s46
      %p48 = scmp.eq.s32.totalorder %s47, 0
      %s50 = sadd.s32 %s49, 1
      %s51 = scalar_select %p48, %s49, %s50
      %p54 = pneg %p48
      %p55 = scmp.eq.s32.totalorder %s9, 1
      %p56 = por %p54, %p55
      %p57 = scmp.ne.s32.totalorder %s49, %s52
      %p58 = scmp.eq.s32.totalorder %s9, 0
      %p59 = por %p57, %p58
      %p60 = scmp.ne.s32.totalorder %s49, %s52
      %p61 = scmp.eq.s32.totalorder %s14, 1
      %p62 = por %p60, %p61
      %p63 = scmp.ne.s32.totalorder %s52, %s53
      %p64 = scmp.eq.s32.totalorder %s14, 0
      %p65 = por %p63, %p64
      %p66 = scmp.ne.s32.totalorder %s52, %s53
      %p67 = scmp.eq.s32.totalorder %s15, 1
      %p68 = por %p66, %p67
      %p70 = scmp.ne.s32.totalorder %s53, %s69
      %p71 = scmp.eq.s32.totalorder %s15, 0
      %p72 = por %p70, %p71
      %s73 = ssub.s32 %s16, %s42
      %s74 = ssub.s32 %s19, %s30
      %s75 = sor.u32 %s73, %s74
      %s76 = ssub.s32 %s18, %s34
      %s77 = sor.u32 %s75, %s76
      %p78 = scmp.eq.s32.totalorder %s77, 0
      %s80 = sadd.s32 %s79, 1
      %s81 = scalar_select %p78, %s79, %s80
      %p84 = pneg %p78
      %p85 = scmp.eq.s32.totalorder %s9, 1
      %p86 = por %p84, %p85
      %p87 = scmp.ne.s32.totalorder %s79, %s82
      %p88 = scmp.eq.s32.totalorder %s9, 0
      %p89 = por %p87, %p88
      %p90 = scmp.ne.s32.totalorder %s79, %s82
      %p91 = scmp.eq.s32.totalorder %s14, 1
      %p92 = por %p90, %p91
      %p93 = scmp.ne.s32.totalorder %s82, %s83
      %p94 = scmp.eq.s32.totalorder %s14, 0
      %p95 = por %p93, %p94
      %p96 = scmp.ne.s32.totalorder %s82, %s83
      %p97 = scmp.eq.s32.totalorder %s15, 1
      %p98 = por %p96, %p97
      %p100 = scmp.ne.s32.totalorder %s83, %s99
      %p101 = scmp.eq.s32.totalorder %s15, 0
      %p102 = por %p100, %p101
      %s103 = ssub.s32 %s16, %s42
      %s104 = ssub.s32 %s18, %s34
      %s105 = sor.u32 %s103, %s104
      %p106 = scmp.eq.s32.totalorder %s105, 0
      %s108 = sadd.s32 %s107, 1
      %s109 = scalar_select %p106, %s107, %s108
      %p112 = pneg %p106
      %p113 = scmp.eq.s32.totalorder %s9, 1
      %p114 = por %p112, %p113
      %p115 = scmp.ne.s32.totalorder %s107, %s110
      %p116 = scmp.eq.s32.totalorder %s9, 0
      %p117 = por %p115, %p116
      %p118 = scmp.ne.s32.totalorder %s107, %s110
      %p119 = scmp.eq.s32.totalorder %s14, 1
      %p120 = por %p118, %p119
      %p121 = scmp.ne.s32.totalorder %s110, %s111
      %p122 = scmp.eq.s32.totalorder %s14, 0
      %p123 = por %p121, %p122
      %p124 = scmp.ne.s32.totalorder %s110, %s111
      %p125 = scmp.eq.s32.totalorder %s15, 1
      %p126 = por %p124, %p125
      %p128 = scmp.ne.s32.totalorder %s111, %s127
      %p129 = scmp.eq.s32.totalorder %s15, 0
      %p130 = por %p128, %p129
      %s131 = ssub.s32 %s16, %s42
      %s132 = ssub.s32 %s17, %s38
      %s133 = sor.u32 %s131, %s132
      %s134 = ssub.s32 %s18, %s34
      %s135 = sor.u32 %s133, %s134
      %p136 = scmp.eq.s32.totalorder %s135, 0
      %s138 = sadd.s32 %s137, 1
      %s139 = scalar_select %p136, %s137, %s138
      %p142 = pneg %p136
      %p143 = scmp.eq.s32.totalorder %s9, 1
      %p144 = por %p142, %p143
      %p145 = scmp.ne.s32.totalorder %s137, %s140
      %p146 = scmp.eq.s32.totalorder %s9, 0
      %p147 = por %p145, %p146
      %p148 = scmp.ne.s32.totalorder %s137, %s140
      %p149 = scmp.eq.s32.totalorder %s14, 1
      %p150 = por %p148, %p149
      %p151 = scmp.ne.s32.totalorder %s140, %s141
      %p152 = scmp.eq.s32.totalorder %s14, 0
      %p153 = por %p151, %p152
      %p154 = scmp.ne.s32.totalorder %s140, %s141
      %p155 = scmp.eq.s32.totalorder %s15, 1
      %p156 = por %p154, %p155
      %p158 = scmp.ne.s32.totalorder %s141, %s157
      %p159 = scmp.eq.s32.totalorder %s15, 0
      %p160 = por %p158, %p159
      %p161 = scmp.le.s32.totalorder 1, %s9
      %p162 = scmp.lt.s32.totalorder %s9, 3
      %p163 = pnand %p161, %p162
      %p164 = pneg %p163
      // Predicated region
      $region9: #{autoencoder_forward.11} parent=5 // pred_check
        _
      $region10: #{autoencoder_forward.11} parent=5 // pred_check_branch
        %166 = sbr.rel (%p163) target = $region12
      $region11: #{autoencoder_forward.11} parent=5 // pred_region
        %s167 = ssub.s32 %s9, 1
        // Predicated region
        $region13: #{autoencoder_forward.11} parent=11 // pred_check
          %p168 = pneg %p65
        $region14: #{autoencoder_forward.11} parent=11 // pred_check_branch
          %170 = sbr.rel (%p168) target = $region16
        $region15: #{autoencoder_forward.11} parent=11 // pred_region
          %s171 = smul.u32 2, %s21
          %s172 = smul.u32 2, %s23
          %p173 = scmp.lt.s32.totalorder %s20, 0
          %s174 = scalar_select %p173, %s20, 0
          %p175 = scmp.lt.s32.totalorder %s171, 1
          %s176 = scalar_select %p175, %s171, 1
          %p177 = scmp.lt.s32.totalorder %s172, 1
          %s178 = scalar_select %p177, %s172, 1
          %s179 = smul.addr %s176, 2
          %s180 = sadd.s32 %s178, %s179
          %s181 = smul.addr %s174, 4
          %s182 = sadd.s32 %s180, %s181
          %s183 = smul.addr %s182, 4
          %s184 = scalar_lea.vmem %s0, %s183
          %s185 = smul.u32 2, %s21
          %s186 = smul.u32 2, %s23
        $region16: #{autoencoder_forward.11} parent=11 // pred_fallthru
          _
      $region12: #{autoencoder_forward.11} parent=5 // pred_fallthru
        _
      %p187 = scmp.lt.s32.totalorder %s9, 2
      // Predicated region
      $region17: #{autoencoder_forward.11} parent=5 // pred_check
        %p188 = pneg %p187
      $region18: #{autoencoder_forward.11} parent=5 // pred_check_branch
        %190 = sbr.rel (%p188) target = $region20
      $region19: #{autoencoder_forward.11} parent=5 // pred_region
        // Predicated region
        $region21: #{autoencoder_forward.11} parent=19 // pred_check
          %p191 = pneg %p89
        $region22: #{autoencoder_forward.11} parent=19 // pred_check_branch
          %193 = sbr.rel (%p191) target = $region24
        $region23: #{autoencoder_forward.11} parent=19 // pred_region
          %p194 = scmp.lt.s32.totalorder %s16, 0
          %s195 = scalar_select %p194, %s16, 0
          %p196 = scmp.lt.s32.totalorder %s19, 0
          %s197 = scalar_select %p196, %s19, 0
          %p198 = scmp.lt.s32.totalorder %s18, 1
          %s199 = scalar_select %p198, %s18, 1
          %s200 = smul.addr %s199, 64
          %s201 = smul.addr %s197, 128
          %s202 = sadd.s32 %s200, %s201
          %s203 = smul.addr %s195, 128
          %s204 = sadd.s32 %s202, %s203
          %s205 = smul.addr %s204, 4
          %s206 = scalar_lea.vmem %s1, %s205
        $region24: #{autoencoder_forward.11} parent=19 // pred_fallthru
          _
        // Predicated region
        $region25: #{autoencoder_forward.11} parent=19 // pred_check
          %p207 = pneg %p117
        $region26: #{autoencoder_forward.11} parent=19 // pred_check_branch
          %209 = sbr.rel (%p207) target = $region28
        $region27: #{autoencoder_forward.11} parent=19 // pred_region
          %s210 = smul.u32 2, %s18
          %p211 = scmp.lt.s32.totalorder %s16, 0
          %s212 = scalar_select %p211, %s16, 0
          %p213 = scmp.lt.s32.totalorder %s210, 3
          %s214 = scalar_select %p213, %s210, 3
          %s215 = smul.addr %s212, 4
          %s216 = sadd.s32 %s214, %s215
          %s217 = scalar_lea.vmem %s2, %s216
          %s218 = smul.u32 2, %s18
        $region28: #{autoencoder_forward.11} parent=19 // pred_fallthru
          _
      $region20: #{autoencoder_forward.11} parent=5 // pred_fallthru
        _
      %p219 = scmp.le.s32.totalorder 1, %s9
      %p220 = scmp.lt.s32.totalorder %s9, 3
      %p221 = pnand %p219, %p220
      %p222 = pneg %p221
      // Predicated region
      $region29: #{autoencoder_forward.11} parent=5 // pred_check
        _
      $region30: #{autoencoder_forward.11} parent=5 // pred_check_branch
        %224 = sbr.rel (%p221) target = $region32
      $region31: #{autoencoder_forward.11} parent=5 // pred_region
        %s225 = ssub.s32 %s9, 1
        %s226 = smul.u32 2, %s21
        %s227 = smul.u32 2, %s23
        %p228 = scmp.lt.s32.totalorder %s20, 0
        %s229 = scalar_select %p228, %s20, 0
        %p230 = scmp.lt.s32.totalorder %s226, 1
        %s231 = scalar_select %p230, %s226, 1
        %p232 = scmp.lt.s32.totalorder %s227, 1
        %s233 = scalar_select %p232, %s227, 1
        %s234 = smul.addr %s231, 2
        %s235 = sadd.s32 %s233, %s234
        %s236 = smul.addr %s229, 4
        %s237 = sadd.s32 %s235, %s236
        %s238 = smul.addr %s237, 4
        %s239 = scalar_lea.vmem %s0, %s238
        %p240 = pneg %p65
        %p241 = pneg %p62
        %p242 = scmp.lt.s32.totalorder %s20, 0
        %s243 = scalar_select %p242, %s20, 0
        %p244 = scmp.lt.s32.totalorder %s23, 0
        %s245 = scalar_select %p244, %s23, 0
        %p246 = scmp.lt.s32.totalorder %s22, 1
        %s247 = scalar_select %p246, %s22, 1
        %s248 = smul.addr %s247, 64
        %s249 = smul.addr %s245, 128
        %s250 = sadd.s32 %s248, %s249
        %s251 = smul.addr %s243, 128
        %s252 = sadd.s32 %s250, %s251
        %s253 = smul.addr %s252, 4
        %s254 = scalar_lea.vmem %s1, %s253
        %p255 = pneg %p95
        %p256 = pneg %p92
        %s257 = smul.u32 2, %s22
        %p258 = scmp.lt.s32.totalorder %s20, 0
        %s259 = scalar_select %p258, %s20, 0
        %p260 = scmp.lt.s32.totalorder %s257, 3
        %s261 = scalar_select %p260, %s257, 3
        %s262 = smul.addr %s259, 4
        %s263 = sadd.s32 %s261, %s262
        %s264 = scalar_lea.vmem %s2, %s263
        %p265 = pneg %p123
        %p266 = pneg %p120
        %p267 = pneg %p153
        %p268 = pneg %p150
        %s269 = sand.u32 %s140, 1
        %s270 = sand.u32 %s140, 1
        %s271 = smul.addr %s270, 16
        %s272 = scalar_lea.vmem [#allocation3], %s271
        %s273 = smul.u32 2, %s21
        %s274 = smul.u32 2, %s23
        %p275 = scmp.lt.s32.totalorder %s20, 0
        %s276 = scalar_select %p275, %s20, 0
        %p277 = scmp.lt.s32.totalorder %s273, 1
        %s278 = scalar_select %p277, %s273, 1
        %p279 = scmp.lt.s32.totalorder %s274, 1
        %s280 = scalar_select %p279, %s274, 1
        %s281 = smul.addr %s278, 2
        %s282 = sadd.s32 %s280, %s281
        %s283 = smul.addr %s276, 4
        %s284 = sadd.s32 %s282, %s283
        %s285 = smul.addr %s284, 4
        %s286 = scalar_lea.vmem %s0, %s285
        %s287 = smul.u32 2, %s21
        %s288 = smul.u32 2, %s23
        %p289 = scmp.lt.s32.totalorder %s20, 0
        %s290 = scalar_select %p289, %s20, 0
        %p291 = scmp.lt.s32.totalorder %s23, 0
        %s292 = scalar_select %p291, %s23, 0
        %p293 = scmp.lt.s32.totalorder %s22, 1
        %s294 = scalar_select %p293, %s22, 1
        %s295 = smul.addr %s294, 64
        %s296 = smul.addr %s292, 128
        %s297 = sadd.s32 %s295, %s296
        %s298 = smul.addr %s290, 128
        %s299 = sadd.s32 %s297, %s298
        %s300 = smul.addr %s299, 4
        %s301 = scalar_lea.vmem %s1, %s300
        %s302 = smul.u32 2, %s22
        %p303 = scmp.lt.s32.totalorder %s20, 0
        %s304 = scalar_select %p303, %s20, 0
        %p305 = scmp.lt.s32.totalorder %s302, 3
        %s306 = scalar_select %p305, %s302, 3
        %s307 = smul.addr %s304, 4
        %s308 = sadd.s32 %s306, %s307
        %s309 = scalar_lea.vmem %s2, %s308
        %s310 = smul.u32 2, %s22
        %s311 = smul.u32 2, %s21
        %s312 = smul.u32 2, %s22
        %p313 = scmp.eq.s32.totalorder %s23, 0
        // Predicated region
        $region33: #{autoencoder_forward.11} parent=31 // pred_check
          %p314 = pneg %p313
        $region34: #{autoencoder_forward.11} parent=31 // pred_check_branch
          %316 = sbr.rel (%p314) target = $region36
        $region35: #{autoencoder_forward.11} parent=31 // pred_region
          %v317 = vld [vmem:[%s309] sm:$0x3]
          %v319 = vlaneseq
          %v320 = vshrl.u32 %v319, 7
          %v321 = vsub.s32 0, %v320
          %v322 = vrot.slane %v317, %v321
          %v323 = vlaneseq
          %v324 = vshrl.u32 %v323, 7
          %v325 = vsub.s32 1, %v324
          %v326 = vrot.slane %v317, %v325
          %329 = vst [vmem:[#allocation2] sm:$0xff] %v322
          %330 = vst [vmem:[#allocation2 + $0x8] sm:$0xff] %v326
          %331 = vst [vmem:[#allocation2 + $0x10] sm:$0xff] %v322
          %332 = vst [vmem:[#allocation2 + $0x18] sm:$0xff] %v326
        $region36: #{autoencoder_forward.11} parent=31 // pred_fallthru
          _
        %v333 = vld [vmem:[#allocation2] sm:$0xff]
        %v334 = vld [vmem:[#allocation2 + $0x8] sm:$0xff]
        %v335 = vld [vmem:[#allocation2 + $0x10] sm:$0xff]
        %v336 = vld [vmem:[#allocation2 + $0x18] sm:$0xff]
        %v337 = vld [vmem:[%s286] sm:$0xff]
        %v338 = vld [vmem:[%s286 + $0x8] sm:$0xff]
        %v339 = vld [vmem:[%s301] sm:$0xff]
        %v340 = vld [vmem:[%s301 + $0x8] sm:$0xff]
        %v341 = vld [vmem:[%s301 + $0x10] sm:$0xff]
        %v342 = vld [vmem:[%s301 + $0x18] sm:$0xff]
        %v343 = vld [vmem:[%s301 + $0x20] sm:$0xff]
        %v344 = vld [vmem:[%s301 + $0x28] sm:$0xff]
        %v345 = vld [vmem:[%s301 + $0x30] sm:$0xff]
        %v346 = vld [vmem:[%s301 + $0x38] sm:$0xff]
        %v347 = vld [vmem:[%s301 + $0x40] sm:$0xff]
        %v348 = vld [vmem:[%s301 + $0x48] sm:$0xff]
        %v349 = vld [vmem:[%s301 + $0x50] sm:$0xff]
        %v350 = vld [vmem:[%s301 + $0x58] sm:$0xff]
        %v351 = vld [vmem:[%s301 + $0x60] sm:$0xff]
        %v352 = vld [vmem:[%s301 + $0x68] sm:$0xff]
        %v353 = vld [vmem:[%s301 + $0x70] sm:$0xff]
        %v354 = vld [vmem:[%s301 + $0x78] sm:$0xff]
        %v355 = vld [vmem:[%s301 + $0x80] sm:$0xff]
        %v356 = vld [vmem:[%s301 + $0x88] sm:$0xff]
        %v357 = vld [vmem:[%s301 + $0x90] sm:$0xff]
        %v358 = vld [vmem:[%s301 + $0x98] sm:$0xff]
        %v359 = vld [vmem:[%s301 + $0xa0] sm:$0xff]
        %v360 = vld [vmem:[%s301 + $0xa8] sm:$0xff]
        %v361 = vld [vmem:[%s301 + $0xb0] sm:$0xff]
        %v362 = vld [vmem:[%s301 + $0xb8] sm:$0xff]
        %v363 = vld [vmem:[%s301 + $0xc0] sm:$0xff]
        %v364 = vld [vmem:[%s301 + $0xc8] sm:$0xff]
        %v365 = vld [vmem:[%s301 + $0xd0] sm:$0xff]
        %v366 = vld [vmem:[%s301 + $0xd8] sm:$0xff]
        %v367 = vld [vmem:[%s301 + $0xe0] sm:$0xff]
        %v368 = vld [vmem:[%s301 + $0xe8] sm:$0xff]
        %v369 = vld [vmem:[%s301 + $0xf0] sm:$0xff]
        %v370 = vld [vmem:[%s301 + $0xf8] sm:$0xff]
        %v373 = vunpack.c.l.b16 %v337
        %v374 = vunpack.c.h.b16 %v337
        %v375 = vunpack.c.l.b16 %v338
        %v376 = vunpack.c.h.b16 %v338
        %v377 = vpack.c.b16 %v375, %v373
        %v378 = vpack.c.b16 %v376, %v374
        %v413 = vunpack.c.l.b16 %v339
        %v414 = vunpack.c.h.b16 %v339
        %v415 = vunpack.c.l.b16 %v340
        %v416 = vunpack.c.h.b16 %v340
        %v417 = vunpack.c.l.b16 %v341
        %v418 = vunpack.c.h.b16 %v341
        %v419 = vunpack.c.l.b16 %v342
        %v420 = vunpack.c.h.b16 %v342
        %v421 = vunpack.c.l.b16 %v343
        %v422 = vunpack.c.h.b16 %v343
        %v423 = vunpack.c.l.b16 %v344
        %v424 = vunpack.c.h.b16 %v344
        %v425 = vunpack.c.l.b16 %v345
        %v426 = vunpack.c.h.b16 %v345
        %v427 = vunpack.c.l.b16 %v346
        %v428 = vunpack.c.h.b16 %v346
        %v429 = vunpack.c.l.b16 %v347
        %v430 = vunpack.c.h.b16 %v347
        %v431 = vunpack.c.l.b16 %v348
        %v432 = vunpack.c.h.b16 %v348
        %v433 = vunpack.c.l.b16 %v349
        %v434 = vunpack.c.h.b16 %v349
        %v435 = vunpack.c.l.b16 %v350
        %v436 = vunpack.c.h.b16 %v350
        %v437 = vunpack.c.l.b16 %v351
        %v438 = vunpack.c.h.b16 %v351
        %v439 = vunpack.c.l.b16 %v352
        %v440 = vunpack.c.h.b16 %v352
        %v441 = vunpack.c.l.b16 %v353
        %v442 = vunpack.c.h.b16 %v353
        %v443 = vunpack.c.l.b16 %v354
        %v444 = vunpack.c.h.b16 %v354
        %v445 = vunpack.c.l.b16 %v355
        %v446 = vunpack.c.h.b16 %v355
        %v447 = vunpack.c.l.b16 %v356
        %v448 = vunpack.c.h.b16 %v356
        %v449 = vunpack.c.l.b16 %v357
        %v450 = vunpack.c.h.b16 %v357
        %v451 = vunpack.c.l.b16 %v358
        %v452 = vunpack.c.h.b16 %v358
        %v453 = vunpack.c.l.b16 %v359
        %v454 = vunpack.c.h.b16 %v359
        %v455 = vunpack.c.l.b16 %v360
        %v456 = vunpack.c.h.b16 %v360
        %v457 = vunpack.c.l.b16 %v361
        %v458 = vunpack.c.h.b16 %v361
        %v459 = vunpack.c.l.b16 %v362
        %v460 = vunpack.c.h.b16 %v362
        %v461 = vunpack.c.l.b16 %v363
        %v462 = vunpack.c.h.b16 %v363
        %v463 = vunpack.c.l.b16 %v364
        %v464 = vunpack.c.h.b16 %v364
        %v465 = vunpack.c.l.b16 %v365
        %v466 = vunpack.c.h.b16 %v365
        %v467 = vunpack.c.l.b16 %v366
        %v468 = vunpack.c.h.b16 %v366
        %v469 = vunpack.c.l.b16 %v367
        %v470 = vunpack.c.h.b16 %v367
        %v471 = vunpack.c.l.b16 %v368
        %v472 = vunpack.c.h.b16 %v368
        %v473 = vunpack.c.l.b16 %v369
        %v474 = vunpack.c.h.b16 %v369
        %v475 = vunpack.c.l.b16 %v370
        %v476 = vunpack.c.h.b16 %v370
        %v477 = vpack.c.b16 %v415, %v413
        %v478 = vpack.c.b16 %v416, %v414
        %v479 = vpack.c.b16 %v419, %v417
        %v480 = vpack.c.b16 %v420, %v418
        %v481 = vpack.c.b16 %v423, %v421
        %v482 = vpack.c.b16 %v424, %v422
        %v483 = vpack.c.b16 %v427, %v425
        %v484 = vpack.c.b16 %v428, %v426
        %v485 = vpack.c.b16 %v431, %v429
        %v486 = vpack.c.b16 %v432, %v430
        %v487 = vpack.c.b16 %v435, %v433
        %v488 = vpack.c.b16 %v436, %v434
        %v489 = vpack.c.b16 %v439, %v437
        %v490 = vpack.c.b16 %v440, %v438
        %v491 = vpack.c.b16 %v443, %v441
        %v492 = vpack.c.b16 %v444, %v442
        %v493 = vpack.c.b16 %v447, %v445
        %v494 = vpack.c.b16 %v448, %v446
        %v495 = vpack.c.b16 %v451, %v449
        %v496 = vpack.c.b16 %v452, %v450
        %v497 = vpack.c.b16 %v455, %v453
        %v498 = vpack.c.b16 %v456, %v454
        %v499 = vpack.c.b16 %v459, %v457
        %v500 = vpack.c.b16 %v460, %v458
        %v501 = vpack.c.b16 %v463, %v461
        %v502 = vpack.c.b16 %v464, %v462
        %v503 = vpack.c.b16 %v467, %v465
        %v504 = vpack.c.b16 %v468, %v466
        %v505 = vpack.c.b16 %v471, %v469
        %v506 = vpack.c.b16 %v472, %v470
        %v507 = vpack.c.b16 %v475, %v473
        %v508 = vpack.c.b16 %v476, %v474
        %541 = vmatprep.subr.bf16.mxu0 %v492
        %542 = vmatpush1.bf16.msra.mxu0 %v491
        %543 = vmatprep.subr.bf16.mxu0 %v490
        %544 = vmatpush1.bf16.msra.mxu0 %v489
        %545 = vmatprep.subr.bf16.mxu0 %v488
        %546 = vmatpush1.bf16.msra.mxu0 %v487
        %547 = vmatprep.subr.bf16.mxu0 %v486
        %548 = vmatpush1.bf16.msra.mxu0 %v485
        %549 = vmatprep.subr.bf16.mxu0 %v484
        %550 = vmatpush1.bf16.msra.mxu0 %v483
        %551 = vmatprep.subr.bf16.mxu0 %v482
        %552 = vmatpush1.bf16.msra.mxu0 %v481
        %553 = vmatprep.subr.bf16.mxu0 %v480
        %554 = vmatpush1.bf16.msra.mxu0 %v479
        %555 = vmatprep.subr.bf16.mxu0 %v478
        %556 = vmatpush1.bf16.msra.mxu0 %v477
        %557 = vmatprep.subr.bf16.mxu0 %v508
        %558 = vmatpush2.bf16.msra.mxu0 %v507
        %559 = vmatprep.subr.bf16.mxu0 %v506
        %560 = vmatpush2.bf16.msra.mxu0 %v505
        %561 = vmatprep.subr.bf16.mxu0 %v504
        %562 = vmatpush2.bf16.msra.mxu0 %v503
        %563 = vmatprep.subr.bf16.mxu0 %v502
        %564 = vmatpush2.bf16.msra.mxu0 %v501
        %565 = vmatprep.subr.bf16.mxu0 %v500
        %566 = vmatpush2.bf16.msra.mxu0 %v499
        %567 = vmatprep.subr.bf16.mxu0 %v498
        %568 = vmatpush2.bf16.msra.mxu0 %v497
        %569 = vmatprep.subr.bf16.mxu0 %v496
        %570 = vmatpush2.bf16.msra.mxu0 %v495
        %571 = vmatprep.subr.bf16.mxu0 %v494
        %572 = vmatpush2.bf16.msra.mxu0 %v493
        %573 = vmatprep.mubr.bf16.mxu0 %v378
        %574 = vmatmul.mubr.bf16.gmra.mxu0 %v377
        %v575 = vpop.f32.mrf.mxu0
        %v576 = vadd.f32 0.0, %v575
        %v577 = vpop.f32.mrf.mxu0
        %v578 = vadd.f32 0.0, %v577
        %v579 = vpop.f32.mrf.mxu0
        %v580 = vadd.f32 0.0, %v579
        %v581 = vpop.f32.mrf.mxu0
        %v582 = vadd.f32 0.0, %v581
        %583 = vdwg.mxu0
        %v584 = vadd.f32 %v333, %v576
        %v585 = vadd.f32 %v334, %v578
        %v586 = vadd.f32 %v335, %v580
        %v587 = vadd.f32 %v336, %v582
        %588 = vst [vmem:[#allocation2] sm:$0xff] %v584
        %589 = vst [vmem:[#allocation2 + $0x8] sm:$0xff] %v585
        %590 = vst [vmem:[#allocation2 + $0x10] sm:$0xff] %v586
        %591 = vst [vmem:[#allocation2 + $0x18] sm:$0xff] %v587
        // Predicated region
        $region37: #{autoencoder_forward.11} parent=31 // pred_check
          %p592 = pneg %p313
        $region38: #{autoencoder_forward.11} parent=31 // pred_check_branch
          %594 = sbr.rel (%p592) target = $region40
        $region39: #{autoencoder_forward.11} parent=31 // pred_region
          %v595 = vld [vmem:[#allocation2] sm:$0xff]
          %v596 = vld [vmem:[#allocation2 + $0x8] sm:$0xff]
          %v597 = vld [vmem:[#allocation2 + $0x10] sm:$0xff]
          %v598 = vld [vmem:[#allocation2 + $0x18] sm:$0xff]
          %v599 = vpack.c.bf16 %v597, %v595
          %v600 = vpack.c.bf16 %v598, %v596
          %v603 = vunpack.c.l.b16 %v599
          %v604 = vunpack.c.l.b16 %v600
          %v605 = vunpack.c.h.b16 %v599
          %v606 = vunpack.c.h.b16 %v600
          %v607 = vpack.c.b16 %v604, %v603
          %v608 = vpack.c.b16 %v606, %v605
          %611 = vst [vmem:[%s272] sm:$0xff] %v607
          %612 = vst [vmem:[%s272 + $0x8] sm:$0xff] %v608
        $region40: #{autoencoder_forward.11} parent=31 // pred_fallthru
          _
        %s613 = sand.u32 %s140, 1
        %s614 = sand.u32 %s140, 1
        %s615 = smul.addr %s614, 16
        %s616 = scalar_lea.vmem [#allocation3], %s615
        // Predicated region
        $region41: #{autoencoder_forward.11} parent=31 // pred_check
          %p617 = pneg %p150
        $region42: #{autoencoder_forward.11} parent=31 // pred_check_branch
          %619 = sbr.rel (%p617) target = $region44
        $region43: #{autoencoder_forward.11} parent=31 // pred_region
          %s620 = smul.u32 2, %s21
          %s621 = smul.u32 2, %s22
          %s622 = smul.addr %s620, 4
          %s623 = sadd.s32 %s621, %s622
          %s624 = smul.addr %s20, 8
          %s625 = sadd.s32 %s623, %s624
          %s626 = smul.addr %s625, 4
          %s627 = scalar_lea.vmem %s3, %s626
          // Predicated region
          $region45: #{autoencoder_forward.11} parent=43 // pred_check
            _
          $region46: #{autoencoder_forward.11} parent=43 // pred_check_branch
            %629 = sbr.rel (0) target = $region48
          $region47: #{autoencoder_forward.11} parent=43 // pred_region
            // Predicated region
            $region49: #{autoencoder_forward.11} parent=47 // pred_check
              _
            $region50: #{autoencoder_forward.11} parent=47 // pred_check_branch
              %631 = sbr.rel (0) target = $region52
            $region51: #{autoencoder_forward.11} parent=47 // pred_region
              // Predicated region
              $region64: #{autoencoder_forward.11} parent=51 // pred_check
                _
              $region65: #{autoencoder_forward.11} parent=51 // pred_check_branch
                %649 = sbr.rel (0) target = $region67
              $region66: #{autoencoder_forward.11} parent=51 // pred_region
                loop: start=0, step=1, limit=1
                $region68: #{autoencoder_forward.11} parent=66 // loop_pre_header
                  _
                $region69: #{autoencoder_forward.11} parent=66 // loop_header
                  %s651 = sphi 0, %s655
                  %p652 = scmp.ge.s32.totalorder %s651, 1
                  %s656 = sphi %s616, %s616
                  %s657 = sphi %s627, %s627
                $region70: #{autoencoder_forward.11} parent=66 // loop_header_branch
                  %654 = sbr.rel (%p652) target = $region74
                $region71: #{autoencoder_forward.11} parent=66 // loop_body
                  %v658 = vld [vmem:[%s656] sm:$0xff]
                  %659 = vst [vmem:[%s657] sm:$0xff] %v658
                  %v660 = vld [vmem:[%s656 + $0x8] sm:$0xff]
                  %661 = vst [vmem:[%s657 + $0x10] sm:$0xff] %v660
                $region72: #{autoencoder_forward.11} parent=66 // loop_footer
                  %s655 = sadd.s32 1, %s651
                $region73: #{autoencoder_forward.11} parent=66 // loop_footer_branch
                  %650 = sbr.rel target = $region69
                $region74: #{autoencoder_forward.11} parent=66 // loop_exit
                  _
              $region67: #{autoencoder_forward.11} parent=51 // pred_fallthru
                _
              // Predicated region
              $region75: #{autoencoder_forward.11} parent=51 // pred_check
                _
              $region76: #{autoencoder_forward.11} parent=51 // pred_check_branch
                %663 = sbr.rel target = $region78
              $region77: #{autoencoder_forward.11} parent=51 // pred_region
                _
              $region78: #{autoencoder_forward.11} parent=51 // pred_fallthru
                _
            $region52: #{autoencoder_forward.11} parent=47 // pred_fallthru
              _
            // Predicated region
            $region53: #{autoencoder_forward.11} parent=47 // pred_check
              _
            $region54: #{autoencoder_forward.11} parent=47 // pred_check_branch
              %633 = sbr.rel target = $region56
            $region55: #{autoencoder_forward.11} parent=47 // pred_region
              %s635 = ssub.s32 256, 1
              loop: start=0, step=1, limit=1
              $region57: #{autoencoder_forward.11} parent=55 // loop_pre_header
                _
              $region58: #{autoencoder_forward.11} parent=55 // loop_header
                %s637 = sphi 0, %s641
                %p638 = scmp.ge.s32.totalorder %s637, 1
                %s642 = sphi %s616, %s616
                %s643 = sphi %s627, %s627
              $region59: #{autoencoder_forward.11} parent=55 // loop_header_branch
                %640 = sbr.rel (%p638) target = $region63
              $region60: #{autoencoder_forward.11} parent=55 // loop_body
                %v644 = vld [vmem:[%s642] sm:%s635]
                %645 = vst [vmem:[%s643] sm:%s635] %v644
                %v646 = vld [vmem:[%s642 + $0x8] sm:%s635]
                %647 = vst [vmem:[%s643 + $0x10] sm:%s635] %v646
              $region61: #{autoencoder_forward.11} parent=55 // loop_footer
                %s641 = sadd.s32 1, %s637
              $region62: #{autoencoder_forward.11} parent=55 // loop_footer_branch
                %636 = sbr.rel target = $region58
              $region63: #{autoencoder_forward.11} parent=55 // loop_exit
                _
            $region56: #{autoencoder_forward.11} parent=47 // pred_fallthru
              _
          $region48: #{autoencoder_forward.11} parent=43 // pred_fallthru
            _
          %664 = vnop
        $region44: #{autoencoder_forward.11} parent=31 // pred_fallthru
          _
      $region32: #{autoencoder_forward.11} parent=5 // pred_fallthru
        _
      %p665 = scmp.le.s32.totalorder 2, %s9
      // Predicated region
      $region79: #{autoencoder_forward.11} parent=5 // pred_check
        %p666 = pneg %p665
      $region80: #{autoencoder_forward.11} parent=5 // pred_check_branch
        %668 = sbr.rel (%p666) target = $region82
      $region81: #{autoencoder_forward.11} parent=5 // pred_region
        %s669 = ssub.s32 %s9, 2
        // Predicated region
        $region83: #{autoencoder_forward.11} parent=81 // pred_check
          %p670 = pneg %p156
        $region84: #{autoencoder_forward.11} parent=81 // pred_check_branch
          %672 = sbr.rel (%p670) target = $region86
        $region85: #{autoencoder_forward.11} parent=81 // pred_region
          %s673 = sand.u32 %s141, 1
          %s674 = sand.u32 %s141, 1
          %s675 = smul.addr %s674, 16
          %s676 = scalar_lea.vmem [#allocation3], %s675
        $region86: #{autoencoder_forward.11} parent=81 // pred_fallthru
          _
      $region82: #{autoencoder_forward.11} parent=5 // pred_fallthru
        _
    $region6: #{autoencoder_forward.11} parent=1 // loop_footer
      %s13 = sadd.s32 1, %s9
    $region7: #{autoencoder_forward.11} parent=1 // loop_footer_branch
      %8 = sbr.rel target = $region3
    $region8: #{autoencoder_forward.11} parent=1 // loop_exit
      _

// kernel: autoencoder_forward.12
$region0: #{autoencoder_forward.12}
  #allocation0 [shape = 'u32[]', space=smem, size = 0x4, offset = 0x4, fixed_abs, tag = 'smem constant byte address 0x4 - core index']
  #allocation1 [shape = 'u32[144,128]{1,0:T(1,128)}', space=vmem, size = 0x12000, scoped, tag = 'internal scratch']
  #allocation2 [shape = 'f32[16,256]{1,0:T(8,128)}', space=vmem, size = 0x4000, scoped, tag = 'scratch operand']
  %s0 = inlined_call_operand.vmem [shape: bf16[1,16,512], index: 0, kind: input, shape index: {}]
  %s1 = inlined_call_operand.hbm [shape: bf16[1,1,2,512,256], index: 1, kind: input, shape index: {}]
  %s2 = inlined_call_operand.vmem [shape: f32[1,1,512], index: 2, kind: input, shape index: {}]
  %s3 = inlined_call_operand.vmem [shape: bf16[1,16,512], index: 3, kind: output, shape index: {}]
  %s4 = sld [smem:[#allocation0]]
  $region91: #{autoencoder_forward.12} parent=0
    _
  %s6 = ssub.s32 1, %s4
  %s7 = scalar_select 0, %s6, %s4
  $region1: #{autoencoder_forward.12} parent=0
    #allocation3 [shape = 'u8[524288]{0}', space=vmem, size = 0x80000, scoped, tag = 'input window, operand 1']
    #allocation4 [shape = 's32[2]{0}', space=sflag, size = 0x8, scoped, tag = 'scoped memory for autoencoder_forward.12']
    #allocation5 [shape = 'u8[16384]{0}', space=vmem, size = 0x4000, scoped, tag = 'output window, operand 0']
    %8 = vsyncpa [#allocation4], 0
    %s9 = scalar_lea.sflag [#allocation4], 1
    %10 = vsyncpa %s9, 0
    loop: start=0, step=1, limit=4
    $region2: #{autoencoder_forward.12} parent=1 // loop_pre_header
      _
    $region3: #{autoencoder_forward.12} parent=1 // loop_header
      %s12 = sphi 0, %s16
      %p13 = scmp.ge.s32.totalorder %s12, 4
      %s19 = sphi 0, %s45
      %s20 = sphi 0, %s41
      %s21 = sphi 0, %s37
      %s22 = sphi 0, %s33
      %s23 = sphi 0, %s19
      %s24 = sphi 0, %s20
      %s25 = sphi 0, %s21
      %s26 = sphi 0, %s22
      %s27 = sphi 0, %s23
      %s28 = sphi 0, %s24
      %s29 = sphi 0, %s25
      %s30 = sphi 0, %s26
      %s52 = sphi 0, %s54
      %s55 = sphi 0, %s52
      %s56 = sphi 0, %s55
      %s72 = sphi 0, %s56
      %s82 = sphi 0, %s84
      %s85 = sphi 0, %s82
      %s86 = sphi 0, %s85
      %s102 = sphi 0, %s86
      %s110 = sphi 0, %s112
      %s113 = sphi 0, %s110
      %s114 = sphi 0, %s113
      %s130 = sphi 0, %s114
      %s140 = sphi 0, %s142
      %s143 = sphi 0, %s140
      %s144 = sphi 0, %s143
      %s160 = sphi 0, %s144
    $region4: #{autoencoder_forward.12} parent=1 // loop_header_branch
      %15 = sbr.rel (%p13) target = $region8
    $region5: #{autoencoder_forward.12} parent=1 // loop_body
      %s17 = ssub.s32 %s12, 1
      %s18 = ssub.s32 %s12, 2
      %s31 = sadd.s32 1, %s22
      %p32 = scmp.ge.s32.totalorder %s31, 1
      %s33 = scalar_select %p32, 0, %s31
      %s34 = sadd.s32 1, %s21
      %s35 = scalar_select %p32, %s34, %s21
      %p36 = scmp.ge.s32.totalorder %s35, 2
      %s37 = scalar_select %p36, 0, %s35
      %s38 = sadd.s32 1, %s20
      %s39 = scalar_select %p36, %s38, %s20
      %p40 = scmp.ge.s32.totalorder %s39, 1
      %s41 = scalar_select %p40, 0, %s39
      %s42 = sadd.s32 1, %s19
      %s43 = scalar_select %p40, %s42, %s19
      %p44 = scmp.ge.s32.totalorder %s43, 1
      %s45 = scalar_select %p44, 0, %s43
      %s46 = ssub.s32 %s19, %s45
      %s47 = ssub.s32 %s20, %s41
      %s48 = sor.u32 %s46, %s47
      %s49 = ssub.s32 %s22, %s33
      %s50 = sor.u32 %s48, %s49
      %p51 = scmp.eq.s32.totalorder %s50, 0
      %s53 = sadd.s32 %s52, 1
      %s54 = scalar_select %p51, %s52, %s53
      %p57 = pneg %p51
      %p58 = scmp.eq.s32.totalorder %s12, 1
      %p59 = por %p57, %p58
      %p60 = scmp.ne.s32.totalorder %s52, %s55
      %p61 = scmp.eq.s32.totalorder %s12, 0
      %p62 = por %p60, %p61
      %p63 = scmp.ne.s32.totalorder %s52, %s55
      %p64 = scmp.eq.s32.totalorder %s17, 1
      %p65 = por %p63, %p64
      %p66 = scmp.ne.s32.totalorder %s55, %s56
      %p67 = scmp.eq.s32.totalorder %s17, 0
      %p68 = por %p66, %p67
      %p69 = scmp.ne.s32.totalorder %s55, %s56
      %p70 = scmp.eq.s32.totalorder %s18, 1
      %p71 = por %p69, %p70
      %p73 = scmp.ne.s32.totalorder %s56, %s72
      %p74 = scmp.eq.s32.totalorder %s18, 0
      %p75 = por %p73, %p74
      %s76 = ssub.s32 %s19, %s45
      %s77 = ssub.s32 %s22, %s33
      %s78 = sor.u32 %s76, %s77
      %s79 = ssub.s32 %s21, %s37
      %s80 = sor.u32 %s78, %s79
      %p81 = scmp.eq.s32.totalorder %s80, 0
      %s83 = sadd.s32 %s82, 1
      %s84 = scalar_select %p81, %s82, %s83
      %p87 = pneg %p81
      %p88 = scmp.eq.s32.totalorder %s12, 1
      %p89 = por %p87, %p88
      %p90 = scmp.ne.s32.totalorder %s82, %s85
      %p91 = scmp.eq.s32.totalorder %s12, 0
      %p92 = por %p90, %p91
      %p93 = scmp.ne.s32.totalorder %s82, %s85
      %p94 = scmp.eq.s32.totalorder %s17, 1
      %p95 = por %p93, %p94
      %p96 = scmp.ne.s32.totalorder %s85, %s86
      %p97 = scmp.eq.s32.totalorder %s17, 0
      %p98 = por %p96, %p97
      %p99 = scmp.ne.s32.totalorder %s85, %s86
      %p100 = scmp.eq.s32.totalorder %s18, 1
      %p101 = por %p99, %p100
      %p103 = scmp.ne.s32.totalorder %s86, %s102
      %p104 = scmp.eq.s32.totalorder %s18, 0
      %p105 = por %p103, %p104
      %s106 = ssub.s32 %s19, %s45
      %s107 = ssub.s32 %s21, %s37
      %s108 = sor.u32 %s106, %s107
      %p109 = scmp.eq.s32.totalorder %s108, 0
      %s111 = sadd.s32 %s110, 1
      %s112 = scalar_select %p109, %s110, %s111
      %p115 = pneg %p109
      %p116 = scmp.eq.s32.totalorder %s12, 1
      %p117 = por %p115, %p116
      %p118 = scmp.ne.s32.totalorder %s110, %s113
      %p119 = scmp.eq.s32.totalorder %s12, 0
      %p120 = por %p118, %p119
      %p121 = scmp.ne.s32.totalorder %s110, %s113
      %p122 = scmp.eq.s32.totalorder %s17, 1
      %p123 = por %p121, %p122
      %p124 = scmp.ne.s32.totalorder %s113, %s114
      %p125 = scmp.eq.s32.totalorder %s17, 0
      %p126 = por %p124, %p125
      %p127 = scmp.ne.s32.totalorder %s113, %s114
      %p128 = scmp.eq.s32.totalorder %s18, 1
      %p129 = por %p127, %p128
      %p131 = scmp.ne.s32.totalorder %s114, %s130
      %p132 = scmp.eq.s32.totalorder %s18, 0
      %p133 = por %p131, %p132
      %s134 = ssub.s32 %s19, %s45
      %s135 = ssub.s32 %s20, %s41
      %s136 = sor.u32 %s134, %s135
      %s137 = ssub.s32 %s21, %s37
      %s138 = sor.u32 %s136, %s137
      %p139 = scmp.eq.s32.totalorder %s138, 0
      %s141 = sadd.s32 %s140, 1
      %s142 = scalar_select %p139, %s140, %s141
      %p145 = pneg %p139
      %p146 = scmp.eq.s32.totalorder %s12, 1
      %p147 = por %p145, %p146
      %p148 = scmp.ne.s32.totalorder %s140, %s143
      %p149 = scmp.eq.s32.totalorder %s12, 0
      %p150 = por %p148, %p149
      %p151 = scmp.ne.s32.totalorder %s140, %s143
      %p152 = scmp.eq.s32.totalorder %s17, 1
      %p153 = por %p151, %p152
      %p154 = scmp.ne.s32.totalorder %s143, %s144
      %p155 = scmp.eq.s32.totalorder %s17, 0
      %p156 = por %p154, %p155
      %p157 = scmp.ne.s32.totalorder %s143, %s144
      %p158 = scmp.eq.s32.totalorder %s18, 1
      %p159 = por %p157, %p158
      %p161 = scmp.ne.s32.totalorder %s144, %s160
      %p162 = scmp.eq.s32.totalorder %s18, 0
      %p163 = por %p161, %p162
      %p164 = scmp.le.s32.totalorder 1, %s12
      %p165 = scmp.lt.s32.totalorder %s12, 3
      %p166 = pnand %p164, %p165
      %p167 = pneg %p166
      // Predicated region
      $region9: #{autoencoder_forward.12} parent=5 // pred_check
        _
      $region10: #{autoencoder_forward.12} parent=5 // pred_check_branch
        %169 = sbr.rel (%p166) target = $region12
      $region11: #{autoencoder_forward.12} parent=5 // pred_region
        %s170 = ssub.s32 %s12, 1
        // Predicated region
        $region13: #{autoencoder_forward.12} parent=11 // pred_check
          %p171 = pneg %p68
        $region14: #{autoencoder_forward.12} parent=11 // pred_check_branch
          %173 = sbr.rel (%p171) target = $region16
        $region15: #{autoencoder_forward.12} parent=11 // pred_region
          %s174 = smul.u32 2, %s24
          %s175 = smul.u32 4, %s26
          %p176 = scmp.lt.s32.totalorder %s23, 0
          %s177 = scalar_select %p176, %s23, 0
          %p178 = scmp.lt.s32.totalorder %s174, 1
          %s179 = scalar_select %p178, %s174, 1
          %p180 = scmp.lt.s32.totalorder %s175, 3
          %s181 = scalar_select %p180, %s175, 3
          %s182 = smul.addr %s179, 4
          %s183 = sadd.s32 %s181, %s182
          %s184 = smul.addr %s177, 8
          %s185 = sadd.s32 %s183, %s184
          %s186 = smul.addr %s185, 4
          %s187 = scalar_lea.vmem %s0, %s186
          %s188 = smul.u32 2, %s24
          %s189 = smul.u32 4, %s26
        $region16: #{autoencoder_forward.12} parent=11 // pred_fallthru
          _
      $region12: #{autoencoder_forward.12} parent=5 // pred_fallthru
        _
      %p190 = scmp.lt.s32.totalorder %s12, 2
      // Predicated region
      $region17: #{autoencoder_forward.12} parent=5 // pred_check
        %p191 = pneg %p190
      $region18: #{autoencoder_forward.12} parent=5 // pred_check_branch
        %193 = sbr.rel (%p191) target = $region20
      $region19: #{autoencoder_forward.12} parent=5 // pred_region
        // Predicated region
        $region21: #{autoencoder_forward.12} parent=19 // pred_check
          %p194 = pneg %p92
        $region22: #{autoencoder_forward.12} parent=19 // pred_check_branch
          %196 = sbr.rel (%p194) target = $region24
        $region23: #{autoencoder_forward.12} parent=19 // pred_region
          %s197 = sand.u32 %s82, 1
          %s198 = scalar_lea.sflag [#allocation4], %s197
          %s199 = sand.u32 %s82, 1
          %s200 = smul.addr %s199, 512
          %s201 = scalar_lea.vmem [#allocation3], %s200
          %s203 = ssub.s32 8192, 8192
          %204 = vsyncadd %s198, %s203
          %s205 = smul.addr %s21, 128
          %s206 = smul.addr %s22, 256
          %s207 = sadd.s32 %s205, %s206
          %s208 = smul.addr %s19, 256
          %s209 = sadd.s32 %s207, %s208
          %s210 = smul.addr %s209, 64
          %s211 = scalar_lea.hbm %s1, %s210
          %s212 = sshll.u32 %s201, 4
          %s213 = int_to_ptr.vmem [resolvable:$true] %s212
          %218 = dma.hbm_to_vmem [thread:$0]  %s211, 8192, %s213, %s198, 128, 128, 8
        $region24: #{autoencoder_forward.12} parent=19 // pred_fallthru
          _
        // Predicated region
        $region25: #{autoencoder_forward.12} parent=19 // pred_check
          %p219 = pneg %p120
        $region26: #{autoencoder_forward.12} parent=19 // pred_check_branch
          %221 = sbr.rel (%p219) target = $region28
        $region27: #{autoencoder_forward.12} parent=19 // pred_region
          %s222 = smul.u32 2, %s21
          %p223 = scmp.lt.s32.totalorder %s19, 0
          %s224 = scalar_select %p223, %s19, 0
          %p225 = scmp.lt.s32.totalorder %s222, 3
          %s226 = scalar_select %p225, %s222, 3
          %s227 = smul.addr %s224, 4
          %s228 = sadd.s32 %s226, %s227
          %s229 = scalar_lea.vmem %s2, %s228
          %s230 = smul.u32 2, %s21
        $region28: #{autoencoder_forward.12} parent=19 // pred_fallthru
          _
      $region20: #{autoencoder_forward.12} parent=5 // pred_fallthru
        _
      %p231 = scmp.le.s32.totalorder 1, %s12
      %p232 = scmp.lt.s32.totalorder %s12, 3
      %p233 = pnand %p231, %p232
      %p234 = pneg %p233
      // Predicated region
      $region29: #{autoencoder_forward.12} parent=5 // pred_check
        _
      $region30: #{autoencoder_forward.12} parent=5 // pred_check_branch
        %236 = sbr.rel (%p233) target = $region32
      $region31: #{autoencoder_forward.12} parent=5 // pred_region
        %s237 = ssub.s32 %s12, 1
        %s238 = sand.u32 %s85, 1
        %s239 = scalar_lea.sflag [#allocation4], %s238
        %s240 = sand.u32 %s85, 1
        %s241 = smul.addr %s240, 512
        %s242 = scalar_lea.vmem [#allocation3], %s241
        // Predicated region
        $region33: #{autoencoder_forward.12} parent=31 // pred_check
          %p243 = pneg %p98
        $region34: #{autoencoder_forward.12} parent=31 // pred_check_branch
          %245 = sbr.rel (%p243) target = $region36
        $region35: #{autoencoder_forward.12} parent=31 // pred_region
          %246 = dma.done %s239, 8192
        $region36: #{autoencoder_forward.12} parent=31 // pred_fallthru
          _
        %s247 = smul.u32 2, %s24
        %s248 = smul.u32 4, %s26
        %p249 = scmp.lt.s32.totalorder %s23, 0
        %s250 = scalar_select %p249, %s23, 0
        %p251 = scmp.lt.s32.totalorder %s247, 1
        %s252 = scalar_select %p251, %s247, 1
        %p253 = scmp.lt.s32.totalorder %s248, 3
        %s254 = scalar_select %p253, %s248, 3
        %s255 = smul.addr %s252, 4
        %s256 = sadd.s32 %s254, %s255
        %s257 = smul.addr %s250, 8
        %s258 = sadd.s32 %s256, %s257
        %s259 = smul.addr %s258, 4
        %s260 = scalar_lea.vmem %s0, %s259
        %p261 = pneg %p68
        %p262 = pneg %p65
        %s263 = sand.u32 %s85, 1
        %s264 = scalar_lea.sflag [#allocation4], %s263
        %s265 = sand.u32 %s85, 1
        %s266 = smul.addr %s265, 512
        %s267 = scalar_lea.vmem [#allocation3], %s266
        %p268 = pneg %p98
        %p269 = pneg %p95
        %s270 = smul.u32 2, %s25
        %p271 = scmp.lt.s32.totalorder %s23, 0
        %s272 = scalar_select %p271, %s23, 0
        %p273 = scmp.lt.s32.totalorder %s270, 3
        %s274 = scalar_select %p273, %s270, 3
        %s275 = smul.addr %s272, 4
        %s276 = sadd.s32 %s274, %s275
        %s277 = scalar_lea.vmem %s2, %s276
        %p278 = pneg %p126
        %p279 = pneg %p123
        %p280 = pneg %p156
        %p281 = pneg %p153
        %s282 = sand.u32 %s143, 1
        %s283 = sand.u32 %s143, 1
        %s284 = smul.addr %s283, 16
        %s285 = scalar_lea.vmem [#allocation5], %s284
        %s286 = smul.u32 2, %s24
        %s287 = smul.u32 4, %s26
        %p288 = scmp.lt.s32.totalorder %s23, 0
        %s289 = scalar_select %p288, %s23, 0
        %p290 = scmp.lt.s32.totalorder %s286, 1
        %s291 = scalar_select %p290, %s286, 1
        %p292 = scmp.lt.s32.totalorder %s287, 3
        %s293 = scalar_select %p292, %s287, 3
        %s294 = smul.addr %s291, 4
        %s295 = sadd.s32 %s293, %s294
        %s296 = smul.addr %s289, 8
        %s297 = sadd.s32 %s295, %s296
        %s298 = smul.addr %s297, 4
        %s299 = scalar_lea.vmem %s0, %s298
        %s300 = smul.u32 2, %s24
        %s301 = smul.u32 4, %s26
        %s302 = smul.u32 2, %s25
        %p303 = scmp.lt.s32.totalorder %s23, 0
        %s304 = scalar_select %p303, %s23, 0
        %p305 = scmp.lt.s32.totalorder %s302, 3
        %s306 = scalar_select %p305, %s302, 3
        %s307 = smul.addr %s304, 4
        %s308 = sadd.s32 %s306, %s307
        %s309 = scalar_lea.vmem %s2, %s308
        %s310 = smul.u32 2, %s25
        %s311 = smul.u32 2, %s24
        %s312 = smul.u32 2, %s25
        %p313 = scmp.eq.s32.totalorder %s26, 0
        // Predicated region
        $region37: #{autoencoder_forward.12} parent=31 // pred_check
          %p314 = pneg %p313
        $region38: #{autoencoder_forward.12} parent=31 // pred_check_branch
          %316 = sbr.rel (%p314) target = $region40
        $region39: #{autoencoder_forward.12} parent=31 // pred_region
          %v317 = vld [vmem:[%s309] sm:$0x3]
          %v319 = vlaneseq
          %v320 = vshrl.u32 %v319, 7
          %v321 = vsub.s32 0, %v320
          %v322 = vrot.slane %v317, %v321
          %v323 = vlaneseq
          %v324 = vshrl.u32 %v323, 7
          %v325 = vsub.s32 1, %v324
          %v326 = vrot.slane %v317, %v325
          %329 = vst [vmem:[#allocation2] sm:$0xff] %v322
          %330 = vst [vmem:[#allocation2 + $0x8] sm:$0xff] %v326
          %331 = vst [vmem:[#allocation2 + $0x10] sm:$0xff] %v322
          %332 = vst [vmem:[#allocation2 + $0x18] sm:$0xff] %v326
        $region40: #{autoencoder_forward.12} parent=31 // pred_fallthru
          _
        %v333 = vld [vmem:[#allocation2] sm:$0xff]
        %v334 = vld [vmem:[#allocation2 + $0x8] sm:$0xff]
        %v335 = vld [vmem:[#allocation2 + $0x10] sm:$0xff]
        %v336 = vld [vmem:[#allocation2 + $0x18] sm:$0xff]
        %v337 = vld [vmem:[%s299] sm:$0xff]
        %v338 = vld [vmem:[%s299 + $0x8] sm:$0xff]
        %v339 = vld [vmem:[%s299 + $0x10] sm:$0xff]
        %v340 = vld [vmem:[%s299 + $0x18] sm:$0xff]
        %v341 = vld [vmem:[%s242] sm:$0xff]
        %v342 = vld [vmem:[%s242 + $0x8] sm:$0xff]
        %v343 = vld [vmem:[%s242 + $0x10] sm:$0xff]
        %v344 = vld [vmem:[%s242 + $0x18] sm:$0xff]
        %v345 = vld [vmem:[%s242 + $0x20] sm:$0xff]
        %v346 = vld [vmem:[%s242 + $0x28] sm:$0xff]
        %v347 = vld [vmem:[%s242 + $0x30] sm:$0xff]
        %v348 = vld [vmem:[%s242 + $0x38] sm:$0xff]
        %v349 = vld [vmem:[%s242 + $0x40] sm:$0xff]
        %v350 = vld [vmem:[%s242 + $0x48] sm:$0xff]
        %v351 = vld [vmem:[%s242 + $0x50] sm:$0xff]
        %v352 = vld [vmem:[%s242 + $0x58] sm:$0xff]
        %v353 = vld [vmem:[%s242 + $0x60] sm:$0xff]
        %v354 = vld [vmem:[%s242 + $0x68] sm:$0xff]
        %v355 = vld [vmem:[%s242 + $0x70] sm:$0xff]
        %v356 = vld [vmem:[%s242 + $0x78] sm:$0xff]
        %v357 = vld [vmem:[%s242 + $0x80] sm:$0xff]
        %v358 = vld [vmem:[%s242 + $0x88] sm:$0xff]
        %v359 = vld [vmem:[%s242 + $0x90] sm:$0xff]
        %v360 = vld [vmem:[%s242 + $0x98] sm:$0xff]
        %v361 = vld [vmem:[%s242 + $0xa0] sm:$0xff]
        %v362 = vld [vmem:[%s242 + $0xa8] sm:$0xff]
        %v363 = vld [vmem:[%s242 + $0xb0] sm:$0xff]
        %v364 = vld [vmem:[%s242 + $0xb8] sm:$0xff]
        %v365 = vld [vmem:[%s242 + $0xc0] sm:$0xff]
        %v366 = vld [vmem:[%s242 + $0xc8] sm:$0xff]
        %v367 = vld [vmem:[%s242 + $0xd0] sm:$0xff]
        %v368 = vld [vmem:[%s242 + $0xd8] sm:$0xff]
        %v369 = vld [vmem:[%s242 + $0xe0] sm:$0xff]
        %v370 = vld [vmem:[%s242 + $0xe8] sm:$0xff]
        %v371 = vld [vmem:[%s242 + $0xf0] sm:$0xff]
        %v372 = vld [vmem:[%s242 + $0xf8] sm:$0xff]
        %v373 = vld [vmem:[%s242 + $0x100] sm:$0xff]
        %v374 = vld [vmem:[%s242 + $0x108] sm:$0xff]
        %v375 = vld [vmem:[%s242 + $0x110] sm:$0xff]
        %v376 = vld [vmem:[%s242 + $0x118] sm:$0xff]
        %v377 = vld [vmem:[%s242 + $0x120] sm:$0xff]
        %v378 = vld [vmem:[%s242 + $0x128] sm:$0xff]
        %v379 = vld [vmem:[%s242 + $0x130] sm:$0xff]
        %v380 = vld [vmem:[%s242 + $0x138] sm:$0xff]
        %v381 = vld [vmem:[%s242 + $0x140] sm:$0xff]
        %v382 = vld [vmem:[%s242 + $0x148] sm:$0xff]
        %v383 = vld [vmem:[%s242 + $0x150] sm:$0xff]
        %v384 = vld [vmem:[%s242 + $0x158] sm:$0xff]
        %v385 = vld [vmem:[%s242 + $0x160] sm:$0xff]
        %v386 = vld [vmem:[%s242 + $0x168] sm:$0xff]
        %v387 = vld [vmem:[%s242 + $0x170] sm:$0xff]
        %v388 = vld [vmem:[%s242 + $0x178] sm:$0xff]
        %v389 = vld [vmem:[%s242 + $0x180] sm:$0xff]
        %v390 = vld [vmem:[%s242 + $0x188] sm:$0xff]
        %v391 = vld [vmem:[%s242 + $0x190] sm:$0xff]
        %v392 = vld [vmem:[%s242 + $0x198] sm:$0xff]
        %v393 = vld [vmem:[%s242 + $0x1a0] sm:$0xff]
        %v394 = vld [vmem:[%s242 + $0x1a8] sm:$0xff]
        %v395 = vld [vmem:[%s242 + $0x1b0] sm:$0xff]
        %v396 = vld [vmem:[%s242 + $0x1b8] sm:$0xff]
        %v397 = vld [vmem:[%s242 + $0x1c0] sm:$0xff]
        %v398 = vld [vmem:[%s242 + $0x1c8] sm:$0xff]
        %v399 = vld [vmem:[%s242 + $0x1d0] sm:$0xff]
        %v400 = vld [vmem:[%s242 + $0x1d8] sm:$0xff]
        %v401 = vld [vmem:[%s242 + $0x1e0] sm:$0xff]
        %v402 = vld [vmem:[%s242 + $0x1e8] sm:$0xff]
        %v403 = vld [vmem:[%s242 + $0x1f0] sm:$0xff]
        %v404 = vld [vmem:[%s242 + $0x1f8] sm:$0xff]
        %v409 = vunpack.c.l.b16 %v337
        %v410 = vunpack.c.h.b16 %v337
        %v411 = vunpack.c.l.b16 %v338
        %v412 = vunpack.c.h.b16 %v338
        %v413 = vunpack.c.l.b16 %v339
        %v414 = vunpack.c.h.b16 %v339
        %v415 = vunpack.c.l.b16 %v340
        %v416 = vunpack.c.h.b16 %v340
        %v417 = vpack.c.b16 %v413, %v409
        %v418 = vpack.c.b16 %v414, %v410
        %v419 = vpack.c.b16 %v415, %v411
        %v420 = vpack.c.b16 %v416, %v412
        %v489 = vunpack.c.l.b16 %v341
        %v490 = vunpack.c.h.b16 %v341
        %v491 = vunpack.c.l.b16 %v342
        %v492 = vunpack.c.h.b16 %v342
        %v493 = vunpack.c.l.b16 %v343
        %v494 = vunpack.c.h.b16 %v343
        %v495 = vunpack.c.l.b16 %v344
        %v496 = vunpack.c.h.b16 %v344
        %v497 = vunpack.c.l.b16 %v345
        %v498 = vunpack.c.h.b16 %v345
        %v499 = vunpack.c.l.b16 %v346
        %v500 = vunpack.c.h.b16 %v346
        %v501 = vunpack.c.l.b16 %v347
        %v502 = vunpack.c.h.b16 %v347
        %v503 = vunpack.c.l.b16 %v348
        %v504 = vunpack.c.h.b16 %v348
        %v505 = vunpack.c.l.b16 %v349
        %v506 = vunpack.c.h.b16 %v349
        %v507 = vunpack.c.l.b16 %v350
        %v508 = vunpack.c.h.b16 %v350
        %v509 = vunpack.c.l.b16 %v351
        %v510 = vunpack.c.h.b16 %v351
        %v511 = vunpack.c.l.b16 %v352
        %v512 = vunpack.c.h.b16 %v352
        %v513 = vunpack.c.l.b16 %v353
        %v514 = vunpack.c.h.b16 %v353
        %v515 = vunpack.c.l.b16 %v354
        %v516 = vunpack.c.h.b16 %v354
        %v517 = vunpack.c.l.b16 %v355
        %v518 = vunpack.c.h.b16 %v355
        %v519 = vunpack.c.l.b16 %v356
        %v520 = vunpack.c.h.b16 %v356
        %v521 = vunpack.c.l.b16 %v357
        %v522 = vunpack.c.h.b16 %v357
        %v523 = vunpack.c.l.b16 %v358
        %v524 = vunpack.c.h.b16 %v358
        %v525 = vunpack.c.l.b16 %v359
        %v526 = vunpack.c.h.b16 %v359
        %v527 = vunpack.c.l.b16 %v360
        %v528 = vunpack.c.h.b16 %v360
        %v529 = vunpack.c.l.b16 %v361
        %v530 = vunpack.c.h.b16 %v361
        %v531 = vunpack.c.l.b16 %v362
        %v532 = vunpack.c.h.b16 %v362
        %v533 = vunpack.c.l.b16 %v363
        %v534 = vunpack.c.h.b16 %v363
        %v535 = vunpack.c.l.b16 %v364
        %v536 = vunpack.c.h.b16 %v364
        %v537 = vunpack.c.l.b16 %v365
        %v538 = vunpack.c.h.b16 %v365
        %v539 = vunpack.c.l.b16 %v366
        %v540 = vunpack.c.h.b16 %v366
        %v541 = vunpack.c.l.b16 %v367
        %v542 = vunpack.c.h.b16 %v367
        %v543 = vunpack.c.l.b16 %v368
        %v544 = vunpack.c.h.b16 %v368
        %v545 = vunpack.c.l.b16 %v369
        %v546 = vunpack.c.h.b16 %v369
        %v547 = vunpack.c.l.b16 %v370
        %v548 = vunpack.c.h.b16 %v370
        %v549 = vunpack.c.l.b16 %v371
        %v550 = vunpack.c.h.b16 %v371
        %v551 = vunpack.c.l.b16 %v372
        %v552 = vunpack.c.h.b16 %v372
        %v553 = vunpack.c.l.b16 %v373
        %v554 = vunpack.c.h.b16 %v373
        %v555 = vunpack.c.l.b16 %v374
        %v556 = vunpack.c.h.b16 %v374
        %v557 = vunpack.c.l.b16 %v375
        %v558 = vunpack.c.h.b16 %v375
        %v559 = vunpack.c.l.b16 %v376
        %v560 = vunpack.c.h.b16 %v376
        %v561 = vunpack.c.l.b16 %v377
        %v562 = vunpack.c.h.b16 %v377
        %v563 = vunpack.c.l.b16 %v378
        %v564 = vunpack.c.h.b16 %v378
        %v565 = vunpack.c.l.b16 %v379
        %v566 = vunpack.c.h.b16 %v379
        %v567 = vunpack.c.l.b16 %v380
        %v568 = vunpack.c.h.b16 %v380
        %v569 = vunpack.c.l.b16 %v381
        %v570 = vunpack.c.h.b16 %v381
        %v571 = vunpack.c.l.b16 %v382
        %v572 = vunpack.c.h.b16 %v382
        %v573 = vunpack.c.l.b16 %v383
        %v574 = vunpack.c.h.b16 %v383
        %v575 = vunpack.c.l.b16 %v384
        %v576 = vunpack.c.h.b16 %v384
        %v577 = vunpack.c.l.b16 %v385
        %v578 = vunpack.c.h.b16 %v385
        %v579 = vunpack.c.l.b16 %v386
        %v580 = vunpack.c.h.b16 %v386
        %v581 = vunpack.c.l.b16 %v387
        %v582 = vunpack.c.h.b16 %v387
        %v583 = vunpack.c.l.b16 %v388
        %v584 = vunpack.c.h.b16 %v388
        %v585 = vunpack.c.l.b16 %v389
        %v586 = vunpack.c.h.b16 %v389
        %v587 = vunpack.c.l.b16 %v390
        %v588 = vunpack.c.h.b16 %v390
        %v589 = vunpack.c.l.b16 %v391
        %v590 = vunpack.c.h.b16 %v391
        %v591 = vunpack.c.l.b16 %v392
        %v592 = vunpack.c.h.b16 %v392
        %v593 = vunpack.c.l.b16 %v393
        %v594 = vunpack.c.h.b16 %v393
        %v595 = vunpack.c.l.b16 %v394
        %v596 = vunpack.c.h.b16 %v394
        %v597 = vunpack.c.l.b16 %v395
        %v598 = vunpack.c.h.b16 %v395
        %v599 = vunpack.c.l.b16 %v396
        %v600 = vunpack.c.h.b16 %v396
        %v601 = vunpack.c.l.b16 %v397
        %v602 = vunpack.c.h.b16 %v397
        %v603 = vunpack.c.l.b16 %v398
        %v604 = vunpack.c.h.b16 %v398
        %v605 = vunpack.c.l.b16 %v399
        %v606 = vunpack.c.h.b16 %v399
        %v607 = vunpack.c.l.b16 %v400
        %v608 = vunpack.c.h.b16 %v400
        %v609 = vunpack.c.l.b16 %v401
        %v610 = vunpack.c.h.b16 %v401
        %v611 = vunpack.c.l.b16 %v402
        %v612 = vunpack.c.h.b16 %v402
        %v613 = vunpack.c.l.b16 %v403
        %v614 = vunpack.c.h.b16 %v403
        %v615 = vunpack.c.l.b16 %v404
        %v616 = vunpack.c.h.b16 %v404
        %v617 = vpack.c.b16 %v491, %v489
        %v618 = vpack.c.b16 %v492, %v490
        %v619 = vpack.c.b16 %v495, %v493
        %v620 = vpack.c.b16 %v496, %v494
        %v621 = vpack.c.b16 %v499, %v497
        %v622 = vpack.c.b16 %v500, %v498
        %v623 = vpack.c.b16 %v503, %v501
        %v624 = vpack.c.b16 %v504, %v502
        %v625 = vpack.c.b16 %v507, %v505
        %v626 = vpack.c.b16 %v508, %v506
        %v627 = vpack.c.b16 %v511, %v509
        %v628 = vpack.c.b16 %v512, %v510
        %v629 = vpack.c.b16 %v515, %v513
        %v630 = vpack.c.b16 %v516, %v514
        %v631 = vpack.c.b16 %v519, %v517
        %v632 = vpack.c.b16 %v520, %v518
        %v633 = vpack.c.b16 %v523, %v521
        %v634 = vpack.c.b16 %v524, %v522
        %v635 = vpack.c.b16 %v527, %v525
        %v636 = vpack.c.b16 %v528, %v526
        %v637 = vpack.c.b16 %v531, %v529
        %v638 = vpack.c.b16 %v532, %v530
        %v639 = vpack.c.b16 %v535, %v533
        %v640 = vpack.c.b16 %v536, %v534
        %v641 = vpack.c.b16 %v539, %v537
        %v642 = vpack.c.b16 %v540, %v538
        %v643 = vpack.c.b16 %v543, %v541
        %v644 = vpack.c.b16 %v544, %v542
        %v645 = vpack.c.b16 %v547, %v545
        %v646 = vpack.c.b16 %v548, %v546
        %v647 = vpack.c.b16 %v551, %v549
        %v648 = vpack.c.b16 %v552, %v550
        %v649 = vpack.c.b16 %v555, %v553
        %v650 = vpack.c.b16 %v556, %v554
        %v651 = vpack.c.b16 %v559, %v557
        %v652 = vpack.c.b16 %v560, %v558
        %v653 = vpack.c.b16 %v563, %v561
        %v654 = vpack.c.b16 %v564, %v562
        %v655 = vpack.c.b16 %v567, %v565
        %v656 = vpack.c.b16 %v568, %v566
        %v657 = vpack.c.b16 %v571, %v569
        %v658 = vpack.c.b16 %v572, %v570
        %v659 = vpack.c.b16 %v575, %v573
        %v660 = vpack.c.b16 %v576, %v574
        %v661 = vpack.c.b16 %v579, %v577
        %v662 = vpack.c.b16 %v580, %v578
        %v663 = vpack.c.b16 %v583, %v581
        %v664 = vpack.c.b16 %v584, %v582
        %v665 = vpack.c.b16 %v587, %v585
        %v666 = vpack.c.b16 %v588, %v586
        %v667 = vpack.c.b16 %v591, %v589
        %v668 = vpack.c.b16 %v592, %v590
        %v669 = vpack.c.b16 %v595, %v593
        %v670 = vpack.c.b16 %v596, %v594
        %v671 = vpack.c.b16 %v599, %v597
        %v672 = vpack.c.b16 %v600, %v598
        %v673 = vpack.c.b16 %v603, %v601
        %v674 = vpack.c.b16 %v604, %v602
        %v675 = vpack.c.b16 %v607, %v605
        %v676 = vpack.c.b16 %v608, %v606
        %v677 = vpack.c.b16 %v611, %v609
        %v678 = vpack.c.b16 %v612, %v610
        %v679 = vpack.c.b16 %v615, %v613
        %v680 = vpack.c.b16 %v616, %v614
        %745 = vmatprep.subr.bf16.mxu0 %v632
        %746 = vmatpush1.bf16.msra.mxu0 %v631
        %747 = vmatprep.subr.bf16.mxu0 %v630
        %748 = vmatpush1.bf16.msra.mxu0 %v629
        %749 = vmatprep.subr.bf16.mxu0 %v628
        %750 = vmatpush1.bf16.msra.mxu0 %v627
        %751 = vmatprep.subr.bf16.mxu0 %v626
        %752 = vmatpush1.bf16.msra.mxu0 %v625
        %753 = vmatprep.subr.bf16.mxu0 %v624
        %754 = vmatpush1.bf16.msra.mxu0 %v623
        %755 = vmatprep.subr.bf16.mxu0 %v622
        %756 = vmatpush1.bf16.msra.mxu0 %v621
        %757 = vmatprep.subr.bf16.mxu0 %v620
        %758 = vmatpush1.bf16.msra.mxu0 %v619
        %759 = vmatprep.subr.bf16.mxu0 %v618
        %760 = vmatpush1.bf16.msra.mxu0 %v617
        %761 = vmatprep.subr.bf16.mxu0 %v648
        %762 = vmatpush2.bf16.msra.mxu0 %v647
        %763 = vmatprep.subr.bf16.mxu0 %v646
        %764 = vmatpush2.bf16.msra.mxu0 %v645
        %765 = vmatprep.subr.bf16.mxu0 %v644
        %766 = vmatpush2.bf16.msra.mxu0 %v643
        %767 = vmatprep.subr.bf16.mxu0 %v642
        %768 = vmatpush2.bf16.msra.mxu0 %v641
        %769 = vmatprep.subr.bf16.mxu0 %v640
        %770 = vmatpush2.bf16.msra.mxu0 %v639
        %771 = vmatprep.subr.bf16.mxu0 %v638
        %772 = vmatpush2.bf16.msra.mxu0 %v637
        %773 = vmatprep.subr.bf16.mxu0 %v636
        %774 = vmatpush2.bf16.msra.mxu0 %v635
        %775 = vmatprep.subr.bf16.mxu0 %v634
        %776 = vmatpush2.bf16.msra.mxu0 %v633
        %777 = vmatprep.mubr.bf16.mxu0 %v418
        %778 = vmatmul.mubr.bf16.gmra.mxu0 %v417
        %v779 = vpop.f32.mrf.mxu0
        %v780 = vadd.f32 0.0, %v779
        %v781 = vpop.f32.mrf.mxu0
        %v782 = vadd.f32 0.0, %v781
        %v783 = vpop.f32.mrf.mxu0
        %v784 = vadd.f32 0.0, %v783
        %v785 = vpop.f32.mrf.mxu0
        %v786 = vadd.f32 0.0, %v785
        %787 = vdwg.mxu0
        %788 = vmatprep.subr.bf16.mxu0 %v664
        %789 = vmatpush1.bf16.msra.mxu0 %v663
        %790 = vmatprep.subr.bf16.mxu0 %v662
        %791 = vmatpush1.bf16.msra.mxu0 %v661
        %792 = vmatprep.subr.bf16.mxu0 %v660
        %793 = vmatpush1.bf16.msra.mxu0 %v659
        %794 = vmatprep.subr.bf16.mxu0 %v658
        %795 = vmatpush1.bf16.msra.mxu0 %v657
        %796 = vmatprep.subr.bf16.mxu0 %v656
        %797 = vmatpush1.bf16.msra.mxu0 %v655
        %798 = vmatprep.subr.bf16.mxu0 %v654
        %799 = vmatpush1.bf16.msra.mxu0 %v653
        %800 = vmatprep.subr.bf16.mxu0 %v652
        %801 = vmatpush1.bf16.msra.mxu0 %v651
        %802 = vmatprep.subr.bf16.mxu0 %v650
        %803 = vmatpush1.bf16.msra.mxu0 %v649
        %804 = vmatprep.subr.bf16.mxu0 %v680
        %805 = vmatpush2.bf16.msra.mxu0 %v679
        %806 = vmatprep.subr.bf16.mxu0 %v678
        %807 = vmatpush2.bf16.msra.mxu0 %v677
        %808 = vmatprep.subr.bf16.mxu0 %v676
        %809 = vmatpush2.bf16.msra.mxu0 %v675
        %810 = vmatprep.subr.bf16.mxu0 %v674
        %811 = vmatpush2.bf16.msra.mxu0 %v673
        %812 = vmatprep.subr.bf16.mxu0 %v672
        %813 = vmatpush2.bf16.msra.mxu0 %v671
        %814 = vmatprep.subr.bf16.mxu0 %v670
        %815 = vmatpush2.bf16.msra.mxu0 %v669
        %816 = vmatprep.subr.bf16.mxu0 %v668
        %817 = vmatpush2.bf16.msra.mxu0 %v667
        %818 = vmatprep.subr.bf16.mxu0 %v666
        %819 = vmatpush2.bf16.msra.mxu0 %v665
        %820 = vmatprep.mubr.bf16.mxu0 %v420
        %821 = vmatmul.mubr.bf16.gmra.mxu0 %v419
        %v822 = vpop.f32.mrf.mxu0
        %v823 = vadd.f32 %v780, %v822
        %v824 = vpop.f32.mrf.mxu0
        %v825 = vadd.f32 %v782, %v824
        %v826 = vpop.f32.mrf.mxu0
        %v827 = vadd.f32 %v784, %v826
        %v828 = vpop.f32.mrf.mxu0
        %v829 = vadd.f32 %v786, %v828
        %830 = vdwg.mxu0
        %v831 = vadd.f32 %v333, %v823
        %v832 = vadd.f32 %v334, %v825
        %v833 = vadd.f32 %v335, %v827
        %v834 = vadd.f32 %v336, %v829
        %835 = vst [vmem:[#allocation2] sm:$0xff] %v831
        %836 = vst [vmem:[#allocation2 + $0x8] sm:$0xff] %v832
        %837 = vst [vmem:[#allocation2 + $0x10] sm:$0xff] %v833
        %838 = vst [vmem:[#allocation2 + $0x18] sm:$0xff] %v834
        // Predicated region
        $region41: #{autoencoder_forward.12} parent=31 // pred_check
          %p839 = pneg %p313
        $region42: #{autoencoder_forward.12} parent=31 // pred_check_branch
          %841 = sbr.rel (%p839) target = $region44
        $region43: #{autoencoder_forward.12} parent=31 // pred_region
          %v842 = vld [vmem:[#allocation2] sm:$0xff]
          %v843 = vld [vmem:[#allocation2 + $0x8] sm:$0xff]
          %v844 = vld [vmem:[#allocation2 + $0x10] sm:$0xff]
          %v845 = vld [vmem:[#allocation2 + $0x18] sm:$0xff]
          %v846 = vpack.c.bf16 %v844, %v842
          %v847 = vpack.c.bf16 %v845, %v843
          %v850 = vunpack.c.l.b16 %v846
          %v851 = vunpack.c.l.b16 %v847
          %v852 = vunpack.c.h.b16 %v846
          %v853 = vunpack.c.h.b16 %v847
          %v854 = vpack.c.b16 %v851, %v850
          %v855 = vpack.c.b16 %v853, %v852
          %858 = vst [vmem:[%s285] sm:$0xff] %v854
          %859 = vst [vmem:[%s285 + $0x8] sm:$0xff] %v855
        $region44: #{autoencoder_forward.12} parent=31 // pred_fallthru
          _
        %s860 = sand.u32 %s143, 1
        %s861 = sand.u32 %s143, 1
        %s862 = smul.addr %s861, 16
        %s863 = scalar_lea.vmem [#allocation5], %s862
        // Predicated region
        $region45: #{autoencoder_forward.12} parent=31 // pred_check
          %p864 = pneg %p153
        $region46: #{autoencoder_forward.12} parent=31 // pred_check_branch
          %866 = sbr.rel (%p864) target = $region48
        $region47: #{autoencoder_forward.12} parent=31 // pred_region
          %s867 = smul.u32 2, %s24
          %s868 = smul.u32 2, %s25
          %s869 = smul.addr %s867, 4
          %s870 = sadd.s32 %s868, %s869
          %s871 = smul.addr %s23, 8
          %s872 = sadd.s32 %s870, %s871
          %s873 = smul.addr %s872, 4
          %s874 = scalar_lea.vmem %s3, %s873
          // Predicated region
          $region49: #{autoencoder_forward.12} parent=47 // pred_check
            _
          $region50: #{autoencoder_forward.12} parent=47 // pred_check_branch
            %876 = sbr.rel (0) target = $region52
          $region51: #{autoencoder_forward.12} parent=47 // pred_region
            // Predicated region
            $region53: #{autoencoder_forward.12} parent=51 // pred_check
              _
            $region54: #{autoencoder_forward.12} parent=51 // pred_check_branch
              %878 = sbr.rel (0) target = $region56
            $region55: #{autoencoder_forward.12} parent=51 // pred_region
              // Predicated region
              $region68: #{autoencoder_forward.12} parent=55 // pred_check
                _
              $region69: #{autoencoder_forward.12} parent=55 // pred_check_branch
                %896 = sbr.rel (0) target = $region71
              $region70: #{autoencoder_forward.12} parent=55 // pred_region
                loop: start=0, step=1, limit=1
                $region72: #{autoencoder_forward.12} parent=70 // loop_pre_header
                  _
                $region73: #{autoencoder_forward.12} parent=70 // loop_header
                  %s898 = sphi 0, %s902
                  %p899 = scmp.ge.s32.totalorder %s898, 1
                  %s903 = sphi %s863, %s863
                  %s904 = sphi %s874, %s874
                $region74: #{autoencoder_forward.12} parent=70 // loop_header_branch
                  %901 = sbr.rel (%p899) target = $region78
                $region75: #{autoencoder_forward.12} parent=70 // loop_body
                  %v905 = vld [vmem:[%s903] sm:$0xff]
                  %906 = vst [vmem:[%s904] sm:$0xff] %v905
                  %v907 = vld [vmem:[%s903 + $0x8] sm:$0xff]
                  %908 = vst [vmem:[%s904 + $0x10] sm:$0xff] %v907
                $region76: #{autoencoder_forward.12} parent=70 // loop_footer
                  %s902 = sadd.s32 1, %s898
                $region77: #{autoencoder_forward.12} parent=70 // loop_footer_branch
                  %897 = sbr.rel target = $region73
                $region78: #{autoencoder_forward.12} parent=70 // loop_exit
                  _
              $region71: #{autoencoder_forward.12} parent=55 // pred_fallthru
                _
              // Predicated region
              $region79: #{autoencoder_forward.12} parent=55 // pred_check
                _
              $region80: #{autoencoder_forward.12} parent=55 // pred_check_branch
                %910 = sbr.rel target = $region82
              $region81: #{autoencoder_forward.12} parent=55 // pred_region
                _
              $region82: #{autoencoder_forward.12} parent=55 // pred_fallthru
                _
            $region56: #{autoencoder_forward.12} parent=51 // pred_fallthru
              _
            // Predicated region
            $region57: #{autoencoder_forward.12} parent=51 // pred_check
              _
            $region58: #{autoencoder_forward.12} parent=51 // pred_check_branch
              %880 = sbr.rel target = $region60
            $region59: #{autoencoder_forward.12} parent=51 // pred_region
              %s882 = ssub.s32 256, 1
              loop: start=0, step=1, limit=1
              $region61: #{autoencoder_forward.12} parent=59 // loop_pre_header
                _
              $region62: #{autoencoder_forward.12} parent=59 // loop_header
                %s884 = sphi 0, %s888
                %p885 = scmp.ge.s32.totalorder %s884, 1
                %s889 = sphi %s863, %s863
                %s890 = sphi %s874, %s874
              $region63: #{autoencoder_forward.12} parent=59 // loop_header_branch
                %887 = sbr.rel (%p885) target = $region67
              $region64: #{autoencoder_forward.12} parent=59 // loop_body
                %v891 = vld [vmem:[%s889] sm:%s882]
                %892 = vst [vmem:[%s890] sm:%s882] %v891
                %v893 = vld [vmem:[%s889 + $0x8] sm:%s882]
                %894 = vst [vmem:[%s890 + $0x10] sm:%s882] %v893
              $region65: #{autoencoder_forward.12} parent=59 // loop_footer
                %s888 = sadd.s32 1, %s884
              $region66: #{autoencoder_forward.12} parent=59 // loop_footer_branch
                %883 = sbr.rel target = $region62
              $region67: #{autoencoder_forward.12} parent=59 // loop_exit
                _
            $region60: #{autoencoder_forward.12} parent=51 // pred_fallthru
              _
          $region52: #{autoencoder_forward.12} parent=47 // pred_fallthru
            _
          %911 = vnop
        $region48: #{autoencoder_forward.12} parent=31 // pred_fallthru
          _
      $region32: #{autoencoder_forward.12} parent=5 // pred_fallthru
        _
      %p912 = scmp.le.s32.totalorder 2, %s12
      // Predicated region
      $region83: #{autoencoder_forward.12} parent=5 // pred_check
        %p913 = pneg %p912
      $region84: #{autoencoder_forward.12} parent=5 // pred_check_branch
        %915 = sbr.rel (%p913) target = $region86
      $region85: #{autoencoder_forward.12} parent=5 // pred_region
        %s916 = ssub.s32 %s12, 2
        // Predicated region
        $region87: #{autoencoder_forward.12} parent=85 // pred_check
          %p917 = pneg %p159
        $region88: #{autoencoder_forward.12} parent=85 // pred_check_branch
          %919 = sbr.rel (%p917) target = $region90
        $region89: #{autoencoder_forward.12} parent=85 // pred_region
          %s920 = sand.u32 %s144, 1
          %s921 = sand.u32 %s144, 1
          %s922 = smul.addr %s921, 16
          %s923 = scalar_lea.vmem [#allocation5], %s922
        $region90: #{autoencoder_forward.12} parent=85 // pred_fallthru
          _
      $region86: #{autoencoder_forward.12} parent=5 // pred_fallthru
        _
    $region6: #{autoencoder_forward.12} parent=1 // loop_footer
      %s16 = sadd.s32 1, %s12
    $region7: #{autoencoder_forward.12} parent=1 // loop_footer_branch
      %11 = sbr.rel target = $region3
    $region8: #{autoencoder_forward.12} parent=1 // loop_exit
      _
    %924 = vsyncpa [#allocation4], 1
    %s925 = scalar_lea.sflag [#allocation4], 1
    %926 = vsyncpa %s925, 1

// kernel: autoencoder_forward.10
$region0: #{autoencoder_forward.10}
  #allocation0 [shape = 'u32[]', space=smem, size = 0x4, offset = 0x4, fixed_abs, tag = 'smem constant byte address 0x4 - core index']
  #allocation1 [shape = 'u32[144,128]{1,0:T(1,128)}', space=vmem, size = 0x12000, scoped, tag = 'internal scratch']
  #allocation2 [shape = 'f32[16,256]{1,0:T(8,128)}', space=vmem, size = 0x4000, scoped, tag = 'scratch operand']
  %s0 = inlined_call_operand.vmem [shape: bf16[1,16,128], index: 0, kind: input, shape index: {}]
  %s1 = inlined_call_operand.vmem [shape: bf16[1,1,2,128,256], index: 1, kind: input, shape index: {}]
  %s2 = inlined_call_operand.vmem [shape: f32[1,1,512], index: 2, kind: input, shape index: {}]
  %s3 = inlined_call_operand.vmem [shape: bf16[1,16,512], index: 3, kind: output, shape index: {}]
  %s4 = sld [smem:[#allocation0]]
  $region87: #{autoencoder_forward.10} parent=0
    _
  %s6 = ssub.s32 1, %s4
  %s7 = scalar_select 0, %s6, %s4
  $region1: #{autoencoder_forward.10} parent=0
    #allocation3 [shape = 'u8[16384]{0}', space=vmem, size = 0x4000, scoped, tag = 'output window, operand 0']
    loop: start=0, step=1, limit=4
    $region2: #{autoencoder_forward.10} parent=1 // loop_pre_header
      _
    $region3: #{autoencoder_forward.10} parent=1 // loop_header
      %s9 = sphi 0, %s13
      %p10 = scmp.ge.s32.totalorder %s9, 4
      %s16 = sphi 0, %s42
      %s17 = sphi 0, %s38
      %s18 = sphi 0, %s34
      %s19 = sphi 0, %s30
      %s20 = sphi 0, %s16
      %s21 = sphi 0, %s17
      %s22 = sphi 0, %s18
      %s23 = sphi 0, %s19
      %s24 = sphi 0, %s20
      %s25 = sphi 0, %s21
      %s26 = sphi 0, %s22
      %s27 = sphi 0, %s23
      %s49 = sphi 0, %s51
      %s52 = sphi 0, %s49
      %s53 = sphi 0, %s52
      %s69 = sphi 0, %s53
      %s79 = sphi 0, %s81
      %s82 = sphi 0, %s79
      %s83 = sphi 0, %s82
      %s99 = sphi 0, %s83
      %s107 = sphi 0, %s109
      %s110 = sphi 0, %s107
      %s111 = sphi 0, %s110
      %s127 = sphi 0, %s111
      %s137 = sphi 0, %s139
      %s140 = sphi 0, %s137
      %s141 = sphi 0, %s140
      %s157 = sphi 0, %s141
    $region4: #{autoencoder_forward.10} parent=1 // loop_header_branch
      %12 = sbr.rel (%p10) target = $region8
    $region5: #{autoencoder_forward.10} parent=1 // loop_body
      %s14 = ssub.s32 %s9, 1
      %s15 = ssub.s32 %s9, 2
      %s28 = sadd.s32 1, %s19
      %p29 = scmp.ge.s32.totalorder %s28, 1
      %s30 = scalar_select %p29, 0, %s28
      %s31 = sadd.s32 1, %s18
      %s32 = scalar_select %p29, %s31, %s18
      %p33 = scmp.ge.s32.totalorder %s32, 2
      %s34 = scalar_select %p33, 0, %s32
      %s35 = sadd.s32 1, %s17
      %s36 = scalar_select %p33, %s35, %s17
      %p37 = scmp.ge.s32.totalorder %s36, 1
      %s38 = scalar_select %p37, 0, %s36
      %s39 = sadd.s32 1, %s16
      %s40 = scalar_select %p37, %s39, %s16
      %p41 = scmp.ge.s32.totalorder %s40, 1
      %s42 = scalar_select %p41, 0, %s40
      %s43 = ssub.s32 %s16, %s42
      %s44 = ssub.s32 %s17, %s38
      %s45 = sor.u32 %s43, %s44
      %s46 = ssub.s32 %s19, %s30
      %s47 = sor.u32 %s45, %s46
      %p48 = scmp.eq.s32.totalorder %s47, 0
      %s50 = sadd.s32 %s49, 1
      %s51 = scalar_select %p48, %s49, %s50
      %p54 = pneg %p48
      %p55 = scmp.eq.s32.totalorder %s9, 1
      %p56 = por %p54, %p55
      %p57 = scmp.ne.s32.totalorder %s49, %s52
      %p58 = scmp.eq.s32.totalorder %s9, 0
      %p59 = por %p57, %p58
      %p60 = scmp.ne.s32.totalorder %s49, %s52
      %p61 = scmp.eq.s32.totalorder %s14, 1
      %p62 = por %p60, %p61
      %p63 = scmp.ne.s32.totalorder %s52, %s53
      %p64 = scmp.eq.s32.totalorder %s14, 0
      %p65 = por %p63, %p64
      %p66 = scmp.ne.s32.totalorder %s52, %s53
      %p67 = scmp.eq.s32.totalorder %s15, 1
      %p68 = por %p66, %p67
      %p70 = scmp.ne.s32.totalorder %s53, %s69
      %p71 = scmp.eq.s32.totalorder %s15, 0
      %p72 = por %p70, %p71
      %s73 = ssub.s32 %s16, %s42
      %s74 = ssub.s32 %s19, %s30
      %s75 = sor.u32 %s73, %s74
      %s76 = ssub.s32 %s18, %s34
      %s77 = sor.u32 %s75, %s76
      %p78 = scmp.eq.s32.totalorder %s77, 0
      %s80 = sadd.s32 %s79, 1
      %s81 = scalar_select %p78, %s79, %s80
      %p84 = pneg %p78
      %p85 = scmp.eq.s32.totalorder %s9, 1
      %p86 = por %p84, %p85
      %p87 = scmp.ne.s32.totalorder %s79, %s82
      %p88 = scmp.eq.s32.totalorder %s9, 0
      %p89 = por %p87, %p88
      %p90 = scmp.ne.s32.totalorder %s79, %s82
      %p91 = scmp.eq.s32.totalorder %s14, 1
      %p92 = por %p90, %p91
      %p93 = scmp.ne.s32.totalorder %s82, %s83
      %p94 = scmp.eq.s32.totalorder %s14, 0
      %p95 = por %p93, %p94
      %p96 = scmp.ne.s32.totalorder %s82, %s83
      %p97 = scmp.eq.s32.totalorder %s15, 1
      %p98 = por %p96, %p97
      %p100 = scmp.ne.s32.totalorder %s83, %s99
      %p101 = scmp.eq.s32.totalorder %s15, 0
      %p102 = por %p100, %p101
      %s103 = ssub.s32 %s16, %s42
      %s104 = ssub.s32 %s18, %s34
      %s105 = sor.u32 %s103, %s104
      %p106 = scmp.eq.s32.totalorder %s105, 0
      %s108 = sadd.s32 %s107, 1
      %s109 = scalar_select %p106, %s107, %s108
      %p112 = pneg %p106
      %p113 = scmp.eq.s32.totalorder %s9, 1
      %p114 = por %p112, %p113
      %p115 = scmp.ne.s32.totalorder %s107, %s110
      %p116 = scmp.eq.s32.totalorder %s9, 0
      %p117 = por %p115, %p116
      %p118 = scmp.ne.s32.totalorder %s107, %s110
      %p119 = scmp.eq.s32.totalorder %s14, 1
      %p120 = por %p118, %p119
      %p121 = scmp.ne.s32.totalorder %s110, %s111
      %p122 = scmp.eq.s32.totalorder %s14, 0
      %p123 = por %p121, %p122
      %p124 = scmp.ne.s32.totalorder %s110, %s111
      %p125 = scmp.eq.s32.totalorder %s15, 1
      %p126 = por %p124, %p125
      %p128 = scmp.ne.s32.totalorder %s111, %s127
      %p129 = scmp.eq.s32.totalorder %s15, 0
      %p130 = por %p128, %p129
      %s131 = ssub.s32 %s16, %s42
      %s132 = ssub.s32 %s17, %s38
      %s133 = sor.u32 %s131, %s132
      %s134 = ssub.s32 %s18, %s34
      %s135 = sor.u32 %s133, %s134
      %p136 = scmp.eq.s32.totalorder %s135, 0
      %s138 = sadd.s32 %s137, 1
      %s139 = scalar_select %p136, %s137, %s138
      %p142 = pneg %p136
      %p143 = scmp.eq.s32.totalorder %s9, 1
      %p144 = por %p142, %p143
      %p145 = scmp.ne.s32.totalorder %s137, %s140
      %p146 = scmp.eq.s32.totalorder %s9, 0
      %p147 = por %p145, %p146
      %p148 = scmp.ne.s32.totalorder %s137, %s140
      %p149 = scmp.eq.s32.totalorder %s14, 1
      %p150 = por %p148, %p149
      %p151 = scmp.ne.s32.totalorder %s140, %s141
      %p152 = scmp.eq.s32.totalorder %s14, 0
      %p153 = por %p151, %p152
      %p154 = scmp.ne.s32.totalorder %s140, %s141
      %p155 = scmp.eq.s32.totalorder %s15, 1
      %p156 = por %p154, %p155
      %p158 = scmp.ne.s32.totalorder %s141, %s157
      %p159 = scmp.eq.s32.totalorder %s15, 0
      %p160 = por %p158, %p159
      %p161 = scmp.le.s32.totalorder 1, %s9
      %p162 = scmp.lt.s32.totalorder %s9, 3
      %p163 = pnand %p161, %p162
      %p164 = pneg %p163
      // Predicated region
      $region9: #{autoencoder_forward.10} parent=5 // pred_check
        _
      $region10: #{autoencoder_forward.10} parent=5 // pred_check_branch
        %166 = sbr.rel (%p163) target = $region12
      $region11: #{autoencoder_forward.10} parent=5 // pred_region
        %s167 = ssub.s32 %s9, 1
        // Predicated region
        $region13: #{autoencoder_forward.10} parent=11 // pred_check
          %p168 = pneg %p65
        $region14: #{autoencoder_forward.10} parent=11 // pred_check_branch
          %170 = sbr.rel (%p168) target = $region16
        $region15: #{autoencoder_forward.10} parent=11 // pred_region
          %s171 = smul.u32 2, %s21
          %p172 = scmp.lt.s32.totalorder %s20, 0
          %s173 = scalar_select %p172, %s20, 0
          %p174 = scmp.lt.s32.totalorder %s171, 1
          %s175 = scalar_select %p174, %s171, 1
          %p176 = scmp.lt.s32.totalorder %s23, 0
          %s177 = scalar_select %p176, %s23, 0
          %s178 = sadd.s32 %s177, %s175
          %s179 = smul.addr %s173, 2
          %s180 = sadd.s32 %s178, %s179
          %s181 = smul.addr %s180, 4
          %s182 = scalar_lea.vmem %s0, %s181
          %s183 = smul.u32 2, %s21
        $region16: #{autoencoder_forward.10} parent=11 // pred_fallthru
          _
      $region12: #{autoencoder_forward.10} parent=5 // pred_fallthru
        _
      %p184 = scmp.lt.s32.totalorder %s9, 2
      // Predicated region
      $region17: #{autoencoder_forward.10} parent=5 // pred_check
        %p185 = pneg %p184
      $region18: #{autoencoder_forward.10} parent=5 // pred_check_branch
        %187 = sbr.rel (%p185) target = $region20
      $region19: #{autoencoder_forward.10} parent=5 // pred_region
        // Predicated region
        $region21: #{autoencoder_forward.10} parent=19 // pred_check
          %p188 = pneg %p89
        $region22: #{autoencoder_forward.10} parent=19 // pred_check_branch
          %190 = sbr.rel (%p188) target = $region24
        $region23: #{autoencoder_forward.10} parent=19 // pred_region
          %p191 = scmp.lt.s32.totalorder %s16, 0
          %s192 = scalar_select %p191, %s16, 0
          %p193 = scmp.lt.s32.totalorder %s19, 0
          %s194 = scalar_select %p193, %s19, 0
          %p195 = scmp.lt.s32.totalorder %s18, 1
          %s196 = scalar_select %p195, %s18, 1
          %s197 = smul.addr %s196, 32
          %s198 = smul.addr %s194, 64
          %s199 = sadd.s32 %s197, %s198
          %s200 = smul.addr %s192, 64
          %s201 = sadd.s32 %s199, %s200
          %s202 = smul.addr %s201, 4
          %s203 = scalar_lea.vmem %s1, %s202
        $region24: #{autoencoder_forward.10} parent=19 // pred_fallthru
          _
        // Predicated region
        $region25: #{autoencoder_forward.10} parent=19 // pred_check
          %p204 = pneg %p117
        $region26: #{autoencoder_forward.10} parent=19 // pred_check_branch
          %206 = sbr.rel (%p204) target = $region28
        $region27: #{autoencoder_forward.10} parent=19 // pred_region
          %s207 = smul.u32 2, %s18
          %p208 = scmp.lt.s32.totalorder %s16, 0
          %s209 = scalar_select %p208, %s16, 0
          %p210 = scmp.lt.s32.totalorder %s207, 3
          %s211 = scalar_select %p210, %s207, 3
          %s212 = smul.addr %s209, 4
          %s213 = sadd.s32 %s211, %s212
          %s214 = scalar_lea.vmem %s2, %s213
          %s215 = smul.u32 2, %s18
        $region28: #{autoencoder_forward.10} parent=19 // pred_fallthru
          _
      $region20: #{autoencoder_forward.10} parent=5 // pred_fallthru
        _
      %p216 = scmp.le.s32.totalorder 1, %s9
      %p217 = scmp.lt.s32.totalorder %s9, 3
      %p218 = pnand %p216, %p217
      %p219 = pneg %p218
      // Predicated region
      $region29: #{autoencoder_forward.10} parent=5 // pred_check
        _
      $region30: #{autoencoder_forward.10} parent=5 // pred_check_branch
        %221 = sbr.rel (%p218) target = $region32
      $region31: #{autoencoder_forward.10} parent=5 // pred_region
        %s222 = ssub.s32 %s9, 1
        %s223 = smul.u32 2, %s21
        %p224 = scmp.lt.s32.totalorder %s20, 0
        %s225 = scalar_select %p224, %s20, 0
        %p226 = scmp.lt.s32.totalorder %s223, 1
        %s227 = scalar_select %p226, %s223, 1
        %p228 = scmp.lt.s32.totalorder %s23, 0
        %s229 = scalar_select %p228, %s23, 0
        %s230 = sadd.s32 %s229, %s227
        %s231 = smul.addr %s225, 2
        %s232 = sadd.s32 %s230, %s231
        %s233 = smul.addr %s232, 4
        %s234 = scalar_lea.vmem %s0, %s233
        %p235 = pneg %p65
        %p236 = pneg %p62
        %p237 = scmp.lt.s32.totalorder %s20, 0
        %s238 = scalar_select %p237, %s20, 0
        %p239 = scmp.lt.s32.totalorder %s23, 0
        %s240 = scalar_select %p239, %s23, 0
        %p241 = scmp.lt.s32.totalorder %s22, 1
        %s242 = scalar_select %p241, %s22, 1
        %s243 = smul.addr %s242, 32
        %s244 = smul.addr %s240, 64
        %s245 = sadd.s32 %s243, %s244
        %s246 = smul.addr %s238, 64
        %s247 = sadd.s32 %s245, %s246
        %s248 = smul.addr %s247, 4
        %s249 = scalar_lea.vmem %s1, %s248
        %p250 = pneg %p95
        %p251 = pneg %p92
        %s252 = smul.u32 2, %s22
        %p253 = scmp.lt.s32.totalorder %s20, 0
        %s254 = scalar_select %p253, %s20, 0
        %p255 = scmp.lt.s32.totalorder %s252, 3
        %s256 = scalar_select %p255, %s252, 3
        %s257 = smul.addr %s254, 4
        %s258 = sadd.s32 %s256, %s257
        %s259 = scalar_lea.vmem %s2, %s258
        %p260 = pneg %p123
        %p261 = pneg %p120
        %p262 = pneg %p153
        %p263 = pneg %p150
        %s264 = sand.u32 %s140, 1
        %s265 = sand.u32 %s140, 1
        %s266 = smul.addr %s265, 16
        %s267 = scalar_lea.vmem [#allocation3], %s266
        %s268 = smul.u32 2, %s21
        %p269 = scmp.lt.s32.totalorder %s20, 0
        %s270 = scalar_select %p269, %s20, 0
        %p271 = scmp.lt.s32.totalorder %s268, 1
        %s272 = scalar_select %p271, %s268, 1
        %p273 = scmp.lt.s32.totalorder %s23, 0
        %s274 = scalar_select %p273, %s23, 0
        %s275 = sadd.s32 %s274, %s272
        %s276 = smul.addr %s270, 2
        %s277 = sadd.s32 %s275, %s276
        %s278 = smul.addr %s277, 4
        %s279 = scalar_lea.vmem %s0, %s278
        %s280 = smul.u32 2, %s21
        %p281 = scmp.lt.s32.totalorder %s20, 0
        %s282 = scalar_select %p281, %s20, 0
        %p283 = scmp.lt.s32.totalorder %s23, 0
        %s284 = scalar_select %p283, %s23, 0
        %p285 = scmp.lt.s32.totalorder %s22, 1
        %s286 = scalar_select %p285, %s22, 1
        %s287 = smul.addr %s286, 32
        %s288 = smul.addr %s284, 64
        %s289 = sadd.s32 %s287, %s288
        %s290 = smul.addr %s282, 64
        %s291 = sadd.s32 %s289, %s290
        %s292 = smul.addr %s291, 4
        %s293 = scalar_lea.vmem %s1, %s292
        %s294 = smul.u32 2, %s22
        %p295 = scmp.lt.s32.totalorder %s20, 0
        %s296 = scalar_select %p295, %s20, 0
        %p297 = scmp.lt.s32.totalorder %s294, 3
        %s298 = scalar_select %p297, %s294, 3
        %s299 = smul.addr %s296, 4
        %s300 = sadd.s32 %s298, %s299
        %s301 = scalar_lea.vmem %s2, %s300
        %s302 = smul.u32 2, %s22
        %s303 = smul.u32 2, %s21
        %s304 = smul.u32 2, %s22
        %p306 = scmp.eq.s32.totalorder %s23, 0
        // Predicated region
        $region33: #{autoencoder_forward.10} parent=31 // pred_check
          %p307 = pneg %p306
        $region34: #{autoencoder_forward.10} parent=31 // pred_check_branch
          %309 = sbr.rel (%p307) target = $region36
        $region35: #{autoencoder_forward.10} parent=31 // pred_region
          %v310 = vld [vmem:[%s301] sm:$0x3]
          %v312 = vlaneseq
          %v313 = vshrl.u32 %v312, 7
          %v314 = vsub.s32 0, %v313
          %v315 = vrot.slane %v310, %v314
          %v316 = vlaneseq
          %v317 = vshrl.u32 %v316, 7
          %v318 = vsub.s32 1, %v317
          %v319 = vrot.slane %v310, %v318
          %322 = vst [vmem:[#allocation2] sm:$0xff] %v315
          %323 = vst [vmem:[#allocation2 + $0x8] sm:$0xff] %v319
          %324 = vst [vmem:[#allocation2 + $0x10] sm:$0xff] %v315
          %325 = vst [vmem:[#allocation2 + $0x18] sm:$0xff] %v319
        $region36: #{autoencoder_forward.10} parent=31 // pred_fallthru
          _
        %v326 = vld [vmem:[#allocation2] sm:$0xff]
        %v327 = vld [vmem:[#allocation2 + $0x8] sm:$0xff]
        %v328 = vld [vmem:[#allocation2 + $0x10] sm:$0xff]
        %v329 = vld [vmem:[#allocation2 + $0x18] sm:$0xff]
        %v330 = vld [vmem:[%s279] sm:$0xf]
        %v331 = vld [vmem:[%s279 + $0x4] sm:$0xf]
        %v332 = vld [vmem:[%s293] sm:$0xff]
        %v333 = vld [vmem:[%s293 + $0x8] sm:$0xff]
        %v334 = vld [vmem:[%s293 + $0x10] sm:$0xff]
        %v335 = vld [vmem:[%s293 + $0x18] sm:$0xff]
        %v336 = vld [vmem:[%s293 + $0x20] sm:$0xff]
        %v337 = vld [vmem:[%s293 + $0x28] sm:$0xff]
        %v338 = vld [vmem:[%s293 + $0x30] sm:$0xff]
        %v339 = vld [vmem:[%s293 + $0x38] sm:$0xff]
        %v340 = vld [vmem:[%s293 + $0x40] sm:$0xff]
        %v341 = vld [vmem:[%s293 + $0x48] sm:$0xff]
        %v342 = vld [vmem:[%s293 + $0x50] sm:$0xff]
        %v343 = vld [vmem:[%s293 + $0x58] sm:$0xff]
        %v344 = vld [vmem:[%s293 + $0x60] sm:$0xff]
        %v345 = vld [vmem:[%s293 + $0x68] sm:$0xff]
        %v346 = vld [vmem:[%s293 + $0x70] sm:$0xff]
        %v347 = vld [vmem:[%s293 + $0x78] sm:$0xff]
        %v350 = vunpack.c.l.b16 %v330
        %v351 = vunpack.c.l.b16 %v331
        %v352 = vpack.c.b16 %v351, %v350
        %v370 = vunpack.c.l.b16 %v332
        %v371 = vunpack.c.h.b16 %v332
        %v372 = vunpack.c.l.b16 %v333
        %v373 = vunpack.c.h.b16 %v333
        %v374 = vunpack.c.l.b16 %v334
        %v375 = vunpack.c.h.b16 %v334
        %v376 = vunpack.c.l.b16 %v335
        %v377 = vunpack.c.h.b16 %v335
        %v378 = vunpack.c.l.b16 %v336
        %v379 = vunpack.c.h.b16 %v336
        %v380 = vunpack.c.l.b16 %v337
        %v381 = vunpack.c.h.b16 %v337
        %v382 = vunpack.c.l.b16 %v338
        %v383 = vunpack.c.h.b16 %v338
        %v384 = vunpack.c.l.b16 %v339
        %v385 = vunpack.c.h.b16 %v339
        %v386 = vunpack.c.l.b16 %v340
        %v387 = vunpack.c.h.b16 %v340
        %v388 = vunpack.c.l.b16 %v341
        %v389 = vunpack.c.h.b16 %v341
        %v390 = vunpack.c.l.b16 %v342
        %v391 = vunpack.c.h.b16 %v342
        %v392 = vunpack.c.l.b16 %v343
        %v393 = vunpack.c.h.b16 %v343
        %v394 = vunpack.c.l.b16 %v344
        %v395 = vunpack.c.h.b16 %v344
        %v396 = vunpack.c.l.b16 %v345
        %v397 = vunpack.c.h.b16 %v345
        %v398 = vunpack.c.l.b16 %v346
        %v399 = vunpack.c.h.b16 %v346
        %v400 = vunpack.c.l.b16 %v347
        %v401 = vunpack.c.h.b16 %v347
        %v402 = vpack.c.b16 %v372, %v370
        %v403 = vpack.c.b16 %v373, %v371
        %v404 = vpack.c.b16 %v376, %v374
        %v405 = vpack.c.b16 %v377, %v375
        %v406 = vpack.c.b16 %v380, %v378
        %v407 = vpack.c.b16 %v381, %v379
        %v408 = vpack.c.b16 %v384, %v382
        %v409 = vpack.c.b16 %v385, %v383
        %v410 = vpack.c.b16 %v388, %v386
        %v411 = vpack.c.b16 %v389, %v387
        %v412 = vpack.c.b16 %v392, %v390
        %v413 = vpack.c.b16 %v393, %v391
        %v414 = vpack.c.b16 %v396, %v394
        %v415 = vpack.c.b16 %v397, %v395
        %v416 = vpack.c.b16 %v400, %v398
        %v417 = vpack.c.b16 %v401, %v399
        %434 = vmatprep.subr.bf16.mxu0 %v417
        %435 = vmatpush1.bf16.msra.mxu0 %v416
        %436 = vmatprep.subr.bf16.mxu0 %v415
        %437 = vmatpush1.bf16.msra.mxu0 %v414
        %438 = vmatprep.subr.bf16.mxu0 %v413
        %439 = vmatpush1.bf16.msra.mxu0 %v412
        %440 = vmatprep.subr.bf16.mxu0 %v411
        %441 = vmatpush1.bf16.msra.mxu0 %v410
        %442 = vmatprep.subr.bf16.mxu0 %v409
        %443 = vmatpush1.bf16.msra.mxu0 %v408
        %444 = vmatprep.subr.bf16.mxu0 %v407
        %445 = vmatpush1.bf16.msra.mxu0 %v406
        %446 = vmatprep.subr.bf16.mxu0 %v405
        %447 = vmatpush1.bf16.msra.mxu0 %v404
        %448 = vmatprep.subr.bf16.mxu0 %v403
        %449 = vmatpush1.bf16.msra.mxu0 %v402
        %450 = vmatprep.subr.bf16.mxu0 0
        %451 = vmatpush2.bf16.msra.mxu0 0
        %452 = vmatprep.subr.bf16.mxu0 0
        %453 = vmatpush2.bf16.msra.mxu0 0
        %454 = vmatprep.subr.bf16.mxu0 0
        %455 = vmatpush2.bf16.msra.mxu0 0
        %456 = vmatprep.subr.bf16.mxu0 0
        %457 = vmatpush2.bf16.msra.mxu0 0
        %458 = vmatprep.subr.bf16.mxu0 0
        %459 = vmatpush2.bf16.msra.mxu0 0
        %460 = vmatprep.subr.bf16.mxu0 0
        %461 = vmatpush2.bf16.msra.mxu0 0
        %462 = vmatprep.subr.bf16.mxu0 0
        %463 = vmatpush2.bf16.msra.mxu0 0
        %464 = vmatprep.subr.bf16.mxu0 0
        %465 = vmatpush2.bf16.msra.mxu0 0
        %466 = vmatprep.mubr.bf16.mxu0 0
        %467 = vmatmul.mubr.bf16.gmra.mxu0 %v352
        %v468 = vpop.f32.mrf.mxu0
        %v469 = vadd.f32 0.0, %v468
        %v470 = vpop.f32.mrf.mxu0
        %v471 = vadd.f32 0.0, %v470
        %v472 = vpop.f32.mrf.mxu0
        %v473 = vadd.f32 0.0, %v472
        %v474 = vpop.f32.mrf.mxu0
        %v475 = vadd.f32 0.0, %v474
        %476 = vdwg.mxu0
        %v477 = vadd.f32 %v326, %v469
        %v478 = vadd.f32 %v327, %v471
        %v479 = vadd.f32 %v328, %v473
        %v480 = vadd.f32 %v329, %v475
        %481 = vst [vmem:[#allocation2] sm:$0xff] %v477
        %482 = vst [vmem:[#allocation2 + $0x8] sm:$0xff] %v478
        %483 = vst [vmem:[#allocation2 + $0x10] sm:$0xff] %v479
        %484 = vst [vmem:[#allocation2 + $0x18] sm:$0xff] %v480
        // Predicated region
        $region37: #{autoencoder_forward.10} parent=31 // pred_check
          %p485 = pneg %p306
        $region38: #{autoencoder_forward.10} parent=31 // pred_check_branch
          %487 = sbr.rel (%p485) target = $region40
        $region39: #{autoencoder_forward.10} parent=31 // pred_region
          %v488 = vld [vmem:[#allocation2] sm:$0xff]
          %v489 = vld [vmem:[#allocation2 + $0x8] sm:$0xff]
          %v490 = vld [vmem:[#allocation2 + $0x10] sm:$0xff]
          %v491 = vld [vmem:[#allocation2 + $0x18] sm:$0xff]
          %v492 = vpack.c.bf16 %v490, %v488
          %v493 = vpack.c.bf16 %v491, %v489
          %v496 = vunpack.c.l.b16 %v492
          %v497 = vunpack.c.l.b16 %v493
          %v498 = vunpack.c.h.b16 %v492
          %v499 = vunpack.c.h.b16 %v493
          %v500 = vpack.c.b16 %v497, %v496
          %v501 = vpack.c.b16 %v499, %v498
          %504 = vst [vmem:[%s267] sm:$0xff] %v500
          %505 = vst [vmem:[%s267 + $0x8] sm:$0xff] %v501
        $region40: #{autoencoder_forward.10} parent=31 // pred_fallthru
          _
        %s506 = sand.u32 %s140, 1
        %s507 = sand.u32 %s140, 1
        %s508 = smul.addr %s507, 16
        %s509 = scalar_lea.vmem [#allocation3], %s508
        // Predicated region
        $region41: #{autoencoder_forward.10} parent=31 // pred_check
          %p510 = pneg %p150
        $region42: #{autoencoder_forward.10} parent=31 // pred_check_branch
          %512 = sbr.rel (%p510) target = $region44
        $region43: #{autoencoder_forward.10} parent=31 // pred_region
          %s513 = smul.u32 2, %s21
          %s514 = smul.u32 2, %s22
          %s515 = smul.addr %s513, 4
          %s516 = sadd.s32 %s514, %s515
          %s517 = smul.addr %s20, 8
          %s518 = sadd.s32 %s516, %s517
          %s519 = smul.addr %s518, 4
          %s520 = scalar_lea.vmem %s3, %s519
          // Predicated region
          $region45: #{autoencoder_forward.10} parent=43 // pred_check
            _
          $region46: #{autoencoder_forward.10} parent=43 // pred_check_branch
            %522 = sbr.rel (0) target = $region48
          $region47: #{autoencoder_forward.10} parent=43 // pred_region
            // Predicated region
            $region49: #{autoencoder_forward.10} parent=47 // pred_check
              _
            $region50: #{autoencoder_forward.10} parent=47 // pred_check_branch
              %524 = sbr.rel (0) target = $region52
            $region51: #{autoencoder_forward.10} parent=47 // pred_region
              // Predicated region
              $region64: #{autoencoder_forward.10} parent=51 // pred_check
                _
              $region65: #{autoencoder_forward.10} parent=51 // pred_check_branch
                %542 = sbr.rel (0) target = $region67
              $region66: #{autoencoder_forward.10} parent=51 // pred_region
                loop: start=0, step=1, limit=1
                $region68: #{autoencoder_forward.10} parent=66 // loop_pre_header
                  _
                $region69: #{autoencoder_forward.10} parent=66 // loop_header
                  %s544 = sphi 0, %s548
                  %p545 = scmp.ge.s32.totalorder %s544, 1
                  %s549 = sphi %s509, %s509
                  %s550 = sphi %s520, %s520
                $region70: #{autoencoder_forward.10} parent=66 // loop_header_branch
                  %547 = sbr.rel (%p545) target = $region74
                $region71: #{autoencoder_forward.10} parent=66 // loop_body
                  %v551 = vld [vmem:[%s549] sm:$0xff]
                  %552 = vst [vmem:[%s550] sm:$0xff] %v551
                  %v553 = vld [vmem:[%s549 + $0x8] sm:$0xff]
                  %554 = vst [vmem:[%s550 + $0x10] sm:$0xff] %v553
                $region72: #{autoencoder_forward.10} parent=66 // loop_footer
                  %s548 = sadd.s32 1, %s544
                $region73: #{autoencoder_forward.10} parent=66 // loop_footer_branch
                  %543 = sbr.rel target = $region69
                $region74: #{autoencoder_forward.10} parent=66 // loop_exit
                  _
              $region67: #{autoencoder_forward.10} parent=51 // pred_fallthru
                _
              // Predicated region
              $region75: #{autoencoder_forward.10} parent=51 // pred_check
                _
              $region76: #{autoencoder_forward.10} parent=51 // pred_check_branch
                %556 = sbr.rel target = $region78
              $region77: #{autoencoder_forward.10} parent=51 // pred_region
                _
              $region78: #{autoencoder_forward.10} parent=51 // pred_fallthru
                _
            $region52: #{autoencoder_forward.10} parent=47 // pred_fallthru
              _
            // Predicated region
            $region53: #{autoencoder_forward.10} parent=47 // pred_check
              _
            $region54: #{autoencoder_forward.10} parent=47 // pred_check_branch
              %526 = sbr.rel target = $region56
            $region55: #{autoencoder_forward.10} parent=47 // pred_region
              %s528 = ssub.s32 256, 1
              loop: start=0, step=1, limit=1
              $region57: #{autoencoder_forward.10} parent=55 // loop_pre_header
                _
              $region58: #{autoencoder_forward.10} parent=55 // loop_header
                %s530 = sphi 0, %s534
                %p531 = scmp.ge.s32.totalorder %s530, 1
                %s535 = sphi %s509, %s509
                %s536 = sphi %s520, %s520
              $region59: #{autoencoder_forward.10} parent=55 // loop_header_branch
                %533 = sbr.rel (%p531) target = $region63
              $region60: #{autoencoder_forward.10} parent=55 // loop_body
                %v537 = vld [vmem:[%s535] sm:%s528]
                %538 = vst [vmem:[%s536] sm:%s528] %v537
                %v539 = vld [vmem:[%s535 + $0x8] sm:%s528]
                %540 = vst [vmem:[%s536 + $0x10] sm:%s528] %v539
              $region61: #{autoencoder_forward.10} parent=55 // loop_footer
                %s534 = sadd.s32 1, %s530
              $region62: #{autoencoder_forward.10} parent=55 // loop_footer_branch
                %529 = sbr.rel target = $region58
              $region63: #{autoencoder_forward.10} parent=55 // loop_exit
                _
            $region56: #{autoencoder_forward.10} parent=47 // pred_fallthru
              _
          $region48: #{autoencoder_forward.10} parent=43 // pred_fallthru
            _
          %557 = vnop
        $region44: #{autoencoder_forward.10} parent=31 // pred_fallthru
          _
      $region32: #{autoencoder_forward.10} parent=5 // pred_fallthru
        _
      %p558 = scmp.le.s32.totalorder 2, %s9
      // Predicated region
      $region79: #{autoencoder_forward.10} parent=5 // pred_check
        %p559 = pneg %p558
      $region80: #{autoencoder_forward.10} parent=5 // pred_check_branch
        %561 = sbr.rel (%p559) target = $region82
      $region81: #{autoencoder_forward.10} parent=5 // pred_region
        %s562 = ssub.s32 %s9, 2
        // Predicated region
        $region83: #{autoencoder_forward.10} parent=81 // pred_check
          %p563 = pneg %p156
        $region84: #{autoencoder_forward.10} parent=81 // pred_check_branch
          %565 = sbr.rel (%p563) target = $region86
        $region85: #{autoencoder_forward.10} parent=81 // pred_region
          %s566 = sand.u32 %s141, 1
          %s567 = sand.u32 %s141, 1
          %s568 = smul.addr %s567, 16
          %s569 = scalar_lea.vmem [#allocation3], %s568
        $region86: #{autoencoder_forward.10} parent=81 // pred_fallthru
          _
      $region82: #{autoencoder_forward.10} parent=5 // pred_fallthru
        _
    $region6: #{autoencoder_forward.10} parent=1 // loop_footer
      %s13 = sadd.s32 1, %s9
    $region7: #{autoencoder_forward.10} parent=1 // loop_footer_branch
      %8 = sbr.rel target = $region3
    $region8: #{autoencoder_forward.10} parent=1 // loop_exit
      _

// kernel: autoencoder_forward.13
$region0: #{autoencoder_forward.13}
  #allocation0 [shape = 'u32[]', space=smem, size = 0x4, offset = 0x4, fixed_abs, tag = 'smem constant byte address 0x4 - core index']
  #allocation1 [shape = 'u32[144,128]{1,0:T(1,128)}', space=vmem, size = 0x12000, scoped, tag = 'internal scratch']
  #allocation2 [shape = 'f32[16,128]{1,0:T(8,128)}', space=vmem, size = 0x2000, scoped, tag = 'scratch operand']
  %s0 = inlined_call_operand.vmem [shape: bf16[3,16,512], index: 0, kind: input, shape index: {}]
  %s1 = inlined_call_operand.vmem [shape: bf16[3,1,2,512,128], index: 1, kind: input, shape index: {}]
  %s2 = inlined_call_operand.vmem [shape: f32[3,1,256], index: 2, kind: input, shape index: {}]
  %s3 = inlined_call_operand.vmem [shape: bf16[3,16,256], index: 3, kind: output, shape index: {}]
  %s4 = sld [smem:[#allocation0]]
  $region90: #{autoencoder_forward.13} parent=0
    _
  %s6 = ssub.s32 1, %s4
  %s7 = scalar_select 0, %s6, %s4
  $region1: #{autoencoder_forward.13} parent=0
    #allocation3 [shape = 'u8[8192]{0}', space=vmem, size = 0x2000, scoped, tag = 'output window, operand 0']
    loop: start=0, step=1, limit=8
    $region2: #{autoencoder_forward.13} parent=1 // loop_pre_header
      _
    $region3: #{autoencoder_forward.13} parent=1 // loop_header
      %s9 = sphi 0, %s13
      %p10 = scmp.ge.s32.totalorder %s9, 8
      %s16 = sphi 0, %s42
      %s17 = sphi 0, %s38
      %s18 = sphi 0, %s34
      %s19 = sphi 0, %s30
      %s20 = sphi 0, %s16
      %s21 = sphi 0, %s17
      %s22 = sphi 0, %s18
      %s23 = sphi 0, %s19
      %s24 = sphi 0, %s20
      %s25 = sphi 0, %s21
      %s26 = sphi 0, %s22
      %s27 = sphi 0, %s23
      %s49 = sphi 0, %s51
      %s52 = sphi 0, %s49
      %s53 = sphi 0, %s52
      %s69 = sphi 0, %s53
      %s79 = sphi 0, %s81
      %s82 = sphi 0, %s79
      %s83 = sphi 0, %s82
      %s99 = sphi 0, %s83
      %s107 = sphi 0, %s109
      %s110 = sphi 0, %s107
      %s111 = sphi 0, %s110
      %s127 = sphi 0, %s111
      %s137 = sphi 0, %s139
      %s140 = sphi 0, %s137
      %s141 = sphi 0, %s140
      %s157 = sphi 0, %s141
    $region4: #{autoencoder_forward.13} parent=1 // loop_header_branch
      %12 = sbr.rel (%p10) target = $region8
    $region5: #{autoencoder_forward.13} parent=1 // loop_body
      %s14 = ssub.s32 %s9, 1
      %s15 = ssub.s32 %s9, 2
      %s28 = sadd.s32 1, %s19
      %p29 = scmp.ge.s32.totalorder %s28, 1
      %s30 = scalar_select %p29, 0, %s28
      %s31 = sadd.s32 1, %s18
      %s32 = scalar_select %p29, %s31, %s18
      %p33 = scmp.ge.s32.totalorder %s32, 2
      %s34 = scalar_select %p33, 0, %s32
      %s35 = sadd.s32 1, %s17
      %s36 = scalar_select %p33, %s35, %s17
      %p37 = scmp.ge.s32.totalorder %s36, 1
      %s38 = scalar_select %p37, 0, %s36
      %s39 = sadd.s32 1, %s16
      %s40 = scalar_select %p37, %s39, %s16
      %p41 = scmp.ge.s32.totalorder %s40, 3
      %s42 = scalar_select %p41, 0, %s40
      %s43 = ssub.s32 %s16, %s42
      %s44 = ssub.s32 %s17, %s38
      %s45 = sor.u32 %s43, %s44
      %s46 = ssub.s32 %s19, %s30
      %s47 = sor.u32 %s45, %s46
      %p48 = scmp.eq.s32.totalorder %s47, 0
      %s50 = sadd.s32 %s49, 1
      %s51 = scalar_select %p48, %s49, %s50
      %p54 = pneg %p48
      %p55 = scmp.eq.s32.totalorder %s9, 5
      %p56 = por %p54, %p55
      %p57 = scmp.ne.s32.totalorder %s49, %s52
      %p58 = scmp.eq.s32.totalorder %s9, 0
      %p59 = por %p57, %p58
      %p60 = scmp.ne.s32.totalorder %s49, %s52
      %p61 = scmp.eq.s32.totalorder %s14, 5
      %p62 = por %p60, %p61
      %p63 = scmp.ne.s32.totalorder %s52, %s53
      %p64 = scmp.eq.s32.totalorder %s14, 0
      %p65 = por %p63, %p64
      %p66 = scmp.ne.s32.totalorder %s52, %s53
      %p67 = scmp.eq.s32.totalorder %s15, 5
      %p68 = por %p66, %p67
      %p70 = scmp.ne.s32.totalorder %s53, %s69
      %p71 = scmp.eq.s32.totalorder %s15, 0
      %p72 = por %p70, %p71
      %s73 = ssub.s32 %s16, %s42
      %s74 = ssub.s32 %s19, %s30
      %s75 = sor.u32 %s73, %s74
      %s76 = ssub.s32 %s18, %s34
      %s77 = sor.u32 %s75, %s76
      %p78 = scmp.eq.s32.totalorder %s77, 0
      %s80 = sadd.s32 %s79, 1
      %s81 = scalar_select %p78, %s79, %s80
      %p84 = pneg %p78
      %p85 = scmp.eq.s32.totalorder %s9, 5
      %p86 = por %p84, %p85
      %p87 = scmp.ne.s32.totalorder %s79, %s82
      %p88 = scmp.eq.s32.totalorder %s9, 0
      %p89 = por %p87, %p88
      %p90 = scmp.ne.s32.totalorder %s79, %s82
      %p91 = scmp.eq.s32.totalorder %s14, 5
      %p92 = por %p90, %p91
      %p93 = scmp.ne.s32.totalorder %s82, %s83
      %p94 = scmp.eq.s32.totalorder %s14, 0
      %p95 = por %p93, %p94
      %p96 = scmp.ne.s32.totalorder %s82, %s83
      %p97 = scmp.eq.s32.totalorder %s15, 5
      %p98 = por %p96, %p97
      %p100 = scmp.ne.s32.totalorder %s83, %s99
      %p101 = scmp.eq.s32.totalorder %s15, 0
      %p102 = por %p100, %p101
      %s103 = ssub.s32 %s16, %s42
      %s104 = ssub.s32 %s18, %s34
      %s105 = sor.u32 %s103, %s104
      %p106 = scmp.eq.s32.totalorder %s105, 0
      %s108 = sadd.s32 %s107, 1
      %s109 = scalar_select %p106, %s107, %s108
      %p112 = pneg %p106
      %p113 = scmp.eq.s32.totalorder %s9, 5
      %p114 = por %p112, %p113
      %p115 = scmp.ne.s32.totalorder %s107, %s110
      %p116 = scmp.eq.s32.totalorder %s9, 0
      %p117 = por %p115, %p116
      %p118 = scmp.ne.s32.totalorder %s107, %s110
      %p119 = scmp.eq.s32.totalorder %s14, 5
      %p120 = por %p118, %p119
      %p121 = scmp.ne.s32.totalorder %s110, %s111
      %p122 = scmp.eq.s32.totalorder %s14, 0
      %p123 = por %p121, %p122
      %p124 = scmp.ne.s32.totalorder %s110, %s111
      %p125 = scmp.eq.s32.totalorder %s15, 5
      %p126 = por %p124, %p125
      %p128 = scmp.ne.s32.totalorder %s111, %s127
      %p129 = scmp.eq.s32.totalorder %s15, 0
      %p130 = por %p128, %p129
      %s131 = ssub.s32 %s16, %s42
      %s132 = ssub.s32 %s17, %s38
      %s133 = sor.u32 %s131, %s132
      %s134 = ssub.s32 %s18, %s34
      %s135 = sor.u32 %s133, %s134
      %p136 = scmp.eq.s32.totalorder %s135, 0
      %s138 = sadd.s32 %s137, 1
      %s139 = scalar_select %p136, %s137, %s138
      %p142 = pneg %p136
      %p143 = scmp.eq.s32.totalorder %s9, 5
      %p144 = por %p142, %p143
      %p145 = scmp.ne.s32.totalorder %s137, %s140
      %p146 = scmp.eq.s32.totalorder %s9, 0
      %p147 = por %p145, %p146
      %p148 = scmp.ne.s32.totalorder %s137, %s140
      %p149 = scmp.eq.s32.totalorder %s14, 5
      %p150 = por %p148, %p149
      %p151 = scmp.ne.s32.totalorder %s140, %s141
      %p152 = scmp.eq.s32.totalorder %s14, 0
      %p153 = por %p151, %p152
      %p154 = scmp.ne.s32.totalorder %s140, %s141
      %p155 = scmp.eq.s32.totalorder %s15, 5
      %p156 = por %p154, %p155
      %p158 = scmp.ne.s32.totalorder %s141, %s157
      %p159 = scmp.eq.s32.totalorder %s15, 0
      %p160 = por %p158, %p159
      %p161 = scmp.le.s32.totalorder 1, %s9
      %p162 = scmp.lt.s32.totalorder %s9, 7
      %p163 = pnand %p161, %p162
      %p164 = pneg %p163
      // Predicated region
      $region9: #{autoencoder_forward.13} parent=5 // pred_check
        _
      $region10: #{autoencoder_forward.13} parent=5 // pred_check_branch
        %166 = sbr.rel (%p163) target = $region12
      $region11: #{autoencoder_forward.13} parent=5 // pred_region
        %s167 = ssub.s32 %s9, 1
      $region12: #{autoencoder_forward.13} parent=5 // pred_fallthru
        _
      %p168 = scmp.lt.s32.totalorder %s9, 6
      // Predicated region
      $region13: #{autoencoder_forward.13} parent=5 // pred_check
        %p169 = pneg %p168
      $region14: #{autoencoder_forward.13} parent=5 // pred_check_branch
        %171 = sbr.rel (%p169) target = $region16
      $region15: #{autoencoder_forward.13} parent=5 // pred_region
        // Predicated region
        $region17: #{autoencoder_forward.13} parent=15 // pred_check
          %p172 = pneg %p59
        $region18: #{autoencoder_forward.13} parent=15 // pred_check_branch
          %174 = sbr.rel (%p172) target = $region20
        $region19: #{autoencoder_forward.13} parent=15 // pred_region
          %s175 = smul.u32 2, %s17
          %s176 = smul.u32 4, %s19
          %p177 = scmp.lt.s32.totalorder %s16, 2
          %s178 = scalar_select %p177, %s16, 2
          %p179 = scmp.lt.s32.totalorder %s175, 1
          %s180 = scalar_select %p179, %s175, 1
          %p181 = scmp.lt.s32.totalorder %s176, 3
          %s182 = scalar_select %p181, %s176, 3
          %s183 = smul.addr %s180, 4
          %s184 = sadd.s32 %s182, %s183
          %s185 = smul.addr %s178, 8
          %s186 = sadd.s32 %s184, %s185
          %s187 = smul.addr %s186, 4
          %s188 = scalar_lea.vmem %s0, %s187
          %s189 = smul.u32 2, %s17
          %s190 = smul.u32 4, %s19
        $region20: #{autoencoder_forward.13} parent=15 // pred_fallthru
          _
        // Predicated region
        $region21: #{autoencoder_forward.13} parent=15 // pred_check
          %p191 = pneg %p89
        $region22: #{autoencoder_forward.13} parent=15 // pred_check_branch
          %193 = sbr.rel (%p191) target = $region24
        $region23: #{autoencoder_forward.13} parent=15 // pred_region
          %p194 = scmp.lt.s32.totalorder %s16, 2
          %s195 = scalar_select %p194, %s16, 2
          %p196 = scmp.lt.s32.totalorder %s19, 0
          %s197 = scalar_select %p196, %s19, 0
          %p198 = scmp.lt.s32.totalorder %s18, 1
          %s199 = scalar_select %p198, %s18, 1
          %s200 = smul.addr %s199, 64
          %s201 = smul.addr %s197, 128
          %s202 = sadd.s32 %s200, %s201
          %s203 = smul.addr %s195, 128
          %s204 = sadd.s32 %s202, %s203
          %s205 = smul.addr %s204, 4
          %s206 = scalar_lea.vmem %s1, %s205
        $region24: #{autoencoder_forward.13} parent=15 // pred_fallthru
          _
        // Predicated region
        $region25: #{autoencoder_forward.13} parent=15 // pred_check
          %p207 = pneg %p117
        $region26: #{autoencoder_forward.13} parent=15 // pred_check_branch
          %209 = sbr.rel (%p207) target = $region28
        $region27: #{autoencoder_forward.13} parent=15 // pred_region
          %p210 = scmp.lt.s32.totalorder %s16, 2
          %s211 = scalar_select %p210, %s16, 2
          %p212 = scmp.lt.s32.totalorder %s18, 1
          %s213 = scalar_select %p212, %s18, 1
          %s214 = smul.addr %s211, 2
          %s215 = sadd.s32 %s213, %s214
          %s216 = scalar_lea.vmem %s2, %s215
        $region28: #{autoencoder_forward.13} parent=15 // pred_fallthru
          _
      $region16: #{autoencoder_forward.13} parent=5 // pred_fallthru
        _
      %p217 = scmp.le.s32.totalorder 1, %s9
      %p218 = scmp.lt.s32.totalorder %s9, 7
      %p219 = pnand %p217, %p218
      %p220 = pneg %p219
      // Predicated region
      $region29: #{autoencoder_forward.13} parent=5 // pred_check
        _
      $region30: #{autoencoder_forward.13} parent=5 // pred_check_branch
        %222 = sbr.rel (%p219) target = $region32
      $region31: #{autoencoder_forward.13} parent=5 // pred_region
        %s223 = ssub.s32 %s9, 1
        %s224 = smul.u32 2, %s21
        %s225 = smul.u32 4, %s23
        %p226 = scmp.lt.s32.totalorder %s20, 2
        %s227 = scalar_select %p226, %s20, 2
        %p228 = scmp.lt.s32.totalorder %s224, 1
        %s229 = scalar_select %p228, %s224, 1
        %p230 = scmp.lt.s32.totalorder %s225, 3
        %s231 = scalar_select %p230, %s225, 3
        %s232 = smul.addr %s229, 4
        %s233 = sadd.s32 %s231, %s232
        %s234 = smul.addr %s227, 8
        %s235 = sadd.s32 %s233, %s234
        %s236 = smul.addr %s235, 4
        %s237 = scalar_lea.vmem %s0, %s236
        %p238 = pneg %p65
        %p239 = pneg %p62
        %p240 = scmp.lt.s32.totalorder %s20, 2
        %s241 = scalar_select %p240, %s20, 2
        %p242 = scmp.lt.s32.totalorder %s23, 0
        %s243 = scalar_select %p242, %s23, 0
        %p244 = scmp.lt.s32.totalorder %s22, 1
        %s245 = scalar_select %p244, %s22, 1
        %s246 = smul.addr %s245, 64
        %s247 = smul.addr %s243, 128
        %s248 = sadd.s32 %s246, %s247
        %s249 = smul.addr %s241, 128
        %s250 = sadd.s32 %s248, %s249
        %s251 = smul.addr %s250, 4
        %s252 = scalar_lea.vmem %s1, %s251
        %p253 = pneg %p95
        %p254 = pneg %p92
        %p255 = scmp.lt.s32.totalorder %s20, 2
        %s256 = scalar_select %p255, %s20, 2
        %p257 = scmp.lt.s32.totalorder %s22, 1
        %s258 = scalar_select %p257, %s22, 1
        %s259 = smul.addr %s256, 2
        %s260 = sadd.s32 %s258, %s259
        %s261 = scalar_lea.vmem %s2, %s260
        %p262 = pneg %p123
        %p263 = pneg %p120
        %p264 = pneg %p153
        %p265 = pneg %p150
        %s266 = sand.u32 %s140, 1
        %s267 = sand.u32 %s140, 1
        %s268 = smul.addr %s267, 8
        %s269 = scalar_lea.vmem [#allocation3], %s268
        %s270 = smul.u32 2, %s21
        %s271 = smul.u32 4, %s23
        %p272 = scmp.lt.s32.totalorder %s20, 2
        %s273 = scalar_select %p272, %s20, 2
        %p274 = scmp.lt.s32.totalorder %s270, 1
        %s275 = scalar_select %p274, %s270, 1
        %p276 = scmp.lt.s32.totalorder %s271, 3
        %s277 = scalar_select %p276, %s271, 3
        %s278 = smul.addr %s275, 4
        %s279 = sadd.s32 %s277, %s278
        %s280 = smul.addr %s273, 8
        %s281 = sadd.s32 %s279, %s280
        %s282 = smul.addr %s281, 4
        %s283 = scalar_lea.vmem %s0, %s282
        %s284 = smul.u32 2, %s21
        %s285 = smul.u32 4, %s23
        %p286 = scmp.lt.s32.totalorder %s20, 2
        %s287 = scalar_select %p286, %s20, 2
        %p288 = scmp.lt.s32.totalorder %s23, 0
        %s289 = scalar_select %p288, %s23, 0
        %p290 = scmp.lt.s32.totalorder %s22, 1
        %s291 = scalar_select %p290, %s22, 1
        %s292 = smul.addr %s291, 64
        %s293 = smul.addr %s289, 128
        %s294 = sadd.s32 %s292, %s293
        %s295 = smul.addr %s287, 128
        %s296 = sadd.s32 %s294, %s295
        %s297 = smul.addr %s296, 4
        %s298 = scalar_lea.vmem %s1, %s297
        %p299 = scmp.lt.s32.totalorder %s20, 2
        %s300 = scalar_select %p299, %s20, 2
        %p301 = scmp.lt.s32.totalorder %s22, 1
        %s302 = scalar_select %p301, %s22, 1
        %s303 = smul.addr %s300, 2
        %s304 = sadd.s32 %s302, %s303
        %s305 = scalar_lea.vmem %s2, %s304
        %s306 = smul.u32 2, %s21
        %p308 = scmp.eq.s32.totalorder %s23, 0
        // Predicated region
        $region33: #{autoencoder_forward.13} parent=31 // pred_check
          %p309 = pneg %p308
        $region34: #{autoencoder_forward.13} parent=31 // pred_check_branch
          %311 = sbr.rel (%p309) target = $region36
        $region35: #{autoencoder_forward.13} parent=31 // pred_region
          %v312 = vld [vmem:[%s305] sm:$0x1]
          %v314 = vlaneseq
          %v315 = vshrl.u32 %v314, 7
          %v316 = vsub.s32 0, %v315
          %v317 = vrot.slane %v312, %v316
          %319 = vst [vmem:[#allocation2] sm:$0xff] %v317
          %320 = vst [vmem:[#allocation2 + $0x8] sm:$0xff] %v317
        $region36: #{autoencoder_forward.13} parent=31 // pred_fallthru
          _
        %v321 = vld [vmem:[#allocation2] sm:$0xff]
        %v322 = vld [vmem:[#allocation2 + $0x8] sm:$0xff]
        %v323 = vld [vmem:[%s283] sm:$0xff]
        %v324 = vld [vmem:[%s283 + $0x8] sm:$0xff]
        %v325 = vld [vmem:[%s283 + $0x10] sm:$0xff]
        %v326 = vld [vmem:[%s283 + $0x18] sm:$0xff]
        %v327 = vld [vmem:[%s298] sm:$0xf]
        %v328 = vld [vmem:[%s298 + $0x4] sm:$0xf]
        %v329 = vld [vmem:[%s298 + $0x8] sm:$0xf]
        %v330 = vld [vmem:[%s298 + $0xc] sm:$0xf]
        %v331 = vld [vmem:[%s298 + $0x10] sm:$0xf]
        %v332 = vld [vmem:[%s298 + $0x14] sm:$0xf]
        %v333 = vld [vmem:[%s298 + $0x18] sm:$0xf]
        %v334 = vld [vmem:[%s298 + $0x1c] sm:$0xf]
        %v335 = vld [vmem:[%s298 + $0x20] sm:$0xf]
        %v336 = vld [vmem:[%s298 + $0x24] sm:$0xf]
        %v337 = vld [vmem:[%s298 + $0x28] sm:$0xf]
        %v338 = vld [vmem:[%s298 + $0x2c] sm:$0xf]
        %v339 = vld [vmem:[%s298 + $0x30] sm:$0xf]
        %v340 = vld [vmem:[%s298 + $0x34] sm:$0xf]
        %v341 = vld [vmem:[%s298 + $0x38] sm:$0xf]
        %v342 = vld [vmem:[%s298 + $0x3c] sm:$0xf]
        %v343 = vld [vmem:[%s298 + $0x40] sm:$0xf]
        %v344 = vld [vmem:[%s298 + $0x44] sm:$0xf]
        %v345 = vld [vmem:[%s298 + $0x48] sm:$0xf]
        %v346 = vld [vmem:[%s298 + $0x4c] sm:$0xf]
        %v347 = vld [vmem:[%s298 + $0x50] sm:$0xf]
        %v348 = vld [vmem:[%s298 + $0x54] sm:$0xf]
        %v349 = vld [vmem:[%s298 + $0x58] sm:$0xf]
        %v350 = vld [vmem:[%s298 + $0x5c] sm:$0xf]
        %v351 = vld [vmem:[%s298 + $0x60] sm:$0xf]
        %v352 = vld [vmem:[%s298 + $0x64] sm:$0xf]
        %v353 = vld [vmem:[%s298 + $0x68] sm:$0xf]
        %v354 = vld [vmem:[%s298 + $0x6c] sm:$0xf]
        %v355 = vld [vmem:[%s298 + $0x70] sm:$0xf]
        %v356 = vld [vmem:[%s298 + $0x74] sm:$0xf]
        %v357 = vld [vmem:[%s298 + $0x78] sm:$0xf]
        %v358 = vld [vmem:[%s298 + $0x7c] sm:$0xf]
        %v359 = vld [vmem:[%s298 + $0x80] sm:$0xf]
        %v360 = vld [vmem:[%s298 + $0x84] sm:$0xf]
        %v361 = vld [vmem:[%s298 + $0x88] sm:$0xf]
        %v362 = vld [vmem:[%s298 + $0x8c] sm:$0xf]
        %v363 = vld [vmem:[%s298 + $0x90] sm:$0xf]
        %v364 = vld [vmem:[%s298 + $0x94] sm:$0xf]
        %v365 = vld [vmem:[%s298 + $0x98] sm:$0xf]
        %v366 = vld [vmem:[%s298 + $0x9c] sm:$0xf]
        %v367 = vld [vmem:[%s298 + $0xa0] sm:$0xf]
        %v368 = vld [vmem:[%s298 + $0xa4] sm:$0xf]
        %v369 = vld [vmem:[%s298 + $0xa8] sm:$0xf]
        %v370 = vld [vmem:[%s298 + $0xac] sm:$0xf]
        %v371 = vld [vmem:[%s298 + $0xb0] sm:$0xf]
        %v372 = vld [vmem:[%s298 + $0xb4] sm:$0xf]
        %v373 = vld [vmem:[%s298 + $0xb8] sm:$0xf]
        %v374 = vld [vmem:[%s298 + $0xbc] sm:$0xf]
        %v375 = vld [vmem:[%s298 + $0xc0] sm:$0xf]
        %v376 = vld [vmem:[%s298 + $0xc4] sm:$0xf]
        %v377 = vld [vmem:[%s298 + $0xc8] sm:$0xf]
        %v378 = vld [vmem:[%s298 + $0xcc] sm:$0xf]
        %v379 = vld [vmem:[%s298 + $0xd0] sm:$0xf]
        %v380 = vld [vmem:[%s298 + $0xd4] sm:$0xf]
        %v381 = vld [vmem:[%s298 + $0xd8] sm:$0xf]
        %v382 = vld [vmem:[%s298 + $0xdc] sm:$0xf]
        %v383 = vld [vmem:[%s298 + $0xe0] sm:$0xf]
        %v384 = vld [vmem:[%s298 + $0xe4] sm:$0xf]
        %v385 = vld [vmem:[%s298 + $0xe8] sm:$0xf]
        %v386 = vld [vmem:[%s298 + $0xec] sm:$0xf]
        %v387 = vld [vmem:[%s298 + $0xf0] sm:$0xf]
        %v388 = vld [vmem:[%s298 + $0xf4] sm:$0xf]
        %v389 = vld [vmem:[%s298 + $0xf8] sm:$0xf]
        %v390 = vld [vmem:[%s298 + $0xfc] sm:$0xf]
        %v395 = vunpack.c.l.b16 %v323
        %v396 = vunpack.c.h.b16 %v323
        %v397 = vunpack.c.l.b16 %v324
        %v398 = vunpack.c.h.b16 %v324
        %v399 = vunpack.c.l.b16 %v325
        %v400 = vunpack.c.h.b16 %v325
        %v401 = vunpack.c.l.b16 %v326
        %v402 = vunpack.c.h.b16 %v326
        %v403 = vpack.c.b16 %v399, %v395
        %v404 = vpack.c.b16 %v400, %v396
        %v405 = vpack.c.b16 %v401, %v397
        %v406 = vpack.c.b16 %v402, %v398
        %v475 = vunpack.c.l.b16 %v327
        %v476 = vunpack.c.l.b16 %v328
        %v477 = vunpack.c.l.b16 %v329
        %v478 = vunpack.c.l.b16 %v330
        %v479 = vunpack.c.l.b16 %v331
        %v480 = vunpack.c.l.b16 %v332
        %v481 = vunpack.c.l.b16 %v333
        %v482 = vunpack.c.l.b16 %v334
        %v483 = vunpack.c.l.b16 %v335
        %v484 = vunpack.c.l.b16 %v336
        %v485 = vunpack.c.l.b16 %v337
        %v486 = vunpack.c.l.b16 %v338
        %v487 = vunpack.c.l.b16 %v339
        %v488 = vunpack.c.l.b16 %v340
        %v489 = vunpack.c.l.b16 %v341
        %v490 = vunpack.c.l.b16 %v342
        %v491 = vunpack.c.l.b16 %v343
        %v492 = vunpack.c.l.b16 %v344
        %v493 = vunpack.c.l.b16 %v345
        %v494 = vunpack.c.l.b16 %v346
        %v495 = vunpack.c.l.b16 %v347
        %v496 = vunpack.c.l.b16 %v348
        %v497 = vunpack.c.l.b16 %v349
        %v498 = vunpack.c.l.b16 %v350
        %v499 = vunpack.c.l.b16 %v351
        %v500 = vunpack.c.l.b16 %v352
        %v501 = vunpack.c.l.b16 %v353
        %v502 = vunpack.c.l.b16 %v354
        %v503 = vunpack.c.l.b16 %v355
        %v504 = vunpack.c.l.b16 %v356
        %v505 = vunpack.c.l.b16 %v357
        %v506 = vunpack.c.l.b16 %v358
        %v507 = vunpack.c.l.b16 %v359
        %v508 = vunpack.c.l.b16 %v360
        %v509 = vunpack.c.l.b16 %v361
        %v510 = vunpack.c.l.b16 %v362
        %v511 = vunpack.c.l.b16 %v363
        %v512 = vunpack.c.l.b16 %v364
        %v513 = vunpack.c.l.b16 %v365
        %v514 = vunpack.c.l.b16 %v366
        %v515 = vunpack.c.l.b16 %v367
        %v516 = vunpack.c.l.b16 %v368
        %v517 = vunpack.c.l.b16 %v369
        %v518 = vunpack.c.l.b16 %v370
        %v519 = vunpack.c.l.b16 %v371
        %v520 = vunpack.c.l.b16 %v372
        %v521 = vunpack.c.l.b16 %v373
        %v522 = vunpack.c.l.b16 %v374
        %v523 = vunpack.c.l.b16 %v375
        %v524 = vunpack.c.l.b16 %v376
        %v525 = vunpack.c.l.b16 %v377
        %v526 = vunpack.c.l.b16 %v378
        %v527 = vunpack.c.l.b16 %v379
        %v528 = vunpack.c.l.b16 %v380
        %v529 = vunpack.c.l.b16 %v381
        %v530 = vunpack.c.l.b16 %v382
        %v531 = vunpack.c.l.b16 %v383
        %v532 = vunpack.c.l.b16 %v384
        %v533 = vunpack.c.l.b16 %v385
        %v534 = vunpack.c.l.b16 %v386
        %v535 = vunpack.c.l.b16 %v387
        %v536 = vunpack.c.l.b16 %v388
        %v537 = vunpack.c.l.b16 %v389
        %v538 = vunpack.c.l.b16 %v390
        %v539 = vpack.c.b16 %v476, %v475
        %v540 = vpack.c.b16 %v478, %v477
        %v541 = vpack.c.b16 %v480, %v479
        %v542 = vpack.c.b16 %v482, %v481
        %v543 = vpack.c.b16 %v484, %v483
        %v544 = vpack.c.b16 %v486, %v485
        %v545 = vpack.c.b16 %v488, %v487
        %v546 = vpack.c.b16 %v490, %v489
        %v547 = vpack.c.b16 %v492, %v491
        %v548 = vpack.c.b16 %v494, %v493
        %v549 = vpack.c.b16 %v496, %v495
        %v550 = vpack.c.b16 %v498, %v497
        %v551 = vpack.c.b16 %v500, %v499
        %v552 = vpack.c.b16 %v502, %v501
        %v553 = vpack.c.b16 %v504, %v503
        %v554 = vpack.c.b16 %v506, %v505
        %v555 = vpack.c.b16 %v508, %v507
        %v556 = vpack.c.b16 %v510, %v509
        %v557 = vpack.c.b16 %v512, %v511
        %v558 = vpack.c.b16 %v514, %v513
        %v559 = vpack.c.b16 %v516, %v515
        %v560 = vpack.c.b16 %v518, %v517
        %v561 = vpack.c.b16 %v520, %v519
        %v562 = vpack.c.b16 %v522, %v521
        %v563 = vpack.c.b16 %v524, %v523
        %v564 = vpack.c.b16 %v526, %v525
        %v565 = vpack.c.b16 %v528, %v527
        %v566 = vpack.c.b16 %v530, %v529
        %v567 = vpack.c.b16 %v532, %v531
        %v568 = vpack.c.b16 %v534, %v533
        %v569 = vpack.c.b16 %v536, %v535
        %v570 = vpack.c.b16 %v538, %v537
        %603 = vmatprep.subr.bf16.mxu0 0
        %604 = vmatpush1.bf16.msra.mxu0 %v546
        %605 = vmatprep.subr.bf16.mxu0 0
        %606 = vmatpush1.bf16.msra.mxu0 %v545
        %607 = vmatprep.subr.bf16.mxu0 0
        %608 = vmatpush1.bf16.msra.mxu0 %v544
        %609 = vmatprep.subr.bf16.mxu0 0
        %610 = vmatpush1.bf16.msra.mxu0 %v543
        %611 = vmatprep.subr.bf16.mxu0 0
        %612 = vmatpush1.bf16.msra.mxu0 %v542
        %613 = vmatprep.subr.bf16.mxu0 0
        %614 = vmatpush1.bf16.msra.mxu0 %v541
        %615 = vmatprep.subr.bf16.mxu0 0
        %616 = vmatpush1.bf16.msra.mxu0 %v540
        %617 = vmatprep.subr.bf16.mxu0 0
        %618 = vmatpush1.bf16.msra.mxu0 %v539
        %619 = vmatprep.subr.bf16.mxu0 0
        %620 = vmatpush2.bf16.msra.mxu0 %v554
        %621 = vmatprep.subr.bf16.mxu0 0
        %622 = vmatpush2.bf16.msra.mxu0 %v553
        %623 = vmatprep.subr.bf16.mxu0 0
        %624 = vmatpush2.bf16.msra.mxu0 %v552
        %625 = vmatprep.subr.bf16.mxu0 0
        %626 = vmatpush2.bf16.msra.mxu0 %v551
        %627 = vmatprep.subr.bf16.mxu0 0
        %628 = vmatpush2.bf16.msra.mxu0 %v550
        %629 = vmatprep.subr.bf16.mxu0 0
        %630 = vmatpush2.bf16.msra.mxu0 %v549
        %631 = vmatprep.subr.bf16.mxu0 0
        %632 = vmatpush2.bf16.msra.mxu0 %v548
        %633 = vmatprep.subr.bf16.mxu0 0
        %634 = vmatpush2.bf16.msra.mxu0 %v547
        %635 = vmatprep.mubr.bf16.mxu0 %v404
        %636 = vmatmul.mubr.bf16.gmra.mxu0 %v403
        %v637 = vpop.f32.mrf.mxu0
        %v638 = vadd.f32 0.0, %v637
        %v639 = vpop.f32.mrf.mxu0
        %v640 = vpop.f32.mrf.mxu0
        %v641 = vadd.f32 0.0, %v640
        %v642 = vpop.f32.mrf.mxu0
        %643 = vdwg.mxu0
        %644 = vmatprep.subr.bf16.mxu0 0
        %645 = vmatpush1.bf16.msra.mxu0 %v562
        %646 = vmatprep.subr.bf16.mxu0 0
        %647 = vmatpush1.bf16.msra.mxu0 %v561
        %648 = vmatprep.subr.bf16.mxu0 0
        %649 = vmatpush1.bf16.msra.mxu0 %v560
        %650 = vmatprep.subr.bf16.mxu0 0
        %651 = vmatpush1.bf16.msra.mxu0 %v559
        %652 = vmatprep.subr.bf16.mxu0 0
        %653 = vmatpush1.bf16.msra.mxu0 %v558
        %654 = vmatprep.subr.bf16.mxu0 0
        %655 = vmatpush1.bf16.msra.mxu0 %v557
        %656 = vmatprep.subr.bf16.mxu0 0
        %657 = vmatpush1.bf16.msra.mxu0 %v556
        %658 = vmatprep.subr.bf16.mxu0 0
        %659 = vmatpush1.bf16.msra.mxu0 %v555
        %660 = vmatprep.subr.bf16.mxu0 0
        %661 = vmatpush2.bf16.msra.mxu0 %v570
        %662 = vmatprep.subr.bf16.mxu0 0
        %663 = vmatpush2.bf16.msra.mxu0 %v569
        %664 = vmatprep.subr.bf16.mxu0 0
        %665 = vmatpush2.bf16.msra.mxu0 %v568
        %666 = vmatprep.subr.bf16.mxu0 0
        %667 = vmatpush2.bf16.msra.mxu0 %v567
        %668 = vmatprep.subr.bf16.mxu0 0
        %669 = vmatpush2.bf16.msra.mxu0 %v566
        %670 = vmatprep.subr.bf16.mxu0 0
        %671 = vmatpush2.bf16.msra.mxu0 %v565
        %672 = vmatprep.subr.bf16.mxu0 0
        %673 = vmatpush2.bf16.msra.mxu0 %v564
        %674 = vmatprep.subr.bf16.mxu0 0
        %675 = vmatpush2.bf16.msra.mxu0 %v563
        %676 = vmatprep.mubr.bf16.mxu0 %v406
        %677 = vmatmul.mubr.bf16.gmra.mxu0 %v405
        %v678 = vpop.f32.mrf.mxu0
        %v679 = vadd.f32 %v638, %v678
        %v680 = vpop.f32.mrf.mxu0
        %v681 = vpop.f32.mrf.mxu0
        %v682 = vadd.f32 %v641, %v681
        %v683 = vpop.f32.mrf.mxu0
        %684 = vdwg.mxu0
        %v685 = vadd.f32 %v321, %v679
        %v686 = vadd.f32 %v322, %v682
        %687 = vst [vmem:[#allocation2] sm:$0xff] %v685
        %688 = vst [vmem:[#allocation2 + $0x8] sm:$0xff] %v686
        // Predicated region
        $region37: #{autoencoder_forward.13} parent=31 // pred_check
          %p689 = pneg %p308
        $region38: #{autoencoder_forward.13} parent=31 // pred_check_branch
          %691 = sbr.rel (%p689) target = $region40
        $region39: #{autoencoder_forward.13} parent=31 // pred_region
          %v692 = vld [vmem:[#allocation2] sm:$0xff]
          %v693 = vld [vmem:[#allocation2 + $0x8] sm:$0xff]
          %v694 = vpack.c.bf16 %v693, %v692
          %v696 = vunpack.c.l.b16 %v694
          %v697 = vunpack.c.h.b16 %v694
          %v698 = vpack.c.b16 %v696, %v696
          %v699 = vpack.c.b16 %v697, %v697
          %702 = vst [vmem:[%s269] sm:$0xf] %v698
          %703 = vst [vmem:[%s269 + $0x4] sm:$0xf] %v699
        $region40: #{autoencoder_forward.13} parent=31 // pred_fallthru
          _
        %s704 = sand.u32 %s140, 1
        %s705 = sand.u32 %s140, 1
        %s706 = smul.addr %s705, 8
        %s707 = scalar_lea.vmem [#allocation3], %s706
        // Predicated region
        $region41: #{autoencoder_forward.13} parent=31 // pred_check
          %p708 = pneg %p150
        $region42: #{autoencoder_forward.13} parent=31 // pred_check_branch
          %710 = sbr.rel (%p708) target = $region44
        $region43: #{autoencoder_forward.13} parent=31 // pred_region
          %s711 = smul.u32 2, %s21
          %s712 = smul.addr %s711, 2
          %s713 = sadd.s32 %s22, %s712
          %s714 = smul.addr %s20, 4
          %s715 = sadd.s32 %s713, %s714
          %s716 = smul.addr %s715, 4
          %s717 = scalar_lea.vmem %s3, %s716
          // Predicated region
          $region45: #{autoencoder_forward.13} parent=43 // pred_check
            _
          $region46: #{autoencoder_forward.13} parent=43 // pred_check_branch
            %719 = sbr.rel (0) target = $region48
          $region47: #{autoencoder_forward.13} parent=43 // pred_region
            // Predicated region
            $region49: #{autoencoder_forward.13} parent=47 // pred_check
              _
            $region50: #{autoencoder_forward.13} parent=47 // pred_check_branch
              %721 = sbr.rel target = $region52
            $region51: #{autoencoder_forward.13} parent=47 // pred_region
              // Predicated region
              $region64: #{autoencoder_forward.13} parent=51 // pred_check
                _
              $region65: #{autoencoder_forward.13} parent=51 // pred_check_branch
                %739 = sbr.rel (0) target = $region67
              $region66: #{autoencoder_forward.13} parent=51 // pred_region
                loop: start=0, step=1, limit=1
                $region68: #{autoencoder_forward.13} parent=66 // loop_pre_header
                  _
                $region69: #{autoencoder_forward.13} parent=66 // loop_header
                  %s741 = sphi 0, %s745
                  %p742 = scmp.ge.s32.totalorder %s741, 1
                  %s746 = sphi %s707, %s707
                  %s747 = sphi %s717, %s717
                $region70: #{autoencoder_forward.13} parent=66 // loop_header_branch
                  %744 = sbr.rel (%p742) target = $region74
                $region71: #{autoencoder_forward.13} parent=66 // loop_body
                  _
                $region72: #{autoencoder_forward.13} parent=66 // loop_footer
                  %s745 = sadd.s32 1, %s741
                $region73: #{autoencoder_forward.13} parent=66 // loop_footer_branch
                  %740 = sbr.rel target = $region69
                $region74: #{autoencoder_forward.13} parent=66 // loop_exit
                  _
                %s749 = ssub.s32 16, 1
                loop: start=0, step=1, limit=1
                $region75: #{autoencoder_forward.13} parent=66 // loop_pre_header
                  _
                $region76: #{autoencoder_forward.13} parent=66 // loop_header
                  %s751 = sphi 0, %s755
                  %p752 = scmp.ge.s32.totalorder %s751, 1
                  %s756 = sphi %s707, %s707
                  %s757 = sphi %s717, %s717
                $region77: #{autoencoder_forward.13} parent=66 // loop_header_branch
                  %754 = sbr.rel (%p752) target = $region81
                $region78: #{autoencoder_forward.13} parent=66 // loop_body
                  %v758 = vld [vmem:[%s756] sm:%s749]
                  %759 = vst [vmem:[%s757] sm:%s749] %v758
                  %v760 = vld [vmem:[%s756 + $0x4] sm:%s749]
                  %761 = vst [vmem:[%s757 + $0x8] sm:%s749] %v760
                $region79: #{autoencoder_forward.13} parent=66 // loop_footer
                  %s755 = sadd.s32 1, %s751
                $region80: #{autoencoder_forward.13} parent=66 // loop_footer_branch
                  %750 = sbr.rel target = $region76
                $region81: #{autoencoder_forward.13} parent=66 // loop_exit
                  _
              $region67: #{autoencoder_forward.13} parent=51 // pred_fallthru
                _
            $region52: #{autoencoder_forward.13} parent=47 // pred_fallthru
              _
            // Predicated region
            $region53: #{autoencoder_forward.13} parent=47 // pred_check
              _
            $region54: #{autoencoder_forward.13} parent=47 // pred_check_branch
              %723 = sbr.rel (0) target = $region56
            $region55: #{autoencoder_forward.13} parent=47 // pred_region
              %s725 = ssub.s32 16, 1
              loop: start=0, step=1, limit=1
              $region57: #{autoencoder_forward.13} parent=55 // loop_pre_header
                _
              $region58: #{autoencoder_forward.13} parent=55 // loop_header
                %s727 = sphi 0, %s731
                %p728 = scmp.ge.s32.totalorder %s727, 1
                %s732 = sphi %s707, %s707
                %s733 = sphi %s717, %s717
              $region59: #{autoencoder_forward.13} parent=55 // loop_header_branch
                %730 = sbr.rel (%p728) target = $region63
              $region60: #{autoencoder_forward.13} parent=55 // loop_body
                %v734 = vld [vmem:[%s732] sm:%s725]
                %735 = vst [vmem:[%s733] sm:%s725] %v734
                %v736 = vld [vmem:[%s732 + $0x4] sm:%s725]
                %737 = vst [vmem:[%s733 + $0x8] sm:%s725] %v736
              $region61: #{autoencoder_forward.13} parent=55 // loop_footer
                %s731 = sadd.s32 1, %s727
              $region62: #{autoencoder_forward.13} parent=55 // loop_footer_branch
                %726 = sbr.rel target = $region58
              $region63: #{autoencoder_forward.13} parent=55 // loop_exit
                _
            $region56: #{autoencoder_forward.13} parent=47 // pred_fallthru
              _
          $region48: #{autoencoder_forward.13} parent=43 // pred_fallthru
            _
          %762 = vnop
        $region44: #{autoencoder_forward.13} parent=31 // pred_fallthru
          _
      $region32: #{autoencoder_forward.13} parent=5 // pred_fallthru
        _
      %p763 = scmp.le.s32.totalorder 2, %s9
      // Predicated region
      $region82: #{autoencoder_forward.13} parent=5 // pred_check
        %p764 = pneg %p763
      $region83: #{autoencoder_forward.13} parent=5 // pred_check_branch
        %766 = sbr.rel (%p764) target = $region85
      $region84: #{autoencoder_forward.13} parent=5 // pred_region
        %s767 = ssub.s32 %s9, 2
        // Predicated region
        $region86: #{autoencoder_forward.13} parent=84 // pred_check
          %p768 = pneg %p156
        $region87: #{autoencoder_forward.13} parent=84 // pred_check_branch
          %770 = sbr.rel (%p768) target = $region89
        $region88: #{autoencoder_forward.13} parent=84 // pred_region
          %s771 = sand.u32 %s141, 1
          %s772 = sand.u32 %s141, 1
          %s773 = smul.addr %s772, 8
          %s774 = scalar_lea.vmem [#allocation3], %s773
        $region89: #{autoencoder_forward.13} parent=84 // pred_fallthru
          _
      $region85: #{autoencoder_forward.13} parent=5 // pred_fallthru
        _
    $region6: #{autoencoder_forward.13} parent=1 // loop_footer
      %s13 = sadd.s32 1, %s9
    $region7: #{autoencoder_forward.13} parent=1 // loop_footer_branch
      %8 = sbr.rel target = $region3
    $region8: #{autoencoder_forward.13} parent=1 // loop_exit
      _

// kernel: autoencoder_forward.14
$region0: #{autoencoder_forward.14}
  #allocation0 [shape = 'u32[]', space=smem, size = 0x4, offset = 0x4, fixed_abs, tag = 'smem constant byte address 0x4 - core index']
  #allocation1 [shape = 'u32[144,128]{1,0:T(1,128)}', space=vmem, size = 0x12000, scoped, tag = 'internal scratch']
  #allocation2 [shape = 'f32[16,128]{1,0:T(8,128)}', space=vmem, size = 0x2000, scoped, tag = 'scratch operand']
  %s0 = inlined_call_operand.vmem [shape: bf16[3,16,256], index: 0, kind: input, shape index: {}]
  %s1 = inlined_call_operand.vmem [shape: bf16[3,1,1,256,128], index: 1, kind: input, shape index: {}]
  %s2 = inlined_call_operand.vmem [shape: f32[3,1,128], index: 2, kind: input, shape index: {}]
  %s3 = inlined_call_operand.vmem [shape: bf16[3,16,128], index: 3, kind: output, shape index: {}]
  %s4 = sld [smem:[#allocation0]]
  $region53: #{autoencoder_forward.14} parent=0
    _
  %s6 = ssub.s32 1, %s4
  %s7 = scalar_select 0, %s6, %s4
  loop: start=0, step=1, limit=5
  $region2: #{autoencoder_forward.14} parent=0 // loop_pre_header
    _
  $region3: #{autoencoder_forward.14} parent=0 // loop_header
    %s9 = sphi 0, %s13
    %p10 = scmp.ge.s32.totalorder %s9, 5
    %s16 = sphi 0, %s42
    %s17 = sphi 0, %s38
    %s18 = sphi 0, %s34
    %s19 = sphi 0, %s30
    %s20 = sphi 0, %s16
    %s21 = sphi 0, %s17
    %s22 = sphi 0, %s18
    %s23 = sphi 0, %s19
    %s24 = sphi 0, %s20
    %s25 = sphi 0, %s21
    %s26 = sphi 0, %s22
    %s27 = sphi 0, %s23
    %s49 = sphi 0, %s51
    %s52 = sphi 0, %s49
    %s53 = sphi 0, %s52
    %s69 = sphi 0, %s53
    %s79 = sphi 0, %s81
    %s82 = sphi 0, %s79
    %s83 = sphi 0, %s82
    %s99 = sphi 0, %s83
    %s107 = sphi 0, %s109
    %s110 = sphi 0, %s107
    %s111 = sphi 0, %s110
    %s127 = sphi 0, %s111
    %s137 = sphi 0, %s139
    %s140 = sphi 0, %s137
    %s141 = sphi 0, %s140
    %s157 = sphi 0, %s141
  $region4: #{autoencoder_forward.14} parent=0 // loop_header_branch
    %12 = sbr.rel (%p10) target = $region8
  $region5: #{autoencoder_forward.14} parent=0 // loop_body
    %s14 = ssub.s32 %s9, 1
    %s15 = ssub.s32 %s9, 2
    %s28 = sadd.s32 1, %s19
    %p29 = scmp.ge.s32.totalorder %s28, 1
    %s30 = scalar_select %p29, 0, %s28
    %s31 = sadd.s32 1, %s18
    %s32 = scalar_select %p29, %s31, %s18
    %p33 = scmp.ge.s32.totalorder %s32, 1
    %s34 = scalar_select %p33, 0, %s32
    %s35 = sadd.s32 1, %s17
    %s36 = scalar_select %p33, %s35, %s17
    %p37 = scmp.ge.s32.totalorder %s36, 1
    %s38 = scalar_select %p37, 0, %s36
    %s39 = sadd.s32 1, %s16
    %s40 = scalar_select %p37, %s39, %s16
    %p41 = scmp.ge.s32.totalorder %s40, 3
    %s42 = scalar_select %p41, 0, %s40
    %s43 = ssub.s32 %s16, %s42
    %s44 = ssub.s32 %s17, %s38
    %s45 = sor.u32 %s43, %s44
    %s46 = ssub.s32 %s19, %s30
    %s47 = sor.u32 %s45, %s46
    %p48 = scmp.eq.s32.totalorder %s47, 0
    %s50 = sadd.s32 %s49, 1
    %s51 = scalar_select %p48, %s49, %s50
    %p54 = pneg %p48
    %p55 = scmp.eq.s32.totalorder %s9, 2
    %p56 = por %p54, %p55
    %p57 = scmp.ne.s32.totalorder %s49, %s52
    %p58 = scmp.eq.s32.totalorder %s9, 0
    %p59 = por %p57, %p58
    %p60 = scmp.ne.s32.totalorder %s49, %s52
    %p61 = scmp.eq.s32.totalorder %s14, 2
    %p62 = por %p60, %p61
    %p63 = scmp.ne.s32.totalorder %s52, %s53
    %p64 = scmp.eq.s32.totalorder %s14, 0
    %p65 = por %p63, %p64
    %p66 = scmp.ne.s32.totalorder %s52, %s53
    %p67 = scmp.eq.s32.totalorder %s15, 2
    %p68 = por %p66, %p67
    %p70 = scmp.ne.s32.totalorder %s53, %s69
    %p71 = scmp.eq.s32.totalorder %s15, 0
    %p72 = por %p70, %p71
    %s73 = ssub.s32 %s16, %s42
    %s74 = ssub.s32 %s19, %s30
    %s75 = sor.u32 %s73, %s74
    %s76 = ssub.s32 %s18, %s34
    %s77 = sor.u32 %s75, %s76
    %p78 = scmp.eq.s32.totalorder %s77, 0
    %s80 = sadd.s32 %s79, 1
    %s81 = scalar_select %p78, %s79, %s80
    %p84 = pneg %p78
    %p85 = scmp.eq.s32.totalorder %s9, 2
    %p86 = por %p84, %p85
    %p87 = scmp.ne.s32.totalorder %s79, %s82
    %p88 = scmp.eq.s32.totalorder %s9, 0
    %p89 = por %p87, %p88
    %p90 = scmp.ne.s32.totalorder %s79, %s82
    %p91 = scmp.eq.s32.totalorder %s14, 2
    %p92 = por %p90, %p91
    %p93 = scmp.ne.s32.totalorder %s82, %s83
    %p94 = scmp.eq.s32.totalorder %s14, 0
    %p95 = por %p93, %p94
    %p96 = scmp.ne.s32.totalorder %s82, %s83
    %p97 = scmp.eq.s32.totalorder %s15, 2
    %p98 = por %p96, %p97
    %p100 = scmp.ne.s32.totalorder %s83, %s99
    %p101 = scmp.eq.s32.totalorder %s15, 0
    %p102 = por %p100, %p101
    %s103 = ssub.s32 %s16, %s42
    %s104 = ssub.s32 %s18, %s34
    %s105 = sor.u32 %s103, %s104
    %p106 = scmp.eq.s32.totalorder %s105, 0
    %s108 = sadd.s32 %s107, 1
    %s109 = scalar_select %p106, %s107, %s108
    %p112 = pneg %p106
    %p113 = scmp.eq.s32.totalorder %s9, 2
    %p114 = por %p112, %p113
    %p115 = scmp.ne.s32.totalorder %s107, %s110
    %p116 = scmp.eq.s32.totalorder %s9, 0
    %p117 = por %p115, %p116
    %p118 = scmp.ne.s32.totalorder %s107, %s110
    %p119 = scmp.eq.s32.totalorder %s14, 2
    %p120 = por %p118, %p119
    %p121 = scmp.ne.s32.totalorder %s110, %s111
    %p122 = scmp.eq.s32.totalorder %s14, 0
    %p123 = por %p121, %p122
    %p124 = scmp.ne.s32.totalorder %s110, %s111
    %p125 = scmp.eq.s32.totalorder %s15, 2
    %p126 = por %p124, %p125
    %p128 = scmp.ne.s32.totalorder %s111, %s127
    %p129 = scmp.eq.s32.totalorder %s15, 0
    %p130 = por %p128, %p129
    %s131 = ssub.s32 %s16, %s42
    %s132 = ssub.s32 %s17, %s38
    %s133 = sor.u32 %s131, %s132
    %s134 = ssub.s32 %s18, %s34
    %s135 = sor.u32 %s133, %s134
    %p136 = scmp.eq.s32.totalorder %s135, 0
    %s138 = sadd.s32 %s137, 1
    %s139 = scalar_select %p136, %s137, %s138
    %p142 = pneg %p136
    %p143 = scmp.eq.s32.totalorder %s9, 2
    %p144 = por %p142, %p143
    %p145 = scmp.ne.s32.totalorder %s137, %s140
    %p146 = scmp.eq.s32.totalorder %s9, 0
    %p147 = por %p145, %p146
    %p148 = scmp.ne.s32.totalorder %s137, %s140
    %p149 = scmp.eq.s32.totalorder %s14, 2
    %p150 = por %p148, %p149
    %p151 = scmp.ne.s32.totalorder %s140, %s141
    %p152 = scmp.eq.s32.totalorder %s14, 0
    %p153 = por %p151, %p152
    %p154 = scmp.ne.s32.totalorder %s140, %s141
    %p155 = scmp.eq.s32.totalorder %s15, 2
    %p156 = por %p154, %p155
    %p158 = scmp.ne.s32.totalorder %s141, %s157
    %p159 = scmp.eq.s32.totalorder %s15, 0
    %p160 = por %p158, %p159
    %p161 = scmp.le.s32.totalorder 1, %s9
    %p162 = scmp.lt.s32.totalorder %s9, 4
    %p163 = pnand %p161, %p162
    %p164 = pneg %p163
    // Predicated region
    $region9: #{autoencoder_forward.14} parent=5 // pred_check
      _
    $region10: #{autoencoder_forward.14} parent=5 // pred_check_branch
      %166 = sbr.rel (%p163) target = $region12
    $region11: #{autoencoder_forward.14} parent=5 // pred_region
      %s167 = ssub.s32 %s9, 1
    $region12: #{autoencoder_forward.14} parent=5 // pred_fallthru
      _
    %p168 = scmp.lt.s32.totalorder %s9, 3
    // Predicated region
    $region13: #{autoencoder_forward.14} parent=5 // pred_check
      %p169 = pneg %p168
    $region14: #{autoencoder_forward.14} parent=5 // pred_check_branch
      %171 = sbr.rel (%p169) target = $region16
    $region15: #{autoencoder_forward.14} parent=5 // pred_region
      // Predicated region
      $region17: #{autoencoder_forward.14} parent=15 // pred_check
        %p172 = pneg %p59
      $region18: #{autoencoder_forward.14} parent=15 // pred_check_branch
        %174 = sbr.rel (%p172) target = $region20
      $region19: #{autoencoder_forward.14} parent=15 // pred_region
        %s175 = smul.u32 2, %s17
        %s176 = smul.u32 2, %s19
        %p177 = scmp.lt.s32.totalorder %s16, 2
        %s178 = scalar_select %p177, %s16, 2
        %p179 = scmp.lt.s32.totalorder %s175, 1
        %s180 = scalar_select %p179, %s175, 1
        %p181 = scmp.lt.s32.totalorder %s176, 1
        %s182 = scalar_select %p181, %s176, 1
        %s183 = smul.addr %s180, 2
        %s184 = sadd.s32 %s182, %s183
        %s185 = smul.addr %s178, 4
        %s186 = sadd.s32 %s184, %s185
        %s187 = smul.addr %s186, 4
        %s188 = scalar_lea.vmem %s0, %s187
        %s189 = smul.u32 2, %s17
        %s190 = smul.u32 2, %s19
      $region20: #{autoencoder_forward.14} parent=15 // pred_fallthru
        _
      // Predicated region
      $region21: #{autoencoder_forward.14} parent=15 // pred_check
        %p191 = pneg %p89
      $region22: #{autoencoder_forward.14} parent=15 // pred_check_branch
        %193 = sbr.rel (%p191) target = $region24
      $region23: #{autoencoder_forward.14} parent=15 // pred_region
        %p194 = scmp.lt.s32.totalorder %s16, 2
        %s195 = scalar_select %p194, %s16, 2
        %p196 = scmp.lt.s32.totalorder %s19, 0
        %s197 = scalar_select %p196, %s19, 0
        %p198 = scmp.lt.s32.totalorder %s18, 0
        %s199 = scalar_select %p198, %s18, 0
        %s200 = smul.addr %s199, 32
        %s201 = smul.addr %s197, 32
        %s202 = sadd.s32 %s200, %s201
        %s203 = smul.addr %s195, 32
        %s204 = sadd.s32 %s202, %s203
        %s205 = smul.addr %s204, 4
        %s206 = scalar_lea.vmem %s1, %s205
      $region24: #{autoencoder_forward.14} parent=15 // pred_fallthru
        _
      // Predicated region
      $region25: #{autoencoder_forward.14} parent=15 // pred_check
        %p207 = pneg %p117
      $region26: #{autoencoder_forward.14} parent=15 // pred_check_branch
        %209 = sbr.rel (%p207) target = $region28
      $region27: #{autoencoder_forward.14} parent=15 // pred_region
        %p210 = scmp.lt.s32.totalorder %s16, 2
        %s211 = scalar_select %p210, %s16, 2
        %p212 = scmp.lt.s32.totalorder %s18, 0
        %s213 = scalar_select %p212, %s18, 0
        %s214 = sadd.s32 %s213, %s211
        %s215 = scalar_lea.vmem %s2, %s214
      $region28: #{autoencoder_forward.14} parent=15 // pred_fallthru
        _
    $region16: #{autoencoder_forward.14} parent=5 // pred_fallthru
      _
    %p216 = scmp.le.s32.totalorder 1, %s9
    %p217 = scmp.lt.s32.totalorder %s9, 4
    %p218 = pnand %p216, %p217
    %p219 = pneg %p218
    // Predicated region
    $region29: #{autoencoder_forward.14} parent=5 // pred_check
      _
    $region30: #{autoencoder_forward.14} parent=5 // pred_check_branch
      %221 = sbr.rel (%p218) target = $region32
    $region31: #{autoencoder_forward.14} parent=5 // pred_region
      %s222 = ssub.s32 %s9, 1
      %s223 = smul.u32 2, %s21
      %s224 = smul.u32 2, %s23
      %p225 = scmp.lt.s32.totalorder %s20, 2
      %s226 = scalar_select %p225, %s20, 2
      %p227 = scmp.lt.s32.totalorder %s223, 1
      %s228 = scalar_select %p227, %s223, 1
      %p229 = scmp.lt.s32.totalorder %s224, 1
      %s230 = scalar_select %p229, %s224, 1
      %s231 = smul.addr %s228, 2
      %s232 = sadd.s32 %s230, %s231
      %s233 = smul.addr %s226, 4
      %s234 = sadd.s32 %s232, %s233
      %s235 = smul.addr %s234, 4
      %s236 = scalar_lea.vmem %s0, %s235
      %p237 = pneg %p65
      %p238 = pneg %p62
      %p239 = scmp.lt.s32.totalorder %s20, 2
      %s240 = scalar_select %p239, %s20, 2
      %p241 = scmp.lt.s32.totalorder %s23, 0
      %s242 = scalar_select %p241, %s23, 0
      %p243 = scmp.lt.s32.totalorder %s22, 0
      %s244 = scalar_select %p243, %s22, 0
      %s245 = smul.addr %s244, 32
      %s246 = smul.addr %s242, 32
      %s247 = sadd.s32 %s245, %s246
      %s248 = smul.addr %s240, 32
      %s249 = sadd.s32 %s247, %s248
      %s250 = smul.addr %s249, 4
      %s251 = scalar_lea.vmem %s1, %s250
      %p252 = pneg %p95
      %p253 = pneg %p92
      %p254 = scmp.lt.s32.totalorder %s20, 2
      %s255 = scalar_select %p254, %s20, 2
      %p256 = scmp.lt.s32.totalorder %s22, 0
      %s257 = scalar_select %p256, %s22, 0
      %s258 = sadd.s32 %s257, %s255
      %s259 = scalar_lea.vmem %s2, %s258
      %p260 = pneg %p123
      %p261 = pneg %p120
      %p262 = pneg %p153
      %p263 = pneg %p150
      %s264 = smul.u32 2, %s21
      %p265 = scmp.lt.s32.totalorder %s20, 2
      %s266 = scalar_select %p265, %s20, 2
      %p267 = scmp.lt.s32.totalorder %s264, 1
      %s268 = scalar_select %p267, %s264, 1
      %p269 = scmp.lt.s32.totalorder %s22, 0
      %s270 = scalar_select %p269, %s22, 0
      %s271 = sadd.s32 %s270, %s268
      %s272 = smul.addr %s266, 2
      %s273 = sadd.s32 %s271, %s272
      %s274 = smul.addr %s273, 4
      %s275 = scalar_lea.vmem %s3, %s274
      %s276 = smul.u32 2, %s21
      %s277 = smul.u32 2, %s23
      %p278 = scmp.lt.s32.totalorder %s20, 2
      %s279 = scalar_select %p278, %s20, 2
      %p280 = scmp.lt.s32.totalorder %s276, 1
      %s281 = scalar_select %p280, %s276, 1
      %p282 = scmp.lt.s32.totalorder %s277, 1
      %s283 = scalar_select %p282, %s277, 1
      %s284 = smul.addr %s281, 2
      %s285 = sadd.s32 %s283, %s284
      %s286 = smul.addr %s279, 4
      %s287 = sadd.s32 %s285, %s286
      %s288 = smul.addr %s287, 4
      %s289 = scalar_lea.vmem %s0, %s288
      %s290 = smul.u32 2, %s21
      %s291 = smul.u32 2, %s23
      %p292 = scmp.lt.s32.totalorder %s20, 2
      %s293 = scalar_select %p292, %s20, 2
      %p294 = scmp.lt.s32.totalorder %s23, 0
      %s295 = scalar_select %p294, %s23, 0
      %p296 = scmp.lt.s32.totalorder %s22, 0
      %s297 = scalar_select %p296, %s22, 0
      %s298 = smul.addr %s297, 32
      %s299 = smul.addr %s295, 32
      %s300 = sadd.s32 %s298, %s299
      %s301 = smul.addr %s293, 32
      %s302 = sadd.s32 %s300, %s301
      %s303 = smul.addr %s302, 4
      %s304 = scalar_lea.vmem %s1, %s303
      %p305 = scmp.lt.s32.totalorder %s20, 2
      %s306 = scalar_select %p305, %s20, 2
      %p307 = scmp.lt.s32.totalorder %s22, 0
      %s308 = scalar_select %p307, %s22, 0
      %s309 = sadd.s32 %s308, %s306
      %s310 = scalar_lea.vmem %s2, %s309
      %s311 = smul.u32 2, %s21
      %p312 = scmp.lt.s32.totalorder %s20, 2
      %s313 = scalar_select %p312, %s20, 2
      %p314 = scmp.lt.s32.totalorder %s311, 1
      %s315 = scalar_select %p314, %s311, 1
      %p316 = scmp.lt.s32.totalorder %s22, 0
      %s317 = scalar_select %p316, %s22, 0
      %s318 = sadd.s32 %s317, %s315
      %s319 = smul.addr %s313, 2
      %s320 = sadd.s32 %s318, %s319
      %s321 = smul.addr %s320, 4
      %s322 = scalar_lea.vmem %s3, %s321
      %s323 = smul.u32 2, %s21
      %p325 = scmp.eq.s32.totalorder %s23, 0
      // Predicated region
      $region33: #{autoencoder_forward.14} parent=31 // pred_check
        %p326 = pneg %p325
      $region34: #{autoencoder_forward.14} parent=31 // pred_check_branch
        %328 = sbr.rel (%p326) target = $region36
      $region35: #{autoencoder_forward.14} parent=31 // pred_region
        %v329 = vld [vmem:[%s310] sm:$0x1]
        %v331 = vlaneseq
        %v332 = vshrl.u32 %v331, 7
        %v333 = vsub.s32 0, %v332
        %v334 = vrot.slane %v329, %v333
        %336 = vst [vmem:[#allocation2] sm:$0xff] %v334
        %337 = vst [vmem:[#allocation2 + $0x8] sm:$0xff] %v334
      $region36: #{autoencoder_forward.14} parent=31 // pred_fallthru
        _
      %v338 = vld [vmem:[#allocation2] sm:$0xff]
      %v339 = vld [vmem:[#allocation2 + $0x8] sm:$0xff]
      %v340 = vld [vmem:[%s289] sm:$0xff]
      %v341 = vld [vmem:[%s289 + $0x8] sm:$0xff]
      %v342 = vld [vmem:[%s304] sm:$0xf]
      %v343 = vld [vmem:[%s304 + $0x4] sm:$0xf]
      %v344 = vld [vmem:[%s304 + $0x8] sm:$0xf]
      %v345 = vld [vmem:[%s304 + $0xc] sm:$0xf]
      %v346 = vld [vmem:[%s304 + $0x10] sm:$0xf]
      %v347 = vld [vmem:[%s304 + $0x14] sm:$0xf]
      %v348 = vld [vmem:[%s304 + $0x18] sm:$0xf]
      %v349 = vld [vmem:[%s304 + $0x1c] sm:$0xf]
      %v350 = vld [vmem:[%s304 + $0x20] sm:$0xf]
      %v351 = vld [vmem:[%s304 + $0x24] sm:$0xf]
      %v352 = vld [vmem:[%s304 + $0x28] sm:$0xf]
      %v353 = vld [vmem:[%s304 + $0x2c] sm:$0xf]
      %v354 = vld [vmem:[%s304 + $0x30] sm:$0xf]
      %v355 = vld [vmem:[%s304 + $0x34] sm:$0xf]
      %v356 = vld [vmem:[%s304 + $0x38] sm:$0xf]
      %v357 = vld [vmem:[%s304 + $0x3c] sm:$0xf]
      %v358 = vld [vmem:[%s304 + $0x40] sm:$0xf]
      %v359 = vld [vmem:[%s304 + $0x44] sm:$0xf]
      %v360 = vld [vmem:[%s304 + $0x48] sm:$0xf]
      %v361 = vld [vmem:[%s304 + $0x4c] sm:$0xf]
      %v362 = vld [vmem:[%s304 + $0x50] sm:$0xf]
      %v363 = vld [vmem:[%s304 + $0x54] sm:$0xf]
      %v364 = vld [vmem:[%s304 + $0x58] sm:$0xf]
      %v365 = vld [vmem:[%s304 + $0x5c] sm:$0xf]
      %v366 = vld [vmem:[%s304 + $0x60] sm:$0xf]
      %v367 = vld [vmem:[%s304 + $0x64] sm:$0xf]
      %v368 = vld [vmem:[%s304 + $0x68] sm:$0xf]
      %v369 = vld [vmem:[%s304 + $0x6c] sm:$0xf]
      %v370 = vld [vmem:[%s304 + $0x70] sm:$0xf]
      %v371 = vld [vmem:[%s304 + $0x74] sm:$0xf]
      %v372 = vld [vmem:[%s304 + $0x78] sm:$0xf]
      %v373 = vld [vmem:[%s304 + $0x7c] sm:$0xf]
      %v376 = vunpack.c.l.b16 %v340
      %v377 = vunpack.c.h.b16 %v340
      %v378 = vunpack.c.l.b16 %v341
      %v379 = vunpack.c.h.b16 %v341
      %v380 = vpack.c.b16 %v378, %v376
      %v381 = vpack.c.b16 %v379, %v377
      %v416 = vunpack.c.l.b16 %v342
      %v417 = vunpack.c.l.b16 %v343
      %v418 = vunpack.c.l.b16 %v344
      %v419 = vunpack.c.l.b16 %v345
      %v420 = vunpack.c.l.b16 %v346
      %v421 = vunpack.c.l.b16 %v347
      %v422 = vunpack.c.l.b16 %v348
      %v423 = vunpack.c.l.b16 %v349
      %v424 = vunpack.c.l.b16 %v350
      %v425 = vunpack.c.l.b16 %v351
      %v426 = vunpack.c.l.b16 %v352
      %v427 = vunpack.c.l.b16 %v353
      %v428 = vunpack.c.l.b16 %v354
      %v429 = vunpack.c.l.b16 %v355
      %v430 = vunpack.c.l.b16 %v356
      %v431 = vunpack.c.l.b16 %v357
      %v432 = vunpack.c.l.b16 %v358
      %v433 = vunpack.c.l.b16 %v359
      %v434 = vunpack.c.l.b16 %v360
      %v435 = vunpack.c.l.b16 %v361
      %v436 = vunpack.c.l.b16 %v362
      %v437 = vunpack.c.l.b16 %v363
      %v438 = vunpack.c.l.b16 %v364
      %v439 = vunpack.c.l.b16 %v365
      %v440 = vunpack.c.l.b16 %v366
      %v441 = vunpack.c.l.b16 %v367
      %v442 = vunpack.c.l.b16 %v368
      %v443 = vunpack.c.l.b16 %v369
      %v444 = vunpack.c.l.b16 %v370
      %v445 = vunpack.c.l.b16 %v371
      %v446 = vunpack.c.l.b16 %v372
      %v447 = vunpack.c.l.b16 %v373
      %v448 = vpack.c.b16 %v417, %v416
      %v449 = vpack.c.b16 %v419, %v418
      %v450 = vpack.c.b16 %v421, %v420
      %v451 = vpack.c.b16 %v423, %v422
      %v452 = vpack.c.b16 %v425, %v424
      %v453 = vpack.c.b16 %v427, %v426
      %v454 = vpack.c.b16 %v429, %v428
      %v455 = vpack.c.b16 %v431, %v430
      %v456 = vpack.c.b16 %v433, %v432
      %v457 = vpack.c.b16 %v435, %v434
      %v458 = vpack.c.b16 %v437, %v436
      %v459 = vpack.c.b16 %v439, %v438
      %v460 = vpack.c.b16 %v441, %v440
      %v461 = vpack.c.b16 %v443, %v442
      %v462 = vpack.c.b16 %v445, %v444
      %v463 = vpack.c.b16 %v447, %v446
      %480 = vmatprep.subr.bf16.mxu0 0
      %481 = vmatpush1.bf16.msra.mxu0 %v455
      %482 = vmatprep.subr.bf16.mxu0 0
      %483 = vmatpush1.bf16.msra.mxu0 %v454
      %484 = vmatprep.subr.bf16.mxu0 0
      %485 = vmatpush1.bf16.msra.mxu0 %v453
      %486 = vmatprep.subr.bf16.mxu0 0
      %487 = vmatpush1.bf16.msra.mxu0 %v452
      %488 = vmatprep.subr.bf16.mxu0 0
      %489 = vmatpush1.bf16.msra.mxu0 %v451
      %490 = vmatprep.subr.bf16.mxu0 0
      %491 = vmatpush1.bf16.msra.mxu0 %v450
      %492 = vmatprep.subr.bf16.mxu0 0
      %493 = vmatpush1.bf16.msra.mxu0 %v449
      %494 = vmatprep.subr.bf16.mxu0 0
      %495 = vmatpush1.bf16.msra.mxu0 %v448
      %496 = vmatprep.subr.bf16.mxu0 0
      %497 = vmatpush2.bf16.msra.mxu0 %v463
      %498 = vmatprep.subr.bf16.mxu0 0
      %499 = vmatpush2.bf16.msra.mxu0 %v462
      %500 = vmatprep.subr.bf16.mxu0 0
      %501 = vmatpush2.bf16.msra.mxu0 %v461
      %502 = vmatprep.subr.bf16.mxu0 0
      %503 = vmatpush2.bf16.msra.mxu0 %v460
      %504 = vmatprep.subr.bf16.mxu0 0
      %505 = vmatpush2.bf16.msra.mxu0 %v459
      %506 = vmatprep.subr.bf16.mxu0 0
      %507 = vmatpush2.bf16.msra.mxu0 %v458
      %508 = vmatprep.subr.bf16.mxu0 0
      %509 = vmatpush2.bf16.msra.mxu0 %v457
      %510 = vmatprep.subr.bf16.mxu0 0
      %511 = vmatpush2.bf16.msra.mxu0 %v456
      %512 = vmatprep.mubr.bf16.mxu0 %v381
      %513 = vmatmul.mubr.bf16.gmra.mxu0 %v380
      %v514 = vpop.f32.mrf.mxu0
      %v515 = vadd.f32 0.0, %v514
      %v516 = vpop.f32.mrf.mxu0
      %v517 = vpop.f32.mrf.mxu0
      %v518 = vadd.f32 0.0, %v517
      %v519 = vpop.f32.mrf.mxu0
      %520 = vdwg.mxu0
      %v521 = vadd.f32 %v338, %v515
      %v522 = vadd.f32 %v339, %v518
      %523 = vst [vmem:[#allocation2] sm:$0xff] %v521
      %524 = vst [vmem:[#allocation2 + $0x8] sm:$0xff] %v522
      // Predicated region
      $region37: #{autoencoder_forward.14} parent=31 // pred_check
        %p525 = pneg %p325
      $region38: #{autoencoder_forward.14} parent=31 // pred_check_branch
        %527 = sbr.rel (%p525) target = $region40
      $region39: #{autoencoder_forward.14} parent=31 // pred_region
        %v528 = vld [vmem:[#allocation2] sm:$0xff]
        %v529 = vld [vmem:[#allocation2 + $0x8] sm:$0xff]
        %v530 = vpack.c.bf16 %v529, %v528
        %v532 = vunpack.c.l.b16 %v530
        %v533 = vunpack.c.h.b16 %v530
        %v534 = vpack.c.b16 %v532, %v532
        %v535 = vpack.c.b16 %v533, %v533
        %538 = vst [vmem:[%s322] sm:$0xf] %v534
        %539 = vst [vmem:[%s322 + $0x4] sm:$0xf] %v535
      $region40: #{autoencoder_forward.14} parent=31 // pred_fallthru
        _
      %s540 = smul.u32 2, %s21
      %p541 = scmp.lt.s32.totalorder %s20, 2
      %s542 = scalar_select %p541, %s20, 2
      %p543 = scmp.lt.s32.totalorder %s540, 1
      %s544 = scalar_select %p543, %s540, 1
      %p545 = scmp.lt.s32.totalorder %s22, 0
      %s546 = scalar_select %p545, %s22, 0
      %s547 = sadd.s32 %s546, %s544
      %s548 = smul.addr %s542, 2
      %s549 = sadd.s32 %s547, %s548
      %s550 = smul.addr %s549, 4
      %s551 = scalar_lea.vmem %s3, %s550
      // Predicated region
      $region41: #{autoencoder_forward.14} parent=31 // pred_check
        %p552 = pneg %p150
      $region42: #{autoencoder_forward.14} parent=31 // pred_check_branch
        %554 = sbr.rel (%p552) target = $region44
      $region43: #{autoencoder_forward.14} parent=31 // pred_region
        %s555 = smul.u32 2, %s21
      $region44: #{autoencoder_forward.14} parent=31 // pred_fallthru
        _
    $region32: #{autoencoder_forward.14} parent=5 // pred_fallthru
      _
    %p556 = scmp.le.s32.totalorder 2, %s9
    // Predicated region
    $region45: #{autoencoder_forward.14} parent=5 // pred_check
      %p557 = pneg %p556
    $region46: #{autoencoder_forward.14} parent=5 // pred_check_branch
      %559 = sbr.rel (%p557) target = $region48
    $region47: #{autoencoder_forward.14} parent=5 // pred_region
      %s560 = ssub.s32 %s9, 2
      // Predicated region
      $region49: #{autoencoder_forward.14} parent=47 // pred_check
        %p561 = pneg %p156
      $region50: #{autoencoder_forward.14} parent=47 // pred_check_branch
        %563 = sbr.rel (%p561) target = $region52
      $region51: #{autoencoder_forward.14} parent=47 // pred_region
        %s564 = smul.u32 2, %s25
        %p565 = scmp.lt.s32.totalorder %s24, 2
        %s566 = scalar_select %p565, %s24, 2
        %p567 = scmp.lt.s32.totalorder %s564, 1
        %s568 = scalar_select %p567, %s564, 1
        %p569 = scmp.lt.s32.totalorder %s26, 0
        %s570 = scalar_select %p569, %s26, 0
        %s571 = sadd.s32 %s570, %s568
        %s572 = smul.addr %s566, 2
        %s573 = sadd.s32 %s571, %s572
        %s574 = smul.addr %s573, 4
        %s575 = scalar_lea.vmem %s3, %s574
      $region52: #{autoencoder_forward.14} parent=47 // pred_fallthru
        _
    $region48: #{autoencoder_forward.14} parent=5 // pred_fallthru
      _
  $region6: #{autoencoder_forward.14} parent=0 // loop_footer
    %s13 = sadd.s32 1, %s9
  $region7: #{autoencoder_forward.14} parent=0 // loop_footer_branch
    %8 = sbr.rel target = $region3
  $region8: #{autoencoder_forward.14} parent=0 // loop_exit
    _

// kernel: autoencoder_forward.15
$region0: #{autoencoder_forward.15}
  #allocation0 [shape = 'u32[]', space=smem, size = 0x4, offset = 0x4, fixed_abs, tag = 'smem constant byte address 0x4 - core index']
  #allocation1 [shape = 'u32[144,128]{1,0:T(1,128)}', space=vmem, size = 0x12000, scoped, tag = 'internal scratch']
  #allocation2 [shape = 'f32[16,128]{1,0:T(8,128)}', space=vmem, size = 0x2000, scoped, tag = 'scratch operand']
  %s0 = inlined_call_operand.vmem [shape: bf16[3,16,128], index: 0, kind: input, shape index: {}]
  %s1 = inlined_call_operand.vmem [shape: bf16[3,1,2,128,128], index: 1, kind: input, shape index: {}]
  %s2 = inlined_call_operand.vmem [shape: f32[3,1,256], index: 2, kind: input, shape index: {}]
  %s3 = inlined_call_operand.vmem [shape: bf16[3,16,256], index: 3, kind: output, shape index: {}]
  %s4 = sld [smem:[#allocation0]]
  $region90: #{autoencoder_forward.15} parent=0
    _
  %s6 = ssub.s32 1, %s4
  %s7 = scalar_select 0, %s6, %s4
  $region1: #{autoencoder_forward.15} parent=0
    #allocation3 [shape = 'u8[8192]{0}', space=vmem, size = 0x2000, scoped, tag = 'output window, operand 0']
    loop: start=0, step=1, limit=8
    $region2: #{autoencoder_forward.15} parent=1 // loop_pre_header
      _
    $region3: #{autoencoder_forward.15} parent=1 // loop_header
      %s9 = sphi 0, %s13
      %p10 = scmp.ge.s32.totalorder %s9, 8
      %s16 = sphi 0, %s42
      %s17 = sphi 0, %s38
      %s18 = sphi 0, %s34
      %s19 = sphi 0, %s30
      %s20 = sphi 0, %s16
      %s21 = sphi 0, %s17
      %s22 = sphi 0, %s18
      %s23 = sphi 0, %s19
      %s24 = sphi 0, %s20
      %s25 = sphi 0, %s21
      %s26 = sphi 0, %s22
      %s27 = sphi 0, %s23
      %s49 = sphi 0, %s51
      %s52 = sphi 0, %s49
      %s53 = sphi 0, %s52
      %s69 = sphi 0, %s53
      %s79 = sphi 0, %s81
      %s82 = sphi 0, %s79
      %s83 = sphi 0, %s82
      %s99 = sphi 0, %s83
      %s107 = sphi 0, %s109
      %s110 = sphi 0, %s107
      %s111 = sphi 0, %s110
      %s127 = sphi 0, %s111
      %s137 = sphi 0, %s139
      %s140 = sphi 0, %s137
      %s141 = sphi 0, %s140
      %s157 = sphi 0, %s141
    $region4: #{autoencoder_forward.15} parent=1 // loop_header_branch
      %12 = sbr.rel (%p10) target = $region8
    $region5: #{autoencoder_forward.15} parent=1 // loop_body
      %s14 = ssub.s32 %s9, 1
      %s15 = ssub.s32 %s9, 2
      %s28 = sadd.s32 1, %s19
      %p29 = scmp.ge.s32.totalorder %s28, 1
      %s30 = scalar_select %p29, 0, %s28
      %s31 = sadd.s32 1, %s18
      %s32 = scalar_select %p29, %s31, %s18
      %p33 = scmp.ge.s32.totalorder %s32, 2
      %s34 = scalar_select %p33, 0, %s32
      %s35 = sadd.s32 1, %s17
      %s36 = scalar_select %p33, %s35, %s17
      %p37 = scmp.ge.s32.totalorder %s36, 1
      %s38 = scalar_select %p37, 0, %s36
      %s39 = sadd.s32 1, %s16
      %s40 = scalar_select %p37, %s39, %s16
      %p41 = scmp.ge.s32.totalorder %s40, 3
      %s42 = scalar_select %p41, 0, %s40
      %s43 = ssub.s32 %s16, %s42
      %s44 = ssub.s32 %s17, %s38
      %s45 = sor.u32 %s43, %s44
      %s46 = ssub.s32 %s19, %s30
      %s47 = sor.u32 %s45, %s46
      %p48 = scmp.eq.s32.totalorder %s47, 0
      %s50 = sadd.s32 %s49, 1
      %s51 = scalar_select %p48, %s49, %s50
      %p54 = pneg %p48
      %p55 = scmp.eq.s32.totalorder %s9, 5
      %p56 = por %p54, %p55
      %p57 = scmp.ne.s32.totalorder %s49, %s52
      %p58 = scmp.eq.s32.totalorder %s9, 0
      %p59 = por %p57, %p58
      %p60 = scmp.ne.s32.totalorder %s49, %s52
      %p61 = scmp.eq.s32.totalorder %s14, 5
      %p62 = por %p60, %p61
      %p63 = scmp.ne.s32.totalorder %s52, %s53
      %p64 = scmp.eq.s32.totalorder %s14, 0
      %p65 = por %p63, %p64
      %p66 = scmp.ne.s32.totalorder %s52, %s53
      %p67 = scmp.eq.s32.totalorder %s15, 5
      %p68 = por %p66, %p67
      %p70 = scmp.ne.s32.totalorder %s53, %s69
      %p71 = scmp.eq.s32.totalorder %s15, 0
      %p72 = por %p70, %p71
      %s73 = ssub.s32 %s16, %s42
      %s74 = ssub.s32 %s19, %s30
      %s75 = sor.u32 %s73, %s74
      %s76 = ssub.s32 %s18, %s34
      %s77 = sor.u32 %s75, %s76
      %p78 = scmp.eq.s32.totalorder %s77, 0
      %s80 = sadd.s32 %s79, 1
      %s81 = scalar_select %p78, %s79, %s80
      %p84 = pneg %p78
      %p85 = scmp.eq.s32.totalorder %s9, 5
      %p86 = por %p84, %p85
      %p87 = scmp.ne.s32.totalorder %s79, %s82
      %p88 = scmp.eq.s32.totalorder %s9, 0
      %p89 = por %p87, %p88
      %p90 = scmp.ne.s32.totalorder %s79, %s82
      %p91 = scmp.eq.s32.totalorder %s14, 5
      %p92 = por %p90, %p91
      %p93 = scmp.ne.s32.totalorder %s82, %s83
      %p94 = scmp.eq.s32.totalorder %s14, 0
      %p95 = por %p93, %p94
      %p96 = scmp.ne.s32.totalorder %s82, %s83
      %p97 = scmp.eq.s32.totalorder %s15, 5
      %p98 = por %p96, %p97
      %p100 = scmp.ne.s32.totalorder %s83, %s99
      %p101 = scmp.eq.s32.totalorder %s15, 0
      %p102 = por %p100, %p101
      %s103 = ssub.s32 %s16, %s42
      %s104 = ssub.s32 %s18, %s34
      %s105 = sor.u32 %s103, %s104
      %p106 = scmp.eq.s32.totalorder %s105, 0
      %s108 = sadd.s32 %s107, 1
      %s109 = scalar_select %p106, %s107, %s108
      %p112 = pneg %p106
      %p113 = scmp.eq.s32.totalorder %s9, 5
      %p114 = por %p112, %p113
      %p115 = scmp.ne.s32.totalorder %s107, %s110
      %p116 = scmp.eq.s32.totalorder %s9, 0
      %p117 = por %p115, %p116
      %p118 = scmp.ne.s32.totalorder %s107, %s110
      %p119 = scmp.eq.s32.totalorder %s14, 5
      %p120 = por %p118, %p119
      %p121 = scmp.ne.s32.totalorder %s110, %s111
      %p122 = scmp.eq.s32.totalorder %s14, 0
      %p123 = por %p121, %p122
      %p124 = scmp.ne.s32.totalorder %s110, %s111
      %p125 = scmp.eq.s32.totalorder %s15, 5
      %p126 = por %p124, %p125
      %p128 = scmp.ne.s32.totalorder %s111, %s127
      %p129 = scmp.eq.s32.totalorder %s15, 0
      %p130 = por %p128, %p129
      %s131 = ssub.s32 %s16, %s42
      %s132 = ssub.s32 %s17, %s38
      %s133 = sor.u32 %s131, %s132
      %s134 = ssub.s32 %s18, %s34
      %s135 = sor.u32 %s133, %s134
      %p136 = scmp.eq.s32.totalorder %s135, 0
      %s138 = sadd.s32 %s137, 1
      %s139 = scalar_select %p136, %s137, %s138
      %p142 = pneg %p136
      %p143 = scmp.eq.s32.totalorder %s9, 5
      %p144 = por %p142, %p143
      %p145 = scmp.ne.s32.totalorder %s137, %s140
      %p146 = scmp.eq.s32.totalorder %s9, 0
      %p147 = por %p145, %p146
      %p148 = scmp.ne.s32.totalorder %s137, %s140
      %p149 = scmp.eq.s32.totalorder %s14, 5
      %p150 = por %p148, %p149
      %p151 = scmp.ne.s32.totalorder %s140, %s141
      %p152 = scmp.eq.s32.totalorder %s14, 0
      %p153 = por %p151, %p152
      %p154 = scmp.ne.s32.totalorder %s140, %s141
      %p155 = scmp.eq.s32.totalorder %s15, 5
      %p156 = por %p154, %p155
      %p158 = scmp.ne.s32.totalorder %s141, %s157
      %p159 = scmp.eq.s32.totalorder %s15, 0
      %p160 = por %p158, %p159
      %p161 = scmp.le.s32.totalorder 1, %s9
      %p162 = scmp.lt.s32.totalorder %s9, 7
      %p163 = pnand %p161, %p162
      %p164 = pneg %p163
      // Predicated region
      $region9: #{autoencoder_forward.15} parent=5 // pred_check
        _
      $region10: #{autoencoder_forward.15} parent=5 // pred_check_branch
        %166 = sbr.rel (%p163) target = $region12
      $region11: #{autoencoder_forward.15} parent=5 // pred_region
        %s167 = ssub.s32 %s9, 1
      $region12: #{autoencoder_forward.15} parent=5 // pred_fallthru
        _
      %p168 = scmp.lt.s32.totalorder %s9, 6
      // Predicated region
      $region13: #{autoencoder_forward.15} parent=5 // pred_check
        %p169 = pneg %p168
      $region14: #{autoencoder_forward.15} parent=5 // pred_check_branch
        %171 = sbr.rel (%p169) target = $region16
      $region15: #{autoencoder_forward.15} parent=5 // pred_region
        // Predicated region
        $region17: #{autoencoder_forward.15} parent=15 // pred_check
          %p172 = pneg %p59
        $region18: #{autoencoder_forward.15} parent=15 // pred_check_branch
          %174 = sbr.rel (%p172) target = $region20
        $region19: #{autoencoder_forward.15} parent=15 // pred_region
          %s175 = smul.u32 2, %s17
          %p176 = scmp.lt.s32.totalorder %s16, 2
          %s177 = scalar_select %p176, %s16, 2
          %p178 = scmp.lt.s32.totalorder %s175, 1
          %s179 = scalar_select %p178, %s175, 1
          %p180 = scmp.lt.s32.totalorder %s19, 0
          %s181 = scalar_select %p180, %s19, 0
          %s182 = sadd.s32 %s181, %s179
          %s183 = smul.addr %s177, 2
          %s184 = sadd.s32 %s182, %s183
          %s185 = smul.addr %s184, 4
          %s186 = scalar_lea.vmem %s0, %s185
          %s187 = smul.u32 2, %s17
        $region20: #{autoencoder_forward.15} parent=15 // pred_fallthru
          _
        // Predicated region
        $region21: #{autoencoder_forward.15} parent=15 // pred_check
          %p188 = pneg %p89
        $region22: #{autoencoder_forward.15} parent=15 // pred_check_branch
          %190 = sbr.rel (%p188) target = $region24
        $region23: #{autoencoder_forward.15} parent=15 // pred_region
          %p191 = scmp.lt.s32.totalorder %s16, 2
          %s192 = scalar_select %p191, %s16, 2
          %p193 = scmp.lt.s32.totalorder %s19, 0
          %s194 = scalar_select %p193, %s19, 0
          %p195 = scmp.lt.s32.totalorder %s18, 1
          %s196 = scalar_select %p195, %s18, 1
          %s197 = smul.addr %s196, 16
          %s198 = smul.addr %s194, 32
          %s199 = sadd.s32 %s197, %s198
          %s200 = smul.addr %s192, 32
          %s201 = sadd.s32 %s199, %s200
          %s202 = smul.addr %s201, 4
          %s203 = scalar_lea.vmem %s1, %s202
        $region24: #{autoencoder_forward.15} parent=15 // pred_fallthru
          _
        // Predicated region
        $region25: #{autoencoder_forward.15} parent=15 // pred_check
          %p204 = pneg %p117
        $region26: #{autoencoder_forward.15} parent=15 // pred_check_branch
          %206 = sbr.rel (%p204) target = $region28
        $region27: #{autoencoder_forward.15} parent=15 // pred_region
          %p207 = scmp.lt.s32.totalorder %s16, 2
          %s208 = scalar_select %p207, %s16, 2
          %p209 = scmp.lt.s32.totalorder %s18, 1
          %s210 = scalar_select %p209, %s18, 1
          %s211 = smul.addr %s208, 2
          %s212 = sadd.s32 %s210, %s211
          %s213 = scalar_lea.vmem %s2, %s212
        $region28: #{autoencoder_forward.15} parent=15 // pred_fallthru
          _
      $region16: #{autoencoder_forward.15} parent=5 // pred_fallthru
        _
      %p214 = scmp.le.s32.totalorder 1, %s9
      %p215 = scmp.lt.s32.totalorder %s9, 7
      %p216 = pnand %p214, %p215
      %p217 = pneg %p216
      // Predicated region
      $region29: #{autoencoder_forward.15} parent=5 // pred_check
        _
      $region30: #{autoencoder_forward.15} parent=5 // pred_check_branch
        %219 = sbr.rel (%p216) target = $region32
      $region31: #{autoencoder_forward.15} parent=5 // pred_region
        %s220 = ssub.s32 %s9, 1
        %s221 = smul.u32 2, %s21
        %p222 = scmp.lt.s32.totalorder %s20, 2
        %s223 = scalar_select %p222, %s20, 2
        %p224 = scmp.lt.s32.totalorder %s221, 1
        %s225 = scalar_select %p224, %s221, 1
        %p226 = scmp.lt.s32.totalorder %s23, 0
        %s227 = scalar_select %p226, %s23, 0
        %s228 = sadd.s32 %s227, %s225
        %s229 = smul.addr %s223, 2
        %s230 = sadd.s32 %s228, %s229
        %s231 = smul.addr %s230, 4
        %s232 = scalar_lea.vmem %s0, %s231
        %p233 = pneg %p65
        %p234 = pneg %p62
        %p235 = scmp.lt.s32.totalorder %s20, 2
        %s236 = scalar_select %p235, %s20, 2
        %p237 = scmp.lt.s32.totalorder %s23, 0
        %s238 = scalar_select %p237, %s23, 0
        %p239 = scmp.lt.s32.totalorder %s22, 1
        %s240 = scalar_select %p239, %s22, 1
        %s241 = smul.addr %s240, 16
        %s242 = smul.addr %s238, 32
        %s243 = sadd.s32 %s241, %s242
        %s244 = smul.addr %s236, 32
        %s245 = sadd.s32 %s243, %s244
        %s246 = smul.addr %s245, 4
        %s247 = scalar_lea.vmem %s1, %s246
        %p248 = pneg %p95
        %p249 = pneg %p92
        %p250 = scmp.lt.s32.totalorder %s20, 2
        %s251 = scalar_select %p250, %s20, 2
        %p252 = scmp.lt.s32.totalorder %s22, 1
        %s253 = scalar_select %p252, %s22, 1
        %s254 = smul.addr %s251, 2
        %s255 = sadd.s32 %s253, %s254
        %s256 = scalar_lea.vmem %s2, %s255
        %p257 = pneg %p123
        %p258 = pneg %p120
        %p259 = pneg %p153
        %p260 = pneg %p150
        %s261 = sand.u32 %s140, 1
        %s262 = sand.u32 %s140, 1
        %s263 = smul.addr %s262, 8
        %s264 = scalar_lea.vmem [#allocation3], %s263
        %s265 = smul.u32 2, %s21
        %p266 = scmp.lt.s32.totalorder %s20, 2
        %s267 = scalar_select %p266, %s20, 2
        %p268 = scmp.lt.s32.totalorder %s265, 1
        %s269 = scalar_select %p268, %s265, 1
        %p270 = scmp.lt.s32.totalorder %s23, 0
        %s271 = scalar_select %p270, %s23, 0
        %s272 = sadd.s32 %s271, %s269
        %s273 = smul.addr %s267, 2
        %s274 = sadd.s32 %s272, %s273
        %s275 = smul.addr %s274, 4
        %s276 = scalar_lea.vmem %s0, %s275
        %s277 = smul.u32 2, %s21
        %p278 = scmp.lt.s32.totalorder %s20, 2
        %s279 = scalar_select %p278, %s20, 2
        %p280 = scmp.lt.s32.totalorder %s23, 0
        %s281 = scalar_select %p280, %s23, 0
        %p282 = scmp.lt.s32.totalorder %s22, 1
        %s283 = scalar_select %p282, %s22, 1
        %s284 = smul.addr %s283, 16
        %s285 = smul.addr %s281, 32
        %s286 = sadd.s32 %s284, %s285
        %s287 = smul.addr %s279, 32
        %s288 = sadd.s32 %s286, %s287
        %s289 = smul.addr %s288, 4
        %s290 = scalar_lea.vmem %s1, %s289
        %p291 = scmp.lt.s32.totalorder %s20, 2
        %s292 = scalar_select %p291, %s20, 2
        %p293 = scmp.lt.s32.totalorder %s22, 1
        %s294 = scalar_select %p293, %s22, 1
        %s295 = smul.addr %s292, 2
        %s296 = sadd.s32 %s294, %s295
        %s297 = scalar_lea.vmem %s2, %s296
        %s298 = smul.u32 2, %s21
        %p300 = scmp.eq.s32.totalorder %s23, 0
        // Predicated region
        $region33: #{autoencoder_forward.15} parent=31 // pred_check
          %p301 = pneg %p300
        $region34: #{autoencoder_forward.15} parent=31 // pred_check_branch
          %303 = sbr.rel (%p301) target = $region36
        $region35: #{autoencoder_forward.15} parent=31 // pred_region
          %v304 = vld [vmem:[%s297] sm:$0x1]
          %v306 = vlaneseq
          %v307 = vshrl.u32 %v306, 7
          %v308 = vsub.s32 0, %v307
          %v309 = vrot.slane %v304, %v308
          %311 = vst [vmem:[#allocation2] sm:$0xff] %v309
          %312 = vst [vmem:[#allocation2 + $0x8] sm:$0xff] %v309
        $region36: #{autoencoder_forward.15} parent=31 // pred_fallthru
          _
        %v313 = vld [vmem:[#allocation2] sm:$0xff]
        %v314 = vld [vmem:[#allocation2 + $0x8] sm:$0xff]
        %v315 = vld [vmem:[%s276] sm:$0xf]
        %v316 = vld [vmem:[%s276 + $0x4] sm:$0xf]
        %v317 = vld [vmem:[%s290] sm:$0xf]
        %v318 = vld [vmem:[%s290 + $0x4] sm:$0xf]
        %v319 = vld [vmem:[%s290 + $0x8] sm:$0xf]
        %v320 = vld [vmem:[%s290 + $0xc] sm:$0xf]
        %v321 = vld [vmem:[%s290 + $0x10] sm:$0xf]
        %v322 = vld [vmem:[%s290 + $0x14] sm:$0xf]
        %v323 = vld [vmem:[%s290 + $0x18] sm:$0xf]
        %v324 = vld [vmem:[%s290 + $0x1c] sm:$0xf]
        %v325 = vld [vmem:[%s290 + $0x20] sm:$0xf]
        %v326 = vld [vmem:[%s290 + $0x24] sm:$0xf]
        %v327 = vld [vmem:[%s290 + $0x28] sm:$0xf]
        %v328 = vld [vmem:[%s290 + $0x2c] sm:$0xf]
        %v329 = vld [vmem:[%s290 + $0x30] sm:$0xf]
        %v330 = vld [vmem:[%s290 + $0x34] sm:$0xf]
        %v331 = vld [vmem:[%s290 + $0x38] sm:$0xf]
        %v332 = vld [vmem:[%s290 + $0x3c] sm:$0xf]
        %v335 = vunpack.c.l.b16 %v315
        %v336 = vunpack.c.l.b16 %v316
        %v337 = vpack.c.b16 %v336, %v335
        %v355 = vunpack.c.l.b16 %v317
        %v356 = vunpack.c.l.b16 %v318
        %v357 = vunpack.c.l.b16 %v319
        %v358 = vunpack.c.l.b16 %v320
        %v359 = vunpack.c.l.b16 %v321
        %v360 = vunpack.c.l.b16 %v322
        %v361 = vunpack.c.l.b16 %v323
        %v362 = vunpack.c.l.b16 %v324
        %v363 = vunpack.c.l.b16 %v325
        %v364 = vunpack.c.l.b16 %v326
        %v365 = vunpack.c.l.b16 %v327
        %v366 = vunpack.c.l.b16 %v328
        %v367 = vunpack.c.l.b16 %v329
        %v368 = vunpack.c.l.b16 %v330
        %v369 = vunpack.c.l.b16 %v331
        %v370 = vunpack.c.l.b16 %v332
        %v371 = vpack.c.b16 %v356, %v355
        %v372 = vpack.c.b16 %v358, %v357
        %v373 = vpack.c.b16 %v360, %v359
        %v374 = vpack.c.b16 %v362, %v361
        %v375 = vpack.c.b16 %v364, %v363
        %v376 = vpack.c.b16 %v366, %v365
        %v377 = vpack.c.b16 %v368, %v367
        %v378 = vpack.c.b16 %v370, %v369
        %387 = vmatprep.subr.bf16.mxu0 0
        %388 = vmatpush1.bf16.msra.mxu0 %v378
        %389 = vmatprep.subr.bf16.mxu0 0
        %390 = vmatpush1.bf16.msra.mxu0 %v377
        %391 = vmatprep.subr.bf16.mxu0 0
        %392 = vmatpush1.bf16.msra.mxu0 %v376
        %393 = vmatprep.subr.bf16.mxu0 0
        %394 = vmatpush1.bf16.msra.mxu0 %v375
        %395 = vmatprep.subr.bf16.mxu0 0
        %396 = vmatpush1.bf16.msra.mxu0 %v374
        %397 = vmatprep.subr.bf16.mxu0 0
        %398 = vmatpush1.bf16.msra.mxu0 %v373
        %399 = vmatprep.subr.bf16.mxu0 0
        %400 = vmatpush1.bf16.msra.mxu0 %v372
        %401 = vmatprep.subr.bf16.mxu0 0
        %402 = vmatpush1.bf16.msra.mxu0 %v371
        %403 = vmatprep.subr.bf16.mxu0 0
        %404 = vmatpush2.bf16.msra.mxu0 0
        %405 = vmatprep.subr.bf16.mxu0 0
        %406 = vmatpush2.bf16.msra.mxu0 0
        %407 = vmatprep.subr.bf16.mxu0 0
        %408 = vmatpush2.bf16.msra.mxu0 0
        %409 = vmatprep.subr.bf16.mxu0 0
        %410 = vmatpush2.bf16.msra.mxu0 0
        %411 = vmatprep.subr.bf16.mxu0 0
        %412 = vmatpush2.bf16.msra.mxu0 0
        %413 = vmatprep.subr.bf16.mxu0 0
        %414 = vmatpush2.bf16.msra.mxu0 0
        %415 = vmatprep.subr.bf16.mxu0 0
        %416 = vmatpush2.bf16.msra.mxu0 0
        %417 = vmatprep.subr.bf16.mxu0 0
        %418 = vmatpush2.bf16.msra.mxu0 0
        %419 = vmatprep.mubr.bf16.mxu0 0
        %420 = vmatmul.mubr.bf16.gmra.mxu0 %v337
        %v421 = vpop.f32.mrf.mxu0
        %v422 = vadd.f32 0.0, %v421
        %v423 = vpop.f32.mrf.mxu0
        %v424 = vpop.f32.mrf.mxu0
        %v425 = vadd.f32 0.0, %v424
        %v426 = vpop.f32.mrf.mxu0
        %427 = vdwg.mxu0
        %v428 = vadd.f32 %v313, %v422
        %v429 = vadd.f32 %v314, %v425
        %430 = vst [vmem:[#allocation2] sm:$0xff] %v428
        %431 = vst [vmem:[#allocation2 + $0x8] sm:$0xff] %v429
        // Predicated region
        $region37: #{autoencoder_forward.15} parent=31 // pred_check
          %p432 = pneg %p300
        $region38: #{autoencoder_forward.15} parent=31 // pred_check_branch
          %434 = sbr.rel (%p432) target = $region40
        $region39: #{autoencoder_forward.15} parent=31 // pred_region
          %v435 = vld [vmem:[#allocation2] sm:$0xff]
          %v436 = vld [vmem:[#allocation2 + $0x8] sm:$0xff]
          %v437 = vpack.c.bf16 %v436, %v435
          %v439 = vunpack.c.l.b16 %v437
          %v440 = vunpack.c.h.b16 %v437
          %v441 = vpack.c.b16 %v439, %v439
          %v442 = vpack.c.b16 %v440, %v440
          %445 = vst [vmem:[%s264] sm:$0xf] %v441
          %446 = vst [vmem:[%s264 + $0x4] sm:$0xf] %v442
        $region40: #{autoencoder_forward.15} parent=31 // pred_fallthru
          _
        %s447 = sand.u32 %s140, 1
        %s448 = sand.u32 %s140, 1
        %s449 = smul.addr %s448, 8
        %s450 = scalar_lea.vmem [#allocation3], %s449
        // Predicated region
        $region41: #{autoencoder_forward.15} parent=31 // pred_check
          %p451 = pneg %p150
        $region42: #{autoencoder_forward.15} parent=31 // pred_check_branch
          %453 = sbr.rel (%p451) target = $region44
        $region43: #{autoencoder_forward.15} parent=31 // pred_region
          %s454 = smul.u32 2, %s21
          %s455 = smul.addr %s454, 2
          %s456 = sadd.s32 %s22, %s455
          %s457 = smul.addr %s20, 4
          %s458 = sadd.s32 %s456, %s457
          %s459 = smul.addr %s458, 4
          %s460 = scalar_lea.vmem %s3, %s459
          // Predicated region
          $region45: #{autoencoder_forward.15} parent=43 // pred_check
            _
          $region46: #{autoencoder_forward.15} parent=43 // pred_check_branch
            %462 = sbr.rel (0) target = $region48
          $region47: #{autoencoder_forward.15} parent=43 // pred_region
            // Predicated region
            $region49: #{autoencoder_forward.15} parent=47 // pred_check
              _
            $region50: #{autoencoder_forward.15} parent=47 // pred_check_branch
              %464 = sbr.rel target = $region52
            $region51: #{autoencoder_forward.15} parent=47 // pred_region
              // Predicated region
              $region64: #{autoencoder_forward.15} parent=51 // pred_check
                _
              $region65: #{autoencoder_forward.15} parent=51 // pred_check_branch
                %482 = sbr.rel (0) target = $region67
              $region66: #{autoencoder_forward.15} parent=51 // pred_region
                loop: start=0, step=1, limit=1
                $region68: #{autoencoder_forward.15} parent=66 // loop_pre_header
                  _
                $region69: #{autoencoder_forward.15} parent=66 // loop_header
                  %s484 = sphi 0, %s488
                  %p485 = scmp.ge.s32.totalorder %s484, 1
                  %s489 = sphi %s450, %s450
                  %s490 = sphi %s460, %s460
                $region70: #{autoencoder_forward.15} parent=66 // loop_header_branch
                  %487 = sbr.rel (%p485) target = $region74
                $region71: #{autoencoder_forward.15} parent=66 // loop_body
                  _
                $region72: #{autoencoder_forward.15} parent=66 // loop_footer
                  %s488 = sadd.s32 1, %s484
                $region73: #{autoencoder_forward.15} parent=66 // loop_footer_branch
                  %483 = sbr.rel target = $region69
                $region74: #{autoencoder_forward.15} parent=66 // loop_exit
                  _
                %s492 = ssub.s32 16, 1
                loop: start=0, step=1, limit=1
                $region75: #{autoencoder_forward.15} parent=66 // loop_pre_header
                  _
                $region76: #{autoencoder_forward.15} parent=66 // loop_header
                  %s494 = sphi 0, %s498
                  %p495 = scmp.ge.s32.totalorder %s494, 1
                  %s499 = sphi %s450, %s450
                  %s500 = sphi %s460, %s460
                $region77: #{autoencoder_forward.15} parent=66 // loop_header_branch
                  %497 = sbr.rel (%p495) target = $region81
                $region78: #{autoencoder_forward.15} parent=66 // loop_body
                  %v501 = vld [vmem:[%s499] sm:%s492]
                  %502 = vst [vmem:[%s500] sm:%s492] %v501
                  %v503 = vld [vmem:[%s499 + $0x4] sm:%s492]
                  %504 = vst [vmem:[%s500 + $0x8] sm:%s492] %v503
                $region79: #{autoencoder_forward.15} parent=66 // loop_footer
                  %s498 = sadd.s32 1, %s494
                $region80: #{autoencoder_forward.15} parent=66 // loop_footer_branch
                  %493 = sbr.rel target = $region76
                $region81: #{autoencoder_forward.15} parent=66 // loop_exit
                  _
              $region67: #{autoencoder_forward.15} parent=51 // pred_fallthru
                _
            $region52: #{autoencoder_forward.15} parent=47 // pred_fallthru
              _
            // Predicated region
            $region53: #{autoencoder_forward.15} parent=47 // pred_check
              _
            $region54: #{autoencoder_forward.15} parent=47 // pred_check_branch
              %466 = sbr.rel (0) target = $region56
            $region55: #{autoencoder_forward.15} parent=47 // pred_region
              %s468 = ssub.s32 16, 1
              loop: start=0, step=1, limit=1
              $region57: #{autoencoder_forward.15} parent=55 // loop_pre_header
                _
              $region58: #{autoencoder_forward.15} parent=55 // loop_header
                %s470 = sphi 0, %s474
                %p471 = scmp.ge.s32.totalorder %s470, 1
                %s475 = sphi %s450, %s450
                %s476 = sphi %s460, %s460
              $region59: #{autoencoder_forward.15} parent=55 // loop_header_branch
                %473 = sbr.rel (%p471) target = $region63
              $region60: #{autoencoder_forward.15} parent=55 // loop_body
                %v477 = vld [vmem:[%s475] sm:%s468]
                %478 = vst [vmem:[%s476] sm:%s468] %v477
                %v479 = vld [vmem:[%s475 + $0x4] sm:%s468]
                %480 = vst [vmem:[%s476 + $0x8] sm:%s468] %v479
              $region61: #{autoencoder_forward.15} parent=55 // loop_footer
                %s474 = sadd.s32 1, %s470
              $region62: #{autoencoder_forward.15} parent=55 // loop_footer_branch
                %469 = sbr.rel target = $region58
              $region63: #{autoencoder_forward.15} parent=55 // loop_exit
                _
            $region56: #{autoencoder_forward.15} parent=47 // pred_fallthru
              _
          $region48: #{autoencoder_forward.15} parent=43 // pred_fallthru
            _
          %505 = vnop
        $region44: #{autoencoder_forward.15} parent=31 // pred_fallthru
          _
      $region32: #{autoencoder_forward.15} parent=5 // pred_fallthru
        _
      %p506 = scmp.le.s32.totalorder 2, %s9
      // Predicated region
      $region82: #{autoencoder_forward.15} parent=5 // pred_check
        %p507 = pneg %p506
      $region83: #{autoencoder_forward.15} parent=5 // pred_check_branch
        %509 = sbr.rel (%p507) target = $region85
      $region84: #{autoencoder_forward.15} parent=5 // pred_region
        %s510 = ssub.s32 %s9, 2
        // Predicated region
        $region86: #{autoencoder_forward.15} parent=84 // pred_check
          %p511 = pneg %p156
        $region87: #{autoencoder_forward.15} parent=84 // pred_check_branch
          %513 = sbr.rel (%p511) target = $region89
        $region88: #{autoencoder_forward.15} parent=84 // pred_region
          %s514 = sand.u32 %s141, 1
          %s515 = sand.u32 %s141, 1
          %s516 = smul.addr %s515, 8
          %s517 = scalar_lea.vmem [#allocation3], %s516
        $region89: #{autoencoder_forward.15} parent=84 // pred_fallthru
          _
      $region85: #{autoencoder_forward.15} parent=5 // pred_fallthru
        _
    $region6: #{autoencoder_forward.15} parent=1 // loop_footer
      %s13 = sadd.s32 1, %s9
    $region7: #{autoencoder_forward.15} parent=1 // loop_footer_branch
      %8 = sbr.rel target = $region3
    $region8: #{autoencoder_forward.15} parent=1 // loop_exit
      _

// kernel: autoencoder_forward.16
$region0: #{autoencoder_forward.16}
  #allocation0 [shape = 'u32[]', space=smem, size = 0x4, offset = 0x4, fixed_abs, tag = 'smem constant byte address 0x4 - core index']
  #allocation1 [shape = 'u32[144,128]{1,0:T(1,128)}', space=vmem, size = 0x12000, scoped, tag = 'internal scratch']
  #allocation2 [shape = 'f32[16,256]{1,0:T(8,128)}', space=vmem, size = 0x4000, scoped, tag = 'scratch operand']
  %s0 = inlined_call_operand.vmem [shape: bf16[3,16,256], index: 0, kind: input, shape index: {}]
  %s1 = inlined_call_operand.vmem [shape: bf16[3,1,2,256,256], index: 1, kind: input, shape index: {}]
  %s2 = inlined_call_operand.vmem [shape: f32[3,1,512], index: 2, kind: input, shape index: {}]
  %s3 = inlined_call_operand.vmem [shape: bf16[3,16,512], index: 3, kind: output, shape index: {}]
  %s4 = sld [smem:[#allocation0]]
  $region87: #{autoencoder_forward.16} parent=0
    _
  %s6 = ssub.s32 1, %s4
  %s7 = scalar_select 0, %s6, %s4
  $region1: #{autoencoder_forward.16} parent=0
    #allocation3 [shape = 'u8[16384]{0}', space=vmem, size = 0x4000, scoped, tag = 'output window, operand 0']
    loop: start=0, step=1, limit=8
    $region2: #{autoencoder_forward.16} parent=1 // loop_pre_header
      _
    $region3: #{autoencoder_forward.16} parent=1 // loop_header
      %s9 = sphi 0, %s13
      %p10 = scmp.ge.s32.totalorder %s9, 8
      %s16 = sphi 0, %s42
      %s17 = sphi 0, %s38
      %s18 = sphi 0, %s34
      %s19 = sphi 0, %s30
      %s20 = sphi 0, %s16
      %s21 = sphi 0, %s17
      %s22 = sphi 0, %s18
      %s23 = sphi 0, %s19
      %s24 = sphi 0, %s20
      %s25 = sphi 0, %s21
      %s26 = sphi 0, %s22
      %s27 = sphi 0, %s23
      %s49 = sphi 0, %s51
      %s52 = sphi 0, %s49
      %s53 = sphi 0, %s52
      %s69 = sphi 0, %s53
      %s79 = sphi 0, %s81
      %s82 = sphi 0, %s79
      %s83 = sphi 0, %s82
      %s99 = sphi 0, %s83
      %s107 = sphi 0, %s109
      %s110 = sphi 0, %s107
      %s111 = sphi 0, %s110
      %s127 = sphi 0, %s111
      %s137 = sphi 0, %s139
      %s140 = sphi 0, %s137
      %s141 = sphi 0, %s140
      %s157 = sphi 0, %s141
    $region4: #{autoencoder_forward.16} parent=1 // loop_header_branch
      %12 = sbr.rel (%p10) target = $region8
    $region5: #{autoencoder_forward.16} parent=1 // loop_body
      %s14 = ssub.s32 %s9, 1
      %s15 = ssub.s32 %s9, 2
      %s28 = sadd.s32 1, %s19
      %p29 = scmp.ge.s32.totalorder %s28, 1
      %s30 = scalar_select %p29, 0, %s28
      %s31 = sadd.s32 1, %s18
      %s32 = scalar_select %p29, %s31, %s18
      %p33 = scmp.ge.s32.totalorder %s32, 2
      %s34 = scalar_select %p33, 0, %s32
      %s35 = sadd.s32 1, %s17
      %s36 = scalar_select %p33, %s35, %s17
      %p37 = scmp.ge.s32.totalorder %s36, 1
      %s38 = scalar_select %p37, 0, %s36
      %s39 = sadd.s32 1, %s16
      %s40 = scalar_select %p37, %s39, %s16
      %p41 = scmp.ge.s32.totalorder %s40, 3
      %s42 = scalar_select %p41, 0, %s40
      %s43 = ssub.s32 %s16, %s42
      %s44 = ssub.s32 %s17, %s38
      %s45 = sor.u32 %s43, %s44
      %s46 = ssub.s32 %s19, %s30
      %s47 = sor.u32 %s45, %s46
      %p48 = scmp.eq.s32.totalorder %s47, 0
      %s50 = sadd.s32 %s49, 1
      %s51 = scalar_select %p48, %s49, %s50
      %p54 = pneg %p48
      %p55 = scmp.eq.s32.totalorder %s9, 5
      %p56 = por %p54, %p55
      %p57 = scmp.ne.s32.totalorder %s49, %s52
      %p58 = scmp.eq.s32.totalorder %s9, 0
      %p59 = por %p57, %p58
      %p60 = scmp.ne.s32.totalorder %s49, %s52
      %p61 = scmp.eq.s32.totalorder %s14, 5
      %p62 = por %p60, %p61
      %p63 = scmp.ne.s32.totalorder %s52, %s53
      %p64 = scmp.eq.s32.totalorder %s14, 0
      %p65 = por %p63, %p64
      %p66 = scmp.ne.s32.totalorder %s52, %s53
      %p67 = scmp.eq.s32.totalorder %s15, 5
      %p68 = por %p66, %p67
      %p70 = scmp.ne.s32.totalorder %s53, %s69
      %p71 = scmp.eq.s32.totalorder %s15, 0
      %p72 = por %p70, %p71
      %s73 = ssub.s32 %s16, %s42
      %s74 = ssub.s32 %s19, %s30
      %s75 = sor.u32 %s73, %s74
      %s76 = ssub.s32 %s18, %s34
      %s77 = sor.u32 %s75, %s76
      %p78 = scmp.eq.s32.totalorder %s77, 0
      %s80 = sadd.s32 %s79, 1
      %s81 = scalar_select %p78, %s79, %s80
      %p84 = pneg %p78
      %p85 = scmp.eq.s32.totalorder %s9, 5
      %p86 = por %p84, %p85
      %p87 = scmp.ne.s32.totalorder %s79, %s82
      %p88 = scmp.eq.s32.totalorder %s9, 0
      %p89 = por %p87, %p88
      %p90 = scmp.ne.s32.totalorder %s79, %s82
      %p91 = scmp.eq.s32.totalorder %s14, 5
      %p92 = por %p90, %p91
      %p93 = scmp.ne.s32.totalorder %s82, %s83
      %p94 = scmp.eq.s32.totalorder %s14, 0
      %p95 = por %p93, %p94
      %p96 = scmp.ne.s32.totalorder %s82, %s83
      %p97 = scmp.eq.s32.totalorder %s15, 5
      %p98 = por %p96, %p97
      %p100 = scmp.ne.s32.totalorder %s83, %s99
      %p101 = scmp.eq.s32.totalorder %s15, 0
      %p102 = por %p100, %p101
      %s103 = ssub.s32 %s16, %s42
      %s104 = ssub.s32 %s18, %s34
      %s105 = sor.u32 %s103, %s104
      %p106 = scmp.eq.s32.totalorder %s105, 0
      %s108 = sadd.s32 %s107, 1
      %s109 = scalar_select %p106, %s107, %s108
      %p112 = pneg %p106
      %p113 = scmp.eq.s32.totalorder %s9, 5
      %p114 = por %p112, %p113
      %p115 = scmp.ne.s32.totalorder %s107, %s110
      %p116 = scmp.eq.s32.totalorder %s9, 0
      %p117 = por %p115, %p116
      %p118 = scmp.ne.s32.totalorder %s107, %s110
      %p119 = scmp.eq.s32.totalorder %s14, 5
      %p120 = por %p118, %p119
      %p121 = scmp.ne.s32.totalorder %s110, %s111
      %p122 = scmp.eq.s32.totalorder %s14, 0
      %p123 = por %p121, %p122
      %p124 = scmp.ne.s32.totalorder %s110, %s111
      %p125 = scmp.eq.s32.totalorder %s15, 5
      %p126 = por %p124, %p125
      %p128 = scmp.ne.s32.totalorder %s111, %s127
      %p129 = scmp.eq.s32.totalorder %s15, 0
      %p130 = por %p128, %p129
      %s131 = ssub.s32 %s16, %s42
      %s132 = ssub.s32 %s17, %s38
      %s133 = sor.u32 %s131, %s132
      %s134 = ssub.s32 %s18, %s34
      %s135 = sor.u32 %s133, %s134
      %p136 = scmp.eq.s32.totalorder %s135, 0
      %s138 = sadd.s32 %s137, 1
      %s139 = scalar_select %p136, %s137, %s138
      %p142 = pneg %p136
      %p143 = scmp.eq.s32.totalorder %s9, 5
      %p144 = por %p142, %p143
      %p145 = scmp.ne.s32.totalorder %s137, %s140
      %p146 = scmp.eq.s32.totalorder %s9, 0
      %p147 = por %p145, %p146
      %p148 = scmp.ne.s32.totalorder %s137, %s140
      %p149 = scmp.eq.s32.totalorder %s14, 5
      %p150 = por %p148, %p149
      %p151 = scmp.ne.s32.totalorder %s140, %s141
      %p152 = scmp.eq.s32.totalorder %s14, 0
      %p153 = por %p151, %p152
      %p154 = scmp.ne.s32.totalorder %s140, %s141
      %p155 = scmp.eq.s32.totalorder %s15, 5
      %p156 = por %p154, %p155
      %p158 = scmp.ne.s32.totalorder %s141, %s157
      %p159 = scmp.eq.s32.totalorder %s15, 0
      %p160 = por %p158, %p159
      %p161 = scmp.le.s32.totalorder 1, %s9
      %p162 = scmp.lt.s32.totalorder %s9, 7
      %p163 = pnand %p161, %p162
      %p164 = pneg %p163
      // Predicated region
      $region9: #{autoencoder_forward.16} parent=5 // pred_check
        _
      $region10: #{autoencoder_forward.16} parent=5 // pred_check_branch
        %166 = sbr.rel (%p163) target = $region12
      $region11: #{autoencoder_forward.16} parent=5 // pred_region
        %s167 = ssub.s32 %s9, 1
      $region12: #{autoencoder_forward.16} parent=5 // pred_fallthru
        _
      %p168 = scmp.lt.s32.totalorder %s9, 6
      // Predicated region
      $region13: #{autoencoder_forward.16} parent=5 // pred_check
        %p169 = pneg %p168
      $region14: #{autoencoder_forward.16} parent=5 // pred_check_branch
        %171 = sbr.rel (%p169) target = $region16
      $region15: #{autoencoder_forward.16} parent=5 // pred_region
        // Predicated region
        $region17: #{autoencoder_forward.16} parent=15 // pred_check
          %p172 = pneg %p59
        $region18: #{autoencoder_forward.16} parent=15 // pred_check_branch
          %174 = sbr.rel (%p172) target = $region20
        $region19: #{autoencoder_forward.16} parent=15 // pred_region
          %s175 = smul.u32 2, %s17
          %s176 = smul.u32 2, %s19
          %p177 = scmp.lt.s32.totalorder %s16, 2
          %s178 = scalar_select %p177, %s16, 2
          %p179 = scmp.lt.s32.totalorder %s175, 1
          %s180 = scalar_select %p179, %s175, 1
          %p181 = scmp.lt.s32.totalorder %s176, 1
          %s182 = scalar_select %p181, %s176, 1
          %s183 = smul.addr %s180, 2
          %s184 = sadd.s32 %s182, %s183
          %s185 = smul.addr %s178, 4
          %s186 = sadd.s32 %s184, %s185
          %s187 = smul.addr %s186, 4
          %s188 = scalar_lea.vmem %s0, %s187
          %s189 = smul.u32 2, %s17
          %s190 = smul.u32 2, %s19
        $region20: #{autoencoder_forward.16} parent=15 // pred_fallthru
          _
        // Predicated region
        $region21: #{autoencoder_forward.16} parent=15 // pred_check
          %p191 = pneg %p89
        $region22: #{autoencoder_forward.16} parent=15 // pred_check_branch
          %193 = sbr.rel (%p191) target = $region24
        $region23: #{autoencoder_forward.16} parent=15 // pred_region
          %p194 = scmp.lt.s32.totalorder %s16, 2
          %s195 = scalar_select %p194, %s16, 2
          %p196 = scmp.lt.s32.totalorder %s19, 0
          %s197 = scalar_select %p196, %s19, 0
          %p198 = scmp.lt.s32.totalorder %s18, 1
          %s199 = scalar_select %p198, %s18, 1
          %s200 = smul.addr %s199, 64
          %s201 = smul.addr %s197, 128
          %s202 = sadd.s32 %s200, %s201
          %s203 = smul.addr %s195, 128
          %s204 = sadd.s32 %s202, %s203
          %s205 = smul.addr %s204, 4
          %s206 = scalar_lea.vmem %s1, %s205
        $region24: #{autoencoder_forward.16} parent=15 // pred_fallthru
          _
        // Predicated region
        $region25: #{autoencoder_forward.16} parent=15 // pred_check
          %p207 = pneg %p117
        $region26: #{autoencoder_forward.16} parent=15 // pred_check_branch
          %209 = sbr.rel (%p207) target = $region28
        $region27: #{autoencoder_forward.16} parent=15 // pred_region
          %s210 = smul.u32 2, %s18
          %p211 = scmp.lt.s32.totalorder %s16, 2
          %s212 = scalar_select %p211, %s16, 2
          %p213 = scmp.lt.s32.totalorder %s210, 3
          %s214 = scalar_select %p213, %s210, 3
          %s215 = smul.addr %s212, 4
          %s216 = sadd.s32 %s214, %s215
          %s217 = scalar_lea.vmem %s2, %s216
          %s218 = smul.u32 2, %s18
        $region28: #{autoencoder_forward.16} parent=15 // pred_fallthru
          _
      $region16: #{autoencoder_forward.16} parent=5 // pred_fallthru
        _
      %p219 = scmp.le.s32.totalorder 1, %s9
      %p220 = scmp.lt.s32.totalorder %s9, 7
      %p221 = pnand %p219, %p220
      %p222 = pneg %p221
      // Predicated region
      $region29: #{autoencoder_forward.16} parent=5 // pred_check
        _
      $region30: #{autoencoder_forward.16} parent=5 // pred_check_branch
        %224 = sbr.rel (%p221) target = $region32
      $region31: #{autoencoder_forward.16} parent=5 // pred_region
        %s225 = ssub.s32 %s9, 1
        %s226 = smul.u32 2, %s21
        %s227 = smul.u32 2, %s23
        %p228 = scmp.lt.s32.totalorder %s20, 2
        %s229 = scalar_select %p228, %s20, 2
        %p230 = scmp.lt.s32.totalorder %s226, 1
        %s231 = scalar_select %p230, %s226, 1
        %p232 = scmp.lt.s32.totalorder %s227, 1
        %s233 = scalar_select %p232, %s227, 1
        %s234 = smul.addr %s231, 2
        %s235 = sadd.s32 %s233, %s234
        %s236 = smul.addr %s229, 4
        %s237 = sadd.s32 %s235, %s236
        %s238 = smul.addr %s237, 4
        %s239 = scalar_lea.vmem %s0, %s238
        %p240 = pneg %p65
        %p241 = pneg %p62
        %p242 = scmp.lt.s32.totalorder %s20, 2
        %s243 = scalar_select %p242, %s20, 2
        %p244 = scmp.lt.s32.totalorder %s23, 0
        %s245 = scalar_select %p244, %s23, 0
        %p246 = scmp.lt.s32.totalorder %s22, 1
        %s247 = scalar_select %p246, %s22, 1
        %s248 = smul.addr %s247, 64
        %s249 = smul.addr %s245, 128
        %s250 = sadd.s32 %s248, %s249
        %s251 = smul.addr %s243, 128
        %s252 = sadd.s32 %s250, %s251
        %s253 = smul.addr %s252, 4
        %s254 = scalar_lea.vmem %s1, %s253
        %p255 = pneg %p95
        %p256 = pneg %p92
        %s257 = smul.u32 2, %s22
        %p258 = scmp.lt.s32.totalorder %s20, 2
        %s259 = scalar_select %p258, %s20, 2
        %p260 = scmp.lt.s32.totalorder %s257, 3
        %s261 = scalar_select %p260, %s257, 3
        %s262 = smul.addr %s259, 4
        %s263 = sadd.s32 %s261, %s262
        %s264 = scalar_lea.vmem %s2, %s263
        %p265 = pneg %p123
        %p266 = pneg %p120
        %p267 = pneg %p153
        %p268 = pneg %p150
        %s269 = sand.u32 %s140, 1
        %s270 = sand.u32 %s140, 1
        %s271 = smul.addr %s270, 16
        %s272 = scalar_lea.vmem [#allocation3], %s271
        %s273 = smul.u32 2, %s21
        %s274 = smul.u32 2, %s23
        %p275 = scmp.lt.s32.totalorder %s20, 2
        %s276 = scalar_select %p275, %s20, 2
        %p277 = scmp.lt.s32.totalorder %s273, 1
        %s278 = scalar_select %p277, %s273, 1
        %p279 = scmp.lt.s32.totalorder %s274, 1
        %s280 = scalar_select %p279, %s274, 1
        %s281 = smul.addr %s278, 2
        %s282 = sadd.s32 %s280, %s281
        %s283 = smul.addr %s276, 4
        %s284 = sadd.s32 %s282, %s283
        %s285 = smul.addr %s284, 4
        %s286 = scalar_lea.vmem %s0, %s285
        %s287 = smul.u32 2, %s21
        %s288 = smul.u32 2, %s23
        %p289 = scmp.lt.s32.totalorder %s20, 2
        %s290 = scalar_select %p289, %s20, 2
        %p291 = scmp.lt.s32.totalorder %s23, 0
        %s292 = scalar_select %p291, %s23, 0
        %p293 = scmp.lt.s32.totalorder %s22, 1
        %s294 = scalar_select %p293, %s22, 1
        %s295 = smul.addr %s294, 64
        %s296 = smul.addr %s292, 128
        %s297 = sadd.s32 %s295, %s296
        %s298 = smul.addr %s290, 128
        %s299 = sadd.s32 %s297, %s298
        %s300 = smul.addr %s299, 4
        %s301 = scalar_lea.vmem %s1, %s300
        %s302 = smul.u32 2, %s22
        %p303 = scmp.lt.s32.totalorder %s20, 2
        %s304 = scalar_select %p303, %s20, 2
        %p305 = scmp.lt.s32.totalorder %s302, 3
        %s306 = scalar_select %p305, %s302, 3
        %s307 = smul.addr %s304, 4
        %s308 = sadd.s32 %s306, %s307
        %s309 = scalar_lea.vmem %s2, %s308
        %s310 = smul.u32 2, %s22
        %s311 = smul.u32 2, %s21
        %s312 = smul.u32 2, %s22
        %p313 = scmp.eq.s32.totalorder %s23, 0
        // Predicated region
        $region33: #{autoencoder_forward.16} parent=31 // pred_check
          %p314 = pneg %p313
        $region34: #{autoencoder_forward.16} parent=31 // pred_check_branch
          %316 = sbr.rel (%p314) target = $region36
        $region35: #{autoencoder_forward.16} parent=31 // pred_region
          %v317 = vld [vmem:[%s309] sm:$0x3]
          %v319 = vlaneseq
          %v320 = vshrl.u32 %v319, 7
          %v321 = vsub.s32 0, %v320
          %v322 = vrot.slane %v317, %v321
          %v323 = vlaneseq
          %v324 = vshrl.u32 %v323, 7
          %v325 = vsub.s32 1, %v324
          %v326 = vrot.slane %v317, %v325
          %329 = vst [vmem:[#allocation2] sm:$0xff] %v322
          %330 = vst [vmem:[#allocation2 + $0x8] sm:$0xff] %v326
          %331 = vst [vmem:[#allocation2 + $0x10] sm:$0xff] %v322
          %332 = vst [vmem:[#allocation2 + $0x18] sm:$0xff] %v326
        $region36: #{autoencoder_forward.16} parent=31 // pred_fallthru
          _
        %v333 = vld [vmem:[#allocation2] sm:$0xff]
        %v334 = vld [vmem:[#allocation2 + $0x8] sm:$0xff]
        %v335 = vld [vmem:[#allocation2 + $0x10] sm:$0xff]
        %v336 = vld [vmem:[#allocation2 + $0x18] sm:$0xff]
        %v337 = vld [vmem:[%s286] sm:$0xff]
        %v338 = vld [vmem:[%s286 + $0x8] sm:$0xff]
        %v339 = vld [vmem:[%s301] sm:$0xff]
        %v340 = vld [vmem:[%s301 + $0x8] sm:$0xff]
        %v341 = vld [vmem:[%s301 + $0x10] sm:$0xff]
        %v342 = vld [vmem:[%s301 + $0x18] sm:$0xff]
        %v343 = vld [vmem:[%s301 + $0x20] sm:$0xff]
        %v344 = vld [vmem:[%s301 + $0x28] sm:$0xff]
        %v345 = vld [vmem:[%s301 + $0x30] sm:$0xff]
        %v346 = vld [vmem:[%s301 + $0x38] sm:$0xff]
        %v347 = vld [vmem:[%s301 + $0x40] sm:$0xff]
        %v348 = vld [vmem:[%s301 + $0x48] sm:$0xff]
        %v349 = vld [vmem:[%s301 + $0x50] sm:$0xff]
        %v350 = vld [vmem:[%s301 + $0x58] sm:$0xff]
        %v351 = vld [vmem:[%s301 + $0x60] sm:$0xff]
        %v352 = vld [vmem:[%s301 + $0x68] sm:$0xff]
        %v353 = vld [vmem:[%s301 + $0x70] sm:$0xff]
        %v354 = vld [vmem:[%s301 + $0x78] sm:$0xff]
        %v355 = vld [vmem:[%s301 + $0x80] sm:$0xff]
        %v356 = vld [vmem:[%s301 + $0x88] sm:$0xff]
        %v357 = vld [vmem:[%s301 + $0x90] sm:$0xff]
        %v358 = vld [vmem:[%s301 + $0x98] sm:$0xff]
        %v359 = vld [vmem:[%s301 + $0xa0] sm:$0xff]
        %v360 = vld [vmem:[%s301 + $0xa8] sm:$0xff]
        %v361 = vld [vmem:[%s301 + $0xb0] sm:$0xff]
        %v362 = vld [vmem:[%s301 + $0xb8] sm:$0xff]
        %v363 = vld [vmem:[%s301 + $0xc0] sm:$0xff]
        %v364 = vld [vmem:[%s301 + $0xc8] sm:$0xff]
        %v365 = vld [vmem:[%s301 + $0xd0] sm:$0xff]
        %v366 = vld [vmem:[%s301 + $0xd8] sm:$0xff]
        %v367 = vld [vmem:[%s301 + $0xe0] sm:$0xff]
        %v368 = vld [vmem:[%s301 + $0xe8] sm:$0xff]
        %v369 = vld [vmem:[%s301 + $0xf0] sm:$0xff]
        %v370 = vld [vmem:[%s301 + $0xf8] sm:$0xff]
        %v373 = vunpack.c.l.b16 %v337
        %v374 = vunpack.c.h.b16 %v337
        %v375 = vunpack.c.l.b16 %v338
        %v376 = vunpack.c.h.b16 %v338
        %v377 = vpack.c.b16 %v375, %v373
        %v378 = vpack.c.b16 %v376, %v374
        %v413 = vunpack.c.l.b16 %v339
        %v414 = vunpack.c.h.b16 %v339
        %v415 = vunpack.c.l.b16 %v340
        %v416 = vunpack.c.h.b16 %v340
        %v417 = vunpack.c.l.b16 %v341
        %v418 = vunpack.c.h.b16 %v341
        %v419 = vunpack.c.l.b16 %v342
        %v420 = vunpack.c.h.b16 %v342
        %v421 = vunpack.c.l.b16 %v343
        %v422 = vunpack.c.h.b16 %v343
        %v423 = vunpack.c.l.b16 %v344
        %v424 = vunpack.c.h.b16 %v344
        %v425 = vunpack.c.l.b16 %v345
        %v426 = vunpack.c.h.b16 %v345
        %v427 = vunpack.c.l.b16 %v346
        %v428 = vunpack.c.h.b16 %v346
        %v429 = vunpack.c.l.b16 %v347
        %v430 = vunpack.c.h.b16 %v347
        %v431 = vunpack.c.l.b16 %v348
        %v432 = vunpack.c.h.b16 %v348
        %v433 = vunpack.c.l.b16 %v349
        %v434 = vunpack.c.h.b16 %v349
        %v435 = vunpack.c.l.b16 %v350
        %v436 = vunpack.c.h.b16 %v350
        %v437 = vunpack.c.l.b16 %v351
        %v438 = vunpack.c.h.b16 %v351
        %v439 = vunpack.c.l.b16 %v352
        %v440 = vunpack.c.h.b16 %v352
        %v441 = vunpack.c.l.b16 %v353
        %v442 = vunpack.c.h.b16 %v353
        %v443 = vunpack.c.l.b16 %v354
        %v444 = vunpack.c.h.b16 %v354
        %v445 = vunpack.c.l.b16 %v355
        %v446 = vunpack.c.h.b16 %v355
        %v447 = vunpack.c.l.b16 %v356
        %v448 = vunpack.c.h.b16 %v356
        %v449 = vunpack.c.l.b16 %v357
        %v450 = vunpack.c.h.b16 %v357
        %v451 = vunpack.c.l.b16 %v358
        %v452 = vunpack.c.h.b16 %v358
        %v453 = vunpack.c.l.b16 %v359
        %v454 = vunpack.c.h.b16 %v359
        %v455 = vunpack.c.l.b16 %v360
        %v456 = vunpack.c.h.b16 %v360
        %v457 = vunpack.c.l.b16 %v361
        %v458 = vunpack.c.h.b16 %v361
        %v459 = vunpack.c.l.b16 %v362
        %v460 = vunpack.c.h.b16 %v362
        %v461 = vunpack.c.l.b16 %v363
        %v462 = vunpack.c.h.b16 %v363
        %v463 = vunpack.c.l.b16 %v364
        %v464 = vunpack.c.h.b16 %v364
        %v465 = vunpack.c.l.b16 %v365
        %v466 = vunpack.c.h.b16 %v365
        %v467 = vunpack.c.l.b16 %v366
        %v468 = vunpack.c.h.b16 %v366
        %v469 = vunpack.c.l.b16 %v367
        %v470 = vunpack.c.h.b16 %v367
        %v471 = vunpack.c.l.b16 %v368
        %v472 = vunpack.c.h.b16 %v368
        %v473 = vunpack.c.l.b16 %v369
        %v474 = vunpack.c.h.b16 %v369
        %v475 = vunpack.c.l.b16 %v370
        %v476 = vunpack.c.h.b16 %v370
        %v477 = vpack.c.b16 %v415, %v413
        %v478 = vpack.c.b16 %v416, %v414
        %v479 = vpack.c.b16 %v419, %v417
        %v480 = vpack.c.b16 %v420, %v418
        %v481 = vpack.c.b16 %v423, %v421
        %v482 = vpack.c.b16 %v424, %v422
        %v483 = vpack.c.b16 %v427, %v425
        %v484 = vpack.c.b16 %v428, %v426
        %v485 = vpack.c.b16 %v431, %v429
        %v486 = vpack.c.b16 %v432, %v430
        %v487 = vpack.c.b16 %v435, %v433
        %v488 = vpack.c.b16 %v436, %v434
        %v489 = vpack.c.b16 %v439, %v437
        %v490 = vpack.c.b16 %v440, %v438
        %v491 = vpack.c.b16 %v443, %v441
        %v492 = vpack.c.b16 %v444, %v442
        %v493 = vpack.c.b16 %v447, %v445
        %v494 = vpack.c.b16 %v448, %v446
        %v495 = vpack.c.b16 %v451, %v449
        %v496 = vpack.c.b16 %v452, %v450
        %v497 = vpack.c.b16 %v455, %v453
        %v498 = vpack.c.b16 %v456, %v454
        %v499 = vpack.c.b16 %v459, %v457
        %v500 = vpack.c.b16 %v460, %v458
        %v501 = vpack.c.b16 %v463, %v461
        %v502 = vpack.c.b16 %v464, %v462
        %v503 = vpack.c.b16 %v467, %v465
        %v504 = vpack.c.b16 %v468, %v466
        %v505 = vpack.c.b16 %v471, %v469
        %v506 = vpack.c.b16 %v472, %v470
        %v507 = vpack.c.b16 %v475, %v473
        %v508 = vpack.c.b16 %v476, %v474
        %541 = vmatprep.subr.bf16.mxu0 %v492
        %542 = vmatpush1.bf16.msra.mxu0 %v491
        %543 = vmatprep.subr.bf16.mxu0 %v490
        %544 = vmatpush1.bf16.msra.mxu0 %v489
        %545 = vmatprep.subr.bf16.mxu0 %v488
        %546 = vmatpush1.bf16.msra.mxu0 %v487
        %547 = vmatprep.subr.bf16.mxu0 %v486
        %548 = vmatpush1.bf16.msra.mxu0 %v485
        %549 = vmatprep.subr.bf16.mxu0 %v484
        %550 = vmatpush1.bf16.msra.mxu0 %v483
        %551 = vmatprep.subr.bf16.mxu0 %v482
        %552 = vmatpush1.bf16.msra.mxu0 %v481
        %553 = vmatprep.subr.bf16.mxu0 %v480
        %554 = vmatpush1.bf16.msra.mxu0 %v479
        %555 = vmatprep.subr.bf16.mxu0 %v478
        %556 = vmatpush1.bf16.msra.mxu0 %v477
        %557 = vmatprep.subr.bf16.mxu0 %v508
        %558 = vmatpush2.bf16.msra.mxu0 %v507
        %559 = vmatprep.subr.bf16.mxu0 %v506
        %560 = vmatpush2.bf16.msra.mxu0 %v505
        %561 = vmatprep.subr.bf16.mxu0 %v504
        %562 = vmatpush2.bf16.msra.mxu0 %v503
        %563 = vmatprep.subr.bf16.mxu0 %v502
        %564 = vmatpush2.bf16.msra.mxu0 %v501
        %565 = vmatprep.subr.bf16.mxu0 %v500
        %566 = vmatpush2.bf16.msra.mxu0 %v499
        %567 = vmatprep.subr.bf16.mxu0 %v498
        %568 = vmatpush2.bf16.msra.mxu0 %v497
        %569 = vmatprep.subr.bf16.mxu0 %v496
        %570 = vmatpush2.bf16.msra.mxu0 %v495
        %571 = vmatprep.subr.bf16.mxu0 %v494
        %572 = vmatpush2.bf16.msra.mxu0 %v493
        %573 = vmatprep.mubr.bf16.mxu0 %v378
        %574 = vmatmul.mubr.bf16.gmra.mxu0 %v377
        %v575 = vpop.f32.mrf.mxu0
        %v576 = vadd.f32 0.0, %v575
        %v577 = vpop.f32.mrf.mxu0
        %v578 = vadd.f32 0.0, %v577
        %v579 = vpop.f32.mrf.mxu0
        %v580 = vadd.f32 0.0, %v579
        %v581 = vpop.f32.mrf.mxu0
        %v582 = vadd.f32 0.0, %v581
        %583 = vdwg.mxu0
        %v584 = vadd.f32 %v333, %v576
        %v585 = vadd.f32 %v334, %v578
        %v586 = vadd.f32 %v335, %v580
        %v587 = vadd.f32 %v336, %v582
        %588 = vst [vmem:[#allocation2] sm:$0xff] %v584
        %589 = vst [vmem:[#allocation2 + $0x8] sm:$0xff] %v585
        %590 = vst [vmem:[#allocation2 + $0x10] sm:$0xff] %v586
        %591 = vst [vmem:[#allocation2 + $0x18] sm:$0xff] %v587
        // Predicated region
        $region37: #{autoencoder_forward.16} parent=31 // pred_check
          %p592 = pneg %p313
        $region38: #{autoencoder_forward.16} parent=31 // pred_check_branch
          %594 = sbr.rel (%p592) target = $region40
        $region39: #{autoencoder_forward.16} parent=31 // pred_region
          %v595 = vld [vmem:[#allocation2] sm:$0xff]
          %v596 = vld [vmem:[#allocation2 + $0x8] sm:$0xff]
          %v597 = vld [vmem:[#allocation2 + $0x10] sm:$0xff]
          %v598 = vld [vmem:[#allocation2 + $0x18] sm:$0xff]
          %v599 = vpack.c.bf16 %v597, %v595
          %v600 = vpack.c.bf16 %v598, %v596
          %v603 = vunpack.c.l.b16 %v599
          %v604 = vunpack.c.l.b16 %v600
          %v605 = vunpack.c.h.b16 %v599
          %v606 = vunpack.c.h.b16 %v600
          %v607 = vpack.c.b16 %v604, %v603
          %v608 = vpack.c.b16 %v606, %v605
          %611 = vst [vmem:[%s272] sm:$0xff] %v607
          %612 = vst [vmem:[%s272 + $0x8] sm:$0xff] %v608
        $region40: #{autoencoder_forward.16} parent=31 // pred_fallthru
          _
        %s613 = sand.u32 %s140, 1
        %s614 = sand.u32 %s140, 1
        %s615 = smul.addr %s614, 16
        %s616 = scalar_lea.vmem [#allocation3], %s615
        // Predicated region
        $region41: #{autoencoder_forward.16} parent=31 // pred_check
          %p617 = pneg %p150
        $region42: #{autoencoder_forward.16} parent=31 // pred_check_branch
          %619 = sbr.rel (%p617) target = $region44
        $region43: #{autoencoder_forward.16} parent=31 // pred_region
          %s620 = smul.u32 2, %s21
          %s621 = smul.u32 2, %s22
          %s622 = smul.addr %s620, 4
          %s623 = sadd.s32 %s621, %s622
          %s624 = smul.addr %s20, 8
          %s625 = sadd.s32 %s623, %s624
          %s626 = smul.addr %s625, 4
          %s627 = scalar_lea.vmem %s3, %s626
          // Predicated region
          $region45: #{autoencoder_forward.16} parent=43 // pred_check
            _
          $region46: #{autoencoder_forward.16} parent=43 // pred_check_branch
            %629 = sbr.rel (0) target = $region48
          $region47: #{autoencoder_forward.16} parent=43 // pred_region
            // Predicated region
            $region49: #{autoencoder_forward.16} parent=47 // pred_check
              _
            $region50: #{autoencoder_forward.16} parent=47 // pred_check_branch
              %631 = sbr.rel (0) target = $region52
            $region51: #{autoencoder_forward.16} parent=47 // pred_region
              // Predicated region
              $region64: #{autoencoder_forward.16} parent=51 // pred_check
                _
              $region65: #{autoencoder_forward.16} parent=51 // pred_check_branch
                %649 = sbr.rel (0) target = $region67
              $region66: #{autoencoder_forward.16} parent=51 // pred_region
                loop: start=0, step=1, limit=1
                $region68: #{autoencoder_forward.16} parent=66 // loop_pre_header
                  _
                $region69: #{autoencoder_forward.16} parent=66 // loop_header
                  %s651 = sphi 0, %s655
                  %p652 = scmp.ge.s32.totalorder %s651, 1
                  %s656 = sphi %s616, %s616
                  %s657 = sphi %s627, %s627
                $region70: #{autoencoder_forward.16} parent=66 // loop_header_branch
                  %654 = sbr.rel (%p652) target = $region74
                $region71: #{autoencoder_forward.16} parent=66 // loop_body
                  %v658 = vld [vmem:[%s656] sm:$0xff]
                  %659 = vst [vmem:[%s657] sm:$0xff] %v658
                  %v660 = vld [vmem:[%s656 + $0x8] sm:$0xff]
                  %661 = vst [vmem:[%s657 + $0x10] sm:$0xff] %v660
                $region72: #{autoencoder_forward.16} parent=66 // loop_footer
                  %s655 = sadd.s32 1, %s651
                $region73: #{autoencoder_forward.16} parent=66 // loop_footer_branch
                  %650 = sbr.rel target = $region69
                $region74: #{autoencoder_forward.16} parent=66 // loop_exit
                  _
              $region67: #{autoencoder_forward.16} parent=51 // pred_fallthru
                _
              // Predicated region
              $region75: #{autoencoder_forward.16} parent=51 // pred_check
                _
              $region76: #{autoencoder_forward.16} parent=51 // pred_check_branch
                %663 = sbr.rel target = $region78
              $region77: #{autoencoder_forward.16} parent=51 // pred_region
                _
              $region78: #{autoencoder_forward.16} parent=51 // pred_fallthru
                _
            $region52: #{autoencoder_forward.16} parent=47 // pred_fallthru
              _
            // Predicated region
            $region53: #{autoencoder_forward.16} parent=47 // pred_check
              _
            $region54: #{autoencoder_forward.16} parent=47 // pred_check_branch
              %633 = sbr.rel target = $region56
            $region55: #{autoencoder_forward.16} parent=47 // pred_region
              %s635 = ssub.s32 256, 1
              loop: start=0, step=1, limit=1
              $region57: #{autoencoder_forward.16} parent=55 // loop_pre_header
                _
              $region58: #{autoencoder_forward.16} parent=55 // loop_header
                %s637 = sphi 0, %s641
                %p638 = scmp.ge.s32.totalorder %s637, 1
                %s642 = sphi %s616, %s616
                %s643 = sphi %s627, %s627
              $region59: #{autoencoder_forward.16} parent=55 // loop_header_branch
                %640 = sbr.rel (%p638) target = $region63
              $region60: #{autoencoder_forward.16} parent=55 // loop_body
                %v644 = vld [vmem:[%s642] sm:%s635]
                %645 = vst [vmem:[%s643] sm:%s635] %v644
                %v646 = vld [vmem:[%s642 + $0x8] sm:%s635]
                %647 = vst [vmem:[%s643 + $0x10] sm:%s635] %v646
              $region61: #{autoencoder_forward.16} parent=55 // loop_footer
                %s641 = sadd.s32 1, %s637
              $region62: #{autoencoder_forward.16} parent=55 // loop_footer_branch
                %636 = sbr.rel target = $region58
              $region63: #{autoencoder_forward.16} parent=55 // loop_exit
                _
            $region56: #{autoencoder_forward.16} parent=47 // pred_fallthru
              _
          $region48: #{autoencoder_forward.16} parent=43 // pred_fallthru
            _
          %664 = vnop
        $region44: #{autoencoder_forward.16} parent=31 // pred_fallthru
          _
      $region32: #{autoencoder_forward.16} parent=5 // pred_fallthru
        _
      %p665 = scmp.le.s32.totalorder 2, %s9
      // Predicated region
      $region79: #{autoencoder_forward.16} parent=5 // pred_check
        %p666 = pneg %p665
      $region80: #{autoencoder_forward.16} parent=5 // pred_check_branch
        %668 = sbr.rel (%p666) target = $region82
      $region81: #{autoencoder_forward.16} parent=5 // pred_region
        %s669 = ssub.s32 %s9, 2
        // Predicated region
        $region83: #{autoencoder_forward.16} parent=81 // pred_check
          %p670 = pneg %p156
        $region84: #{autoencoder_forward.16} parent=81 // pred_check_branch
          %672 = sbr.rel (%p670) target = $region86
        $region85: #{autoencoder_forward.16} parent=81 // pred_region
          %s673 = sand.u32 %s141, 1
          %s674 = sand.u32 %s141, 1
          %s675 = smul.addr %s674, 16
          %s676 = scalar_lea.vmem [#allocation3], %s675
        $region86: #{autoencoder_forward.16} parent=81 // pred_fallthru
          _
      $region82: #{autoencoder_forward.16} parent=5 // pred_fallthru
        _
    $region6: #{autoencoder_forward.16} parent=1 // loop_footer
      %s13 = sadd.s32 1, %s9
    $region7: #{autoencoder_forward.16} parent=1 // loop_footer_branch
      %8 = sbr.rel target = $region3
    $region8: #{autoencoder_forward.16} parent=1 // loop_exit
      _

// kernel: autoencoder_forward.17
$region0: #{autoencoder_forward.17}
  #allocation0 [shape = 'u32[]', space=smem, size = 0x4, offset = 0x4, fixed_abs, tag = 'smem constant byte address 0x4 - core index']
  #allocation1 [shape = 'u32[144,128]{1,0:T(1,128)}', space=vmem, size = 0x12000, scoped, tag = 'internal scratch']
  #allocation2 [shape = 'f32[16,128]{1,0:T(8,128)}', space=vmem, size = 0x2000, scoped, tag = 'scratch operand']
  %s0 = inlined_call_operand.vmem [shape: bf16[1,16,512], index: 0, kind: input, shape index: {}]
  %s1 = inlined_call_operand.vmem [shape: bf16[1,1,2,512,128], index: 1, kind: input, shape index: {}]
  %s2 = inlined_call_operand.vmem [shape: f32[1,1,256], index: 2, kind: input, shape index: {}]
  %s3 = inlined_call_operand.vmem [shape: f32[1,16,256], index: 3, kind: output, shape index: {}]
  %s4 = sld [smem:[#allocation0]]
  $region87: #{autoencoder_forward.17} parent=0
    _
  %s6 = ssub.s32 1, %s4
  %s7 = scalar_select 0, %s6, %s4
  $region1: #{autoencoder_forward.17} parent=0
    #allocation3 [shape = 'u8[16384]{0}', space=vmem, size = 0x4000, scoped, tag = 'output window, operand 0']
    loop: start=0, step=1, limit=4
    $region2: #{autoencoder_forward.17} parent=1 // loop_pre_header
      _
    $region3: #{autoencoder_forward.17} parent=1 // loop_header
      %s9 = sphi 0, %s13
      %p10 = scmp.ge.s32.totalorder %s9, 4
      %s16 = sphi 0, %s42
      %s17 = sphi 0, %s38
      %s18 = sphi 0, %s34
      %s19 = sphi 0, %s30
      %s20 = sphi 0, %s16
      %s21 = sphi 0, %s17
      %s22 = sphi 0, %s18
      %s23 = sphi 0, %s19
      %s24 = sphi 0, %s20
      %s25 = sphi 0, %s21
      %s26 = sphi 0, %s22
      %s27 = sphi 0, %s23
      %s49 = sphi 0, %s51
      %s52 = sphi 0, %s49
      %s53 = sphi 0, %s52
      %s69 = sphi 0, %s53
      %s79 = sphi 0, %s81
      %s82 = sphi 0, %s79
      %s83 = sphi 0, %s82
      %s99 = sphi 0, %s83
      %s107 = sphi 0, %s109
      %s110 = sphi 0, %s107
      %s111 = sphi 0, %s110
      %s127 = sphi 0, %s111
      %s137 = sphi 0, %s139
      %s140 = sphi 0, %s137
      %s141 = sphi 0, %s140
      %s157 = sphi 0, %s141
    $region4: #{autoencoder_forward.17} parent=1 // loop_header_branch
      %12 = sbr.rel (%p10) target = $region8
    $region5: #{autoencoder_forward.17} parent=1 // loop_body
      %s14 = ssub.s32 %s9, 1
      %s15 = ssub.s32 %s9, 2
      %s28 = sadd.s32 1, %s19
      %p29 = scmp.ge.s32.totalorder %s28, 1
      %s30 = scalar_select %p29, 0, %s28
      %s31 = sadd.s32 1, %s18
      %s32 = scalar_select %p29, %s31, %s18
      %p33 = scmp.ge.s32.totalorder %s32, 2
      %s34 = scalar_select %p33, 0, %s32
      %s35 = sadd.s32 1, %s17
      %s36 = scalar_select %p33, %s35, %s17
      %p37 = scmp.ge.s32.totalorder %s36, 1
      %s38 = scalar_select %p37, 0, %s36
      %s39 = sadd.s32 1, %s16
      %s40 = scalar_select %p37, %s39, %s16
      %p41 = scmp.ge.s32.totalorder %s40, 1
      %s42 = scalar_select %p41, 0, %s40
      %s43 = ssub.s32 %s16, %s42
      %s44 = ssub.s32 %s17, %s38
      %s45 = sor.u32 %s43, %s44
      %s46 = ssub.s32 %s19, %s30
      %s47 = sor.u32 %s45, %s46
      %p48 = scmp.eq.s32.totalorder %s47, 0
      %s50 = sadd.s32 %s49, 1
      %s51 = scalar_select %p48, %s49, %s50
      %p54 = pneg %p48
      %p55 = scmp.eq.s32.totalorder %s9, 1
      %p56 = por %p54, %p55
      %p57 = scmp.ne.s32.totalorder %s49, %s52
      %p58 = scmp.eq.s32.totalorder %s9, 0
      %p59 = por %p57, %p58
      %p60 = scmp.ne.s32.totalorder %s49, %s52
      %p61 = scmp.eq.s32.totalorder %s14, 1
      %p62 = por %p60, %p61
      %p63 = scmp.ne.s32.totalorder %s52, %s53
      %p64 = scmp.eq.s32.totalorder %s14, 0
      %p65 = por %p63, %p64
      %p66 = scmp.ne.s32.totalorder %s52, %s53
      %p67 = scmp.eq.s32.totalorder %s15, 1
      %p68 = por %p66, %p67
      %p70 = scmp.ne.s32.totalorder %s53, %s69
      %p71 = scmp.eq.s32.totalorder %s15, 0
      %p72 = por %p70, %p71
      %s73 = ssub.s32 %s16, %s42
      %s74 = ssub.s32 %s19, %s30
      %s75 = sor.u32 %s73, %s74
      %s76 = ssub.s32 %s18, %s34
      %s77 = sor.u32 %s75, %s76
      %p78 = scmp.eq.s32.totalorder %s77, 0
      %s80 = sadd.s32 %s79, 1
      %s81 = scalar_select %p78, %s79, %s80
      %p84 = pneg %p78
      %p85 = scmp.eq.s32.totalorder %s9, 1
      %p86 = por %p84, %p85
      %p87 = scmp.ne.s32.totalorder %s79, %s82
      %p88 = scmp.eq.s32.totalorder %s9, 0
      %p89 = por %p87, %p88
      %p90 = scmp.ne.s32.totalorder %s79, %s82
      %p91 = scmp.eq.s32.totalorder %s14, 1
      %p92 = por %p90, %p91
      %p93 = scmp.ne.s32.totalorder %s82, %s83
      %p94 = scmp.eq.s32.totalorder %s14, 0
      %p95 = por %p93, %p94
      %p96 = scmp.ne.s32.totalorder %s82, %s83
      %p97 = scmp.eq.s32.totalorder %s15, 1
      %p98 = por %p96, %p97
      %p100 = scmp.ne.s32.totalorder %s83, %s99
      %p101 = scmp.eq.s32.totalorder %s15, 0
      %p102 = por %p100, %p101
      %s103 = ssub.s32 %s16, %s42
      %s104 = ssub.s32 %s18, %s34
      %s105 = sor.u32 %s103, %s104
      %p106 = scmp.eq.s32.totalorder %s105, 0
      %s108 = sadd.s32 %s107, 1
      %s109 = scalar_select %p106, %s107, %s108
      %p112 = pneg %p106
      %p113 = scmp.eq.s32.totalorder %s9, 1
      %p114 = por %p112, %p113
      %p115 = scmp.ne.s32.totalorder %s107, %s110
      %p116 = scmp.eq.s32.totalorder %s9, 0
      %p117 = por %p115, %p116
      %p118 = scmp.ne.s32.totalorder %s107, %s110
      %p119 = scmp.eq.s32.totalorder %s14, 1
      %p120 = por %p118, %p119
      %p121 = scmp.ne.s32.totalorder %s110, %s111
      %p122 = scmp.eq.s32.totalorder %s14, 0
      %p123 = por %p121, %p122
      %p124 = scmp.ne.s32.totalorder %s110, %s111
      %p125 = scmp.eq.s32.totalorder %s15, 1
      %p126 = por %p124, %p125
      %p128 = scmp.ne.s32.totalorder %s111, %s127
      %p129 = scmp.eq.s32.totalorder %s15, 0
      %p130 = por %p128, %p129
      %s131 = ssub.s32 %s16, %s42
      %s132 = ssub.s32 %s17, %s38
      %s133 = sor.u32 %s131, %s132
      %s134 = ssub.s32 %s18, %s34
      %s135 = sor.u32 %s133, %s134
      %p136 = scmp.eq.s32.totalorder %s135, 0
      %s138 = sadd.s32 %s137, 1
      %s139 = scalar_select %p136, %s137, %s138
      %p142 = pneg %p136
      %p143 = scmp.eq.s32.totalorder %s9, 1
      %p144 = por %p142, %p143
      %p145 = scmp.ne.s32.totalorder %s137, %s140
      %p146 = scmp.eq.s32.totalorder %s9, 0
      %p147 = por %p145, %p146
      %p148 = scmp.ne.s32.totalorder %s137, %s140
      %p149 = scmp.eq.s32.totalorder %s14, 1
      %p150 = por %p148, %p149
      %p151 = scmp.ne.s32.totalorder %s140, %s141
      %p152 = scmp.eq.s32.totalorder %s14, 0
      %p153 = por %p151, %p152
      %p154 = scmp.ne.s32.totalorder %s140, %s141
      %p155 = scmp.eq.s32.totalorder %s15, 1
      %p156 = por %p154, %p155
      %p158 = scmp.ne.s32.totalorder %s141, %s157
      %p159 = scmp.eq.s32.totalorder %s15, 0
      %p160 = por %p158, %p159
      %p161 = scmp.le.s32.totalorder 1, %s9
      %p162 = scmp.lt.s32.totalorder %s9, 3
      %p163 = pnand %p161, %p162
      %p164 = pneg %p163
      // Predicated region
      $region9: #{autoencoder_forward.17} parent=5 // pred_check
        _
      $region10: #{autoencoder_forward.17} parent=5 // pred_check_branch
        %166 = sbr.rel (%p163) target = $region12
      $region11: #{autoencoder_forward.17} parent=5 // pred_region
        %s167 = ssub.s32 %s9, 1
        // Predicated region
        $region13: #{autoencoder_forward.17} parent=11 // pred_check
          %p168 = pneg %p65
        $region14: #{autoencoder_forward.17} parent=11 // pred_check_branch
          %170 = sbr.rel (%p168) target = $region16
        $region15: #{autoencoder_forward.17} parent=11 // pred_region
          %s171 = smul.u32 2, %s21
          %s172 = smul.u32 4, %s23
          %p173 = scmp.lt.s32.totalorder %s20, 0
          %s174 = scalar_select %p173, %s20, 0
          %p175 = scmp.lt.s32.totalorder %s171, 1
          %s176 = scalar_select %p175, %s171, 1
          %p177 = scmp.lt.s32.totalorder %s172, 3
          %s178 = scalar_select %p177, %s172, 3
          %s179 = smul.addr %s176, 4
          %s180 = sadd.s32 %s178, %s179
          %s181 = smul.addr %s174, 8
          %s182 = sadd.s32 %s180, %s181
          %s183 = smul.addr %s182, 4
          %s184 = scalar_lea.vmem %s0, %s183
          %s185 = smul.u32 2, %s21
          %s186 = smul.u32 4, %s23
        $region16: #{autoencoder_forward.17} parent=11 // pred_fallthru
          _
      $region12: #{autoencoder_forward.17} parent=5 // pred_fallthru
        _
      %p187 = scmp.lt.s32.totalorder %s9, 2
      // Predicated region
      $region17: #{autoencoder_forward.17} parent=5 // pred_check
        %p188 = pneg %p187
      $region18: #{autoencoder_forward.17} parent=5 // pred_check_branch
        %190 = sbr.rel (%p188) target = $region20
      $region19: #{autoencoder_forward.17} parent=5 // pred_region
        // Predicated region
        $region21: #{autoencoder_forward.17} parent=19 // pred_check
          %p191 = pneg %p89
        $region22: #{autoencoder_forward.17} parent=19 // pred_check_branch
          %193 = sbr.rel (%p191) target = $region24
        $region23: #{autoencoder_forward.17} parent=19 // pred_region
          %p194 = scmp.lt.s32.totalorder %s16, 0
          %s195 = scalar_select %p194, %s16, 0
          %p196 = scmp.lt.s32.totalorder %s19, 0
          %s197 = scalar_select %p196, %s19, 0
          %p198 = scmp.lt.s32.totalorder %s18, 1
          %s199 = scalar_select %p198, %s18, 1
          %s200 = smul.addr %s199, 64
          %s201 = smul.addr %s197, 128
          %s202 = sadd.s32 %s200, %s201
          %s203 = smul.addr %s195, 128
          %s204 = sadd.s32 %s202, %s203
          %s205 = smul.addr %s204, 4
          %s206 = scalar_lea.vmem %s1, %s205
        $region24: #{autoencoder_forward.17} parent=19 // pred_fallthru
          _
        // Predicated region
        $region25: #{autoencoder_forward.17} parent=19 // pred_check
          %p207 = pneg %p117
        $region26: #{autoencoder_forward.17} parent=19 // pred_check_branch
          %209 = sbr.rel (%p207) target = $region28
        $region27: #{autoencoder_forward.17} parent=19 // pred_region
          %p210 = scmp.lt.s32.totalorder %s16, 0
          %s211 = scalar_select %p210, %s16, 0
          %p212 = scmp.lt.s32.totalorder %s18, 1
          %s213 = scalar_select %p212, %s18, 1
          %s214 = smul.addr %s211, 2
          %s215 = sadd.s32 %s213, %s214
          %s216 = scalar_lea.vmem %s2, %s215
        $region28: #{autoencoder_forward.17} parent=19 // pred_fallthru
          _
      $region20: #{autoencoder_forward.17} parent=5 // pred_fallthru
        _
      %p217 = scmp.le.s32.totalorder 1, %s9
      %p218 = scmp.lt.s32.totalorder %s9, 3
      %p219 = pnand %p217, %p218
      %p220 = pneg %p219
      // Predicated region
      $region29: #{autoencoder_forward.17} parent=5 // pred_check
        _
      $region30: #{autoencoder_forward.17} parent=5 // pred_check_branch
        %222 = sbr.rel (%p219) target = $region32
      $region31: #{autoencoder_forward.17} parent=5 // pred_region
        %s223 = ssub.s32 %s9, 1
        %s224 = smul.u32 2, %s21
        %s225 = smul.u32 4, %s23
        %p226 = scmp.lt.s32.totalorder %s20, 0
        %s227 = scalar_select %p226, %s20, 0
        %p228 = scmp.lt.s32.totalorder %s224, 1
        %s229 = scalar_select %p228, %s224, 1
        %p230 = scmp.lt.s32.totalorder %s225, 3
        %s231 = scalar_select %p230, %s225, 3
        %s232 = smul.addr %s229, 4
        %s233 = sadd.s32 %s231, %s232
        %s234 = smul.addr %s227, 8
        %s235 = sadd.s32 %s233, %s234
        %s236 = smul.addr %s235, 4
        %s237 = scalar_lea.vmem %s0, %s236
        %p238 = pneg %p65
        %p239 = pneg %p62
        %p240 = scmp.lt.s32.totalorder %s20, 0
        %s241 = scalar_select %p240, %s20, 0
        %p242 = scmp.lt.s32.totalorder %s23, 0
        %s243 = scalar_select %p242, %s23, 0
        %p244 = scmp.lt.s32.totalorder %s22, 1
        %s245 = scalar_select %p244, %s22, 1
        %s246 = smul.addr %s245, 64
        %s247 = smul.addr %s243, 128
        %s248 = sadd.s32 %s246, %s247
        %s249 = smul.addr %s241, 128
        %s250 = sadd.s32 %s248, %s249
        %s251 = smul.addr %s250, 4
        %s252 = scalar_lea.vmem %s1, %s251
        %p253 = pneg %p95
        %p254 = pneg %p92
        %p255 = scmp.lt.s32.totalorder %s20, 0
        %s256 = scalar_select %p255, %s20, 0
        %p257 = scmp.lt.s32.totalorder %s22, 1
        %s258 = scalar_select %p257, %s22, 1
        %s259 = smul.addr %s256, 2
        %s260 = sadd.s32 %s258, %s259
        %s261 = scalar_lea.vmem %s2, %s260
        %p262 = pneg %p123
        %p263 = pneg %p120
        %p264 = pneg %p153
        %p265 = pneg %p150
        %s266 = sand.u32 %s140, 1
        %s267 = sand.u32 %s140, 1
        %s268 = smul.addr %s267, 16
        %s269 = scalar_lea.vmem [#allocation3], %s268
        %s270 = smul.u32 2, %s21
        %s271 = smul.u32 4, %s23
        %p272 = scmp.lt.s32.totalorder %s20, 0
        %s273 = scalar_select %p272, %s20, 0
        %p274 = scmp.lt.s32.totalorder %s270, 1
        %s275 = scalar_select %p274, %s270, 1
        %p276 = scmp.lt.s32.totalorder %s271, 3
        %s277 = scalar_select %p276, %s271, 3
        %s278 = smul.addr %s275, 4
        %s279 = sadd.s32 %s277, %s278
        %s280 = smul.addr %s273, 8
        %s281 = sadd.s32 %s279, %s280
        %s282 = smul.addr %s281, 4
        %s283 = scalar_lea.vmem %s0, %s282
        %s284 = smul.u32 2, %s21
        %s285 = smul.u32 4, %s23
        %p286 = scmp.lt.s32.totalorder %s20, 0
        %s287 = scalar_select %p286, %s20, 0
        %p288 = scmp.lt.s32.totalorder %s23, 0
        %s289 = scalar_select %p288, %s23, 0
        %p290 = scmp.lt.s32.totalorder %s22, 1
        %s291 = scalar_select %p290, %s22, 1
        %s292 = smul.addr %s291, 64
        %s293 = smul.addr %s289, 128
        %s294 = sadd.s32 %s292, %s293
        %s295 = smul.addr %s287, 128
        %s296 = sadd.s32 %s294, %s295
        %s297 = smul.addr %s296, 4
        %s298 = scalar_lea.vmem %s1, %s297
        %p299 = scmp.lt.s32.totalorder %s20, 0
        %s300 = scalar_select %p299, %s20, 0
        %p301 = scmp.lt.s32.totalorder %s22, 1
        %s302 = scalar_select %p301, %s22, 1
        %s303 = smul.addr %s300, 2
        %s304 = sadd.s32 %s302, %s303
        %s305 = scalar_lea.vmem %s2, %s304
        %s306 = smul.u32 2, %s21
        %p308 = scmp.eq.s32.totalorder %s23, 0
        // Predicated region
        $region33: #{autoencoder_forward.17} parent=31 // pred_check
          %p309 = pneg %p308
        $region34: #{autoencoder_forward.17} parent=31 // pred_check_branch
          %311 = sbr.rel (%p309) target = $region36
        $region35: #{autoencoder_forward.17} parent=31 // pred_region
          %v312 = vld [vmem:[%s305] sm:$0x1]
          %v314 = vlaneseq
          %v315 = vshrl.u32 %v314, 7
          %v316 = vsub.s32 0, %v315
          %v317 = vrot.slane %v312, %v316
          %319 = vst [vmem:[#allocation2] sm:$0xff] %v317
          %320 = vst [vmem:[#allocation2 + $0x8] sm:$0xff] %v317
        $region36: #{autoencoder_forward.17} parent=31 // pred_fallthru
          _
        %v321 = vld [vmem:[#allocation2] sm:$0xff]
        %v322 = vld [vmem:[#allocation2 + $0x8] sm:$0xff]
        %v323 = vld [vmem:[%s283] sm:$0xff]
        %v324 = vld [vmem:[%s283 + $0x8] sm:$0xff]
        %v325 = vld [vmem:[%s283 + $0x10] sm:$0xff]
        %v326 = vld [vmem:[%s283 + $0x18] sm:$0xff]
        %v327 = vld [vmem:[%s298] sm:$0xf]
        %v328 = vld [vmem:[%s298 + $0x4] sm:$0xf]
        %v329 = vld [vmem:[%s298 + $0x8] sm:$0xf]
        %v330 = vld [vmem:[%s298 + $0xc] sm:$0xf]
        %v331 = vld [vmem:[%s298 + $0x10] sm:$0xf]
        %v332 = vld [vmem:[%s298 + $0x14] sm:$0xf]
        %v333 = vld [vmem:[%s298 + $0x18] sm:$0xf]
        %v334 = vld [vmem:[%s298 + $0x1c] sm:$0xf]
        %v335 = vld [vmem:[%s298 + $0x20] sm:$0xf]
        %v336 = vld [vmem:[%s298 + $0x24] sm:$0xf]
        %v337 = vld [vmem:[%s298 + $0x28] sm:$0xf]
        %v338 = vld [vmem:[%s298 + $0x2c] sm:$0xf]
        %v339 = vld [vmem:[%s298 + $0x30] sm:$0xf]
        %v340 = vld [vmem:[%s298 + $0x34] sm:$0xf]
        %v341 = vld [vmem:[%s298 + $0x38] sm:$0xf]
        %v342 = vld [vmem:[%s298 + $0x3c] sm:$0xf]
        %v343 = vld [vmem:[%s298 + $0x40] sm:$0xf]
        %v344 = vld [vmem:[%s298 + $0x44] sm:$0xf]
        %v345 = vld [vmem:[%s298 + $0x48] sm:$0xf]
        %v346 = vld [vmem:[%s298 + $0x4c] sm:$0xf]
        %v347 = vld [vmem:[%s298 + $0x50] sm:$0xf]
        %v348 = vld [vmem:[%s298 + $0x54] sm:$0xf]
        %v349 = vld [vmem:[%s298 + $0x58] sm:$0xf]
        %v350 = vld [vmem:[%s298 + $0x5c] sm:$0xf]
        %v351 = vld [vmem:[%s298 + $0x60] sm:$0xf]
        %v352 = vld [vmem:[%s298 + $0x64] sm:$0xf]
        %v353 = vld [vmem:[%s298 + $0x68] sm:$0xf]
        %v354 = vld [vmem:[%s298 + $0x6c] sm:$0xf]
        %v355 = vld [vmem:[%s298 + $0x70] sm:$0xf]
        %v356 = vld [vmem:[%s298 + $0x74] sm:$0xf]
        %v357 = vld [vmem:[%s298 + $0x78] sm:$0xf]
        %v358 = vld [vmem:[%s298 + $0x7c] sm:$0xf]
        %v359 = vld [vmem:[%s298 + $0x80] sm:$0xf]
        %v360 = vld [vmem:[%s298 + $0x84] sm:$0xf]
        %v361 = vld [vmem:[%s298 + $0x88] sm:$0xf]
        %v362 = vld [vmem:[%s298 + $0x8c] sm:$0xf]
        %v363 = vld [vmem:[%s298 + $0x90] sm:$0xf]
        %v364 = vld [vmem:[%s298 + $0x94] sm:$0xf]
        %v365 = vld [vmem:[%s298 + $0x98] sm:$0xf]
        %v366 = vld [vmem:[%s298 + $0x9c] sm:$0xf]
        %v367 = vld [vmem:[%s298 + $0xa0] sm:$0xf]
        %v368 = vld [vmem:[%s298 + $0xa4] sm:$0xf]
        %v369 = vld [vmem:[%s298 + $0xa8] sm:$0xf]
        %v370 = vld [vmem:[%s298 + $0xac] sm:$0xf]
        %v371 = vld [vmem:[%s298 + $0xb0] sm:$0xf]
        %v372 = vld [vmem:[%s298 + $0xb4] sm:$0xf]
        %v373 = vld [vmem:[%s298 + $0xb8] sm:$0xf]
        %v374 = vld [vmem:[%s298 + $0xbc] sm:$0xf]
        %v375 = vld [vmem:[%s298 + $0xc0] sm:$0xf]
        %v376 = vld [vmem:[%s298 + $0xc4] sm:$0xf]
        %v377 = vld [vmem:[%s298 + $0xc8] sm:$0xf]
        %v378 = vld [vmem:[%s298 + $0xcc] sm:$0xf]
        %v379 = vld [vmem:[%s298 + $0xd0] sm:$0xf]
        %v380 = vld [vmem:[%s298 + $0xd4] sm:$0xf]
        %v381 = vld [vmem:[%s298 + $0xd8] sm:$0xf]
        %v382 = vld [vmem:[%s298 + $0xdc] sm:$0xf]
        %v383 = vld [vmem:[%s298 + $0xe0] sm:$0xf]
        %v384 = vld [vmem:[%s298 + $0xe4] sm:$0xf]
        %v385 = vld [vmem:[%s298 + $0xe8] sm:$0xf]
        %v386 = vld [vmem:[%s298 + $0xec] sm:$0xf]
        %v387 = vld [vmem:[%s298 + $0xf0] sm:$0xf]
        %v388 = vld [vmem:[%s298 + $0xf4] sm:$0xf]
        %v389 = vld [vmem:[%s298 + $0xf8] sm:$0xf]
        %v390 = vld [vmem:[%s298 + $0xfc] sm:$0xf]
        %v395 = vunpack.c.l.b16 %v323
        %v396 = vunpack.c.h.b16 %v323
        %v397 = vunpack.c.l.b16 %v324
        %v398 = vunpack.c.h.b16 %v324
        %v399 = vunpack.c.l.b16 %v325
        %v400 = vunpack.c.h.b16 %v325
        %v401 = vunpack.c.l.b16 %v326
        %v402 = vunpack.c.h.b16 %v326
        %v403 = vpack.c.b16 %v399, %v395
        %v404 = vpack.c.b16 %v400, %v396
        %v405 = vpack.c.b16 %v401, %v397
        %v406 = vpack.c.b16 %v402, %v398
        %v475 = vunpack.c.l.b16 %v327
        %v476 = vunpack.c.l.b16 %v328
        %v477 = vunpack.c.l.b16 %v329
        %v478 = vunpack.c.l.b16 %v330
        %v479 = vunpack.c.l.b16 %v331
        %v480 = vunpack.c.l.b16 %v332
        %v481 = vunpack.c.l.b16 %v333
        %v482 = vunpack.c.l.b16 %v334
        %v483 = vunpack.c.l.b16 %v335
        %v484 = vunpack.c.l.b16 %v336
        %v485 = vunpack.c.l.b16 %v337
        %v486 = vunpack.c.l.b16 %v338
        %v487 = vunpack.c.l.b16 %v339
        %v488 = vunpack.c.l.b16 %v340
        %v489 = vunpack.c.l.b16 %v341
        %v490 = vunpack.c.l.b16 %v342
        %v491 = vunpack.c.l.b16 %v343
        %v492 = vunpack.c.l.b16 %v344
        %v493 = vunpack.c.l.b16 %v345
        %v494 = vunpack.c.l.b16 %v346
        %v495 = vunpack.c.l.b16 %v347
        %v496 = vunpack.c.l.b16 %v348
        %v497 = vunpack.c.l.b16 %v349
        %v498 = vunpack.c.l.b16 %v350
        %v499 = vunpack.c.l.b16 %v351
        %v500 = vunpack.c.l.b16 %v352
        %v501 = vunpack.c.l.b16 %v353
        %v502 = vunpack.c.l.b16 %v354
        %v503 = vunpack.c.l.b16 %v355
        %v504 = vunpack.c.l.b16 %v356
        %v505 = vunpack.c.l.b16 %v357
        %v506 = vunpack.c.l.b16 %v358
        %v507 = vunpack.c.l.b16 %v359
        %v508 = vunpack.c.l.b16 %v360
        %v509 = vunpack.c.l.b16 %v361
        %v510 = vunpack.c.l.b16 %v362
        %v511 = vunpack.c.l.b16 %v363
        %v512 = vunpack.c.l.b16 %v364
        %v513 = vunpack.c.l.b16 %v365
        %v514 = vunpack.c.l.b16 %v366
        %v515 = vunpack.c.l.b16 %v367
        %v516 = vunpack.c.l.b16 %v368
        %v517 = vunpack.c.l.b16 %v369
        %v518 = vunpack.c.l.b16 %v370
        %v519 = vunpack.c.l.b16 %v371
        %v520 = vunpack.c.l.b16 %v372
        %v521 = vunpack.c.l.b16 %v373
        %v522 = vunpack.c.l.b16 %v374
        %v523 = vunpack.c.l.b16 %v375
        %v524 = vunpack.c.l.b16 %v376
        %v525 = vunpack.c.l.b16 %v377
        %v526 = vunpack.c.l.b16 %v378
        %v527 = vunpack.c.l.b16 %v379
        %v528 = vunpack.c.l.b16 %v380
        %v529 = vunpack.c.l.b16 %v381
        %v530 = vunpack.c.l.b16 %v382
        %v531 = vunpack.c.l.b16 %v383
        %v532 = vunpack.c.l.b16 %v384
        %v533 = vunpack.c.l.b16 %v385
        %v534 = vunpack.c.l.b16 %v386
        %v535 = vunpack.c.l.b16 %v387
        %v536 = vunpack.c.l.b16 %v388
        %v537 = vunpack.c.l.b16 %v389
        %v538 = vunpack.c.l.b16 %v390
        %v539 = vpack.c.b16 %v476, %v475
        %v540 = vpack.c.b16 %v478, %v477
        %v541 = vpack.c.b16 %v480, %v479
        %v542 = vpack.c.b16 %v482, %v481
        %v543 = vpack.c.b16 %v484, %v483
        %v544 = vpack.c.b16 %v486, %v485
        %v545 = vpack.c.b16 %v488, %v487
        %v546 = vpack.c.b16 %v490, %v489
        %v547 = vpack.c.b16 %v492, %v491
        %v548 = vpack.c.b16 %v494, %v493
        %v549 = vpack.c.b16 %v496, %v495
        %v550 = vpack.c.b16 %v498, %v497
        %v551 = vpack.c.b16 %v500, %v499
        %v552 = vpack.c.b16 %v502, %v501
        %v553 = vpack.c.b16 %v504, %v503
        %v554 = vpack.c.b16 %v506, %v505
        %v555 = vpack.c.b16 %v508, %v507
        %v556 = vpack.c.b16 %v510, %v509
        %v557 = vpack.c.b16 %v512, %v511
        %v558 = vpack.c.b16 %v514, %v513
        %v559 = vpack.c.b16 %v516, %v515
        %v560 = vpack.c.b16 %v518, %v517
        %v561 = vpack.c.b16 %v520, %v519
        %v562 = vpack.c.b16 %v522, %v521
        %v563 = vpack.c.b16 %v524, %v523
        %v564 = vpack.c.b16 %v526, %v525
        %v565 = vpack.c.b16 %v528, %v527
        %v566 = vpack.c.b16 %v530, %v529
        %v567 = vpack.c.b16 %v532, %v531
        %v568 = vpack.c.b16 %v534, %v533
        %v569 = vpack.c.b16 %v536, %v535
        %v570 = vpack.c.b16 %v538, %v537
        %603 = vmatprep.subr.bf16.mxu0 0
        %604 = vmatpush1.bf16.msra.mxu0 %v546
        %605 = vmatprep.subr.bf16.mxu0 0
        %606 = vmatpush1.bf16.msra.mxu0 %v545
        %607 = vmatprep.subr.bf16.mxu0 0
        %608 = vmatpush1.bf16.msra.mxu0 %v544
        %609 = vmatprep.subr.bf16.mxu0 0
        %610 = vmatpush1.bf16.msra.mxu0 %v543
        %611 = vmatprep.subr.bf16.mxu0 0
        %612 = vmatpush1.bf16.msra.mxu0 %v542
        %613 = vmatprep.subr.bf16.mxu0 0
        %614 = vmatpush1.bf16.msra.mxu0 %v541
        %615 = vmatprep.subr.bf16.mxu0 0
        %616 = vmatpush1.bf16.msra.mxu0 %v540
        %617 = vmatprep.subr.bf16.mxu0 0
        %618 = vmatpush1.bf16.msra.mxu0 %v539
        %619 = vmatprep.subr.bf16.mxu0 0
        %620 = vmatpush2.bf16.msra.mxu0 %v554
        %621 = vmatprep.subr.bf16.mxu0 0
        %622 = vmatpush2.bf16.msra.mxu0 %v553
        %623 = vmatprep.subr.bf16.mxu0 0
        %624 = vmatpush2.bf16.msra.mxu0 %v552
        %625 = vmatprep.subr.bf16.mxu0 0
        %626 = vmatpush2.bf16.msra.mxu0 %v551
        %627 = vmatprep.subr.bf16.mxu0 0
        %628 = vmatpush2.bf16.msra.mxu0 %v550
        %629 = vmatprep.subr.bf16.mxu0 0
        %630 = vmatpush2.bf16.msra.mxu0 %v549
        %631 = vmatprep.subr.bf16.mxu0 0
        %632 = vmatpush2.bf16.msra.mxu0 %v548
        %633 = vmatprep.subr.bf16.mxu0 0
        %634 = vmatpush2.bf16.msra.mxu0 %v547
        %635 = vmatprep.mubr.bf16.mxu0 %v404
        %636 = vmatmul.mubr.bf16.gmra.mxu0 %v403
        %v637 = vpop.f32.mrf.mxu0
        %v638 = vadd.f32 0.0, %v637
        %v639 = vpop.f32.mrf.mxu0
        %v640 = vpop.f32.mrf.mxu0
        %v641 = vadd.f32 0.0, %v640
        %v642 = vpop.f32.mrf.mxu0
        %643 = vdwg.mxu0
        %644 = vmatprep.subr.bf16.mxu0 0
        %645 = vmatpush1.bf16.msra.mxu0 %v562
        %646 = vmatprep.subr.bf16.mxu0 0
        %647 = vmatpush1.bf16.msra.mxu0 %v561
        %648 = vmatprep.subr.bf16.mxu0 0
        %649 = vmatpush1.bf16.msra.mxu0 %v560
        %650 = vmatprep.subr.bf16.mxu0 0
        %651 = vmatpush1.bf16.msra.mxu0 %v559
        %652 = vmatprep.subr.bf16.mxu0 0
        %653 = vmatpush1.bf16.msra.mxu0 %v558
        %654 = vmatprep.subr.bf16.mxu0 0
        %655 = vmatpush1.bf16.msra.mxu0 %v557
        %656 = vmatprep.subr.bf16.mxu0 0
        %657 = vmatpush1.bf16.msra.mxu0 %v556
        %658 = vmatprep.subr.bf16.mxu0 0
        %659 = vmatpush1.bf16.msra.mxu0 %v555
        %660 = vmatprep.subr.bf16.mxu0 0
        %661 = vmatpush2.bf16.msra.mxu0 %v570
        %662 = vmatprep.subr.bf16.mxu0 0
        %663 = vmatpush2.bf16.msra.mxu0 %v569
        %664 = vmatprep.subr.bf16.mxu0 0
        %665 = vmatpush2.bf16.msra.mxu0 %v568
        %666 = vmatprep.subr.bf16.mxu0 0
        %667 = vmatpush2.bf16.msra.mxu0 %v567
        %668 = vmatprep.subr.bf16.mxu0 0
        %669 = vmatpush2.bf16.msra.mxu0 %v566
        %670 = vmatprep.subr.bf16.mxu0 0
        %671 = vmatpush2.bf16.msra.mxu0 %v565
        %672 = vmatprep.subr.bf16.mxu0 0
        %673 = vmatpush2.bf16.msra.mxu0 %v564
        %674 = vmatprep.subr.bf16.mxu0 0
        %675 = vmatpush2.bf16.msra.mxu0 %v563
        %676 = vmatprep.mubr.bf16.mxu0 %v406
        %677 = vmatmul.mubr.bf16.gmra.mxu0 %v405
        %v678 = vpop.f32.mrf.mxu0
        %v679 = vadd.f32 %v638, %v678
        %v680 = vpop.f32.mrf.mxu0
        %v681 = vpop.f32.mrf.mxu0
        %v682 = vadd.f32 %v641, %v681
        %v683 = vpop.f32.mrf.mxu0
        %684 = vdwg.mxu0
        %v685 = vadd.f32 %v321, %v679
        %v686 = vadd.f32 %v322, %v682
        %687 = vst [vmem:[#allocation2] sm:$0xff] %v685
        %688 = vst [vmem:[#allocation2 + $0x8] sm:$0xff] %v686
        // Predicated region
        $region37: #{autoencoder_forward.17} parent=31 // pred_check
          %p689 = pneg %p308
        $region38: #{autoencoder_forward.17} parent=31 // pred_check_branch
          %691 = sbr.rel (%p689) target = $region40
        $region39: #{autoencoder_forward.17} parent=31 // pred_region
          %v692 = vld [vmem:[#allocation2] sm:$0xff]
          %v693 = vld [vmem:[#allocation2 + $0x8] sm:$0xff]
          %694 = vst [vmem:[%s269] sm:$0xff] %v692
          %695 = vst [vmem:[%s269 + $0x8] sm:$0xff] %v693
        $region40: #{autoencoder_forward.17} parent=31 // pred_fallthru
          _
        %s696 = sand.u32 %s140, 1
        %s697 = sand.u32 %s140, 1
        %s698 = smul.addr %s697, 16
        %s699 = scalar_lea.vmem [#allocation3], %s698
        // Predicated region
        $region41: #{autoencoder_forward.17} parent=31 // pred_check
          %p700 = pneg %p150
        $region42: #{autoencoder_forward.17} parent=31 // pred_check_branch
          %702 = sbr.rel (%p700) target = $region44
        $region43: #{autoencoder_forward.17} parent=31 // pred_region
          %s703 = smul.u32 2, %s21
          %s704 = smul.addr %s703, 2
          %s705 = sadd.s32 %s22, %s704
          %s706 = smul.addr %s20, 4
          %s707 = sadd.s32 %s705, %s706
          %s708 = smul.addr %s707, 8
          %s709 = scalar_lea.vmem %s3, %s708
          // Predicated region
          $region45: #{autoencoder_forward.17} parent=43 // pred_check
            _
          $region46: #{autoencoder_forward.17} parent=43 // pred_check_branch
            %711 = sbr.rel (0) target = $region48
          $region47: #{autoencoder_forward.17} parent=43 // pred_region
            // Predicated region
            $region49: #{autoencoder_forward.17} parent=47 // pred_check
              _
            $region50: #{autoencoder_forward.17} parent=47 // pred_check_branch
              %713 = sbr.rel (0) target = $region52
            $region51: #{autoencoder_forward.17} parent=47 // pred_region
              // Predicated region
              $region64: #{autoencoder_forward.17} parent=51 // pred_check
                _
              $region65: #{autoencoder_forward.17} parent=51 // pred_check_branch
                %731 = sbr.rel (0) target = $region67
              $region66: #{autoencoder_forward.17} parent=51 // pred_region
                loop: start=0, step=1, limit=1
                $region68: #{autoencoder_forward.17} parent=66 // loop_pre_header
                  _
                $region69: #{autoencoder_forward.17} parent=66 // loop_header
                  %s733 = sphi 0, %s737
                  %p734 = scmp.ge.s32.totalorder %s733, 1
                  %s738 = sphi %s699, %s699
                  %s739 = sphi %s709, %s709
                $region70: #{autoencoder_forward.17} parent=66 // loop_header_branch
                  %736 = sbr.rel (%p734) target = $region74
                $region71: #{autoencoder_forward.17} parent=66 // loop_body
                  %v740 = vld [vmem:[%s738] sm:$0xff]
                  %741 = vst [vmem:[%s739] sm:$0xff] %v740
                  %v742 = vld [vmem:[%s738 + $0x8] sm:$0xff]
                  %743 = vst [vmem:[%s739 + $0x10] sm:$0xff] %v742
                $region72: #{autoencoder_forward.17} parent=66 // loop_footer
                  %s737 = sadd.s32 1, %s733
                $region73: #{autoencoder_forward.17} parent=66 // loop_footer_branch
                  %732 = sbr.rel target = $region69
                $region74: #{autoencoder_forward.17} parent=66 // loop_exit
                  _
              $region67: #{autoencoder_forward.17} parent=51 // pred_fallthru
                _
              // Predicated region
              $region75: #{autoencoder_forward.17} parent=51 // pred_check
                _
              $region76: #{autoencoder_forward.17} parent=51 // pred_check_branch
                %745 = sbr.rel target = $region78
              $region77: #{autoencoder_forward.17} parent=51 // pred_region
                _
              $region78: #{autoencoder_forward.17} parent=51 // pred_fallthru
                _
            $region52: #{autoencoder_forward.17} parent=47 // pred_fallthru
              _
            // Predicated region
            $region53: #{autoencoder_forward.17} parent=47 // pred_check
              _
            $region54: #{autoencoder_forward.17} parent=47 // pred_check_branch
              %715 = sbr.rel target = $region56
            $region55: #{autoencoder_forward.17} parent=47 // pred_region
              %s717 = ssub.s32 256, 1
              loop: start=0, step=1, limit=1
              $region57: #{autoencoder_forward.17} parent=55 // loop_pre_header
                _
              $region58: #{autoencoder_forward.17} parent=55 // loop_header
                %s719 = sphi 0, %s723
                %p720 = scmp.ge.s32.totalorder %s719, 1
                %s724 = sphi %s699, %s699
                %s725 = sphi %s709, %s709
              $region59: #{autoencoder_forward.17} parent=55 // loop_header_branch
                %722 = sbr.rel (%p720) target = $region63
              $region60: #{autoencoder_forward.17} parent=55 // loop_body
                %v726 = vld [vmem:[%s724] sm:%s717]
                %727 = vst [vmem:[%s725] sm:%s717] %v726
                %v728 = vld [vmem:[%s724 + $0x8] sm:%s717]
                %729 = vst [vmem:[%s725 + $0x10] sm:%s717] %v728
              $region61: #{autoencoder_forward.17} parent=55 // loop_footer
                %s723 = sadd.s32 1, %s719
              $region62: #{autoencoder_forward.17} parent=55 // loop_footer_branch
                %718 = sbr.rel target = $region58
              $region63: #{autoencoder_forward.17} parent=55 // loop_exit
                _
            $region56: #{autoencoder_forward.17} parent=47 // pred_fallthru
              _
          $region48: #{autoencoder_forward.17} parent=43 // pred_fallthru
            _
          %746 = vnop
        $region44: #{autoencoder_forward.17} parent=31 // pred_fallthru
          _
      $region32: #{autoencoder_forward.17} parent=5 // pred_fallthru
        _
      %p747 = scmp.le.s32.totalorder 2, %s9
      // Predicated region
      $region79: #{autoencoder_forward.17} parent=5 // pred_check
        %p748 = pneg %p747
      $region80: #{autoencoder_forward.17} parent=5 // pred_check_branch
        %750 = sbr.rel (%p748) target = $region82
      $region81: #{autoencoder_forward.17} parent=5 // pred_region
        %s751 = ssub.s32 %s9, 2
        // Predicated region
        $region83: #{autoencoder_forward.17} parent=81 // pred_check
          %p752 = pneg %p156
        $region84: #{autoencoder_forward.17} parent=81 // pred_check_branch
          %754 = sbr.rel (%p752) target = $region86
        $region85: #{autoencoder_forward.17} parent=81 // pred_region
          %s755 = sand.u32 %s141, 1
          %s756 = sand.u32 %s141, 1
          %s757 = smul.addr %s756, 16
          %s758 = scalar_lea.vmem [#allocation3], %s757
        $region86: #{autoencoder_forward.17} parent=81 // pred_fallthru
          _
      $region82: #{autoencoder_forward.17} parent=5 // pred_fallthru
        _
    $region6: #{autoencoder_forward.17} parent=1 // loop_footer
      %s13 = sadd.s32 1, %s9
    $region7: #{autoencoder_forward.17} parent=1 // loop_footer_branch
      %8 = sbr.rel target = $region3
    $region8: #{autoencoder_forward.17} parent=1 // loop_exit
      _

// kernel: autoencoder_forward.19
$region0: #{autoencoder_forward.19}
  #allocation0 [shape = 'u32[]', space=smem, size = 0x4, offset = 0x4, fixed_abs, tag = 'smem constant byte address 0x4 - core index']
  #allocation1 [shape = 'u32[144,128]{1,0:T(1,128)}', space=vmem, size = 0x12000, scoped, tag = 'internal scratch']
  #allocation2 [shape = 'f32[16,256]{1,0:T(8,128)}', space=vmem, size = 0x4000, scoped, tag = 'scratch operand']
  %s0 = inlined_call_operand.vmem [shape: bf16[1,16,512], index: 0, kind: input, shape index: {}]
  %s1 = inlined_call_operand.vmem [shape: bf16[1,1,2,512,256], index: 1, kind: input, shape index: {}]
  %s2 = inlined_call_operand.vmem [shape: f32[1,1,512], index: 2, kind: input, shape index: {}]
  %s3 = inlined_call_operand.vmem [shape: f32[1,16,512], index: 3, kind: output, shape index: {}]
  %s4 = sld [smem:[#allocation0]]
  $region72: #{autoencoder_forward.19} parent=0
    _
  %s6 = ssub.s32 1, %s4
  %s7 = scalar_select 0, %s6, %s4
  $region1: #{autoencoder_forward.19} parent=0
    #allocation3 [shape = 'u8[32768]{0}', space=vmem, size = 0x8000, scoped, tag = 'output window, operand 0']
    loop: start=0, step=1, limit=4
    $region2: #{autoencoder_forward.19} parent=1 // loop_pre_header
      _
    $region3: #{autoencoder_forward.19} parent=1 // loop_header
      %s9 = sphi 0, %s13
      %p10 = scmp.ge.s32.totalorder %s9, 4
      %s16 = sphi 0, %s42
      %s17 = sphi 0, %s38
      %s18 = sphi 0, %s34
      %s19 = sphi 0, %s30
      %s20 = sphi 0, %s16
      %s21 = sphi 0, %s17
      %s22 = sphi 0, %s18
      %s23 = sphi 0, %s19
      %s24 = sphi 0, %s20
      %s25 = sphi 0, %s21
      %s26 = sphi 0, %s22
      %s27 = sphi 0, %s23
      %s49 = sphi 0, %s51
      %s52 = sphi 0, %s49
      %s53 = sphi 0, %s52
      %s69 = sphi 0, %s53
      %s79 = sphi 0, %s81
      %s82 = sphi 0, %s79
      %s83 = sphi 0, %s82
      %s99 = sphi 0, %s83
      %s107 = sphi 0, %s109
      %s110 = sphi 0, %s107
      %s111 = sphi 0, %s110
      %s127 = sphi 0, %s111
      %s137 = sphi 0, %s139
      %s140 = sphi 0, %s137
      %s141 = sphi 0, %s140
      %s157 = sphi 0, %s141
    $region4: #{autoencoder_forward.19} parent=1 // loop_header_branch
      %12 = sbr.rel (%p10) target = $region8
    $region5: #{autoencoder_forward.19} parent=1 // loop_body
      %s14 = ssub.s32 %s9, 1
      %s15 = ssub.s32 %s9, 2
      %s28 = sadd.s32 1, %s19
      %p29 = scmp.ge.s32.totalorder %s28, 1
      %s30 = scalar_select %p29, 0, %s28
      %s31 = sadd.s32 1, %s18
      %s32 = scalar_select %p29, %s31, %s18
      %p33 = scmp.ge.s32.totalorder %s32, 2
      %s34 = scalar_select %p33, 0, %s32
      %s35 = sadd.s32 1, %s17
      %s36 = scalar_select %p33, %s35, %s17
      %p37 = scmp.ge.s32.totalorder %s36, 1
      %s38 = scalar_select %p37, 0, %s36
      %s39 = sadd.s32 1, %s16
      %s40 = scalar_select %p37, %s39, %s16
      %p41 = scmp.ge.s32.totalorder %s40, 1
      %s42 = scalar_select %p41, 0, %s40
      %s43 = ssub.s32 %s16, %s42
      %s44 = ssub.s32 %s17, %s38
      %s45 = sor.u32 %s43, %s44
      %s46 = ssub.s32 %s19, %s30
      %s47 = sor.u32 %s45, %s46
      %p48 = scmp.eq.s32.totalorder %s47, 0
      %s50 = sadd.s32 %s49, 1
      %s51 = scalar_select %p48, %s49, %s50
      %p54 = pneg %p48
      %p55 = scmp.eq.s32.totalorder %s9, 1
      %p56 = por %p54, %p55
      %p57 = scmp.ne.s32.totalorder %s49, %s52
      %p58 = scmp.eq.s32.totalorder %s9, 0
      %p59 = por %p57, %p58
      %p60 = scmp.ne.s32.totalorder %s49, %s52
      %p61 = scmp.eq.s32.totalorder %s14, 1
      %p62 = por %p60, %p61
      %p63 = scmp.ne.s32.totalorder %s52, %s53
      %p64 = scmp.eq.s32.totalorder %s14, 0
      %p65 = por %p63, %p64
      %p66 = scmp.ne.s32.totalorder %s52, %s53
      %p67 = scmp.eq.s32.totalorder %s15, 1
      %p68 = por %p66, %p67
      %p70 = scmp.ne.s32.totalorder %s53, %s69
      %p71 = scmp.eq.s32.totalorder %s15, 0
      %p72 = por %p70, %p71
      %s73 = ssub.s32 %s16, %s42
      %s74 = ssub.s32 %s19, %s30
      %s75 = sor.u32 %s73, %s74
      %s76 = ssub.s32 %s18, %s34
      %s77 = sor.u32 %s75, %s76
      %p78 = scmp.eq.s32.totalorder %s77, 0
      %s80 = sadd.s32 %s79, 1
      %s81 = scalar_select %p78, %s79, %s80
      %p84 = pneg %p78
      %p85 = scmp.eq.s32.totalorder %s9, 1
      %p86 = por %p84, %p85
      %p87 = scmp.ne.s32.totalorder %s79, %s82
      %p88 = scmp.eq.s32.totalorder %s9, 0
      %p89 = por %p87, %p88
      %p90 = scmp.ne.s32.totalorder %s79, %s82
      %p91 = scmp.eq.s32.totalorder %s14, 1
      %p92 = por %p90, %p91
      %p93 = scmp.ne.s32.totalorder %s82, %s83
      %p94 = scmp.eq.s32.totalorder %s14, 0
      %p95 = por %p93, %p94
      %p96 = scmp.ne.s32.totalorder %s82, %s83
      %p97 = scmp.eq.s32.totalorder %s15, 1
      %p98 = por %p96, %p97
      %p100 = scmp.ne.s32.totalorder %s83, %s99
      %p101 = scmp.eq.s32.totalorder %s15, 0
      %p102 = por %p100, %p101
      %s103 = ssub.s32 %s16, %s42
      %s104 = ssub.s32 %s18, %s34
      %s105 = sor.u32 %s103, %s104
      %p106 = scmp.eq.s32.totalorder %s105, 0
      %s108 = sadd.s32 %s107, 1
      %s109 = scalar_select %p106, %s107, %s108
      %p112 = pneg %p106
      %p113 = scmp.eq.s32.totalorder %s9, 1
      %p114 = por %p112, %p113
      %p115 = scmp.ne.s32.totalorder %s107, %s110
      %p116 = scmp.eq.s32.totalorder %s9, 0
      %p117 = por %p115, %p116
      %p118 = scmp.ne.s32.totalorder %s107, %s110
      %p119 = scmp.eq.s32.totalorder %s14, 1
      %p120 = por %p118, %p119
      %p121 = scmp.ne.s32.totalorder %s110, %s111
      %p122 = scmp.eq.s32.totalorder %s14, 0
      %p123 = por %p121, %p122
      %p124 = scmp.ne.s32.totalorder %s110, %s111
      %p125 = scmp.eq.s32.totalorder %s15, 1
      %p126 = por %p124, %p125
      %p128 = scmp.ne.s32.totalorder %s111, %s127
      %p129 = scmp.eq.s32.totalorder %s15, 0
      %p130 = por %p128, %p129
      %s131 = ssub.s32 %s16, %s42
      %s132 = ssub.s32 %s17, %s38
      %s133 = sor.u32 %s131, %s132
      %s134 = ssub.s32 %s18, %s34
      %s135 = sor.u32 %s133, %s134
      %p136 = scmp.eq.s32.totalorder %s135, 0
      %s138 = sadd.s32 %s137, 1
      %s139 = scalar_select %p136, %s137, %s138
      %p142 = pneg %p136
      %p143 = scmp.eq.s32.totalorder %s9, 1
      %p144 = por %p142, %p143
      %p145 = scmp.ne.s32.totalorder %s137, %s140
      %p146 = scmp.eq.s32.totalorder %s9, 0
      %p147 = por %p145, %p146
      %p148 = scmp.ne.s32.totalorder %s137, %s140
      %p149 = scmp.eq.s32.totalorder %s14, 1
      %p150 = por %p148, %p149
      %p151 = scmp.ne.s32.totalorder %s140, %s141
      %p152 = scmp.eq.s32.totalorder %s14, 0
      %p153 = por %p151, %p152
      %p154 = scmp.ne.s32.totalorder %s140, %s141
      %p155 = scmp.eq.s32.totalorder %s15, 1
      %p156 = por %p154, %p155
      %p158 = scmp.ne.s32.totalorder %s141, %s157
      %p159 = scmp.eq.s32.totalorder %s15, 0
      %p160 = por %p158, %p159
      %p161 = scmp.le.s32.totalorder 1, %s9
      %p162 = scmp.lt.s32.totalorder %s9, 3
      %p163 = pnand %p161, %p162
      %p164 = pneg %p163
      // Predicated region
      $region9: #{autoencoder_forward.19} parent=5 // pred_check
        _
      $region10: #{autoencoder_forward.19} parent=5 // pred_check_branch
        %166 = sbr.rel (%p163) target = $region12
      $region11: #{autoencoder_forward.19} parent=5 // pred_region
        %s167 = ssub.s32 %s9, 1
        // Predicated region
        $region13: #{autoencoder_forward.19} parent=11 // pred_check
          %p168 = pneg %p65
        $region14: #{autoencoder_forward.19} parent=11 // pred_check_branch
          %170 = sbr.rel (%p168) target = $region16
        $region15: #{autoencoder_forward.19} parent=11 // pred_region
          %s171 = smul.u32 2, %s21
          %s172 = smul.u32 4, %s23
          %p173 = scmp.lt.s32.totalorder %s20, 0
          %s174 = scalar_select %p173, %s20, 0
          %p175 = scmp.lt.s32.totalorder %s171, 1
          %s176 = scalar_select %p175, %s171, 1
          %p177 = scmp.lt.s32.totalorder %s172, 3
          %s178 = scalar_select %p177, %s172, 3
          %s179 = smul.addr %s176, 4
          %s180 = sadd.s32 %s178, %s179
          %s181 = smul.addr %s174, 8
          %s182 = sadd.s32 %s180, %s181
          %s183 = smul.addr %s182, 4
          %s184 = scalar_lea.vmem %s0, %s183
          %s185 = smul.u32 2, %s21
          %s186 = smul.u32 4, %s23
        $region16: #{autoencoder_forward.19} parent=11 // pred_fallthru
          _
      $region12: #{autoencoder_forward.19} parent=5 // pred_fallthru
        _
      %p187 = scmp.lt.s32.totalorder %s9, 2
      // Predicated region
      $region17: #{autoencoder_forward.19} parent=5 // pred_check
        %p188 = pneg %p187
      $region18: #{autoencoder_forward.19} parent=5 // pred_check_branch
        %190 = sbr.rel (%p188) target = $region20
      $region19: #{autoencoder_forward.19} parent=5 // pred_region
        // Predicated region
        $region21: #{autoencoder_forward.19} parent=19 // pred_check
          %p191 = pneg %p89
        $region22: #{autoencoder_forward.19} parent=19 // pred_check_branch
          %193 = sbr.rel (%p191) target = $region24
        $region23: #{autoencoder_forward.19} parent=19 // pred_region
          %p194 = scmp.lt.s32.totalorder %s16, 0
          %s195 = scalar_select %p194, %s16, 0
          %p196 = scmp.lt.s32.totalorder %s19, 0
          %s197 = scalar_select %p196, %s19, 0
          %p198 = scmp.lt.s32.totalorder %s18, 1
          %s199 = scalar_select %p198, %s18, 1
          %s200 = smul.addr %s199, 128
          %s201 = smul.addr %s197, 256
          %s202 = sadd.s32 %s200, %s201
          %s203 = smul.addr %s195, 256
          %s204 = sadd.s32 %s202, %s203
          %s205 = smul.addr %s204, 4
          %s206 = scalar_lea.vmem %s1, %s205
        $region24: #{autoencoder_forward.19} parent=19 // pred_fallthru
          _
        // Predicated region
        $region25: #{autoencoder_forward.19} parent=19 // pred_check
          %p207 = pneg %p117
        $region26: #{autoencoder_forward.19} parent=19 // pred_check_branch
          %209 = sbr.rel (%p207) target = $region28
        $region27: #{autoencoder_forward.19} parent=19 // pred_region
          %s210 = smul.u32 2, %s18
          %p211 = scmp.lt.s32.totalorder %s16, 0
          %s212 = scalar_select %p211, %s16, 0
          %p213 = scmp.lt.s32.totalorder %s210, 3
          %s214 = scalar_select %p213, %s210, 3
          %s215 = smul.addr %s212, 4
          %s216 = sadd.s32 %s214, %s215
          %s217 = scalar_lea.vmem %s2, %s216
          %s218 = smul.u32 2, %s18
        $region28: #{autoencoder_forward.19} parent=19 // pred_fallthru
          _
      $region20: #{autoencoder_forward.19} parent=5 // pred_fallthru
        _
      %p219 = scmp.le.s32.totalorder 1, %s9
      %p220 = scmp.lt.s32.totalorder %s9, 3
      %p221 = pnand %p219, %p220
      %p222 = pneg %p221
      // Predicated region
      $region29: #{autoencoder_forward.19} parent=5 // pred_check
        _
      $region30: #{autoencoder_forward.19} parent=5 // pred_check_branch
        %224 = sbr.rel (%p221) target = $region32
      $region31: #{autoencoder_forward.19} parent=5 // pred_region
        %s225 = ssub.s32 %s9, 1
        %s226 = smul.u32 2, %s21
        %s227 = smul.u32 4, %s23
        %p228 = scmp.lt.s32.totalorder %s20, 0
        %s229 = scalar_select %p228, %s20, 0
        %p230 = scmp.lt.s32.totalorder %s226, 1
        %s231 = scalar_select %p230, %s226, 1
        %p232 = scmp.lt.s32.totalorder %s227, 3
        %s233 = scalar_select %p232, %s227, 3
        %s234 = smul.addr %s231, 4
        %s235 = sadd.s32 %s233, %s234
        %s236 = smul.addr %s229, 8
        %s237 = sadd.s32 %s235, %s236
        %s238 = smul.addr %s237, 4
        %s239 = scalar_lea.vmem %s0, %s238
        %p240 = pneg %p65
        %p241 = pneg %p62
        %p242 = scmp.lt.s32.totalorder %s20, 0
        %s243 = scalar_select %p242, %s20, 0
        %p244 = scmp.lt.s32.totalorder %s23, 0
        %s245 = scalar_select %p244, %s23, 0
        %p246 = scmp.lt.s32.totalorder %s22, 1
        %s247 = scalar_select %p246, %s22, 1
        %s248 = smul.addr %s247, 128
        %s249 = smul.addr %s245, 256
        %s250 = sadd.s32 %s248, %s249
        %s251 = smul.addr %s243, 256
        %s252 = sadd.s32 %s250, %s251
        %s253 = smul.addr %s252, 4
        %s254 = scalar_lea.vmem %s1, %s253
        %p255 = pneg %p95
        %p256 = pneg %p92
        %s257 = smul.u32 2, %s22
        %p258 = scmp.lt.s32.totalorder %s20, 0
        %s259 = scalar_select %p258, %s20, 0
        %p260 = scmp.lt.s32.totalorder %s257, 3
        %s261 = scalar_select %p260, %s257, 3
        %s262 = smul.addr %s259, 4
        %s263 = sadd.s32 %s261, %s262
        %s264 = scalar_lea.vmem %s2, %s263
        %p265 = pneg %p123
        %p266 = pneg %p120
        %p267 = pneg %p153
        %p268 = pneg %p150
        %s269 = sand.u32 %s140, 1
        %s270 = sand.u32 %s140, 1
        %s271 = smul.addr %s270, 32
        %s272 = scalar_lea.vmem [#allocation3], %s271
        %s273 = smul.u32 2, %s21
        %s274 = smul.u32 4, %s23
        %p275 = scmp.lt.s32.totalorder %s20, 0
        %s276 = scalar_select %p275, %s20, 0
        %p277 = scmp.lt.s32.totalorder %s273, 1
        %s278 = scalar_select %p277, %s273, 1
        %p279 = scmp.lt.s32.totalorder %s274, 3
        %s280 = scalar_select %p279, %s274, 3
        %s281 = smul.addr %s278, 4
        %s282 = sadd.s32 %s280, %s281
        %s283 = smul.addr %s276, 8
        %s284 = sadd.s32 %s282, %s283
        %s285 = smul.addr %s284, 4
        %s286 = scalar_lea.vmem %s0, %s285
        %s287 = smul.u32 2, %s21
        %s288 = smul.u32 4, %s23
        %p289 = scmp.lt.s32.totalorder %s20, 0
        %s290 = scalar_select %p289, %s20, 0
        %p291 = scmp.lt.s32.totalorder %s23, 0
        %s292 = scalar_select %p291, %s23, 0
        %p293 = scmp.lt.s32.totalorder %s22, 1
        %s294 = scalar_select %p293, %s22, 1
        %s295 = smul.addr %s294, 128
        %s296 = smul.addr %s292, 256
        %s297 = sadd.s32 %s295, %s296
        %s298 = smul.addr %s290, 256
        %s299 = sadd.s32 %s297, %s298
        %s300 = smul.addr %s299, 4
        %s301 = scalar_lea.vmem %s1, %s300
        %s302 = smul.u32 2, %s22
        %p303 = scmp.lt.s32.totalorder %s20, 0
        %s304 = scalar_select %p303, %s20, 0
        %p305 = scmp.lt.s32.totalorder %s302, 3
        %s306 = scalar_select %p305, %s302, 3
        %s307 = smul.addr %s304, 4
        %s308 = sadd.s32 %s306, %s307
        %s309 = scalar_lea.vmem %s2, %s308
        %s310 = smul.u32 2, %s22
        %s311 = smul.u32 2, %s21
        %s312 = smul.u32 2, %s22
        %p313 = scmp.eq.s32.totalorder %s23, 0
        // Predicated region
        $region33: #{autoencoder_forward.19} parent=31 // pred_check
          %p314 = pneg %p313
        $region34: #{autoencoder_forward.19} parent=31 // pred_check_branch
          %316 = sbr.rel (%p314) target = $region36
        $region35: #{autoencoder_forward.19} parent=31 // pred_region
          %v317 = vld [vmem:[%s309] sm:$0x3]
          %v319 = vlaneseq
          %v320 = vshrl.u32 %v319, 7
          %v321 = vsub.s32 0, %v320
          %v322 = vrot.slane %v317, %v321
          %v323 = vlaneseq
          %v324 = vshrl.u32 %v323, 7
          %v325 = vsub.s32 1, %v324
          %v326 = vrot.slane %v317, %v325
          %329 = vst [vmem:[#allocation2] sm:$0xff] %v322
          %330 = vst [vmem:[#allocation2 + $0x8] sm:$0xff] %v326
          %331 = vst [vmem:[#allocation2 + $0x10] sm:$0xff] %v322
          %332 = vst [vmem:[#allocation2 + $0x18] sm:$0xff] %v326
        $region36: #{autoencoder_forward.19} parent=31 // pred_fallthru
          _
        %v333 = vld [vmem:[#allocation2] sm:$0xff]
        %v334 = vld [vmem:[#allocation2 + $0x8] sm:$0xff]
        %v335 = vld [vmem:[#allocation2 + $0x10] sm:$0xff]
        %v336 = vld [vmem:[#allocation2 + $0x18] sm:$0xff]
        %v337 = vld [vmem:[%s286] sm:$0xff]
        %v338 = vld [vmem:[%s286 + $0x8] sm:$0xff]
        %v339 = vld [vmem:[%s286 + $0x10] sm:$0xff]
        %v340 = vld [vmem:[%s286 + $0x18] sm:$0xff]
        %v341 = vld [vmem:[%s301] sm:$0xff]
        %v342 = vld [vmem:[%s301 + $0x8] sm:$0xff]
        %v343 = vld [vmem:[%s301 + $0x10] sm:$0xff]
        %v344 = vld [vmem:[%s301 + $0x18] sm:$0xff]
        %v345 = vld [vmem:[%s301 + $0x20] sm:$0xff]
        %v346 = vld [vmem:[%s301 + $0x28] sm:$0xff]
        %v347 = vld [vmem:[%s301 + $0x30] sm:$0xff]
        %v348 = vld [vmem:[%s301 + $0x38] sm:$0xff]
        %v349 = vld [vmem:[%s301 + $0x40] sm:$0xff]
        %v350 = vld [vmem:[%s301 + $0x48] sm:$0xff]
        %v351 = vld [vmem:[%s301 + $0x50] sm:$0xff]
        %v352 = vld [vmem:[%s301 + $0x58] sm:$0xff]
        %v353 = vld [vmem:[%s301 + $0x60] sm:$0xff]
        %v354 = vld [vmem:[%s301 + $0x68] sm:$0xff]
        %v355 = vld [vmem:[%s301 + $0x70] sm:$0xff]
        %v356 = vld [vmem:[%s301 + $0x78] sm:$0xff]
        %v357 = vld [vmem:[%s301 + $0x80] sm:$0xff]
        %v358 = vld [vmem:[%s301 + $0x88] sm:$0xff]
        %v359 = vld [vmem:[%s301 + $0x90] sm:$0xff]
        %v360 = vld [vmem:[%s301 + $0x98] sm:$0xff]
        %v361 = vld [vmem:[%s301 + $0xa0] sm:$0xff]
        %v362 = vld [vmem:[%s301 + $0xa8] sm:$0xff]
        %v363 = vld [vmem:[%s301 + $0xb0] sm:$0xff]
        %v364 = vld [vmem:[%s301 + $0xb8] sm:$0xff]
        %v365 = vld [vmem:[%s301 + $0xc0] sm:$0xff]
        %v366 = vld [vmem:[%s301 + $0xc8] sm:$0xff]
        %v367 = vld [vmem:[%s301 + $0xd0] sm:$0xff]
        %v368 = vld [vmem:[%s301 + $0xd8] sm:$0xff]
        %v369 = vld [vmem:[%s301 + $0xe0] sm:$0xff]
        %v370 = vld [vmem:[%s301 + $0xe8] sm:$0xff]
        %v371 = vld [vmem:[%s301 + $0xf0] sm:$0xff]
        %v372 = vld [vmem:[%s301 + $0xf8] sm:$0xff]
        %v373 = vld [vmem:[%s301 + $0x100] sm:$0xff]
        %v374 = vld [vmem:[%s301 + $0x108] sm:$0xff]
        %v375 = vld [vmem:[%s301 + $0x110] sm:$0xff]
        %v376 = vld [vmem:[%s301 + $0x118] sm:$0xff]
        %v377 = vld [vmem:[%s301 + $0x120] sm:$0xff]
        %v378 = vld [vmem:[%s301 + $0x128] sm:$0xff]
        %v379 = vld [vmem:[%s301 + $0x130] sm:$0xff]
        %v380 = vld [vmem:[%s301 + $0x138] sm:$0xff]
        %v381 = vld [vmem:[%s301 + $0x140] sm:$0xff]
        %v382 = vld [vmem:[%s301 + $0x148] sm:$0xff]
        %v383 = vld [vmem:[%s301 + $0x150] sm:$0xff]
        %v384 = vld [vmem:[%s301 + $0x158] sm:$0xff]
        %v385 = vld [vmem:[%s301 + $0x160] sm:$0xff]
        %v386 = vld [vmem:[%s301 + $0x168] sm:$0xff]
        %v387 = vld [vmem:[%s301 + $0x170] sm:$0xff]
        %v388 = vld [vmem:[%s301 + $0x178] sm:$0xff]
        %v389 = vld [vmem:[%s301 + $0x180] sm:$0xff]
        %v390 = vld [vmem:[%s301 + $0x188] sm:$0xff]
        %v391 = vld [vmem:[%s301 + $0x190] sm:$0xff]
        %v392 = vld [vmem:[%s301 + $0x198] sm:$0xff]
        %v393 = vld [vmem:[%s301 + $0x1a0] sm:$0xff]
        %v394 = vld [vmem:[%s301 + $0x1a8] sm:$0xff]
        %v395 = vld [vmem:[%s301 + $0x1b0] sm:$0xff]
        %v396 = vld [vmem:[%s301 + $0x1b8] sm:$0xff]
        %v397 = vld [vmem:[%s301 + $0x1c0] sm:$0xff]
        %v398 = vld [vmem:[%s301 + $0x1c8] sm:$0xff]
        %v399 = vld [vmem:[%s301 + $0x1d0] sm:$0xff]
        %v400 = vld [vmem:[%s301 + $0x1d8] sm:$0xff]
        %v401 = vld [vmem:[%s301 + $0x1e0] sm:$0xff]
        %v402 = vld [vmem:[%s301 + $0x1e8] sm:$0xff]
        %v403 = vld [vmem:[%s301 + $0x1f0] sm:$0xff]
        %v404 = vld [vmem:[%s301 + $0x1f8] sm:$0xff]
        %v409 = vunpack.c.l.b16 %v337
        %v410 = vunpack.c.h.b16 %v337
        %v411 = vunpack.c.l.b16 %v338
        %v412 = vunpack.c.h.b16 %v338
        %v413 = vunpack.c.l.b16 %v339
        %v414 = vunpack.c.h.b16 %v339
        %v415 = vunpack.c.l.b16 %v340
        %v416 = vunpack.c.h.b16 %v340
        %v417 = vpack.c.b16 %v413, %v409
        %v418 = vpack.c.b16 %v414, %v410
        %v419 = vpack.c.b16 %v415, %v411
        %v420 = vpack.c.b16 %v416, %v412
        %v489 = vunpack.c.l.b16 %v341
        %v490 = vunpack.c.h.b16 %v341
        %v491 = vunpack.c.l.b16 %v342
        %v492 = vunpack.c.h.b16 %v342
        %v493 = vunpack.c.l.b16 %v343
        %v494 = vunpack.c.h.b16 %v343
        %v495 = vunpack.c.l.b16 %v344
        %v496 = vunpack.c.h.b16 %v344
        %v497 = vunpack.c.l.b16 %v345
        %v498 = vunpack.c.h.b16 %v345
        %v499 = vunpack.c.l.b16 %v346
        %v500 = vunpack.c.h.b16 %v346
        %v501 = vunpack.c.l.b16 %v347
        %v502 = vunpack.c.h.b16 %v347
        %v503 = vunpack.c.l.b16 %v348
        %v504 = vunpack.c.h.b16 %v348
        %v505 = vunpack.c.l.b16 %v349
        %v506 = vunpack.c.h.b16 %v349
        %v507 = vunpack.c.l.b16 %v350
        %v508 = vunpack.c.h.b16 %v350
        %v509 = vunpack.c.l.b16 %v351
        %v510 = vunpack.c.h.b16 %v351
        %v511 = vunpack.c.l.b16 %v352
        %v512 = vunpack.c.h.b16 %v352
        %v513 = vunpack.c.l.b16 %v353
        %v514 = vunpack.c.h.b16 %v353
        %v515 = vunpack.c.l.b16 %v354
        %v516 = vunpack.c.h.b16 %v354
        %v517 = vunpack.c.l.b16 %v355
        %v518 = vunpack.c.h.b16 %v355
        %v519 = vunpack.c.l.b16 %v356
        %v520 = vunpack.c.h.b16 %v356
        %v521 = vunpack.c.l.b16 %v357
        %v522 = vunpack.c.h.b16 %v357
        %v523 = vunpack.c.l.b16 %v358
        %v524 = vunpack.c.h.b16 %v358
        %v525 = vunpack.c.l.b16 %v359
        %v526 = vunpack.c.h.b16 %v359
        %v527 = vunpack.c.l.b16 %v360
        %v528 = vunpack.c.h.b16 %v360
        %v529 = vunpack.c.l.b16 %v361
        %v530 = vunpack.c.h.b16 %v361
        %v531 = vunpack.c.l.b16 %v362
        %v532 = vunpack.c.h.b16 %v362
        %v533 = vunpack.c.l.b16 %v363
        %v534 = vunpack.c.h.b16 %v363
        %v535 = vunpack.c.l.b16 %v364
        %v536 = vunpack.c.h.b16 %v364
        %v537 = vunpack.c.l.b16 %v365
        %v538 = vunpack.c.h.b16 %v365
        %v539 = vunpack.c.l.b16 %v366
        %v540 = vunpack.c.h.b16 %v366
        %v541 = vunpack.c.l.b16 %v367
        %v542 = vunpack.c.h.b16 %v367
        %v543 = vunpack.c.l.b16 %v368
        %v544 = vunpack.c.h.b16 %v368
        %v545 = vunpack.c.l.b16 %v369
        %v546 = vunpack.c.h.b16 %v369
        %v547 = vunpack.c.l.b16 %v370
        %v548 = vunpack.c.h.b16 %v370
        %v549 = vunpack.c.l.b16 %v371
        %v550 = vunpack.c.h.b16 %v371
        %v551 = vunpack.c.l.b16 %v372
        %v552 = vunpack.c.h.b16 %v372
        %v553 = vunpack.c.l.b16 %v373
        %v554 = vunpack.c.h.b16 %v373
        %v555 = vunpack.c.l.b16 %v374
        %v556 = vunpack.c.h.b16 %v374
        %v557 = vunpack.c.l.b16 %v375
        %v558 = vunpack.c.h.b16 %v375
        %v559 = vunpack.c.l.b16 %v376
        %v560 = vunpack.c.h.b16 %v376
        %v561 = vunpack.c.l.b16 %v377
        %v562 = vunpack.c.h.b16 %v377
        %v563 = vunpack.c.l.b16 %v378
        %v564 = vunpack.c.h.b16 %v378
        %v565 = vunpack.c.l.b16 %v379
        %v566 = vunpack.c.h.b16 %v379
        %v567 = vunpack.c.l.b16 %v380
        %v568 = vunpack.c.h.b16 %v380
        %v569 = vunpack.c.l.b16 %v381
        %v570 = vunpack.c.h.b16 %v381
        %v571 = vunpack.c.l.b16 %v382
        %v572 = vunpack.c.h.b16 %v382
        %v573 = vunpack.c.l.b16 %v383
        %v574 = vunpack.c.h.b16 %v383
        %v575 = vunpack.c.l.b16 %v384
        %v576 = vunpack.c.h.b16 %v384
        %v577 = vunpack.c.l.b16 %v385
        %v578 = vunpack.c.h.b16 %v385
        %v579 = vunpack.c.l.b16 %v386
        %v580 = vunpack.c.h.b16 %v386
        %v581 = vunpack.c.l.b16 %v387
        %v582 = vunpack.c.h.b16 %v387
        %v583 = vunpack.c.l.b16 %v388
        %v584 = vunpack.c.h.b16 %v388
        %v585 = vunpack.c.l.b16 %v389
        %v586 = vunpack.c.h.b16 %v389
        %v587 = vunpack.c.l.b16 %v390
        %v588 = vunpack.c.h.b16 %v390
        %v589 = vunpack.c.l.b16 %v391
        %v590 = vunpack.c.h.b16 %v391
        %v591 = vunpack.c.l.b16 %v392
        %v592 = vunpack.c.h.b16 %v392
        %v593 = vunpack.c.l.b16 %v393
        %v594 = vunpack.c.h.b16 %v393
        %v595 = vunpack.c.l.b16 %v394
        %v596 = vunpack.c.h.b16 %v394
        %v597 = vunpack.c.l.b16 %v395
        %v598 = vunpack.c.h.b16 %v395
        %v599 = vunpack.c.l.b16 %v396
        %v600 = vunpack.c.h.b16 %v396
        %v601 = vunpack.c.l.b16 %v397
        %v602 = vunpack.c.h.b16 %v397
        %v603 = vunpack.c.l.b16 %v398
        %v604 = vunpack.c.h.b16 %v398
        %v605 = vunpack.c.l.b16 %v399
        %v606 = vunpack.c.h.b16 %v399
        %v607 = vunpack.c.l.b16 %v400
        %v608 = vunpack.c.h.b16 %v400
        %v609 = vunpack.c.l.b16 %v401
        %v610 = vunpack.c.h.b16 %v401
        %v611 = vunpack.c.l.b16 %v402
        %v612 = vunpack.c.h.b16 %v402
        %v613 = vunpack.c.l.b16 %v403
        %v614 = vunpack.c.h.b16 %v403
        %v615 = vunpack.c.l.b16 %v404
        %v616 = vunpack.c.h.b16 %v404
        %v617 = vpack.c.b16 %v491, %v489
        %v618 = vpack.c.b16 %v492, %v490
        %v619 = vpack.c.b16 %v495, %v493
        %v620 = vpack.c.b16 %v496, %v494
        %v621 = vpack.c.b16 %v499, %v497
        %v622 = vpack.c.b16 %v500, %v498
        %v623 = vpack.c.b16 %v503, %v501
        %v624 = vpack.c.b16 %v504, %v502
        %v625 = vpack.c.b16 %v507, %v505
        %v626 = vpack.c.b16 %v508, %v506
        %v627 = vpack.c.b16 %v511, %v509
        %v628 = vpack.c.b16 %v512, %v510
        %v629 = vpack.c.b16 %v515, %v513
        %v630 = vpack.c.b16 %v516, %v514
        %v631 = vpack.c.b16 %v519, %v517
        %v632 = vpack.c.b16 %v520, %v518
        %v633 = vpack.c.b16 %v523, %v521
        %v634 = vpack.c.b16 %v524, %v522
        %v635 = vpack.c.b16 %v527, %v525
        %v636 = vpack.c.b16 %v528, %v526
        %v637 = vpack.c.b16 %v531, %v529
        %v638 = vpack.c.b16 %v532, %v530
        %v639 = vpack.c.b16 %v535, %v533
        %v640 = vpack.c.b16 %v536, %v534
        %v641 = vpack.c.b16 %v539, %v537
        %v642 = vpack.c.b16 %v540, %v538
        %v643 = vpack.c.b16 %v543, %v541
        %v644 = vpack.c.b16 %v544, %v542
        %v645 = vpack.c.b16 %v547, %v545
        %v646 = vpack.c.b16 %v548, %v546
        %v647 = vpack.c.b16 %v551, %v549
        %v648 = vpack.c.b16 %v552, %v550
        %v649 = vpack.c.b16 %v555, %v553
        %v650 = vpack.c.b16 %v556, %v554
        %v651 = vpack.c.b16 %v559, %v557
        %v652 = vpack.c.b16 %v560, %v558
        %v653 = vpack.c.b16 %v563, %v561
        %v654 = vpack.c.b16 %v564, %v562
        %v655 = vpack.c.b16 %v567, %v565
        %v656 = vpack.c.b16 %v568, %v566
        %v657 = vpack.c.b16 %v571, %v569
        %v658 = vpack.c.b16 %v572, %v570
        %v659 = vpack.c.b16 %v575, %v573
        %v660 = vpack.c.b16 %v576, %v574
        %v661 = vpack.c.b16 %v579, %v577
        %v662 = vpack.c.b16 %v580, %v578
        %v663 = vpack.c.b16 %v583, %v581
        %v664 = vpack.c.b16 %v584, %v582
        %v665 = vpack.c.b16 %v587, %v585
        %v666 = vpack.c.b16 %v588, %v586
        %v667 = vpack.c.b16 %v591, %v589
        %v668 = vpack.c.b16 %v592, %v590
        %v669 = vpack.c.b16 %v595, %v593
        %v670 = vpack.c.b16 %v596, %v594
        %v671 = vpack.c.b16 %v599, %v597
        %v672 = vpack.c.b16 %v600, %v598
        %v673 = vpack.c.b16 %v603, %v601
        %v674 = vpack.c.b16 %v604, %v602
        %v675 = vpack.c.b16 %v607, %v605
        %v676 = vpack.c.b16 %v608, %v606
        %v677 = vpack.c.b16 %v611, %v609
        %v678 = vpack.c.b16 %v612, %v610
        %v679 = vpack.c.b16 %v615, %v613
        %v680 = vpack.c.b16 %v616, %v614
        %745 = vmatprep.subr.bf16.mxu0 %v632
        %746 = vmatpush1.bf16.msra.mxu0 %v631
        %747 = vmatprep.subr.bf16.mxu0 %v630
        %748 = vmatpush1.bf16.msra.mxu0 %v629
        %749 = vmatprep.subr.bf16.mxu0 %v628
        %750 = vmatpush1.bf16.msra.mxu0 %v627
        %751 = vmatprep.subr.bf16.mxu0 %v626
        %752 = vmatpush1.bf16.msra.mxu0 %v625
        %753 = vmatprep.subr.bf16.mxu0 %v624
        %754 = vmatpush1.bf16.msra.mxu0 %v623
        %755 = vmatprep.subr.bf16.mxu0 %v622
        %756 = vmatpush1.bf16.msra.mxu0 %v621
        %757 = vmatprep.subr.bf16.mxu0 %v620
        %758 = vmatpush1.bf16.msra.mxu0 %v619
        %759 = vmatprep.subr.bf16.mxu0 %v618
        %760 = vmatpush1.bf16.msra.mxu0 %v617
        %761 = vmatprep.subr.bf16.mxu0 %v648
        %762 = vmatpush2.bf16.msra.mxu0 %v647
        %763 = vmatprep.subr.bf16.mxu0 %v646
        %764 = vmatpush2.bf16.msra.mxu0 %v645
        %765 = vmatprep.subr.bf16.mxu0 %v644
        %766 = vmatpush2.bf16.msra.mxu0 %v643
        %767 = vmatprep.subr.bf16.mxu0 %v642
        %768 = vmatpush2.bf16.msra.mxu0 %v641
        %769 = vmatprep.subr.bf16.mxu0 %v640
        %770 = vmatpush2.bf16.msra.mxu0 %v639
        %771 = vmatprep.subr.bf16.mxu0 %v638
        %772 = vmatpush2.bf16.msra.mxu0 %v637
        %773 = vmatprep.subr.bf16.mxu0 %v636
        %774 = vmatpush2.bf16.msra.mxu0 %v635
        %775 = vmatprep.subr.bf16.mxu0 %v634
        %776 = vmatpush2.bf16.msra.mxu0 %v633
        %777 = vmatprep.mubr.bf16.mxu0 %v418
        %778 = vmatmul.mubr.bf16.gmra.mxu0 %v417
        %v779 = vpop.f32.mrf.mxu0
        %v780 = vadd.f32 0.0, %v779
        %v781 = vpop.f32.mrf.mxu0
        %v782 = vadd.f32 0.0, %v781
        %v783 = vpop.f32.mrf.mxu0
        %v784 = vadd.f32 0.0, %v783
        %v785 = vpop.f32.mrf.mxu0
        %v786 = vadd.f32 0.0, %v785
        %787 = vdwg.mxu0
        %788 = vmatprep.subr.bf16.mxu0 %v664
        %789 = vmatpush1.bf16.msra.mxu0 %v663
        %790 = vmatprep.subr.bf16.mxu0 %v662
        %791 = vmatpush1.bf16.msra.mxu0 %v661
        %792 = vmatprep.subr.bf16.mxu0 %v660
        %793 = vmatpush1.bf16.msra.mxu0 %v659
        %794 = vmatprep.subr.bf16.mxu0 %v658
        %795 = vmatpush1.bf16.msra.mxu0 %v657
        %796 = vmatprep.subr.bf16.mxu0 %v656
        %797 = vmatpush1.bf16.msra.mxu0 %v655
        %798 = vmatprep.subr.bf16.mxu0 %v654
        %799 = vmatpush1.bf16.msra.mxu0 %v653
        %800 = vmatprep.subr.bf16.mxu0 %v652
        %801 = vmatpush1.bf16.msra.mxu0 %v651
        %802 = vmatprep.subr.bf16.mxu0 %v650
        %803 = vmatpush1.bf16.msra.mxu0 %v649
        %804 = vmatprep.subr.bf16.mxu0 %v680
        %805 = vmatpush2.bf16.msra.mxu0 %v679
        %806 = vmatprep.subr.bf16.mxu0 %v678
        %807 = vmatpush2.bf16.msra.mxu0 %v677
        %808 = vmatprep.subr.bf16.mxu0 %v676
        %809 = vmatpush2.bf16.msra.mxu0 %v675
        %810 = vmatprep.subr.bf16.mxu0 %v674
        %811 = vmatpush2.bf16.msra.mxu0 %v673
        %812 = vmatprep.subr.bf16.mxu0 %v672
        %813 = vmatpush2.bf16.msra.mxu0 %v671
        %814 = vmatprep.subr.bf16.mxu0 %v670
        %815 = vmatpush2.bf16.msra.mxu0 %v669
        %816 = vmatprep.subr.bf16.mxu0 %v668
        %817 = vmatpush2.bf16.msra.mxu0 %v667
        %818 = vmatprep.subr.bf16.mxu0 %v666
        %819 = vmatpush2.bf16.msra.mxu0 %v665
        %820 = vmatprep.mubr.bf16.mxu0 %v420
        %821 = vmatmul.mubr.bf16.gmra.mxu0 %v419
        %v822 = vpop.f32.mrf.mxu0
        %v823 = vadd.f32 %v780, %v822
        %v824 = vpop.f32.mrf.mxu0
        %v825 = vadd.f32 %v782, %v824
        %v826 = vpop.f32.mrf.mxu0
        %v827 = vadd.f32 %v784, %v826
        %v828 = vpop.f32.mrf.mxu0
        %v829 = vadd.f32 %v786, %v828
        %830 = vdwg.mxu0
        %v831 = vadd.f32 %v333, %v823
        %v832 = vadd.f32 %v334, %v825
        %v833 = vadd.f32 %v335, %v827
        %v834 = vadd.f32 %v336, %v829
        %835 = vst [vmem:[#allocation2] sm:$0xff] %v831
        %836 = vst [vmem:[#allocation2 + $0x8] sm:$0xff] %v832
        %837 = vst [vmem:[#allocation2 + $0x10] sm:$0xff] %v833
        %838 = vst [vmem:[#allocation2 + $0x18] sm:$0xff] %v834
        // Predicated region
        $region37: #{autoencoder_forward.19} parent=31 // pred_check
          %p839 = pneg %p313
        $region38: #{autoencoder_forward.19} parent=31 // pred_check_branch
          %841 = sbr.rel (%p839) target = $region40
        $region39: #{autoencoder_forward.19} parent=31 // pred_region
          %v842 = vld [vmem:[#allocation2] sm:$0xff]
          %v843 = vld [vmem:[#allocation2 + $0x8] sm:$0xff]
          %v844 = vld [vmem:[#allocation2 + $0x10] sm:$0xff]
          %v845 = vld [vmem:[#allocation2 + $0x18] sm:$0xff]
          %846 = vst [vmem:[%s272] sm:$0xff] %v842
          %847 = vst [vmem:[%s272 + $0x8] sm:$0xff] %v843
          %848 = vst [vmem:[%s272 + $0x10] sm:$0xff] %v844
          %849 = vst [vmem:[%s272 + $0x18] sm:$0xff] %v845
        $region40: #{autoencoder_forward.19} parent=31 // pred_fallthru
          _
        %s850 = sand.u32 %s140, 1
        %s851 = sand.u32 %s140, 1
        %s852 = smul.addr %s851, 32
        %s853 = scalar_lea.vmem [#allocation3], %s852
        // Predicated region
        $region41: #{autoencoder_forward.19} parent=31 // pred_check
          %p854 = pneg %p150
        $region42: #{autoencoder_forward.19} parent=31 // pred_check_branch
          %856 = sbr.rel (%p854) target = $region44
        $region43: #{autoencoder_forward.19} parent=31 // pred_region
          %s857 = smul.u32 2, %s21
          %s858 = smul.u32 2, %s22
          %s859 = smul.addr %s857, 4
          %s860 = sadd.s32 %s858, %s859
          %s861 = smul.addr %s20, 8
          %s862 = sadd.s32 %s860, %s861
          %s863 = smul.addr %s862, 8
          %s864 = scalar_lea.vmem %s3, %s863
          // Predicated region
          $region45: #{autoencoder_forward.19} parent=43 // pred_check
            _
          $region46: #{autoencoder_forward.19} parent=43 // pred_check_branch
            %866 = sbr.rel (0) target = $region48
          $region47: #{autoencoder_forward.19} parent=43 // pred_region
            // Predicated region
            $region49: #{autoencoder_forward.19} parent=47 // pred_check
              _
            $region50: #{autoencoder_forward.19} parent=47 // pred_check_branch
              %868 = sbr.rel (0) target = $region52
            $region51: #{autoencoder_forward.19} parent=47 // pred_region
              loop: start=0, step=1, limit=1
              $region53: #{autoencoder_forward.19} parent=51 // loop_pre_header
                _
              $region54: #{autoencoder_forward.19} parent=51 // loop_header
                %s870 = sphi 0, %s874
                %p871 = scmp.ge.s32.totalorder %s870, 1
                %s875 = sphi %s853, %s853
                %s876 = sphi %s864, %s864
              $region55: #{autoencoder_forward.19} parent=51 // loop_header_branch
                %873 = sbr.rel (%p871) target = $region59
              $region56: #{autoencoder_forward.19} parent=51 // loop_body
                %v877 = vld [vmem:[%s875] sm:$0xff]
                %878 = vst [vmem:[%s876] sm:$0xff] %v877
                %v879 = vld [vmem:[%s875 + $0x8] sm:$0xff]
                %880 = vst [vmem:[%s876 + $0x8] sm:$0xff] %v879
                %v881 = vld [vmem:[%s875 + $0x10] sm:$0xff]
                %882 = vst [vmem:[%s876 + $0x20] sm:$0xff] %v881
                %v883 = vld [vmem:[%s875 + $0x18] sm:$0xff]
                %884 = vst [vmem:[%s876 + $0x28] sm:$0xff] %v883
              $region57: #{autoencoder_forward.19} parent=51 // loop_footer
                %s874 = sadd.s32 1, %s870
              $region58: #{autoencoder_forward.19} parent=51 // loop_footer_branch
                %869 = sbr.rel target = $region54
              $region59: #{autoencoder_forward.19} parent=51 // loop_exit
                _
            $region52: #{autoencoder_forward.19} parent=47 // pred_fallthru
              _
            // Predicated region
            $region60: #{autoencoder_forward.19} parent=47 // pred_check
              _
            $region61: #{autoencoder_forward.19} parent=47 // pred_check_branch
              %886 = sbr.rel target = $region63
            $region62: #{autoencoder_forward.19} parent=47 // pred_region
              _
            $region63: #{autoencoder_forward.19} parent=47 // pred_fallthru
              _
          $region48: #{autoencoder_forward.19} parent=43 // pred_fallthru
            _
          %887 = vnop
        $region44: #{autoencoder_forward.19} parent=31 // pred_fallthru
          _
      $region32: #{autoencoder_forward.19} parent=5 // pred_fallthru
        _
      %p888 = scmp.le.s32.totalorder 2, %s9
      // Predicated region
      $region64: #{autoencoder_forward.19} parent=5 // pred_check
        %p889 = pneg %p888
      $region65: #{autoencoder_forward.19} parent=5 // pred_check_branch
        %891 = sbr.rel (%p889) target = $region67
      $region66: #{autoencoder_forward.19} parent=5 // pred_region
        %s892 = ssub.s32 %s9, 2
        // Predicated region
        $region68: #{autoencoder_forward.19} parent=66 // pred_check
          %p893 = pneg %p156
        $region69: #{autoencoder_forward.19} parent=66 // pred_check_branch
          %895 = sbr.rel (%p893) target = $region71
        $region70: #{autoencoder_forward.19} parent=66 // pred_region
          %s896 = sand.u32 %s141, 1
          %s897 = sand.u32 %s141, 1
          %s898 = smul.addr %s897, 32
          %s899 = scalar_lea.vmem [#allocation3], %s898
        $region71: #{autoencoder_forward.19} parent=66 // pred_fallthru
          _
      $region67: #{autoencoder_forward.19} parent=5 // pred_fallthru
        _
    $region6: #{autoencoder_forward.19} parent=1 // loop_footer
      %s13 = sadd.s32 1, %s9
    $region7: #{autoencoder_forward.19} parent=1 // loop_footer_branch
      %8 = sbr.rel target = $region3
    $region8: #{autoencoder_forward.19} parent=1 // loop_exit
      _

</llo_original>
